<compile_context>
chip_gen: v7x
topology: tpu7x:2x2x1
jax: 0.10.0
libtpu: 0.0.40
codegen_flags: <defaults>
</compile_context>

<pallas_src>
import numpy as np
import jax
import jax.numpy as jnp
from jax import lax
from jax.experimental import pallas as pl
from jax.experimental.pallas import tpu as pltpu


# ------------------------------ fused kernel --------------------------------

def _make_fused_kernel(H, W, Cin, Hid, Ncls, P, Wd):
    """One grid step processes P lane-packed samples end to end in VMEM."""
    Hp1, Wp1 = H + 2, W + 2            # layer1 / layer3 output spatial
    Hp2, Wp2 = H + 4, W + 4            # layer2 padded-input spatial
    Ho = Hp1 // 2                      # pooled rows
    Wf = Wd + 8                        # padded frame width for the pool stage
    M = H * W
    C1, CH, C3, CL = P * Cin, P * Hid, P * Cin, P * Ncls

    def kernel(x_ref, w1_ref, b1_ref, w2_ref, b2_ref, w3_ref, b3_ref,
               wl_ref, bl_ref, out_ref, y1p_ref, col_ref, y3p_ref):
        f32 = jnp.float32

        # ---- layer1: packed 1x1 conv (pad=1), one MXU dot -------------------
        y1 = jnp.dot(x_ref[0], w1_ref[...],
                     preferred_element_type=f32) + b1_ref[...]      # (M, CH)

        # Padded frame for layer2: outer ring = 0 (layer2's own padding), next
        # ring = b1 (layer1's padded ring), interior = y1.  One full aligned
        # store of the iota-masked bias frame + one interior store.
        rr = lax.broadcasted_iota(jnp.int32, (Hp2, Wp2, 1), 0)
        cc = lax.broadcasted_iota(jnp.int32, (Hp2, Wp2, 1), 1)
        inner = (rr >= 1) & (rr <= Hp2 - 2) & (cc >= 1) & (cc <= Wp2 - 2)
        y1p_ref[...] = jnp.where(inner, b1_ref[...], 0.0)
        y1p_ref[2:2 + H, 2:2 + W, :] = y1.reshape(H, W, CH)

        # ---- layer2: grouped 5x5 conv == im2col + ONE long-K matmul ---------
        # One sublane-shifted slab per kw; its 5 kh taps are free leading-dim
        # slices written lane-blockwise into the im2col scratch.
        for kw in range(5):
            slab = y1p_ref[:, kw:kw + W, :]                         # (Hp2,W,CH)
            for kh in range(5):
                t = kh * 5 + kw
                col_ref[:, t * CH:(t + 1) * CH] = \
                    slab[kh:kh + H].reshape(M, CH)
        y2 = jnp.dot(col_ref[...], w2_ref[...],
                     preferred_element_type=f32) + b2_ref[...]      # (M, CH)

        # ---- layer3: packed 1x1 conv (pad=1) + relu -------------------------
        y3 = jnp.maximum(
            jnp.dot(y2, w3_ref[...], preferred_element_type=f32) + b3_ref[...],
            0.0)                                                    # (M, C3)
        y3p_ref[...] = jnp.broadcast_to(jnp.maximum(b3_ref[...], 0.0),
                                        (Hp1, Wf, C3))
        y3p_ref[1:1 + H, 1:1 + W, :] = y3.reshape(H, W, C3)

        # ---- 2x2 stride-2 maxpool, fully vectorized -------------------------
        # Valid results land on even columns; odd / ring-padding columns are
        # junk the wrapper drops (keeps all reshapes 8-sublane aligned).
        v0 = y3p_ref[:, 0:Wd, :]                                    # (Hp1,Wd,C3)
        v1 = y3p_ref[:, 1:1 + Wd, :]
        cm = jnp.maximum(v0, v1)
        cr = cm.reshape(Ho, 2, Wd, C3)
        pooled = jnp.maximum(cr[:, 0], cr[:, 1])                    # (Ho,Wd,C3)

        # ---- output Linear as a single dot ----------------------------------
        logits = jnp.dot(pooled.reshape(Ho * Wd, C3), wl_ref[...],
                         preferred_element_type=f32) + bl_ref[...]  # (Ho*Wd,CL)
        out_ref[0] = logits

    return kernel


# ------------------------------ public wrapper -------------------------------

@jax.jit
def resnext_forward(x_nchw, w1, b1, w2_tap, b2, w3, b3, wlin, blin):
    """Matches ResNext.forward (eval mode). NCHW float32 in / NCHW out."""
    N, Cin, H, W = x_nchw.shape
    Hid = w1.shape[1]
    Ncls = wlin.shape[1]
    groups = 16                                    # fixed by the module spec
    Ho, Wo = (H + 2) // 2, (W + 2) // 2
    M = H * W

    # Lane-pack P batch samples per grid step (128 lanes at P=4 with Hid=32).
    # Note: on v7x with larger batches (N>=8) this still leaves >=2 grid steps
    # for the two TensorCores; at tiny N we prefer lane width over grid steps.
    P = 4 if N % 4 == 0 else (2 if N % 2 == 0 else 1)
    G = N // P
    C1, CH, C3, CL = P * Cin, P * Hid, P * Cin, P * Ncls
    Wd = ((2 * Wo - 1) + 7) // 8 * 8               # dilated pool width, 8-aligned

    f32 = jnp.float32
    # x: NCHW -> (G, H*W, P*Cin): pixels on sublanes, packed channels on lanes.
    x = jnp.transpose(x_nchw, (0, 2, 3, 1)).astype(f32)
    x = x.reshape(G, P, M, Cin).transpose(0, 2, 1, 3).reshape(G, M, C1)

    # Sample-block-diagonal weight packing (tiny; built once per call in XLA).
    eye = jnp.eye(P, dtype=f32)

    def bdiag(w):
        a, b = w.shape
        return jnp.einsum('ij,pq->piqj', w.astype(f32), eye).reshape(P * a, P * b)

    w1p = bdiag(w1)
    w3p = bdiag(w3)
    wlp = bdiag(wlin)
    w2p = jnp.einsum('tij,pq->tpiqj', w2_tap.astype(f32),
                     eye).reshape(25 * CH, CH)
    b1p = jnp.tile(b1.astype(f32), P).reshape(1, CH)
    b2p = jnp.tile(b2.astype(f32), P).reshape(1, CH)
    b3p = jnp.tile(b3.astype(f32), P).reshape(1, C3)
    blp = jnp.tile(blin.astype(f32), P).reshape(1, CL)

    kernel = _make_fused_kernel(H, W, Cin, Hid, Ncls, P, Wd)

    cg = Hid // groups                             # true per-group fan-in
    flops = 2 * N * M * (Cin * Hid + 25 * Hid * cg + Hid * Cin) \
        + 2 * N * Ho * Wo * Cin * Ncls
    bytes_accessed = 4 * (x.size + w1p.size + b1p.size + w2p.size + b2p.size
                          + w3p.size + b3p.size + wlp.size + blp.size
                          + G * Ho * Wd * CL)

    out = pl.pallas_call(
        kernel,
        out_shape=jax.ShapeDtypeStruct((G, Ho * Wd, CL), f32),
        grid=(G,),
        in_specs=[
            pl.BlockSpec((1, M, C1), lambda g: (g, 0, 0)),
            pl.BlockSpec((C1, CH), lambda g: (0, 0)),
            pl.BlockSpec((1, CH), lambda g: (0, 0)),
            pl.BlockSpec((25 * CH, CH), lambda g: (0, 0)),
            pl.BlockSpec((1, CH), lambda g: (0, 0)),
            pl.BlockSpec((CH, C3), lambda g: (0, 0)),
            pl.BlockSpec((1, C3), lambda g: (0, 0)),
            pl.BlockSpec((C3, CL), lambda g: (0, 0)),
            pl.BlockSpec((1, CL), lambda g: (0, 0)),
        ],
        out_specs=pl.BlockSpec((1, Ho * Wd, CL), lambda g: (g, 0, 0)),
        scratch_shapes=[
            pltpu.VMEM((H + 4, W + 4, CH), f32),       # layer2 padded frame
            pltpu.VMEM((M, 25 * CH), f32),             # im2col buffer
            pltpu.VMEM((H + 2, Wd + 8, C3), f32),      # relu(layer3) frame
        ],
        compiler_params=pltpu.CompilerParams(
            dimension_semantics=("parallel",)),
        cost_estimate=pl.CostEstimate(flops=flops, transcendentals=0,
                                      bytes_accessed=bytes_accessed),
    )(x, w1p, b1p, w2p, b2p, w3p, b3p, wlp, blp)

    # (G, Ho*Wd, P*Ncls) -> keep even (valid) pooled columns, unpack samples,
    # return NCHW (N, Ncls, Ho, Wo).
    out = out.reshape(G, Ho, Wd, P, Ncls)[:, :, 0:2 * Wo - 1:2, :, :]
    out = out.transpose(0, 3, 1, 2, 4).reshape(N, Ho, Wo, Ncls)
    return jnp.transpose(out, (0, 3, 1, 2))


# --------------------------- pure-JAX reference ------------------------------

def ref_forward(x_nchw, w1, b1, w2_hwio, b2, w3, b3, wlin, blin, groups):
    dn = ('NHWC', 'HWIO', 'NHWC')
    hi = lax.Precision.HIGHEST
    x = jnp.transpose(x_nchw, (0, 2, 3, 1))
    y = lax.conv_general_dilated(x, w1[None, None], (1, 1), ((1, 1), (1, 1)),
                                 dimension_numbers=dn, precision=hi) + b1
    y = lax.conv_general_dilated(y, w2_hwio, (1, 1), ((1, 1), (1, 1)),
                                 dimension_numbers=dn,
                                 feature_group_count=groups, precision=hi) + b2
    y = lax.conv_general_dilated(y, w3[None, None], (1, 1), ((1, 1), (1, 1)),
                                 dimension_numbers=dn, precision=hi) + b3
    y = jnp.maximum(y, 0.0)
    y = lax.reduce_window(y, -jnp.inf, lax.max,
                          (1, 2, 2, 1), (1, 2, 2, 1), 'VALID')
    y = jnp.dot(y, wlin, precision=hi) + blin
    return jnp.transpose(y, (0, 3, 1, 2))


# ------------------------------------ main -----------------------------------

if __name__ == "__main__":
    N, C_IN, H, W = 2, 4, 16, 16
    HIDDEN, N_CLASSES, GROUPS = 32, 8, 16      # hidden_size must divide by 16
    CG = HIDDEN // GROUPS

    key = jax.random.PRNGKey(0)
    ks = jax.random.split(key, 9)
    x = jax.random.normal(ks[0], (N, C_IN, H, W), jnp.float32)

    # layer1: Conv2d(C_IN, HIDDEN, 1x1)  -> kernel layout (Cin, Cout)
    w1 = jax.random.normal(ks[1], (C_IN, HIDDEN), jnp.float32) * 0.1
    b1 = jax.random.normal(ks[2], (HIDDEN,), jnp.float32) * 0.1
    # layer2: Conv2d(HIDDEN, HIDDEN, 5x5, groups=16) -> torch layout (Cout, Cin/G, 5, 5)
    w2_t = jax.random.normal(ks[3], (HIDDEN, CG, 5, 5), jnp.float32) * 0.05
    b2 = jax.random.normal(ks[4], (HIDDEN,), jnp.float32) * 0.1
    # layer3: Conv2d(HIDDEN, C_IN, 1x1)
    w3 = jax.random.normal(ks[5], (HIDDEN, C_IN), jnp.float32) * 0.1
    b3 = jax.random.normal(ks[6], (C_IN,), jnp.float32) * 0.1
    # output_layer: Linear(C_IN, N_CLASSES) -> kernel layout (Cin, ncls)
    wlin = jax.random.normal(ks[7], (C_IN, N_CLASSES), jnp.float32) * 0.1
    blin = jax.random.normal(ks[8], (N_CLASSES,), jnp.float32) * 0.1

    # Per-tap block-diagonal dense weights for the grouped conv: (25, C, C)
    w2_np = np.asarray(w2_t)
    w2_dense = np.zeros((25, HIDDEN, HIDDEN), np.float32)
    for co in range(HIDDEN):
        g = co // CG
        for j in range(CG):
            w2_dense[:, g * CG + j, co] = w2_np[co, j].reshape(25)
    w2_dense = jnp.asarray(w2_dense)
    # HWIO weights for the pure-JAX reference grouped conv: (5, 5, CG, HIDDEN)
    w2_hwio = jnp.transpose(w2_t, (2, 3, 1, 0))

    out = resnext_forward(x, w1, b1, w2_dense, b2, w3, b3, wlin, blin)
    out = jax.block_until_ready(out)
    assert out.shape == (N, N_CLASSES, (H + 2) // 2, (W + 2) // 2), out.shape

    ref = ref_forward(x, w1, b1, w2_hwio, b2, w3, b3, wlin, blin, GROUPS)
    np.testing.assert_allclose(np.asarray(out), np.asarray(ref),
                               rtol=1e-2, atol=1e-2)
    print("KERNEL_OK")
</pallas_src>

<mosaic_0001>
module attributes {stable_mosaic.version = 11 : i64} {
  func.func @kernel(%arg0: i32, %arg1: memref<1x256x8xf32, #tpu.memory_space<vmem>>, %arg2: memref<8x64xf32, #tpu.memory_space<vmem>>, %arg3: memref<1x64xf32, #tpu.memory_space<vmem>>, %arg4: memref<1600x64xf32, #tpu.memory_space<vmem>>, %arg5: memref<1x64xf32, #tpu.memory_space<vmem>>, %arg6: memref<64x8xf32, #tpu.memory_space<vmem>>, %arg7: memref<1x8xf32, #tpu.memory_space<vmem>>, %arg8: memref<8x16xf32, #tpu.memory_space<vmem>>, %arg9: memref<1x16xf32, #tpu.memory_space<vmem>>, %arg10: memref<1x216x16xf32, #tpu.memory_space<vmem>>, %arg11: memref<20x20x64xf32, #tpu.memory_space<vmem>>, %arg12: memref<256x1600xf32, #tpu.memory_space<vmem>>, %arg13: memref<18x32x8xf32, #tpu.memory_space<vmem>>) attributes {dimension_semantics = [#tpu.dimension_semantics<parallel>], iteration_bounds = array<i64: 1>, scalar_prefetch = 0 : i64, scratch_operands = 3 : i64, tpu.core_type = #tpu.core_type<tc>, window_params = [{transform_indices = @transform_0, window_bounds = array<i64: 1, 256, 8>}, {pipeline_mode = #tpu.pipeline_mode<synchronous>, transform_indices = @transform_1, window_bounds = array<i64: 8, 64>}, {pipeline_mode = #tpu.pipeline_mode<synchronous>, transform_indices = @transform_2, window_bounds = array<i64: 1, 64>}, {pipeline_mode = #tpu.pipeline_mode<synchronous>, transform_indices = @transform_3, window_bounds = array<i64: 1600, 64>}, {pipeline_mode = #tpu.pipeline_mode<synchronous>, transform_indices = @transform_4, window_bounds = array<i64: 1, 64>}, {pipeline_mode = #tpu.pipeline_mode<synchronous>, transform_indices = @transform_5, window_bounds = array<i64: 64, 8>}, {pipeline_mode = #tpu.pipeline_mode<synchronous>, transform_indices = @transform_6, window_bounds = array<i64: 1, 8>}, {pipeline_mode = #tpu.pipeline_mode<synchronous>, transform_indices = @transform_7, window_bounds = array<i64: 8, 16>}, {pipeline_mode = #tpu.pipeline_mode<synchronous>, transform_indices = @transform_8, window_bounds = array<i64: 1, 16>}, {transform_indices = @transform_9, window_bounds = array<i64: 1, 216, 16>}]} {
    %c0 = arith.constant 0 : index
    %c0_0 = arith.constant 0 : index
    %c0_1 = arith.constant 0 : index
    %0 = vector.load %arg1[%c0, %c0_0, %c0_1] : memref<1x256x8xf32, #tpu.memory_space<vmem>>, vector<1x256x8xf32>
    %1 = vector.shape_cast %0 : vector<1x256x8xf32> to vector<256x8xf32>
    %c0_2 = arith.constant 0 : index
    %c0_3 = arith.constant 0 : index
    %2 = vector.load %arg2[%c0_2, %c0_3] : memref<8x64xf32, #tpu.memory_space<vmem>>, vector<8x64xf32>
    %cst = arith.constant dense<0.000000e+00> : vector<256x64xf32>
    %3 = tpu.matmul %1, %2, %cst {dimension_numbers = #tpu.dot_dimension_numbers<[1], [0], [0], [1], [0, 0, 1, 1], [], []>} : vector<256x8xf32>, vector<8x64xf32>, vector<256x64xf32> -> vector<256x64xf32>
    %c0_4 = arith.constant 0 : index
    %c0_5 = arith.constant 0 : index
    %4 = vector.load %arg3[%c0_4, %c0_5] : memref<1x64xf32, #tpu.memory_space<vmem>>, vector<1x64xf32>
    %5 = vector.broadcast %4 : vector<1x64xf32> to vector<256x64xf32>
    %6 = arith.addf %3, %5 : vector<256x64xf32>
    %7 = tpu.iota {dimensions = array<i32: 0>} : vector<20x20x1xi32>
    %8 = tpu.iota {dimensions = array<i32: 1>} : vector<20x20x1xi32>
    %c1_i32 = arith.constant 1 : i32
    %9 = vector.broadcast %c1_i32 : i32 to vector<20x20x1xi32>
    %10 = arith.cmpi sge, %7, %9 : vector<20x20x1xi32>
    %c18_i32 = arith.constant 18 : i32
    %11 = vector.broadcast %c18_i32 : i32 to vector<20x20x1xi32>
    %12 = arith.cmpi sle, %7, %11 : vector<20x20x1xi32>
    %13 = arith.andi %10, %12 : vector<20x20x1xi1>
    %c1_i32_6 = arith.constant 1 : i32
    %14 = vector.broadcast %c1_i32_6 : i32 to vector<20x20x1xi32>
    %15 = arith.cmpi sge, %8, %14 : vector<20x20x1xi32>
    %16 = arith.andi %13, %15 : vector<20x20x1xi1>
    %c18_i32_7 = arith.constant 18 : i32
    %17 = vector.broadcast %c18_i32_7 : i32 to vector<20x20x1xi32>
    %18 = arith.cmpi sle, %8, %17 : vector<20x20x1xi32>
    %19 = arith.andi %16, %18 : vector<20x20x1xi1>
    %c0_8 = arith.constant 0 : index
    %c0_9 = arith.constant 0 : index
    %20 = vector.load %arg3[%c0_8, %c0_9] : memref<1x64xf32, #tpu.memory_space<vmem>>, vector<1x64xf32>
    %cst_10 = arith.constant 0.000000e+00 : f32
    %21 = vector.shape_cast %19 : vector<20x20x1xi1> to vector<20x20x1xi1>
    %22 = vector.broadcast %21 : vector<20x20x1xi1> to vector<20x20x64xi1>
    %23 = vector.shape_cast %20 : vector<1x64xf32> to vector<1x1x64xf32>
    %24 = vector.broadcast %23 : vector<1x1x64xf32> to vector<20x20x64xf32>
    %25 = vector.broadcast %cst_10 : f32 to vector<20x20x64xf32>
    %26 = arith.select %22, %24, %25 : vector<20x20x64xi1>, vector<20x20x64xf32>
    %c0_11 = arith.constant 0 : index
    %c0_12 = arith.constant 0 : index
    %c0_13 = arith.constant 0 : index
    %27 = vector.load %arg11[%c0_11, %c0_12, %c0_13] : memref<20x20x64xf32, #tpu.memory_space<vmem>>, vector<20x20x64xf32>
    tpu.vector_store %arg11[%c0_11, %c0_12, %c0_13], %26 {strides = array<i32>} : memref<20x20x64xf32, #tpu.memory_space<vmem>>, vector<20x20x64xf32>,
    %28 = vector.shape_cast %6 : vector<256x64xf32> to vector<16x16x64xf32>
    %c2 = arith.constant 2 : index
    %c2_14 = arith.constant 2 : index
    %c0_15 = arith.constant 0 : index
    %29 = vector.load %arg11[%c2, %c2_14, %c0_15] : memref<20x20x64xf32, #tpu.memory_space<vmem>>, vector<16x16x64xf32>
    tpu.vector_store %arg11[%c2, %c2_14, %c0_15], %28 {strides = array<i32>} : memref<20x20x64xf32, #tpu.memory_space<vmem>>, vector<16x16x64xf32>,
    %c0_16 = arith.constant 0 : index
    %c0_17 = arith.constant 0 : index
    %c0_18 = arith.constant 0 : index
    %30 = vector.load %arg11[%c0_16, %c0_17, %c0_18] : memref<20x20x64xf32, #tpu.memory_space<vmem>>, vector<20x16x64xf32>
    %31 = vector.extract_strided_slice %30 {offsets = [0, 0, 0], sizes = [16, 16, 64], strides = [1, 1, 1]} : vector<20x16x64xf32> to vector<16x16x64xf32>
    %32 = vector.shape_cast %31 : vector<16x16x64xf32> to vector<256x64xf32>
    %c0_19 = arith.constant 0 : index
    %c0_20 = arith.constant 0 : index
    %33 = vector.load %arg12[%c0_19, %c0_20] : memref<256x1600xf32, #tpu.memory_space<vmem>>, vector<256x64xf32>
    tpu.vector_store %arg12[%c0_19, %c0_20], %32 {strides = array<i32>} : memref<256x1600xf32, #tpu.memory_space<vmem>>, vector<256x64xf32>,
    %34 = vector.extract_strided_slice %30 {offsets = [1, 0, 0], sizes = [16, 16, 64], strides = [1, 1, 1]} : vector<20x16x64xf32> to vector<16x16x64xf32>
    %35 = vector.shape_cast %34 : vector<16x16x64xf32> to vector<256x64xf32>
    %c0_21 = arith.constant 0 : index
    %c320 = arith.constant 320 : index
    %36 = vector.load %arg12[%c0_21, %c320] : memref<256x1600xf32, #tpu.memory_space<vmem>>, vector<256x64xf32>
    tpu.vector_store %arg12[%c0_21, %c320], %35 {strides = array<i32>} : memref<256x1600xf32, #tpu.memory_space<vmem>>, vector<256x64xf32>,
    %37 = vector.extract_strided_slice %30 {offsets = [2, 0, 0], sizes = [16, 16, 64], strides = [1, 1, 1]} : vector<20x16x64xf32> to vector<16x16x64xf32>
    %38 = vector.shape_cast %37 : vector<16x16x64xf32> to vector<256x64xf32>
    %c0_22 = arith.constant 0 : index
    %c640 = arith.constant 640 : index
    %39 = vector.load %arg12[%c0_22, %c640] : memref<256x1600xf32, #tpu.memory_space<vmem>>, vector<256x64xf32>
    tpu.vector_store %arg12[%c0_22, %c640], %38 {strides = array<i32>} : memref<256x1600xf32, #tpu.memory_space<vmem>>, vector<256x64xf32>,
    %40 = vector.extract_strided_slice %30 {offsets = [3, 0, 0], sizes = [16, 16, 64], strides = [1, 1, 1]} : vector<20x16x64xf32> to vector<16x16x64xf32>
    %41 = vector.shape_cast %40 : vector<16x16x64xf32> to vector<256x64xf32>
    %c0_23 = arith.constant 0 : index
    %c960 = arith.constant 960 : index
    %42 = vector.load %arg12[%c0_23, %c960] : memref<256x1600xf32, #tpu.memory_space<vmem>>, vector<256x64xf32>
    tpu.vector_store %arg12[%c0_23, %c960], %41 {strides = array<i32>} : memref<256x1600xf32, #tpu.memory_space<vmem>>, vector<256x64xf32>,
    %43 = vector.extract_strided_slice %30 {offsets = [4, 0, 0], sizes = [16, 16, 64], strides = [1, 1, 1]} : vector<20x16x64xf32> to vector<16x16x64xf32>
    %44 = vector.shape_cast %43 : vector<16x16x64xf32> to vector<256x64xf32>
    %c0_24 = arith.constant 0 : index
    %c1280 = arith.constant 1280 : index
    %45 = vector.load %arg12[%c0_24, %c1280] : memref<256x1600xf32, #tpu.memory_space<vmem>>, vector<256x64xf32>
    tpu.vector_store %arg12[%c0_24, %c1280], %44 {strides = array<i32>} : memref<256x1600xf32, #tpu.memory_space<vmem>>, vector<256x64xf32>,
    %c0_25 = arith.constant 0 : index
    %c1 = arith.constant 1 : index
    %c0_26 = arith.constant 0 : index
    %46 = vector.load %arg11[%c0_25, %c1, %c0_26] : memref<20x20x64xf32, #tpu.memory_space<vmem>>, vector<20x16x64xf32>
    %47 = vector.extract_strided_slice %46 {offsets = [0, 0, 0], sizes = [16, 16, 64], strides = [1, 1, 1]} : vector<20x16x64xf32> to vector<16x16x64xf32>
    %48 = vector.shape_cast %47 : vector<16x16x64xf32> to vector<256x64xf32>
    %c0_27 = arith.constant 0 : index
    %c64 = arith.constant 64 : index
    %49 = vector.load %arg12[%c0_27, %c64] : memref<256x1600xf32, #tpu.memory_space<vmem>>, vector<256x64xf32>
    tpu.vector_store %arg12[%c0_27, %c64], %48 {strides = array<i32>} : memref<256x1600xf32, #tpu.memory_space<vmem>>, vector<256x64xf32>,
    %50 = vector.extract_strided_slice %46 {offsets = [1, 0, 0], sizes = [16, 16, 64], strides = [1, 1, 1]} : vector<20x16x64xf32> to vector<16x16x64xf32>
    %51 = vector.shape_cast %50 : vector<16x16x64xf32> to vector<256x64xf32>
    %c0_28 = arith.constant 0 : index
    %c384 = arith.constant 384 : index
    %52 = vector.load %arg12[%c0_28, %c384] : memref<256x1600xf32, #tpu.memory_space<vmem>>, vector<256x64xf32>
    tpu.vector_store %arg12[%c0_28, %c384], %51 {strides = array<i32>} : memref<256x1600xf32, #tpu.memory_space<vmem>>, vector<256x64xf32>,
    %53 = vector.extract_strided_slice %46 {offsets = [2, 0, 0], sizes = [16, 16, 64], strides = [1, 1, 1]} : vector<20x16x64xf32> to vector<16x16x64xf32>
    %54 = vector.shape_cast %53 : vector<16x16x64xf32> to vector<256x64xf32>
    %c0_29 = arith.constant 0 : index
    %c704 = arith.constant 704 : index
    %55 = vector.load %arg12[%c0_29, %c704] : memref<256x1600xf32, #tpu.memory_space<vmem>>, vector<256x64xf32>
    tpu.vector_store %arg12[%c0_29, %c704], %54 {strides = array<i32>} : memref<256x1600xf32, #tpu.memory_space<vmem>>, vector<256x64xf32>,
    %56 = vector.extract_strided_slice %46 {offsets = [3, 0, 0], sizes = [16, 16, 64], strides = [1, 1, 1]} : vector<20x16x64xf32> to vector<16x16x64xf32>
    %57 = vector.shape_cast %56 : vector<16x16x64xf32> to vector<256x64xf32>
    %c0_30 = arith.constant 0 : index
    %c1024 = arith.constant 1024 : index
    %58 = vector.load %arg12[%c0_30, %c1024] : memref<256x1600xf32, #tpu.memory_space<vmem>>, vector<256x64xf32>
    tpu.vector_store %arg12[%c0_30, %c1024], %57 {strides = array<i32>} : memref<256x1600xf32, #tpu.memory_space<vmem>>, vector<256x64xf32>,
    %59 = vector.extract_strided_slice %46 {offsets = [4, 0, 0], sizes = [16, 16, 64], strides = [1, 1, 1]} : vector<20x16x64xf32> to vector<16x16x64xf32>
    %60 = vector.shape_cast %59 : vector<16x16x64xf32> to vector<256x64xf32>
    %c0_31 = arith.constant 0 : index
    %c1344 = arith.constant 1344 : index
    %61 = vector.load %arg12[%c0_31, %c1344] : memref<256x1600xf32, #tpu.memory_space<vmem>>, vector<256x64xf32>
    tpu.vector_store %arg12[%c0_31, %c1344], %60 {strides = array<i32>} : memref<256x1600xf32, #tpu.memory_space<vmem>>, vector<256x64xf32>,
    %c0_32 = arith.constant 0 : index
    %c2_33 = arith.constant 2 : index
    %c0_34 = arith.constant 0 : index
    %62 = vector.load %arg11[%c0_32, %c2_33, %c0_34] : memref<20x20x64xf32, #tpu.memory_space<vmem>>, vector<20x16x64xf32>
    %63 = vector.extract_strided_slice %62 {offsets = [0, 0, 0], sizes = [16, 16, 64], strides = [1, 1, 1]} : vector<20x16x64xf32> to vector<16x16x64xf32>
    %64 = vector.shape_cast %63 : vector<16x16x64xf32> to vector<256x64xf32>
    %c0_35 = arith.constant 0 : index
    %c128 = arith.constant 128 : index
    %65 = vector.load %arg12[%c0_35, %c128] : memref<256x1600xf32, #tpu.memory_space<vmem>>, vector<256x64xf32>
    tpu.vector_store %arg12[%c0_35, %c128], %64 {strides = array<i32>} : memref<256x1600xf32, #tpu.memory_space<vmem>>, vector<256x64xf32>,
    %66 = vector.extract_strided_slice %62 {offsets = [1, 0, 0], sizes = [16, 16, 64], strides = [1, 1, 1]} : vector<20x16x64xf32> to vector<16x16x64xf32>
    %67 = vector.shape_cast %66 : vector<16x16x64xf32> to vector<256x64xf32>
    %c0_36 = arith.constant 0 : index
    %c448 = arith.constant 448 : index
    %68 = vector.load %arg12[%c0_36, %c448] : memref<256x1600xf32, #tpu.memory_space<vmem>>, vector<256x64xf32>
    tpu.vector_store %arg12[%c0_36, %c448], %67 {strides = array<i32>} : memref<256x1600xf32, #tpu.memory_space<vmem>>, vector<256x64xf32>,
    %69 = vector.extract_strided_slice %62 {offsets = [2, 0, 0], sizes = [16, 16, 64], strides = [1, 1, 1]} : vector<20x16x64xf32> to vector<16x16x64xf32>
    %70 = vector.shape_cast %69 : vector<16x16x64xf32> to vector<256x64xf32>
    %c0_37 = arith.constant 0 : index
    %c768 = arith.constant 768 : index
    %71 = vector.load %arg12[%c0_37, %c768] : memref<256x1600xf32, #tpu.memory_space<vmem>>, vector<256x64xf32>
    tpu.vector_store %arg12[%c0_37, %c768], %70 {strides = array<i32>} : memref<256x1600xf32, #tpu.memory_space<vmem>>, vector<256x64xf32>,
    %72 = vector.extract_strided_slice %62 {offsets = [3, 0, 0], sizes = [16, 16, 64], strides = [1, 1, 1]} : vector<20x16x64xf32> to vector<16x16x64xf32>
    %73 = vector.shape_cast %72 : vector<16x16x64xf32> to vector<256x64xf32>
    %c0_38 = arith.constant 0 : index
    %c1088 = arith.constant 1088 : index
    %74 = vector.load %arg12[%c0_38, %c1088] : memref<256x1600xf32, #tpu.memory_space<vmem>>, vector<256x64xf32>
    tpu.vector_store %arg12[%c0_38, %c1088], %73 {strides = array<i32>} : memref<256x1600xf32, #tpu.memory_space<vmem>>, vector<256x64xf32>,
    %75 = vector.extract_strided_slice %62 {offsets = [4, 0, 0], sizes = [16, 16, 64], strides = [1, 1, 1]} : vector<20x16x64xf32> to vector<16x16x64xf32>
    %76 = vector.shape_cast %75 : vector<16x16x64xf32> to vector<256x64xf32>
    %c0_39 = arith.constant 0 : index
    %c1408 = arith.constant 1408 : index
    %77 = vector.load %arg12[%c0_39, %c1408] : memref<256x1600xf32, #tpu.memory_space<vmem>>, vector<256x64xf32>
    tpu.vector_store %arg12[%c0_39, %c1408], %76 {strides = array<i32>} : memref<256x1600xf32, #tpu.memory_space<vmem>>, vector<256x64xf32>,
    %c0_40 = arith.constant 0 : index
    %c3 = arith.constant 3 : index
    %c0_41 = arith.constant 0 : index
    %78 = vector.load %arg11[%c0_40, %c3, %c0_41] : memref<20x20x64xf32, #tpu.memory_space<vmem>>, vector<20x16x64xf32>
    %79 = vector.extract_strided_slice %78 {offsets = [0, 0, 0], sizes = [16, 16, 64], strides = [1, 1, 1]} : vector<20x16x64xf32> to vector<16x16x64xf32>
    %80 = vector.shape_cast %79 : vector<16x16x64xf32> to vector<256x64xf32>
    %c0_42 = arith.constant 0 : index
    %c192 = arith.constant 192 : index
    %81 = vector.load %arg12[%c0_42, %c192] : memref<256x1600xf32, #tpu.memory_space<vmem>>, vector<256x64xf32>
    tpu.vector_store %arg12[%c0_42, %c192], %80 {strides = array<i32>} : memref<256x1600xf32, #tpu.memory_space<vmem>>, vector<256x64xf32>,
    %82 = vector.extract_strided_slice %78 {offsets = [1, 0, 0], sizes = [16, 16, 64], strides = [1, 1, 1]} : vector<20x16x64xf32> to vector<16x16x64xf32>
    %83 = vector.shape_cast %82 : vector<16x16x64xf32> to vector<256x64xf32>
    %c0_43 = arith.constant 0 : index
    %c512 = arith.constant 512 : index
    %84 = vector.load %arg12[%c0_43, %c512] : memref<256x1600xf32, #tpu.memory_space<vmem>>, vector<256x64xf32>
    tpu.vector_store %arg12[%c0_43, %c512], %83 {strides = array<i32>} : memref<256x1600xf32, #tpu.memory_space<vmem>>, vector<256x64xf32>,
    %85 = vector.extract_strided_slice %78 {offsets = [2, 0, 0], sizes = [16, 16, 64], strides = [1, 1, 1]} : vector<20x16x64xf32> to vector<16x16x64xf32>
    %86 = vector.shape_cast %85 : vector<16x16x64xf32> to vector<256x64xf32>
    %c0_44 = arith.constant 0 : index
    %c832 = arith.constant 832 : index
    %87 = vector.load %arg12[%c0_44, %c832] : memref<256x1600xf32, #tpu.memory_space<vmem>>, vector<256x64xf32>
    tpu.vector_store %arg12[%c0_44, %c832], %86 {strides = array<i32>} : memref<256x1600xf32, #tpu.memory_space<vmem>>, vector<256x64xf32>,
    %88 = vector.extract_strided_slice %78 {offsets = [3, 0, 0], sizes = [16, 16, 64], strides = [1, 1, 1]} : vector<20x16x64xf32> to vector<16x16x64xf32>
    %89 = vector.shape_cast %88 : vector<16x16x64xf32> to vector<256x64xf32>
    %c0_45 = arith.constant 0 : index
    %c1152 = arith.constant 1152 : index
    %90 = vector.load %arg12[%c0_45, %c1152] : memref<256x1600xf32, #tpu.memory_space<vmem>>, vector<256x64xf32>
    tpu.vector_store %arg12[%c0_45, %c1152], %89 {strides = array<i32>} : memref<256x1600xf32, #tpu.memory_space<vmem>>, vector<256x64xf32>,
    %91 = vector.extract_strided_slice %78 {offsets = [4, 0, 0], sizes = [16, 16, 64], strides = [1, 1, 1]} : vector<20x16x64xf32> to vector<16x16x64xf32>
    %92 = vector.shape_cast %91 : vector<16x16x64xf32> to vector<256x64xf32>
    %c0_46 = arith.constant 0 : index
    %c1472 = arith.constant 1472 : index
    %93 = vector.load %arg12[%c0_46, %c1472] : memref<256x1600xf32, #tpu.memory_space<vmem>>, vector<256x64xf32>
    tpu.vector_store %arg12[%c0_46, %c1472], %92 {strides = array<i32>} : memref<256x1600xf32, #tpu.memory_space<vmem>>, vector<256x64xf32>,
    %c0_47 = arith.constant 0 : index
    %c4 = arith.constant 4 : index
    %c0_48 = arith.constant 0 : index
    %94 = vector.load %arg11[%c0_47, %c4, %c0_48] : memref<20x20x64xf32, #tpu.memory_space<vmem>>, vector<20x16x64xf32>
    %95 = vector.extract_strided_slice %94 {offsets = [0, 0, 0], sizes = [16, 16, 64], strides = [1, 1, 1]} : vector<20x16x64xf32> to vector<16x16x64xf32>
    %96 = vector.shape_cast %95 : vector<16x16x64xf32> to vector<256x64xf32>
    %c0_49 = arith.constant 0 : index
    %c256 = arith.constant 256 : index
    %97 = vector.load %arg12[%c0_49, %c256] : memref<256x1600xf32, #tpu.memory_space<vmem>>, vector<256x64xf32>
    tpu.vector_store %arg12[%c0_49, %c256], %96 {strides = array<i32>} : memref<256x1600xf32, #tpu.memory_space<vmem>>, vector<256x64xf32>,
    %98 = vector.extract_strided_slice %94 {offsets = [1, 0, 0], sizes = [16, 16, 64], strides = [1, 1, 1]} : vector<20x16x64xf32> to vector<16x16x64xf32>
    %99 = vector.shape_cast %98 : vector<16x16x64xf32> to vector<256x64xf32>
    %c0_50 = arith.constant 0 : index
    %c576 = arith.constant 576 : index
    %100 = vector.load %arg12[%c0_50, %c576] : memref<256x1600xf32, #tpu.memory_space<vmem>>, vector<256x64xf32>
    tpu.vector_store %arg12[%c0_50, %c576], %99 {strides = array<i32>} : memref<256x1600xf32, #tpu.memory_space<vmem>>, vector<256x64xf32>,
    %101 = vector.extract_strided_slice %94 {offsets = [2, 0, 0], sizes = [16, 16, 64], strides = [1, 1, 1]} : vector<20x16x64xf32> to vector<16x16x64xf32>
    %102 = vector.shape_cast %101 : vector<16x16x64xf32> to vector<256x64xf32>
    %c0_51 = arith.constant 0 : index
    %c896 = arith.constant 896 : index
    %103 = vector.load %arg12[%c0_51, %c896] : memref<256x1600xf32, #tpu.memory_space<vmem>>, vector<256x64xf32>
    tpu.vector_store %arg12[%c0_51, %c896], %102 {strides = array<i32>} : memref<256x1600xf32, #tpu.memory_space<vmem>>, vector<256x64xf32>,
    %104 = vector.extract_strided_slice %94 {offsets = [3, 0, 0], sizes = [16, 16, 64], strides = [1, 1, 1]} : vector<20x16x64xf32> to vector<16x16x64xf32>
    %105 = vector.shape_cast %104 : vector<16x16x64xf32> to vector<256x64xf32>
    %c0_52 = arith.constant 0 : index
    %c1216 = arith.constant 1216 : index
    %106 = vector.load %arg12[%c0_52, %c1216] : memref<256x1600xf32, #tpu.memory_space<vmem>>, vector<256x64xf32>
    tpu.vector_store %arg12[%c0_52, %c1216], %105 {strides = array<i32>} : memref<256x1600xf32, #tpu.memory_space<vmem>>, vector<256x64xf32>,
    %107 = vector.extract_strided_slice %94 {offsets = [4, 0, 0], sizes = [16, 16, 64], strides = [1, 1, 1]} : vector<20x16x64xf32> to vector<16x16x64xf32>
    %108 = vector.shape_cast %107 : vector<16x16x64xf32> to vector<256x64xf32>
    %c0_53 = arith.constant 0 : index
    %c1536 = arith.constant 1536 : index
    %109 = vector.load %arg12[%c0_53, %c1536] : memref<256x1600xf32, #tpu.memory_space<vmem>>, vector<256x64xf32>
    tpu.vector_store %arg12[%c0_53, %c1536], %108 {strides = array<i32>} : memref<256x1600xf32, #tpu.memory_space<vmem>>, vector<256x64xf32>,
    %c0_54 = arith.constant 0 : index
    %c0_55 = arith.constant 0 : index
    %110 = vector.load %arg12[%c0_54, %c0_55] : memref<256x1600xf32, #tpu.memory_space<vmem>>, vector<256x1600xf32>
    %c0_56 = arith.constant 0 : index
    %c0_57 = arith.constant 0 : index
    %111 = vector.load %arg4[%c0_56, %c0_57] : memref<1600x64xf32, #tpu.memory_space<vmem>>, vector<1600x64xf32>
    %cst_58 = arith.constant dense<0.000000e+00> : vector<256x64xf32>
    %112 = tpu.matmul %110, %111, %cst_58 {dimension_numbers = #tpu.dot_dimension_numbers<[1], [0], [0], [1], [0, 0, 1, 1], [], []>} : vector<256x1600xf32>, vector<1600x64xf32>, vector<256x64xf32> -> vector<256x64xf32>
    %c0_59 = arith.constant 0 : index
    %c0_60 = arith.constant 0 : index
    %113 = vector.load %arg5[%c0_59, %c0_60] : memref<1x64xf32, #tpu.memory_space<vmem>>, vector<1x64xf32>
    %114 = vector.broadcast %113 : vector<1x64xf32> to vector<256x64xf32>
    %115 = arith.addf %112, %114 : vector<256x64xf32>
    %c0_61 = arith.constant 0 : index
    %c0_62 = arith.constant 0 : index
    %116 = vector.load %arg6[%c0_61, %c0_62] : memref<64x8xf32, #tpu.memory_space<vmem>>, vector<64x8xf32>
    %cst_63 = arith.constant dense<0.000000e+00> : vector<256x8xf32>
    %117 = tpu.matmul %115, %116, %cst_63 {dimension_numbers = #tpu.dot_dimension_numbers<[1], [0], [0], [1], [0, 0, 1, 1], [], []>} : vector<256x64xf32>, vector<64x8xf32>, vector<256x8xf32> -> vector<256x8xf32>
    %c0_64 = arith.constant 0 : index
    %c0_65 = arith.constant 0 : index
    %118 = vector.load %arg7[%c0_64, %c0_65] : memref<1x8xf32, #tpu.memory_space<vmem>>, vector<1x8xf32>
    %119 = vector.broadcast %118 : vector<1x8xf32> to vector<256x8xf32>
    %120 = arith.addf %117, %119 : vector<256x8xf32>
    %cst_66 = arith.constant 0.000000e+00 : f32
    %121 = vector.broadcast %cst_66 : f32 to vector<256x8xf32>
    %122 = arith.maximumf %120, %121 : vector<256x8xf32>
    %c0_67 = arith.constant 0 : index
    %c0_68 = arith.constant 0 : index
    %123 = vector.load %arg7[%c0_67, %c0_68] : memref<1x8xf32, #tpu.memory_space<vmem>>, vector<1x8xf32>
    %cst_69 = arith.constant 0.000000e+00 : f32
    %124 = vector.broadcast %cst_69 : f32 to vector<1x8xf32>
    %125 = arith.maximumf %123, %124 : vector<1x8xf32>
    %126 = vector.shape_cast %125 : vector<1x8xf32> to vector<1x1x8xf32>
    %127 = vector.broadcast %126 : vector<1x1x8xf32> to vector<18x32x8xf32>
    %c0_70 = arith.constant 0 : index
    %c0_71 = arith.constant 0 : index
    %c0_72 = arith.constant 0 : index
    %128 = vector.load %arg13[%c0_70, %c0_71, %c0_72] : memref<18x32x8xf32, #tpu.memory_space<vmem>>, vector<18x32x8xf32>
    tpu.vector_store %arg13[%c0_70, %c0_71, %c0_72], %127 {strides = array<i32>} : memref<18x32x8xf32, #tpu.memory_space<vmem>>, vector<18x32x8xf32>,
    %129 = vector.shape_cast %122 : vector<256x8xf32> to vector<16x16x8xf32>
    %c1_73 = arith.constant 1 : index
    %c1_74 = arith.constant 1 : index
    %c0_75 = arith.constant 0 : index
    %130 = vector.load %arg13[%c1_73, %c1_74, %c0_75] : memref<18x32x8xf32, #tpu.memory_space<vmem>>, vector<16x16x8xf32>
    tpu.vector_store %arg13[%c1_73, %c1_74, %c0_75], %129 {strides = array<i32>} : memref<18x32x8xf32, #tpu.memory_space<vmem>>, vector<16x16x8xf32>,
    %c0_76 = arith.constant 0 : index
    %c0_77 = arith.constant 0 : index
    %c0_78 = arith.constant 0 : index
    %131 = vector.load %arg13[%c0_76, %c0_77, %c0_78] : memref<18x32x8xf32, #tpu.memory_space<vmem>>, vector<18x24x8xf32>
    %c0_79 = arith.constant 0 : index
    %c1_80 = arith.constant 1 : index
    %c0_81 = arith.constant 0 : index
    %132 = vector.load %arg13[%c0_79, %c1_80, %c0_81] : memref<18x32x8xf32, #tpu.memory_space<vmem>>, vector<18x24x8xf32>
    %133 = arith.maximumf %131, %132 : vector<18x24x8xf32>
    %134 = vector.shape_cast %133 : vector<18x24x8xf32> to vector<9x2x24x8xf32>
    %135 = vector.extract_strided_slice %134 {offsets = [0, 0, 0, 0], sizes = [9, 1, 24, 8], strides = [1, 1, 1, 1]} : vector<9x2x24x8xf32> to vector<9x1x24x8xf32>
    %136 = vector.shape_cast %135 : vector<9x1x24x8xf32> to vector<9x24x8xf32>
    %137 = vector.extract_strided_slice %134 {offsets = [0, 1, 0, 0], sizes = [9, 1, 24, 8], strides = [1, 1, 1, 1]} : vector<9x2x24x8xf32> to vector<9x1x24x8xf32>
    %138 = vector.shape_cast %137 : vector<9x1x24x8xf32> to vector<9x24x8xf32>
    %139 = arith.maximumf %136, %138 : vector<9x24x8xf32>
    %140 = vector.shape_cast %139 : vector<9x24x8xf32> to vector<216x8xf32>
    %c0_82 = arith.constant 0 : index
    %c0_83 = arith.constant 0 : index
    %141 = vector.load %arg8[%c0_82, %c0_83] : memref<8x16xf32, #tpu.memory_space<vmem>>, vector<8x16xf32>
    %cst_84 = arith.constant dense<0.000000e+00> : vector<216x16xf32>
    %142 = tpu.matmul %140, %141, %cst_84 {dimension_numbers = #tpu.dot_dimension_numbers<[1], [0], [0], [1], [0, 0, 1, 1], [], []>} : vector<216x8xf32>, vector<8x16xf32>, vector<216x16xf32> -> vector<216x16xf32>
    %c0_85 = arith.constant 0 : index
    %c0_86 = arith.constant 0 : index
    %143 = vector.load %arg9[%c0_85, %c0_86] : memref<1x16xf32, #tpu.memory_space<vmem>>, vector<1x16xf32>
    %144 = vector.broadcast %143 : vector<1x16xf32> to vector<216x16xf32>
    %145 = arith.addf %142, %144 : vector<216x16xf32>
    %c0_87 = arith.constant 0 : index
    %c0_88 = arith.constant 0 : index
    %c0_89 = arith.constant 0 : index
    %146 = vector.load %arg10[%c0_87, %c0_88, %c0_89] : memref<1x216x16xf32, #tpu.memory_space<vmem>>, vector<1x216x16xf32>
    %147 = vector.shape_cast %146 : vector<1x216x16xf32> to vector<216x16xf32>
    %148 = vector.shape_cast %145 : vector<216x16xf32> to vector<1x216x16xf32>
    tpu.vector_store %arg10[%c0_87, %c0_88, %c0_89], %148 {strides = array<i32>} : memref<1x216x16xf32, #tpu.memory_space<vmem>>, vector<1x216x16xf32>,
    return
  }
  func.func @transform_0(%arg0: i32) -> (i32, i32, i32) {
    %c0_i32 = arith.constant 0 : i32
    %c0_i32_0 = arith.constant 0 : i32
    %c0_i32_1 = arith.constant 0 : i32
    return %arg0, %c0_i32, %c0_i32_0 : i32, i32, i32
  }
  func.func @transform_1(%arg0: i32) -> (i32, i32) {
    %c0_i32 = arith.constant 0 : i32
    %c0_i32_0 = arith.constant 0 : i32
    %c0_i32_1 = arith.constant 0 : i32
    return %c0_i32, %c0_i32_0 : i32, i32
  }
  func.func @transform_2(%arg0: i32) -> (i32, i32) {
    %c0_i32 = arith.constant 0 : i32
    %c0_i32_0 = arith.constant 0 : i32
    %c0_i32_1 = arith.constant 0 : i32
    return %c0_i32, %c0_i32_0 : i32, i32
  }
  func.func @transform_3(%arg0: i32) -> (i32, i32) {
    %c0_i32 = arith.constant 0 : i32
    %c0_i32_0 = arith.constant 0 : i32
    %c0_i32_1 = arith.constant 0 : i32
    return %c0_i32, %c0_i32_0 : i32, i32
  }
  func.func @transform_4(%arg0: i32) -> (i32, i32) {
    %c0_i32 = arith.constant 0 : i32
    %c0_i32_0 = arith.constant 0 : i32
    %c0_i32_1 = arith.constant 0 : i32
    return %c0_i32, %c0_i32_0 : i32, i32
  }
  func.func @transform_5(%arg0: i32) -> (i32, i32) {
    %c0_i32 = arith.constant 0 : i32
    %c0_i32_0 = arith.constant 0 : i32
    %c0_i32_1 = arith.constant 0 : i32
    return %c0_i32, %c0_i32_0 : i32, i32
  }
  func.func @transform_6(%arg0: i32) -> (i32, i32) {
    %c0_i32 = arith.constant 0 : i32
    %c0_i32_0 = arith.constant 0 : i32
    %c0_i32_1 = arith.constant 0 : i32
    return %c0_i32, %c0_i32_0 : i32, i32
  }
  func.func @transform_7(%arg0: i32) -> (i32, i32) {
    %c0_i32 = arith.constant 0 : i32
    %c0_i32_0 = arith.constant 0 : i32
    %c0_i32_1 = arith.constant 0 : i32
    return %c0_i32, %c0_i32_0 : i32, i32
  }
  func.func @transform_8(%arg0: i32) -> (i32, i32) {
    %c0_i32 = arith.constant 0 : i32
    %c0_i32_0 = arith.constant 0 : i32
    %c0_i32_1 = arith.constant 0 : i32
    return %c0_i32, %c0_i32_0 : i32, i32
  }
  func.func @transform_9(%arg0: i32) -> (i32, i32, i32) {
    %c0_i32 = arith.constant 0 : i32
    %c0_i32_0 = arith.constant 0 : i32
    %c0_i32_1 = arith.constant 0 : i32
    return %arg0, %c0_i32, %c0_i32_0 : i32, i32, i32
  }
}

</mosaic_0001>

<llo_original>
// kernel: tile.23
$region0: #{tile.23}
  #allocation0 [shape = 's32[1]{0}', space=sflag, size = 0x4, scoped, tag = 'scoped memory for tile.23']
  %s0 = inlined_call_operand.vmem [shape: f32[32], index: 0, kind: input, shape index: {}]
  %s1 = inlined_call_operand.vmem [shape: f32[2,32], index: 1, kind: output, shape index: {}]
  // Predicated region
  $region2: #{tile.23} parent=0 // pred_check
    _
  $region3: #{tile.23} parent=0 // pred_check_branch
    %3 = sbr.rel (0) target = $region5
  $region4: #{tile.23} parent=0 // pred_region
    _
  $region5: #{tile.23} parent=0 // pred_fallthru
    _
  %v4 = vld [vmem:[%s0] ss:$0 sm:$0xff]
  %5 = vst [vmem:[%s1] sm:$0x3] %v4

// kernel: tile.24
$region0: #{tile.24}
  %s0 = inlined_call_operand.vmem [shape: f32[2,32], index: 0, kind: input, shape index: {}]
  %s1 = inlined_call_operand.vmem [shape: f32[1,64], index: 1, kind: output, shape index: {}]
  $region1: #{tile.24} parent=0
    #allocation0 [shape = 'u8[4096]{0}', space=vmem, size = 0x1000, scoped, tag = 'scoped mem for output reshape']
    #allocation1 [shape = 'u8[4096]{0}', space=vmem, size = 0x1000, scoped, tag = 'scoped mem for input reshape']
    %s3 = sshllo.u32 0, 2
    %v4 = vld [vmem:[%s0] sm:%s3]
    %5 = vst [vmem:[#allocation1] sm:%s3] %v4
    %v6 = vld [vmem:[#allocation1] sm:$0x1]
    %vm7 = vcmask 261120
    %8 = vst.msk [vmem:[#allocation0] sm:$0x1] %vm7, %v6
    %s9 = scalar_lea.vmem [#allocation1], 1
    %v10 = vld [vmem:[%s9] sm:$0x1]
    %11 = vrot.lane.b32.xlu0 %v10, 32
    %v12 = vpop.permute.xlu0 %11
    %vm13 = vcmask 523520
    %14 = vst.msk [vmem:[#allocation0] sm:$0x1] %vm13, %v12
    %s16 = sshllo.u32 0, 1
    %v18 = vld [vmem:[#allocation0] sm:%s16]
    %s19 = sshllo.u32 0, 1
    %20 = vst [vmem:[%s1] sm:%s19] %v18

// kernel: tile.33
$region0: #{tile.33}
  #allocation0 [shape = 's32[1]{0}', space=sflag, size = 0x4, scoped, tag = 'scoped memory for tile.33']
  %s0 = inlined_call_operand.vmem [shape: f32[4], index: 0, kind: input, shape index: {}]
  %s1 = inlined_call_operand.vmem [shape: f32[2,4], index: 1, kind: output, shape index: {}]
  // Predicated region
  $region2: #{tile.33} parent=0 // pred_check
    _
  $region3: #{tile.33} parent=0 // pred_check_branch
    %3 = sbr.rel (0) target = $region5
  $region4: #{tile.33} parent=0 // pred_region
    _
  $region5: #{tile.33} parent=0 // pred_fallthru
    _
  %v4 = vld [vmem:[%s0] ss:$0 sm:$0xff]
  %5 = vst [vmem:[%s1] sm:$0x3] %v4

// kernel: tile.34
$region0: #{tile.34}
  %s0 = inlined_call_operand.vmem [shape: f32[2,4], index: 0, kind: input, shape index: {}]
  %s1 = inlined_call_operand.vmem [shape: f32[1,8], index: 1, kind: output, shape index: {}]
  $region1: #{tile.34} parent=0
    #allocation0 [shape = 'u8[4096]{0}', space=vmem, size = 0x1000, scoped, tag = 'scoped mem for output reshape']
    #allocation1 [shape = 'u8[4096]{0}', space=vmem, size = 0x1000, scoped, tag = 'scoped mem for input reshape']
    %s3 = sshllo.u32 0, 2
    %v4 = vld [vmem:[%s0] sm:%s3]
    %5 = vst [vmem:[#allocation1] sm:%s3] %v4
    %v6 = vld [vmem:[#allocation1] sm:$0x1]
    %vm7 = vcmask 31744
    %8 = vst.msk [vmem:[#allocation0] sm:$0x1] %vm7, %v6
    %s9 = scalar_lea.vmem [#allocation1], 1
    %v10 = vld [vmem:[%s9] sm:$0x1]
    %11 = vrot.lane.b32.xlu0 %v10, 4
    %v12 = vpop.permute.xlu0 %11
    %vm13 = vcmask 64544
    %14 = vst.msk [vmem:[#allocation0] sm:$0x1] %vm13, %v12
    %s16 = sshllo.u32 0, 1
    %v18 = vld [vmem:[#allocation0] sm:%s16]
    %s19 = sshllo.u32 0, 1
    %20 = vst [vmem:[%s1] sm:%s19] %v18

// kernel: tile.38
$region0: #{tile.38}
  #allocation0 [shape = 's32[1]{0}', space=sflag, size = 0x4, scoped, tag = 'scoped memory for tile.38']
  %s0 = inlined_call_operand.vmem [shape: f32[8], index: 0, kind: input, shape index: {}]
  %s1 = inlined_call_operand.vmem [shape: f32[2,8], index: 1, kind: output, shape index: {}]
  // Predicated region
  $region2: #{tile.38} parent=0 // pred_check
    _
  $region3: #{tile.38} parent=0 // pred_check_branch
    %3 = sbr.rel (0) target = $region5
  $region4: #{tile.38} parent=0 // pred_region
    _
  $region5: #{tile.38} parent=0 // pred_fallthru
    _
  %v4 = vld [vmem:[%s0] ss:$0 sm:$0xff]
  %5 = vst [vmem:[%s1] sm:$0x3] %v4

// kernel: tile.39
$region0: #{tile.39}
  %s0 = inlined_call_operand.vmem [shape: f32[2,8], index: 0, kind: input, shape index: {}]
  %s1 = inlined_call_operand.vmem [shape: f32[1,16], index: 1, kind: output, shape index: {}]
  $region1: #{tile.39} parent=0
    #allocation0 [shape = 'u8[4096]{0}', space=vmem, size = 0x1000, scoped, tag = 'scoped mem for output reshape']
    #allocation1 [shape = 'u8[4096]{0}', space=vmem, size = 0x1000, scoped, tag = 'scoped mem for input reshape']
    %s3 = sshllo.u32 0, 2
    %v4 = vld [vmem:[%s0] sm:%s3]
    %5 = vst [vmem:[#allocation1] sm:%s3] %v4
    %v6 = vld [vmem:[#allocation1] sm:$0x1]
    %vm7 = vcmask 64512
    %8 = vst.msk [vmem:[#allocation0] sm:$0x1] %vm7, %v6
    %s9 = scalar_lea.vmem [#allocation1], 1
    %v10 = vld [vmem:[%s9] sm:$0x1]
    %11 = vrot.lane.b32.xlu0 %v10, 8
    %v12 = vpop.permute.xlu0 %11
    %vm13 = vcmask 130112
    %14 = vst.msk [vmem:[#allocation0] sm:$0x1] %vm13, %v12
    %s16 = sshllo.u32 0, 1
    %v18 = vld [vmem:[#allocation0] sm:%s16]
    %s19 = sshllo.u32 0, 1
    %20 = vst [vmem:[%s1] sm:%s19] %v18

// kernel: resnext_forward.1
$region0: #{resnext_forward.1}
  #allocation0 [shape = 'u32[]', space=smem, size = 0x4, offset = 0x4, fixed_abs, tag = 'smem constant byte address 0x4 - core index']
  #allocation1 [shape = 'u32[144,128]{1,0:T(1,128)}', space=vmem, size = 0x12000, scoped, tag = 'internal scratch']
  #allocation2 [shape = 'f32[20,20,64]{2,1,0:T(8,128)}', space=vmem, size = 0x3c000, scoped, tag = 'scratch operand']
  #allocation3 [shape = 'f32[256,1600]{1,0:T(8,128)}', space=vmem, size = 0x1a0000, scoped, tag = 'scratch operand']
  #allocation4 [shape = 'f32[18,32,8]{2,1,0:T(8,128)}', space=vmem, size = 0x48000, scoped, tag = 'scratch operand']
  %s0 = inlined_call_operand.vmem [shape: f32[1,256,8], index: 0, kind: input, shape index: {}]
  %s1 = inlined_call_operand.vmem [shape: f32[8,64], index: 1, kind: input, shape index: {}]
  %s2 = inlined_call_operand.vmem [shape: f32[1,64], index: 2, kind: input, shape index: {}]
  %s3 = inlined_call_operand.vmem [shape: f32[1600,64], index: 3, kind: input, shape index: {}]
  %s4 = inlined_call_operand.vmem [shape: f32[1,64], index: 4, kind: input, shape index: {}]
  %s5 = inlined_call_operand.vmem [shape: f32[64,8], index: 5, kind: input, shape index: {}]
  %s6 = inlined_call_operand.vmem [shape: f32[1,8], index: 6, kind: input, shape index: {}]
  %s7 = inlined_call_operand.vmem [shape: f32[8,16], index: 7, kind: input, shape index: {}]
  %s8 = inlined_call_operand.vmem [shape: f32[1,16], index: 8, kind: input, shape index: {}]
  %s9 = inlined_call_operand.vmem [shape: f32[1,216,16], index: 9, kind: output, shape index: {}]
  %s10 = sld [smem:[#allocation0]]
  $region46: #{resnext_forward.1} parent=0
    _
  %s12 = ssub.s32 1, %s10
  %s13 = scalar_select 0, %s12, %s10
  // Predicated region
  $region2: #{resnext_forward.1} parent=0 // pred_check
    _
  $region3: #{resnext_forward.1} parent=0 // pred_check_branch
    %15 = sbr.rel (0) target = $region5
  $region4: #{resnext_forward.1} parent=0 // pred_region
    _
  $region5: #{resnext_forward.1} parent=0 // pred_fallthru
    _
  // Predicated region
  $region6: #{resnext_forward.1} parent=0 // pred_check
    _
  $region7: #{resnext_forward.1} parent=0 // pred_check_branch
    %17 = sbr.rel (0) target = $region9
  $region8: #{resnext_forward.1} parent=0 // pred_region
    _
  $region9: #{resnext_forward.1} parent=0 // pred_fallthru
    _
  // Predicated region
  $region10: #{resnext_forward.1} parent=0 // pred_check
    _
  $region11: #{resnext_forward.1} parent=0 // pred_check_branch
    %19 = sbr.rel (0) target = $region13
  $region12: #{resnext_forward.1} parent=0 // pred_region
    _
  $region13: #{resnext_forward.1} parent=0 // pred_fallthru
    _
  // Predicated region
  $region14: #{resnext_forward.1} parent=0 // pred_check
    _
  $region15: #{resnext_forward.1} parent=0 // pred_check_branch
    %21 = sbr.rel (0) target = $region17
  $region16: #{resnext_forward.1} parent=0 // pred_region
    _
  $region17: #{resnext_forward.1} parent=0 // pred_fallthru
    _
  // Predicated region
  $region18: #{resnext_forward.1} parent=0 // pred_check
    _
  $region19: #{resnext_forward.1} parent=0 // pred_check_branch
    %23 = sbr.rel (0) target = $region21
  $region20: #{resnext_forward.1} parent=0 // pred_region
    _
  $region21: #{resnext_forward.1} parent=0 // pred_fallthru
    _
  // Predicated region
  $region22: #{resnext_forward.1} parent=0 // pred_check
    _
  $region23: #{resnext_forward.1} parent=0 // pred_check_branch
    %25 = sbr.rel (0) target = $region25
  $region24: #{resnext_forward.1} parent=0 // pred_region
    _
  $region25: #{resnext_forward.1} parent=0 // pred_fallthru
    _
  // Predicated region
  $region26: #{resnext_forward.1} parent=0 // pred_check
    _
  $region27: #{resnext_forward.1} parent=0 // pred_check_branch
    %27 = sbr.rel (0) target = $region29
  $region28: #{resnext_forward.1} parent=0 // pred_region
    _
  $region29: #{resnext_forward.1} parent=0 // pred_fallthru
    _
  // Predicated region
  $region30: #{resnext_forward.1} parent=0 // pred_check
    _
  $region31: #{resnext_forward.1} parent=0 // pred_check_branch
    %29 = sbr.rel (0) target = $region33
  $region32: #{resnext_forward.1} parent=0 // pred_region
    _
  $region33: #{resnext_forward.1} parent=0 // pred_fallthru
    _
  // Predicated region
  $region34: #{resnext_forward.1} parent=0 // pred_check
    _
  $region35: #{resnext_forward.1} parent=0 // pred_check_branch
    %31 = sbr.rel (0) target = $region37
  $region36: #{resnext_forward.1} parent=0 // pred_region
    _
  $region37: #{resnext_forward.1} parent=0 // pred_fallthru
    _
  %v32 = vld [vmem:[%s0] sm:$0xff]
  %v33 = vld [vmem:[%s0 + $0x8] sm:$0xff]
  %v34 = vld [vmem:[%s0 + $0x10] sm:$0xff]
  %v35 = vld [vmem:[%s0 + $0x18] sm:$0xff]
  %v36 = vld [vmem:[%s0 + $0x20] sm:$0xff]
  %v37 = vld [vmem:[%s0 + $0x28] sm:$0xff]
  %v38 = vld [vmem:[%s0 + $0x30] sm:$0xff]
  %v39 = vld [vmem:[%s0 + $0x38] sm:$0xff]
  %v40 = vld [vmem:[%s0 + $0x40] sm:$0xff]
  %v41 = vld [vmem:[%s0 + $0x48] sm:$0xff]
  %v42 = vld [vmem:[%s0 + $0x50] sm:$0xff]
  %v43 = vld [vmem:[%s0 + $0x58] sm:$0xff]
  %v44 = vld [vmem:[%s0 + $0x60] sm:$0xff]
  %v45 = vld [vmem:[%s0 + $0x68] sm:$0xff]
  %v46 = vld [vmem:[%s0 + $0x70] sm:$0xff]
  %v47 = vld [vmem:[%s0 + $0x78] sm:$0xff]
  %v48 = vld [vmem:[%s0 + $0x80] sm:$0xff]
  %v49 = vld [vmem:[%s0 + $0x88] sm:$0xff]
  %v50 = vld [vmem:[%s0 + $0x90] sm:$0xff]
  %v51 = vld [vmem:[%s0 + $0x98] sm:$0xff]
  %v52 = vld [vmem:[%s0 + $0xa0] sm:$0xff]
  %v53 = vld [vmem:[%s0 + $0xa8] sm:$0xff]
  %v54 = vld [vmem:[%s0 + $0xb0] sm:$0xff]
  %v55 = vld [vmem:[%s0 + $0xb8] sm:$0xff]
  %v56 = vld [vmem:[%s0 + $0xc0] sm:$0xff]
  %v57 = vld [vmem:[%s0 + $0xc8] sm:$0xff]
  %v58 = vld [vmem:[%s0 + $0xd0] sm:$0xff]
  %v59 = vld [vmem:[%s0 + $0xd8] sm:$0xff]
  %v60 = vld [vmem:[%s0 + $0xe0] sm:$0xff]
  %v61 = vld [vmem:[%s0 + $0xe8] sm:$0xff]
  %v62 = vld [vmem:[%s0 + $0xf0] sm:$0xff]
  %v63 = vld [vmem:[%s0 + $0xf8] sm:$0xff]
  %v64 = vld [vmem:[%s1] sm:$0xff]
  %v65 = vld [vmem:[%s2] sm:$0x1]
  %v67 = vlaneseq
  %v68 = vshrl.u32 %v67, 7
  %v69 = vsub.s32 0, %v68
  %v70 = vrot.slane %v65, %v69
  %vm72 = vcmask 64512
  %v74 = vsel %vm72, %v32, 0
  %v77 = vsel %vm72, %v33, 0
  %v80 = vsel %vm72, %v34, 0
  %v83 = vsel %vm72, %v35, 0
  %v86 = vsel %vm72, %v36, 0
  %v89 = vsel %vm72, %v37, 0
  %v92 = vsel %vm72, %v38, 0
  %v95 = vsel %vm72, %v39, 0
  %v98 = vsel %vm72, %v40, 0
  %v101 = vsel %vm72, %v41, 0
  %v104 = vsel %vm72, %v42, 0
  %v107 = vsel %vm72, %v43, 0
  %v110 = vsel %vm72, %v44, 0
  %v113 = vsel %vm72, %v45, 0
  %v116 = vsel %vm72, %v46, 0
  %v119 = vsel %vm72, %v47, 0
  %v122 = vsel %vm72, %v48, 0
  %v125 = vsel %vm72, %v49, 0
  %v128 = vsel %vm72, %v50, 0
  %v131 = vsel %vm72, %v51, 0
  %v134 = vsel %vm72, %v52, 0
  %v137 = vsel %vm72, %v53, 0
  %v140 = vsel %vm72, %v54, 0
  %v143 = vsel %vm72, %v55, 0
  %v146 = vsel %vm72, %v56, 0
  %v149 = vsel %vm72, %v57, 0
  %v152 = vsel %vm72, %v58, 0
  %v155 = vsel %vm72, %v59, 0
  %v158 = vsel %vm72, %v60, 0
  %v161 = vsel %vm72, %v61, 0
  %v164 = vsel %vm72, %v62, 0
  %v167 = vsel %vm72, %v63, 0
  %169 = vmatprep.subr.mxu0 0.0
  %170 = vmatpush1.msra.mxu0 %v64
  %171 = vmatprep.subr.mxu0 0.0
  %172 = vmatpush1.msra.mxu0 0.0
  %173 = vmatprep.subr.mxu0 0.0
  %174 = vmatpush1.msra.mxu0 0.0
  %175 = vmatprep.subr.mxu0 0.0
  %176 = vmatpush1.msra.mxu0 0.0
  %177 = vmatprep.subr.mxu0 0.0
  %178 = vmatpush1.msra.mxu0 0.0
  %179 = vmatprep.subr.mxu0 0.0
  %180 = vmatpush1.msra.mxu0 0.0
  %181 = vmatprep.subr.mxu0 0.0
  %182 = vmatpush1.msra.mxu0 0.0
  %183 = vmatprep.subr.mxu0 0.0
  %184 = vmatpush1.msra.mxu0 0.0
  %185 = vmatprep.subr.mxu0 0.0
  %186 = vmatpush1.msra.mxu0 0.0
  %187 = vmatprep.subr.mxu0 0.0
  %188 = vmatpush1.msra.mxu0 0.0
  %189 = vmatprep.subr.mxu0 0.0
  %190 = vmatpush1.msra.mxu0 0.0
  %191 = vmatprep.subr.mxu0 0.0
  %192 = vmatpush1.msra.mxu0 0.0
  %193 = vmatprep.subr.mxu0 0.0
  %194 = vmatpush1.msra.mxu0 0.0
  %195 = vmatprep.subr.mxu0 0.0
  %196 = vmatpush1.msra.mxu0 0.0
  %197 = vmatprep.subr.mxu0 0.0
  %198 = vmatpush1.msra.mxu0 0.0
  %199 = vmatprep.subr.mxu0 0.0
  %200 = vmatpush1.msra.mxu0 0.0
  %201 = vmatprep.subr.mxu0 0.0
  %202 = vmatpush1.msra.mxu0 0.0
  %203 = vmatprep.subr.mxu0 0.0
  %204 = vmatpush1.msra.mxu0 0.0
  %205 = vmatprep.subr.mxu0 0.0
  %206 = vmatpush1.msra.mxu0 0.0
  %207 = vmatprep.subr.mxu0 0.0
  %208 = vmatpush1.msra.mxu0 0.0
  %209 = vmatprep.subr.mxu0 0.0
  %210 = vmatpush1.msra.mxu0 0.0
  %211 = vmatprep.subr.mxu0 0.0
  %212 = vmatpush1.msra.mxu0 0.0
  %213 = vmatprep.subr.mxu0 0.0
  %214 = vmatpush1.msra.mxu0 0.0
  %215 = vmatprep.subr.mxu0 0.0
  %216 = vmatpush1.msra.mxu0 0.0
  %217 = vmatprep.subr.mxu0 0.0
  %218 = vmatpush1.msra.mxu0 0.0
  %219 = vmatprep.subr.mxu0 0.0
  %220 = vmatpush1.msra.mxu0 0.0
  %221 = vmatprep.subr.mxu0 0.0
  %222 = vmatpush1.msra.mxu0 0.0
  %223 = vmatprep.subr.mxu0 0.0
  %224 = vmatpush1.msra.mxu0 0.0
  %225 = vmatprep.subr.mxu0 0.0
  %226 = vmatpush1.msra.mxu0 0.0
  %227 = vmatprep.subr.mxu0 0.0
  %228 = vmatpush1.msra.mxu0 0.0
  %229 = vmatprep.subr.mxu0 0.0
  %230 = vmatpush1.msra.mxu0 0.0
  %231 = vmatprep.subr.mxu0 0.0
  %232 = vmatpush1.msra.mxu0 0.0
  %233 = vmatprep.mubr.f32.mxu0 0.0
  %234 = vmatmul.mubr.f32.gmra.mrb[0].mxu0 %v74
  %v235 = vpop.f32.mrb[0].mxu0
  %v236 = vadd.f32 %v70, %v235
  %v237 = vpop.f32.mrb[0].mxu0
  %238 = vmatprep.mubr.f32.mxu0 0.0
  %239 = vmatmul.mubr.f32.gmra.mrb[0].mxu0 %v77
  %v240 = vpop.f32.mrb[0].mxu0
  %v241 = vadd.f32 %v70, %v240
  %v242 = vpop.f32.mrb[0].mxu0
  %243 = vmatprep.mubr.f32.mxu0 0.0
  %244 = vmatmul.mubr.f32.gmra.mrb[0].mxu0 %v80
  %v245 = vpop.f32.mrb[0].mxu0
  %v246 = vadd.f32 %v70, %v245
  %v247 = vpop.f32.mrb[0].mxu0
  %248 = vmatprep.mubr.f32.mxu0 0.0
  %249 = vmatmul.mubr.f32.gmra.mrb[0].mxu0 %v83
  %v250 = vpop.f32.mrb[0].mxu0
  %v251 = vadd.f32 %v70, %v250
  %v252 = vpop.f32.mrb[0].mxu0
  %253 = vmatprep.mubr.f32.mxu0 0.0
  %254 = vmatmul.mubr.f32.gmra.mrb[0].mxu0 %v86
  %v255 = vpop.f32.mrb[0].mxu0
  %v256 = vadd.f32 %v70, %v255
  %v257 = vpop.f32.mrb[0].mxu0
  %258 = vmatprep.mubr.f32.mxu0 0.0
  %259 = vmatmul.mubr.f32.gmra.mrb[0].mxu0 %v89
  %v260 = vpop.f32.mrb[0].mxu0
  %v261 = vadd.f32 %v70, %v260
  %v262 = vpop.f32.mrb[0].mxu0
  %263 = vmatprep.mubr.f32.mxu0 0.0
  %264 = vmatmul.mubr.f32.gmra.mrb[0].mxu0 %v92
  %v265 = vpop.f32.mrb[0].mxu0
  %v266 = vadd.f32 %v70, %v265
  %v267 = vpop.f32.mrb[0].mxu0
  %268 = vmatprep.mubr.f32.mxu0 0.0
  %269 = vmatmul.mubr.f32.gmra.mrb[0].mxu0 %v95
  %v270 = vpop.f32.mrb[0].mxu0
  %v271 = vadd.f32 %v70, %v270
  %v272 = vpop.f32.mrb[0].mxu0
  %273 = vmatprep.mubr.f32.mxu0 0.0
  %274 = vmatmul.mubr.f32.gmra.mrb[0].mxu0 %v98
  %v275 = vpop.f32.mrb[0].mxu0
  %v276 = vadd.f32 %v70, %v275
  %v277 = vpop.f32.mrb[0].mxu0
  %278 = vmatprep.mubr.f32.mxu0 0.0
  %279 = vmatmul.mubr.f32.gmra.mrb[0].mxu0 %v101
  %v280 = vpop.f32.mrb[0].mxu0
  %v281 = vadd.f32 %v70, %v280
  %v282 = vpop.f32.mrb[0].mxu0
  %283 = vmatprep.mubr.f32.mxu0 0.0
  %284 = vmatmul.mubr.f32.gmra.mrb[0].mxu0 %v104
  %v285 = vpop.f32.mrb[0].mxu0
  %v286 = vadd.f32 %v70, %v285
  %v287 = vpop.f32.mrb[0].mxu0
  %288 = vmatprep.mubr.f32.mxu0 0.0
  %289 = vmatmul.mubr.f32.gmra.mrb[0].mxu0 %v107
  %v290 = vpop.f32.mrb[0].mxu0
  %v291 = vadd.f32 %v70, %v290
  %v292 = vpop.f32.mrb[0].mxu0
  %293 = vmatprep.mubr.f32.mxu0 0.0
  %294 = vmatmul.mubr.f32.gmra.mrb[0].mxu0 %v110
  %v295 = vpop.f32.mrb[0].mxu0
  %v296 = vadd.f32 %v70, %v295
  %v297 = vpop.f32.mrb[0].mxu0
  %298 = vmatprep.mubr.f32.mxu0 0.0
  %299 = vmatmul.mubr.f32.gmra.mrb[0].mxu0 %v113
  %v300 = vpop.f32.mrb[0].mxu0
  %v301 = vadd.f32 %v70, %v300
  %v302 = vpop.f32.mrb[0].mxu0
  %303 = vmatprep.mubr.f32.mxu0 0.0
  %304 = vmatmul.mubr.f32.gmra.mrb[0].mxu0 %v116
  %v305 = vpop.f32.mrb[0].mxu0
  %v306 = vadd.f32 %v70, %v305
  %v307 = vpop.f32.mrb[0].mxu0
  %308 = vmatprep.mubr.f32.mxu0 0.0
  %309 = vmatmul.mubr.f32.gmra.mrb[0].mxu0 %v119
  %v310 = vpop.f32.mrb[0].mxu0
  %v311 = vadd.f32 %v70, %v310
  %v312 = vpop.f32.mrb[0].mxu0
  %313 = vmatprep.mubr.f32.mxu0 0.0
  %314 = vmatmul.mubr.f32.gmra.mrb[0].mxu0 %v122
  %v315 = vpop.f32.mrb[0].mxu0
  %v316 = vadd.f32 %v70, %v315
  %v317 = vpop.f32.mrb[0].mxu0
  %318 = vmatprep.mubr.f32.mxu0 0.0
  %319 = vmatmul.mubr.f32.gmra.mrb[0].mxu0 %v125
  %v320 = vpop.f32.mrb[0].mxu0
  %v321 = vadd.f32 %v70, %v320
  %v322 = vpop.f32.mrb[0].mxu0
  %323 = vmatprep.mubr.f32.mxu0 0.0
  %324 = vmatmul.mubr.f32.gmra.mrb[0].mxu0 %v128
  %v325 = vpop.f32.mrb[0].mxu0
  %v326 = vadd.f32 %v70, %v325
  %v327 = vpop.f32.mrb[0].mxu0
  %328 = vmatprep.mubr.f32.mxu0 0.0
  %329 = vmatmul.mubr.f32.gmra.mrb[0].mxu0 %v131
  %v330 = vpop.f32.mrb[0].mxu0
  %v331 = vadd.f32 %v70, %v330
  %v332 = vpop.f32.mrb[0].mxu0
  %333 = vmatprep.mubr.f32.mxu0 0.0
  %334 = vmatmul.mubr.f32.gmra.mrb[0].mxu0 %v134
  %v335 = vpop.f32.mrb[0].mxu0
  %v336 = vadd.f32 %v70, %v335
  %v337 = vpop.f32.mrb[0].mxu0
  %338 = vmatprep.mubr.f32.mxu0 0.0
  %339 = vmatmul.mubr.f32.gmra.mrb[0].mxu0 %v137
  %v340 = vpop.f32.mrb[0].mxu0
  %v341 = vadd.f32 %v70, %v340
  %v342 = vpop.f32.mrb[0].mxu0
  %343 = vmatprep.mubr.f32.mxu0 0.0
  %344 = vmatmul.mubr.f32.gmra.mrb[0].mxu0 %v140
  %v345 = vpop.f32.mrb[0].mxu0
  %v346 = vadd.f32 %v70, %v345
  %v347 = vpop.f32.mrb[0].mxu0
  %348 = vmatprep.mubr.f32.mxu0 0.0
  %349 = vmatmul.mubr.f32.gmra.mrb[0].mxu0 %v143
  %v350 = vpop.f32.mrb[0].mxu0
  %v351 = vadd.f32 %v70, %v350
  %v352 = vpop.f32.mrb[0].mxu0
  %353 = vmatprep.mubr.f32.mxu0 0.0
  %354 = vmatmul.mubr.f32.gmra.mrb[0].mxu0 %v146
  %v355 = vpop.f32.mrb[0].mxu0
  %v356 = vadd.f32 %v70, %v355
  %v357 = vpop.f32.mrb[0].mxu0
  %358 = vmatprep.mubr.f32.mxu0 0.0
  %359 = vmatmul.mubr.f32.gmra.mrb[0].mxu0 %v149
  %v360 = vpop.f32.mrb[0].mxu0
  %v361 = vadd.f32 %v70, %v360
  %v362 = vpop.f32.mrb[0].mxu0
  %363 = vmatprep.mubr.f32.mxu0 0.0
  %364 = vmatmul.mubr.f32.gmra.mrb[0].mxu0 %v152
  %v365 = vpop.f32.mrb[0].mxu0
  %v366 = vadd.f32 %v70, %v365
  %v367 = vpop.f32.mrb[0].mxu0
  %368 = vmatprep.mubr.f32.mxu0 0.0
  %369 = vmatmul.mubr.f32.gmra.mrb[0].mxu0 %v155
  %v370 = vpop.f32.mrb[0].mxu0
  %v371 = vadd.f32 %v70, %v370
  %v372 = vpop.f32.mrb[0].mxu0
  %373 = vmatprep.mubr.f32.mxu0 0.0
  %374 = vmatmul.mubr.f32.gmra.mrb[0].mxu0 %v158
  %v375 = vpop.f32.mrb[0].mxu0
  %v376 = vadd.f32 %v70, %v375
  %v377 = vpop.f32.mrb[0].mxu0
  %378 = vmatprep.mubr.f32.mxu0 0.0
  %379 = vmatmul.mubr.f32.gmra.mrb[0].mxu0 %v161
  %v380 = vpop.f32.mrb[0].mxu0
  %v381 = vadd.f32 %v70, %v380
  %v382 = vpop.f32.mrb[0].mxu0
  %383 = vmatprep.mubr.f32.mxu0 0.0
  %384 = vmatmul.mubr.f32.gmra.mrb[0].mxu0 %v164
  %v385 = vpop.f32.mrb[0].mxu0
  %v386 = vadd.f32 %v70, %v385
  %v387 = vpop.f32.mrb[0].mxu0
  %388 = vmatprep.mubr.f32.mxu0 0.0
  %389 = vmatmul.mubr.f32.gmra.mrb[0].mxu0 %v167
  %v390 = vpop.f32.mrb[0].mxu0
  %v391 = vadd.f32 %v70, %v390
  %v392 = vpop.f32.mrb[0].mxu0
  %393 = vdwg.mxu0
  %v394 = vlaneseq
  %v395 = vshrl.u32 %v394, 7
  %v396 = vadd.s32 %v395, 8
  %v397 = vadd.s32 %v395, 16
  %vm398 = vcmp.ge.s32.totalorder %v395, 1
  %vm399 = vcmp.ge.s32.totalorder %v396, 1
  %vm400 = vcmp.ge.s32.totalorder %v397, 1
  %vm401 = vmand 0, %vm398
  %vm402 = vmand 0, %vm399
  %vm403 = vmand 0, %vm400
  %vm404 = vmand 1, %vm398
  %vm405 = vmand 1, %vm399
  %vm406 = vmand 1, %vm400
  %vm407 = vcmp.le.s32.totalorder %v395, 18
  %vm408 = vcmp.le.s32.totalorder %v396, 18
  %vm409 = vcmp.le.s32.totalorder %v397, 18
  %vm410 = vmand %vm401, %vm407
  %vm411 = vmand %vm402, %vm408
  %vm412 = vmand %vm403, %vm409
  %vm413 = vmand %vm404, %vm407
  %vm414 = vmand %vm405, %vm408
  %vm415 = vmand %vm406, %vm409
  %v416 = vsel %vm410, 1, 0
  %v417 = vsel %vm411, 1, 0
  %v418 = vsel %vm412, 1, 0
  %v419 = vsel %vm413, 1, 0
  %v420 = vsel %vm414, 1, 0
  %v421 = vsel %vm415, 1, 0
  %vm422 = vcmp.eq.s32.totalorder %v416, 1
  %vm423 = vcmp.eq.s32.totalorder %v417, 1
  %vm424 = vcmp.eq.s32.totalorder %v418, 1
  %vm425 = vcmp.eq.s32.totalorder %v419, 1
  %vm426 = vcmp.eq.s32.totalorder %v420, 1
  %vm427 = vcmp.eq.s32.totalorder %v421, 1
  %v428 = vsel %vm422, %v70, 0.0
  %v429 = vsel %vm423, %v70, 0.0
  %v430 = vsel %vm424, %v70, 0.0
  %v431 = vsel %vm425, %v70, 0.0
  %v432 = vsel %vm426, %v70, 0.0
  %v433 = vsel %vm427, %v70, 0.0
  %vm434 = vcmask 523264
  %435 = vst.msk [vmem:[#allocation2] sm:$0xff] %vm434, %v428
  %436 = vst.msk [vmem:[#allocation2 + $0x8] sm:$0xff] %vm434, %v429
  %vm437 = vcmask 519168
  %438 = vst.msk [vmem:[#allocation2 + $0x10] sm:$0xf] %vm437, %v430
  %439 = vst.msk [vmem:[#allocation2 + $0x18] sm:$0xff] %vm434, %v431
  %440 = vst.msk [vmem:[#allocation2 + $0x20] sm:$0xff] %vm434, %v432
  %441 = vst.msk [vmem:[#allocation2 + $0x28] sm:$0xf] %vm437, %v433
  %442 = vst.msk [vmem:[#allocation2 + $0x30] sm:$0xff] %vm434, %v431
  %443 = vst.msk [vmem:[#allocation2 + $0x38] sm:$0xff] %vm434, %v432
  %444 = vst.msk [vmem:[#allocation2 + $0x40] sm:$0xf] %vm437, %v433
  %445 = vst.msk [vmem:[#allocation2 + $0x48] sm:$0xff] %vm434, %v431
  %446 = vst.msk [vmem:[#allocation2 + $0x50] sm:$0xff] %vm434, %v432
  %447 = vst.msk [vmem:[#allocation2 + $0x58] sm:$0xf] %vm437, %v433
  %448 = vst.msk [vmem:[#allocation2 + $0x60] sm:$0xff] %vm434, %v431
  %449 = vst.msk [vmem:[#allocation2 + $0x68] sm:$0xff] %vm434, %v432
  %450 = vst.msk [vmem:[#allocation2 + $0x70] sm:$0xf] %vm437, %v433
  %451 = vst.msk [vmem:[#allocation2 + $0x78] sm:$0xff] %vm434, %v431
  %452 = vst.msk [vmem:[#allocation2 + $0x80] sm:$0xff] %vm434, %v432
  %453 = vst.msk [vmem:[#allocation2 + $0x88] sm:$0xf] %vm437, %v433
  %454 = vst.msk [vmem:[#allocation2 + $0x90] sm:$0xff] %vm434, %v431
  %455 = vst.msk [vmem:[#allocation2 + $0x98] sm:$0xff] %vm434, %v432
  %456 = vst.msk [vmem:[#allocation2 + $0xa0] sm:$0xf] %vm437, %v433
  %457 = vst.msk [vmem:[#allocation2 + $0xa8] sm:$0xff] %vm434, %v431
  %458 = vst.msk [vmem:[#allocation2 + $0xb0] sm:$0xff] %vm434, %v432
  %459 = vst.msk [vmem:[#allocation2 + $0xb8] sm:$0xf] %vm437, %v433
  %460 = vst.msk [vmem:[#allocation2 + $0xc0] sm:$0xff] %vm434, %v431
  %461 = vst.msk [vmem:[#allocation2 + $0xc8] sm:$0xff] %vm434, %v432
  %462 = vst.msk [vmem:[#allocation2 + $0xd0] sm:$0xf] %vm437, %v433
  %463 = vst.msk [vmem:[#allocation2 + $0xd8] sm:$0xff] %vm434, %v431
  %464 = vst.msk [vmem:[#allocation2 + $0xe0] sm:$0xff] %vm434, %v432
  %465 = vst.msk [vmem:[#allocation2 + $0xe8] sm:$0xf] %vm437, %v433
  %466 = vst.msk [vmem:[#allocation2 + $0xf0] sm:$0xff] %vm434, %v431
  %467 = vst.msk [vmem:[#allocation2 + $0xf8] sm:$0xff] %vm434, %v432
  %468 = vst.msk [vmem:[#allocation2 + $0x100] sm:$0xf] %vm437, %v433
  %469 = vst.msk [vmem:[#allocation2 + $0x108] sm:$0xff] %vm434, %v431
  %470 = vst.msk [vmem:[#allocation2 + $0x110] sm:$0xff] %vm434, %v432
  %471 = vst.msk [vmem:[#allocation2 + $0x118] sm:$0xf] %vm437, %v433
  %472 = vst.msk [vmem:[#allocation2 + $0x120] sm:$0xff] %vm434, %v431
  %473 = vst.msk [vmem:[#allocation2 + $0x128] sm:$0xff] %vm434, %v432
  %474 = vst.msk [vmem:[#allocation2 + $0x130] sm:$0xf] %vm437, %v433
  %475 = vst.msk [vmem:[#allocation2 + $0x138] sm:$0xff] %vm434, %v431
  %476 = vst.msk [vmem:[#allocation2 + $0x140] sm:$0xff] %vm434, %v432
  %477 = vst.msk [vmem:[#allocation2 + $0x148] sm:$0xf] %vm437, %v433
  %478 = vst.msk [vmem:[#allocation2 + $0x150] sm:$0xff] %vm434, %v431
  %479 = vst.msk [vmem:[#allocation2 + $0x158] sm:$0xff] %vm434, %v432
  %480 = vst.msk [vmem:[#allocation2 + $0x160] sm:$0xf] %vm437, %v433
  %481 = vst.msk [vmem:[#allocation2 + $0x168] sm:$0xff] %vm434, %v431
  %482 = vst.msk [vmem:[#allocation2 + $0x170] sm:$0xff] %vm434, %v432
  %483 = vst.msk [vmem:[#allocation2 + $0x178] sm:$0xf] %vm437, %v433
  %484 = vst.msk [vmem:[#allocation2 + $0x180] sm:$0xff] %vm434, %v431
  %485 = vst.msk [vmem:[#allocation2 + $0x188] sm:$0xff] %vm434, %v432
  %486 = vst.msk [vmem:[#allocation2 + $0x190] sm:$0xf] %vm437, %v433
  %487 = vst.msk [vmem:[#allocation2 + $0x198] sm:$0xff] %vm434, %v431
  %488 = vst.msk [vmem:[#allocation2 + $0x1a0] sm:$0xff] %vm434, %v432
  %489 = vst.msk [vmem:[#allocation2 + $0x1a8] sm:$0xf] %vm437, %v433
  %490 = vst.msk [vmem:[#allocation2 + $0x1b0] sm:$0xff] %vm434, %v431
  %491 = vst.msk [vmem:[#allocation2 + $0x1b8] sm:$0xff] %vm434, %v432
  %492 = vst.msk [vmem:[#allocation2 + $0x1c0] sm:$0xf] %vm437, %v433
  %493 = vst.msk [vmem:[#allocation2 + $0x1c8] sm:$0xff] %vm434, %v428
  %494 = vst.msk [vmem:[#allocation2 + $0x1d0] sm:$0xff] %vm434, %v429
  %495 = vst.msk [vmem:[#allocation2 + $0x1d8] sm:$0xf] %vm437, %v430
  %s496 = scalar_lea.vmem [#allocation2], 48
  %497 = vst.msk [vmem:[%s496 + $0x2] sm:$0xff] %vm434, %v236
  %498 = vst.msk [vmem:[%s496 + $0xa] sm:$0xff] %vm434, %v241
  %499 = vst.msk [vmem:[%s496 + $0x1a] sm:$0xff] %vm434, %v246
  %500 = vst.msk [vmem:[%s496 + $0x22] sm:$0xff] %vm434, %v251
  %501 = vst.msk [vmem:[%s496 + $0x32] sm:$0xff] %vm434, %v256
  %502 = vst.msk [vmem:[%s496 + $0x3a] sm:$0xff] %vm434, %v261
  %503 = vst.msk [vmem:[%s496 + $0x4a] sm:$0xff] %vm434, %v266
  %504 = vst.msk [vmem:[%s496 + $0x52] sm:$0xff] %vm434, %v271
  %505 = vst.msk [vmem:[%s496 + $0x62] sm:$0xff] %vm434, %v276
  %506 = vst.msk [vmem:[%s496 + $0x6a] sm:$0xff] %vm434, %v281
  %507 = vst.msk [vmem:[%s496 + $0x7a] sm:$0xff] %vm434, %v286
  %508 = vst.msk [vmem:[%s496 + $0x82] sm:$0xff] %vm434, %v291
  %509 = vst.msk [vmem:[%s496 + $0x92] sm:$0xff] %vm434, %v296
  %510 = vst.msk [vmem:[%s496 + $0x9a] sm:$0xff] %vm434, %v301
  %511 = vst.msk [vmem:[%s496 + $0xaa] sm:$0xff] %vm434, %v306
  %512 = vst.msk [vmem:[%s496 + $0xb2] sm:$0xff] %vm434, %v311
  %513 = vst.msk [vmem:[%s496 + $0xc2] sm:$0xff] %vm434, %v316
  %514 = vst.msk [vmem:[%s496 + $0xca] sm:$0xff] %vm434, %v321
  %515 = vst.msk [vmem:[%s496 + $0xda] sm:$0xff] %vm434, %v326
  %516 = vst.msk [vmem:[%s496 + $0xe2] sm:$0xff] %vm434, %v331
  %517 = vst.msk [vmem:[%s496 + $0xf2] sm:$0xff] %vm434, %v336
  %518 = vst.msk [vmem:[%s496 + $0xfa] sm:$0xff] %vm434, %v341
  %519 = vst.msk [vmem:[%s496 + $0x10a] sm:$0xff] %vm434, %v346
  %520 = vst.msk [vmem:[%s496 + $0x112] sm:$0xff] %vm434, %v351
  %521 = vst.msk [vmem:[%s496 + $0x122] sm:$0xff] %vm434, %v356
  %522 = vst.msk [vmem:[%s496 + $0x12a] sm:$0xff] %vm434, %v361
  %523 = vst.msk [vmem:[%s496 + $0x13a] sm:$0xff] %vm434, %v366
  %524 = vst.msk [vmem:[%s496 + $0x142] sm:$0xff] %vm434, %v371
  %525 = vst.msk [vmem:[%s496 + $0x152] sm:$0xff] %vm434, %v376
  %526 = vst.msk [vmem:[%s496 + $0x15a] sm:$0xff] %vm434, %v381
  %527 = vst.msk [vmem:[%s496 + $0x16a] sm:$0xff] %vm434, %v386
  %528 = vst.msk [vmem:[%s496 + $0x172] sm:$0xff] %vm434, %v391
  %v529 = vld [vmem:[#allocation2] sm:$0xff]
  %v530 = vld [vmem:[#allocation2 + $0x8] sm:$0xff]
  %v531 = vld [vmem:[#allocation2 + $0x18] sm:$0xff]
  %v532 = vld [vmem:[#allocation2 + $0x20] sm:$0xff]
  %v533 = vld [vmem:[#allocation2 + $0x30] sm:$0xff]
  %v534 = vld [vmem:[#allocation2 + $0x38] sm:$0xff]
  %v535 = vld [vmem:[#allocation2 + $0x48] sm:$0xff]
  %v536 = vld [vmem:[#allocation2 + $0x50] sm:$0xff]
  %v537 = vld [vmem:[#allocation2 + $0x60] sm:$0xff]
  %v538 = vld [vmem:[#allocation2 + $0x68] sm:$0xff]
  %v539 = vld [vmem:[#allocation2 + $0x78] sm:$0xff]
  %v540 = vld [vmem:[#allocation2 + $0x80] sm:$0xff]
  %v541 = vld [vmem:[#allocation2 + $0x90] sm:$0xff]
  %v542 = vld [vmem:[#allocation2 + $0x98] sm:$0xff]
  %v543 = vld [vmem:[#allocation2 + $0xa8] sm:$0xff]
  %v544 = vld [vmem:[#allocation2 + $0xb0] sm:$0xff]
  %v545 = vld [vmem:[#allocation2 + $0xc0] sm:$0xff]
  %v546 = vld [vmem:[#allocation2 + $0xc8] sm:$0xff]
  %v547 = vld [vmem:[#allocation2 + $0xd8] sm:$0xff]
  %v548 = vld [vmem:[#allocation2 + $0xe0] sm:$0xff]
  %v549 = vld [vmem:[#allocation2 + $0xf0] sm:$0xff]
  %v550 = vld [vmem:[#allocation2 + $0xf8] sm:$0xff]
  %v551 = vld [vmem:[#allocation2 + $0x108] sm:$0xff]
  %v552 = vld [vmem:[#allocation2 + $0x110] sm:$0xff]
  %v553 = vld [vmem:[#allocation2 + $0x120] sm:$0xff]
  %v554 = vld [vmem:[#allocation2 + $0x128] sm:$0xff]
  %v555 = vld [vmem:[#allocation2 + $0x138] sm:$0xff]
  %v556 = vld [vmem:[#allocation2 + $0x140] sm:$0xff]
  %v557 = vld [vmem:[#allocation2 + $0x150] sm:$0xff]
  %v558 = vld [vmem:[#allocation2 + $0x158] sm:$0xff]
  %v559 = vld [vmem:[#allocation2 + $0x168] sm:$0xff]
  %v560 = vld [vmem:[#allocation2 + $0x170] sm:$0xff]
  %v561 = vld [vmem:[#allocation2 + $0x180] sm:$0xff]
  %v562 = vld [vmem:[#allocation2 + $0x188] sm:$0xff]
  %v563 = vld [vmem:[#allocation2 + $0x198] sm:$0xff]
  %v564 = vld [vmem:[#allocation2 + $0x1a0] sm:$0xff]
  %v565 = vld [vmem:[#allocation2 + $0x1b0] sm:$0xff]
  %v566 = vld [vmem:[#allocation2 + $0x1b8] sm:$0xff]
  %v567 = vld [vmem:[#allocation2 + $0x1c8] sm:$0xff]
  %v568 = vld [vmem:[#allocation2 + $0x1d0] sm:$0xff]
  %569 = vst.msk [vmem:[#allocation3] sm:$0xff] %vm434, %v529
  %570 = vst.msk [vmem:[#allocation3 + $0x68] sm:$0xff] %vm434, %v530
  %571 = vst.msk [vmem:[#allocation3 + $0xd0] sm:$0xff] %vm434, %v531
  %572 = vst.msk [vmem:[#allocation3 + $0x138] sm:$0xff] %vm434, %v532
  %573 = vst.msk [vmem:[#allocation3 + $0x1a0] sm:$0xff] %vm434, %v533
  %574 = vst.msk [vmem:[#allocation3 + $0x208] sm:$0xff] %vm434, %v534
  %575 = vst.msk [vmem:[#allocation3 + $0x270] sm:$0xff] %vm434, %v535
  %576 = vst.msk [vmem:[#allocation3 + $0x2d8] sm:$0xff] %vm434, %v536
  %577 = vst.msk [vmem:[#allocation3 + $0x340] sm:$0xff] %vm434, %v537
  %578 = vst.msk [vmem:[#allocation3 + $0x3a8] sm:$0xff] %vm434, %v538
  %579 = vst.msk [vmem:[#allocation3 + $0x410] sm:$0xff] %vm434, %v539
  %580 = vst.msk [vmem:[#allocation3 + $0x478] sm:$0xff] %vm434, %v540
  %581 = vst.msk [vmem:[#allocation3 + $0x4e0] sm:$0xff] %vm434, %v541
  %582 = vst.msk [vmem:[#allocation3 + $0x548] sm:$0xff] %vm434, %v542
  %583 = vst.msk [vmem:[#allocation3 + $0x5b0] sm:$0xff] %vm434, %v543
  %584 = vst.msk [vmem:[#allocation3 + $0x618] sm:$0xff] %vm434, %v544
  %585 = vst.msk [vmem:[#allocation3 + $0x680] sm:$0xff] %vm434, %v545
  %586 = vst.msk [vmem:[#allocation3 + $0x6e8] sm:$0xff] %vm434, %v546
  %587 = vst.msk [vmem:[#allocation3 + $0x750] sm:$0xff] %vm434, %v547
  %588 = vst.msk [vmem:[#allocation3 + $0x7b8] sm:$0xff] %vm434, %v548
  %589 = vst.msk [vmem:[#allocation3 + $0x820] sm:$0xff] %vm434, %v549
  %590 = vst.msk [vmem:[#allocation3 + $0x888] sm:$0xff] %vm434, %v550
  %591 = vst.msk [vmem:[#allocation3 + $0x8f0] sm:$0xff] %vm434, %v551
  %592 = vst.msk [vmem:[#allocation3 + $0x958] sm:$0xff] %vm434, %v552
  %593 = vst.msk [vmem:[#allocation3 + $0x9c0] sm:$0xff] %vm434, %v553
  %594 = vst.msk [vmem:[#allocation3 + $0xa28] sm:$0xff] %vm434, %v554
  %595 = vst.msk [vmem:[#allocation3 + $0xa90] sm:$0xff] %vm434, %v555
  %596 = vst.msk [vmem:[#allocation3 + $0xaf8] sm:$0xff] %vm434, %v556
  %597 = vst.msk [vmem:[#allocation3 + $0xb60] sm:$0xff] %vm434, %v557
  %598 = vst.msk [vmem:[#allocation3 + $0xbc8] sm:$0xff] %vm434, %v558
  %599 = vst.msk [vmem:[#allocation3 + $0xc30] sm:$0xff] %vm434, %v559
  %600 = vst.msk [vmem:[#allocation3 + $0xc98] sm:$0xff] %vm434, %v560
  %633 = vrot.lane.b32.xlu0 %v531, 64
  %v634 = vpop.permute.xlu0 %633
  %635 = vrot.lane.b32.xlu0 %v532, 64
  %v636 = vpop.permute.xlu0 %635
  %637 = vrot.lane.b32.xlu0 %v533, 64
  %v638 = vpop.permute.xlu0 %637
  %639 = vrot.lane.b32.xlu0 %v534, 64
  %v640 = vpop.permute.xlu0 %639
  %641 = vrot.lane.b32.xlu0 %v535, 64
  %v642 = vpop.permute.xlu0 %641
  %643 = vrot.lane.b32.xlu0 %v536, 64
  %v644 = vpop.permute.xlu0 %643
  %645 = vrot.lane.b32.xlu0 %v537, 64
  %v646 = vpop.permute.xlu0 %645
  %647 = vrot.lane.b32.xlu0 %v538, 64
  %v648 = vpop.permute.xlu0 %647
  %649 = vrot.lane.b32.xlu0 %v539, 64
  %v650 = vpop.permute.xlu0 %649
  %651 = vrot.lane.b32.xlu0 %v540, 64
  %v652 = vpop.permute.xlu0 %651
  %653 = vrot.lane.b32.xlu0 %v541, 64
  %v654 = vpop.permute.xlu0 %653
  %655 = vrot.lane.b32.xlu0 %v542, 64
  %v656 = vpop.permute.xlu0 %655
  %657 = vrot.lane.b32.xlu0 %v543, 64
  %v658 = vpop.permute.xlu0 %657
  %659 = vrot.lane.b32.xlu0 %v544, 64
  %v660 = vpop.permute.xlu0 %659
  %661 = vrot.lane.b32.xlu0 %v545, 64
  %v662 = vpop.permute.xlu0 %661
  %663 = vrot.lane.b32.xlu0 %v546, 64
  %v664 = vpop.permute.xlu0 %663
  %665 = vrot.lane.b32.xlu0 %v547, 64
  %v666 = vpop.permute.xlu0 %665
  %667 = vrot.lane.b32.xlu0 %v548, 64
  %v668 = vpop.permute.xlu0 %667
  %669 = vrot.lane.b32.xlu0 %v549, 64
  %v670 = vpop.permute.xlu0 %669
  %671 = vrot.lane.b32.xlu0 %v550, 64
  %v672 = vpop.permute.xlu0 %671
  %673 = vrot.lane.b32.xlu0 %v551, 64
  %v674 = vpop.permute.xlu0 %673
  %675 = vrot.lane.b32.xlu0 %v552, 64
  %v676 = vpop.permute.xlu0 %675
  %677 = vrot.lane.b32.xlu0 %v553, 64
  %v678 = vpop.permute.xlu0 %677
  %679 = vrot.lane.b32.xlu0 %v554, 64
  %v680 = vpop.permute.xlu0 %679
  %681 = vrot.lane.b32.xlu0 %v555, 64
  %v682 = vpop.permute.xlu0 %681
  %683 = vrot.lane.b32.xlu0 %v556, 64
  %v684 = vpop.permute.xlu0 %683
  %685 = vrot.lane.b32.xlu0 %v557, 64
  %v686 = vpop.permute.xlu0 %685
  %687 = vrot.lane.b32.xlu0 %v558, 64
  %v688 = vpop.permute.xlu0 %687
  %689 = vrot.lane.b32.xlu0 %v559, 64
  %v690 = vpop.permute.xlu0 %689
  %691 = vrot.lane.b32.xlu0 %v560, 64
  %v692 = vpop.permute.xlu0 %691
  %693 = vrot.lane.b32.xlu0 %v561, 64
  %v694 = vpop.permute.xlu0 %693
  %695 = vrot.lane.b32.xlu0 %v562, 64
  %v696 = vpop.permute.xlu0 %695
  %vm729 = vcmask 1048064
  %730 = vst.msk [vmem:[#allocation3 + $0x10] sm:$0xff] %vm729, %v634
  %731 = vst.msk [vmem:[#allocation3 + $0x78] sm:$0xff] %vm729, %v636
  %732 = vst.msk [vmem:[#allocation3 + $0xe0] sm:$0xff] %vm729, %v638
  %733 = vst.msk [vmem:[#allocation3 + $0x148] sm:$0xff] %vm729, %v640
  %734 = vst.msk [vmem:[#allocation3 + $0x1b0] sm:$0xff] %vm729, %v642
  %735 = vst.msk [vmem:[#allocation3 + $0x218] sm:$0xff] %vm729, %v644
  %736 = vst.msk [vmem:[#allocation3 + $0x280] sm:$0xff] %vm729, %v646
  %737 = vst.msk [vmem:[#allocation3 + $0x2e8] sm:$0xff] %vm729, %v648
  %738 = vst.msk [vmem:[#allocation3 + $0x350] sm:$0xff] %vm729, %v650
  %739 = vst.msk [vmem:[#allocation3 + $0x3b8] sm:$0xff] %vm729, %v652
  %740 = vst.msk [vmem:[#allocation3 + $0x420] sm:$0xff] %vm729, %v654
  %741 = vst.msk [vmem:[#allocation3 + $0x488] sm:$0xff] %vm729, %v656
  %742 = vst.msk [vmem:[#allocation3 + $0x4f0] sm:$0xff] %vm729, %v658
  %743 = vst.msk [vmem:[#allocation3 + $0x558] sm:$0xff] %vm729, %v660
  %744 = vst.msk [vmem:[#allocation3 + $0x5c0] sm:$0xff] %vm729, %v662
  %745 = vst.msk [vmem:[#allocation3 + $0x628] sm:$0xff] %vm729, %v664
  %746 = vst.msk [vmem:[#allocation3 + $0x690] sm:$0xff] %vm729, %v666
  %747 = vst.msk [vmem:[#allocation3 + $0x6f8] sm:$0xff] %vm729, %v668
  %748 = vst.msk [vmem:[#allocation3 + $0x760] sm:$0xff] %vm729, %v670
  %749 = vst.msk [vmem:[#allocation3 + $0x7c8] sm:$0xff] %vm729, %v672
  %750 = vst.msk [vmem:[#allocation3 + $0x830] sm:$0xff] %vm729, %v674
  %751 = vst.msk [vmem:[#allocation3 + $0x898] sm:$0xff] %vm729, %v676
  %752 = vst.msk [vmem:[#allocation3 + $0x900] sm:$0xff] %vm729, %v678
  %753 = vst.msk [vmem:[#allocation3 + $0x968] sm:$0xff] %vm729, %v680
  %754 = vst.msk [vmem:[#allocation3 + $0x9d0] sm:$0xff] %vm729, %v682
  %755 = vst.msk [vmem:[#allocation3 + $0xa38] sm:$0xff] %vm729, %v684
  %756 = vst.msk [vmem:[#allocation3 + $0xaa0] sm:$0xff] %vm729, %v686
  %757 = vst.msk [vmem:[#allocation3 + $0xb08] sm:$0xff] %vm729, %v688
  %758 = vst.msk [vmem:[#allocation3 + $0xb70] sm:$0xff] %vm729, %v690
  %759 = vst.msk [vmem:[#allocation3 + $0xbd8] sm:$0xff] %vm729, %v692
  %760 = vst.msk [vmem:[#allocation3 + $0xc40] sm:$0xff] %vm729, %v694
  %761 = vst.msk [vmem:[#allocation3 + $0xca8] sm:$0xff] %vm729, %v696
  %762 = vst.msk [vmem:[#allocation3 + $0x28] sm:$0xff] %vm434, %v533
  %763 = vst.msk [vmem:[#allocation3 + $0x90] sm:$0xff] %vm434, %v534
  %764 = vst.msk [vmem:[#allocation3 + $0xf8] sm:$0xff] %vm434, %v535
  %765 = vst.msk [vmem:[#allocation3 + $0x160] sm:$0xff] %vm434, %v536
  %766 = vst.msk [vmem:[#allocation3 + $0x1c8] sm:$0xff] %vm434, %v537
  %767 = vst.msk [vmem:[#allocation3 + $0x230] sm:$0xff] %vm434, %v538
  %768 = vst.msk [vmem:[#allocation3 + $0x298] sm:$0xff] %vm434, %v539
  %769 = vst.msk [vmem:[#allocation3 + $0x300] sm:$0xff] %vm434, %v540
  %770 = vst.msk [vmem:[#allocation3 + $0x368] sm:$0xff] %vm434, %v541
  %771 = vst.msk [vmem:[#allocation3 + $0x3d0] sm:$0xff] %vm434, %v542
  %772 = vst.msk [vmem:[#allocation3 + $0x438] sm:$0xff] %vm434, %v543
  %773 = vst.msk [vmem:[#allocation3 + $0x4a0] sm:$0xff] %vm434, %v544
  %774 = vst.msk [vmem:[#allocation3 + $0x508] sm:$0xff] %vm434, %v545
  %775 = vst.msk [vmem:[#allocation3 + $0x570] sm:$0xff] %vm434, %v546
  %776 = vst.msk [vmem:[#allocation3 + $0x5d8] sm:$0xff] %vm434, %v547
  %777 = vst.msk [vmem:[#allocation3 + $0x640] sm:$0xff] %vm434, %v548
  %778 = vst.msk [vmem:[#allocation3 + $0x6a8] sm:$0xff] %vm434, %v549
  %779 = vst.msk [vmem:[#allocation3 + $0x710] sm:$0xff] %vm434, %v550
  %780 = vst.msk [vmem:[#allocation3 + $0x778] sm:$0xff] %vm434, %v551
  %781 = vst.msk [vmem:[#allocation3 + $0x7e0] sm:$0xff] %vm434, %v552
  %782 = vst.msk [vmem:[#allocation3 + $0x848] sm:$0xff] %vm434, %v553
  %783 = vst.msk [vmem:[#allocation3 + $0x8b0] sm:$0xff] %vm434, %v554
  %784 = vst.msk [vmem:[#allocation3 + $0x918] sm:$0xff] %vm434, %v555
  %785 = vst.msk [vmem:[#allocation3 + $0x980] sm:$0xff] %vm434, %v556
  %786 = vst.msk [vmem:[#allocation3 + $0x9e8] sm:$0xff] %vm434, %v557
  %787 = vst.msk [vmem:[#allocation3 + $0xa50] sm:$0xff] %vm434, %v558
  %788 = vst.msk [vmem:[#allocation3 + $0xab8] sm:$0xff] %vm434, %v559
  %789 = vst.msk [vmem:[#allocation3 + $0xb20] sm:$0xff] %vm434, %v560
  %790 = vst.msk [vmem:[#allocation3 + $0xb88] sm:$0xff] %vm434, %v561
  %791 = vst.msk [vmem:[#allocation3 + $0xbf0] sm:$0xff] %vm434, %v562
  %792 = vst.msk [vmem:[#allocation3 + $0xc58] sm:$0xff] %vm434, %v563
  %793 = vst.msk [vmem:[#allocation3 + $0xcc0] sm:$0xff] %vm434, %v564
  %798 = vrot.lane.b32.xlu0 %v563, 64
  %v799 = vpop.permute.xlu0 %798
  %800 = vrot.lane.b32.xlu0 %v564, 64
  %v801 = vpop.permute.xlu0 %800
  %802 = vrot.lane.b32.xlu0 %v565, 64
  %v803 = vpop.permute.xlu0 %802
  %804 = vrot.lane.b32.xlu0 %v566, 64
  %v805 = vpop.permute.xlu0 %804
  %810 = vst.msk [vmem:[#allocation3 + $0x38] sm:$0xff] %vm729, %v642
  %811 = vst.msk [vmem:[#allocation3 + $0xa0] sm:$0xff] %vm729, %v644
  %812 = vst.msk [vmem:[#allocation3 + $0x108] sm:$0xff] %vm729, %v646
  %813 = vst.msk [vmem:[#allocation3 + $0x170] sm:$0xff] %vm729, %v648
  %814 = vst.msk [vmem:[#allocation3 + $0x1d8] sm:$0xff] %vm729, %v650
  %815 = vst.msk [vmem:[#allocation3 + $0x240] sm:$0xff] %vm729, %v652
  %816 = vst.msk [vmem:[#allocation3 + $0x2a8] sm:$0xff] %vm729, %v654
  %817 = vst.msk [vmem:[#allocation3 + $0x310] sm:$0xff] %vm729, %v656
  %818 = vst.msk [vmem:[#allocation3 + $0x378] sm:$0xff] %vm729, %v658
  %819 = vst.msk [vmem:[#allocation3 + $0x3e0] sm:$0xff] %vm729, %v660
  %820 = vst.msk [vmem:[#allocation3 + $0x448] sm:$0xff] %vm729, %v662
  %821 = vst.msk [vmem:[#allocation3 + $0x4b0] sm:$0xff] %vm729, %v664
  %822 = vst.msk [vmem:[#allocation3 + $0x518] sm:$0xff] %vm729, %v666
  %823 = vst.msk [vmem:[#allocation3 + $0x580] sm:$0xff] %vm729, %v668
  %824 = vst.msk [vmem:[#allocation3 + $0x5e8] sm:$0xff] %vm729, %v670
  %825 = vst.msk [vmem:[#allocation3 + $0x650] sm:$0xff] %vm729, %v672
  %826 = vst.msk [vmem:[#allocation3 + $0x6b8] sm:$0xff] %vm729, %v674
  %827 = vst.msk [vmem:[#allocation3 + $0x720] sm:$0xff] %vm729, %v676
  %828 = vst.msk [vmem:[#allocation3 + $0x788] sm:$0xff] %vm729, %v678
  %829 = vst.msk [vmem:[#allocation3 + $0x7f0] sm:$0xff] %vm729, %v680
  %830 = vst.msk [vmem:[#allocation3 + $0x858] sm:$0xff] %vm729, %v682
  %831 = vst.msk [vmem:[#allocation3 + $0x8c0] sm:$0xff] %vm729, %v684
  %832 = vst.msk [vmem:[#allocation3 + $0x928] sm:$0xff] %vm729, %v686
  %833 = vst.msk [vmem:[#allocation3 + $0x990] sm:$0xff] %vm729, %v688
  %834 = vst.msk [vmem:[#allocation3 + $0x9f8] sm:$0xff] %vm729, %v690
  %835 = vst.msk [vmem:[#allocation3 + $0xa60] sm:$0xff] %vm729, %v692
  %836 = vst.msk [vmem:[#allocation3 + $0xac8] sm:$0xff] %vm729, %v694
  %837 = vst.msk [vmem:[#allocation3 + $0xb30] sm:$0xff] %vm729, %v696
  %838 = vst.msk [vmem:[#allocation3 + $0xb98] sm:$0xff] %vm729, %v799
  %839 = vst.msk [vmem:[#allocation3 + $0xc00] sm:$0xff] %vm729, %v801
  %840 = vst.msk [vmem:[#allocation3 + $0xc68] sm:$0xff] %vm729, %v803
  %841 = vst.msk [vmem:[#allocation3 + $0xcd0] sm:$0xff] %vm729, %v805
  %842 = vst.msk [vmem:[#allocation3 + $0x50] sm:$0xff] %vm434, %v537
  %843 = vst.msk [vmem:[#allocation3 + $0xb8] sm:$0xff] %vm434, %v538
  %844 = vst.msk [vmem:[#allocation3 + $0x120] sm:$0xff] %vm434, %v539
  %845 = vst.msk [vmem:[#allocation3 + $0x188] sm:$0xff] %vm434, %v540
  %846 = vst.msk [vmem:[#allocation3 + $0x1f0] sm:$0xff] %vm434, %v541
  %847 = vst.msk [vmem:[#allocation3 + $0x258] sm:$0xff] %vm434, %v542
  %848 = vst.msk [vmem:[#allocation3 + $0x2c0] sm:$0xff] %vm434, %v543
  %849 = vst.msk [vmem:[#allocation3 + $0x328] sm:$0xff] %vm434, %v544
  %850 = vst.msk [vmem:[#allocation3 + $0x390] sm:$0xff] %vm434, %v545
  %851 = vst.msk [vmem:[#allocation3 + $0x3f8] sm:$0xff] %vm434, %v546
  %852 = vst.msk [vmem:[#allocation3 + $0x460] sm:$0xff] %vm434, %v547
  %853 = vst.msk [vmem:[#allocation3 + $0x4c8] sm:$0xff] %vm434, %v548
  %854 = vst.msk [vmem:[#allocation3 + $0x530] sm:$0xff] %vm434, %v549
  %855 = vst.msk [vmem:[#allocation3 + $0x598] sm:$0xff] %vm434, %v550
  %856 = vst.msk [vmem:[#allocation3 + $0x600] sm:$0xff] %vm434, %v551
  %857 = vst.msk [vmem:[#allocation3 + $0x668] sm:$0xff] %vm434, %v552
  %858 = vst.msk [vmem:[#allocation3 + $0x6d0] sm:$0xff] %vm434, %v553
  %859 = vst.msk [vmem:[#allocation3 + $0x738] sm:$0xff] %vm434, %v554
  %860 = vst.msk [vmem:[#allocation3 + $0x7a0] sm:$0xff] %vm434, %v555
  %861 = vst.msk [vmem:[#allocation3 + $0x808] sm:$0xff] %vm434, %v556
  %862 = vst.msk [vmem:[#allocation3 + $0x870] sm:$0xff] %vm434, %v557
  %863 = vst.msk [vmem:[#allocation3 + $0x8d8] sm:$0xff] %vm434, %v558
  %864 = vst.msk [vmem:[#allocation3 + $0x940] sm:$0xff] %vm434, %v559
  %865 = vst.msk [vmem:[#allocation3 + $0x9a8] sm:$0xff] %vm434, %v560
  %866 = vst.msk [vmem:[#allocation3 + $0xa10] sm:$0xff] %vm434, %v561
  %867 = vst.msk [vmem:[#allocation3 + $0xa78] sm:$0xff] %vm434, %v562
  %868 = vst.msk [vmem:[#allocation3 + $0xae0] sm:$0xff] %vm434, %v563
  %869 = vst.msk [vmem:[#allocation3 + $0xb48] sm:$0xff] %vm434, %v564
  %870 = vst.msk [vmem:[#allocation3 + $0xbb0] sm:$0xff] %vm434, %v565
  %871 = vst.msk [vmem:[#allocation3 + $0xc18] sm:$0xff] %vm434, %v566
  %872 = vst.msk [vmem:[#allocation3 + $0xc80] sm:$0xff] %vm434, %v567
  %873 = vst.msk [vmem:[#allocation3 + $0xce8] sm:$0xff] %vm434, %v568
  %v874 = vld [vmem:[#allocation2 + $0x1] sm:$0xff]
  %v875 = vld [vmem:[#allocation2 + $0x9] sm:$0xff]
  %v876 = vld [vmem:[#allocation2 + $0x19] sm:$0xff]
  %v877 = vld [vmem:[#allocation2 + $0x21] sm:$0xff]
  %v878 = vld [vmem:[#allocation2 + $0x31] sm:$0xff]
  %v879 = vld [vmem:[#allocation2 + $0x39] sm:$0xff]
  %v880 = vld [vmem:[#allocation2 + $0x49] sm:$0xff]
  %v881 = vld [vmem:[#allocation2 + $0x51] sm:$0xff]
  %v882 = vld [vmem:[#allocation2 + $0x61] sm:$0xff]
  %v883 = vld [vmem:[#allocation2 + $0x69] sm:$0xff]
  %v884 = vld [vmem:[#allocation2 + $0x79] sm:$0xff]
  %v885 = vld [vmem:[#allocation2 + $0x81] sm:$0xff]
  %v886 = vld [vmem:[#allocation2 + $0x91] sm:$0xff]
  %v887 = vld [vmem:[#allocation2 + $0x99] sm:$0xff]
  %v888 = vld [vmem:[#allocation2 + $0xa9] sm:$0xff]
  %v889 = vld [vmem:[#allocation2 + $0xb1] sm:$0xff]
  %v890 = vld [vmem:[#allocation2 + $0xc1] sm:$0xff]
  %v891 = vld [vmem:[#allocation2 + $0xc9] sm:$0xff]
  %v892 = vld [vmem:[#allocation2 + $0xd9] sm:$0xff]
  %v893 = vld [vmem:[#allocation2 + $0xe1] sm:$0xff]
  %v894 = vld [vmem:[#allocation2 + $0xf1] sm:$0xff]
  %v895 = vld [vmem:[#allocation2 + $0xf9] sm:$0xff]
  %v896 = vld [vmem:[#allocation2 + $0x109] sm:$0xff]
  %v897 = vld [vmem:[#allocation2 + $0x111] sm:$0xff]
  %v898 = vld [vmem:[#allocation2 + $0x121] sm:$0xff]
  %v899 = vld [vmem:[#allocation2 + $0x129] sm:$0xff]
  %v900 = vld [vmem:[#allocation2 + $0x139] sm:$0xff]
  %v901 = vld [vmem:[#allocation2 + $0x141] sm:$0xff]
  %v902 = vld [vmem:[#allocation2 + $0x151] sm:$0xff]
  %v903 = vld [vmem:[#allocation2 + $0x159] sm:$0xff]
  %v904 = vld [vmem:[#allocation2 + $0x169] sm:$0xff]
  %v905 = vld [vmem:[#allocation2 + $0x171] sm:$0xff]
  %v906 = vld [vmem:[#allocation2 + $0x181] sm:$0xff]
  %v907 = vld [vmem:[#allocation2 + $0x189] sm:$0xff]
  %v908 = vld [vmem:[#allocation2 + $0x199] sm:$0xff]
  %v909 = vld [vmem:[#allocation2 + $0x1a1] sm:$0xff]
  %v910 = vld [vmem:[#allocation2 + $0x1b1] sm:$0xff]
  %v911 = vld [vmem:[#allocation2 + $0x1b9] sm:$0xff]
  %v912 = vld [vmem:[#allocation2 + $0x1c9] sm:$0xff]
  %v913 = vld [vmem:[#allocation2 + $0x1d1] sm:$0xff]
  %946 = vrot.lane.b32.xlu0 %v874, 64
  %v947 = vpop.permute.xlu0 %946
  %948 = vrot.lane.b32.xlu0 %v875, 64
  %v949 = vpop.permute.xlu0 %948
  %950 = vrot.lane.b32.xlu0 %v876, 64
  %v951 = vpop.permute.xlu0 %950
  %952 = vrot.lane.b32.xlu0 %v877, 64
  %v953 = vpop.permute.xlu0 %952
  %954 = vrot.lane.b32.xlu0 %v878, 64
  %v955 = vpop.permute.xlu0 %954
  %956 = vrot.lane.b32.xlu0 %v879, 64
  %v957 = vpop.permute.xlu0 %956
  %958 = vrot.lane.b32.xlu0 %v880, 64
  %v959 = vpop.permute.xlu0 %958
  %960 = vrot.lane.b32.xlu0 %v881, 64
  %v961 = vpop.permute.xlu0 %960
  %962 = vrot.lane.b32.xlu0 %v882, 64
  %v963 = vpop.permute.xlu0 %962
  %964 = vrot.lane.b32.xlu0 %v883, 64
  %v965 = vpop.permute.xlu0 %964
  %966 = vrot.lane.b32.xlu0 %v884, 64
  %v967 = vpop.permute.xlu0 %966
  %968 = vrot.lane.b32.xlu0 %v885, 64
  %v969 = vpop.permute.xlu0 %968
  %970 = vrot.lane.b32.xlu0 %v886, 64
  %v971 = vpop.permute.xlu0 %970
  %972 = vrot.lane.b32.xlu0 %v887, 64
  %v973 = vpop.permute.xlu0 %972
  %974 = vrot.lane.b32.xlu0 %v888, 64
  %v975 = vpop.permute.xlu0 %974
  %976 = vrot.lane.b32.xlu0 %v889, 64
  %v977 = vpop.permute.xlu0 %976
  %978 = vrot.lane.b32.xlu0 %v890, 64
  %v979 = vpop.permute.xlu0 %978
  %980 = vrot.lane.b32.xlu0 %v891, 64
  %v981 = vpop.permute.xlu0 %980
  %982 = vrot.lane.b32.xlu0 %v892, 64
  %v983 = vpop.permute.xlu0 %982
  %984 = vrot.lane.b32.xlu0 %v893, 64
  %v985 = vpop.permute.xlu0 %984
  %986 = vrot.lane.b32.xlu0 %v894, 64
  %v987 = vpop.permute.xlu0 %986
  %988 = vrot.lane.b32.xlu0 %v895, 64
  %v989 = vpop.permute.xlu0 %988
  %990 = vrot.lane.b32.xlu0 %v896, 64
  %v991 = vpop.permute.xlu0 %990
  %992 = vrot.lane.b32.xlu0 %v897, 64
  %v993 = vpop.permute.xlu0 %992
  %994 = vrot.lane.b32.xlu0 %v898, 64
  %v995 = vpop.permute.xlu0 %994
  %996 = vrot.lane.b32.xlu0 %v899, 64
  %v997 = vpop.permute.xlu0 %996
  %998 = vrot.lane.b32.xlu0 %v900, 64
  %v999 = vpop.permute.xlu0 %998
  %1000 = vrot.lane.b32.xlu0 %v901, 64
  %v1001 = vpop.permute.xlu0 %1000
  %1002 = vrot.lane.b32.xlu0 %v902, 64
  %v1003 = vpop.permute.xlu0 %1002
  %1004 = vrot.lane.b32.xlu0 %v903, 64
  %v1005 = vpop.permute.xlu0 %1004
  %1006 = vrot.lane.b32.xlu0 %v904, 64
  %v1007 = vpop.permute.xlu0 %1006
  %1008 = vrot.lane.b32.xlu0 %v905, 64
  %v1009 = vpop.permute.xlu0 %1008
  %1042 = vst.msk [vmem:[#allocation3] sm:$0xff] %vm729, %v947
  %1043 = vst.msk [vmem:[#allocation3 + $0x68] sm:$0xff] %vm729, %v949
  %1044 = vst.msk [vmem:[#allocation3 + $0xd0] sm:$0xff] %vm729, %v951
  %1045 = vst.msk [vmem:[#allocation3 + $0x138] sm:$0xff] %vm729, %v953
  %1046 = vst.msk [vmem:[#allocation3 + $0x1a0] sm:$0xff] %vm729, %v955
  %1047 = vst.msk [vmem:[#allocation3 + $0x208] sm:$0xff] %vm729, %v957
  %1048 = vst.msk [vmem:[#allocation3 + $0x270] sm:$0xff] %vm729, %v959
  %1049 = vst.msk [vmem:[#allocation3 + $0x2d8] sm:$0xff] %vm729, %v961
  %1050 = vst.msk [vmem:[#allocation3 + $0x340] sm:$0xff] %vm729, %v963
  %1051 = vst.msk [vmem:[#allocation3 + $0x3a8] sm:$0xff] %vm729, %v965
  %1052 = vst.msk [vmem:[#allocation3 + $0x410] sm:$0xff] %vm729, %v967
  %1053 = vst.msk [vmem:[#allocation3 + $0x478] sm:$0xff] %vm729, %v969
  %1054 = vst.msk [vmem:[#allocation3 + $0x4e0] sm:$0xff] %vm729, %v971
  %1055 = vst.msk [vmem:[#allocation3 + $0x548] sm:$0xff] %vm729, %v973
  %1056 = vst.msk [vmem:[#allocation3 + $0x5b0] sm:$0xff] %vm729, %v975
  %1057 = vst.msk [vmem:[#allocation3 + $0x618] sm:$0xff] %vm729, %v977
  %1058 = vst.msk [vmem:[#allocation3 + $0x680] sm:$0xff] %vm729, %v979
  %1059 = vst.msk [vmem:[#allocation3 + $0x6e8] sm:$0xff] %vm729, %v981
  %1060 = vst.msk [vmem:[#allocation3 + $0x750] sm:$0xff] %vm729, %v983
  %1061 = vst.msk [vmem:[#allocation3 + $0x7b8] sm:$0xff] %vm729, %v985
  %1062 = vst.msk [vmem:[#allocation3 + $0x820] sm:$0xff] %vm729, %v987
  %1063 = vst.msk [vmem:[#allocation3 + $0x888] sm:$0xff] %vm729, %v989
  %1064 = vst.msk [vmem:[#allocation3 + $0x8f0] sm:$0xff] %vm729, %v991
  %1065 = vst.msk [vmem:[#allocation3 + $0x958] sm:$0xff] %vm729, %v993
  %1066 = vst.msk [vmem:[#allocation3 + $0x9c0] sm:$0xff] %vm729, %v995
  %1067 = vst.msk [vmem:[#allocation3 + $0xa28] sm:$0xff] %vm729, %v997
  %1068 = vst.msk [vmem:[#allocation3 + $0xa90] sm:$0xff] %vm729, %v999
  %1069 = vst.msk [vmem:[#allocation3 + $0xaf8] sm:$0xff] %vm729, %v1001
  %1070 = vst.msk [vmem:[#allocation3 + $0xb60] sm:$0xff] %vm729, %v1003
  %1071 = vst.msk [vmem:[#allocation3 + $0xbc8] sm:$0xff] %vm729, %v1005
  %1072 = vst.msk [vmem:[#allocation3 + $0xc30] sm:$0xff] %vm729, %v1007
  %1073 = vst.msk [vmem:[#allocation3 + $0xc98] sm:$0xff] %vm729, %v1009
  %1074 = vst.msk [vmem:[#allocation3 + $0x18] sm:$0xff] %vm434, %v876
  %1075 = vst.msk [vmem:[#allocation3 + $0x80] sm:$0xff] %vm434, %v877
  %1076 = vst.msk [vmem:[#allocation3 + $0xe8] sm:$0xff] %vm434, %v878
  %1077 = vst.msk [vmem:[#allocation3 + $0x150] sm:$0xff] %vm434, %v879
  %1078 = vst.msk [vmem:[#allocation3 + $0x1b8] sm:$0xff] %vm434, %v880
  %1079 = vst.msk [vmem:[#allocation3 + $0x220] sm:$0xff] %vm434, %v881
  %1080 = vst.msk [vmem:[#allocation3 + $0x288] sm:$0xff] %vm434, %v882
  %1081 = vst.msk [vmem:[#allocation3 + $0x2f0] sm:$0xff] %vm434, %v883
  %1082 = vst.msk [vmem:[#allocation3 + $0x358] sm:$0xff] %vm434, %v884
  %1083 = vst.msk [vmem:[#allocation3 + $0x3c0] sm:$0xff] %vm434, %v885
  %1084 = vst.msk [vmem:[#allocation3 + $0x428] sm:$0xff] %vm434, %v886
  %1085 = vst.msk [vmem:[#allocation3 + $0x490] sm:$0xff] %vm434, %v887
  %1086 = vst.msk [vmem:[#allocation3 + $0x4f8] sm:$0xff] %vm434, %v888
  %1087 = vst.msk [vmem:[#allocation3 + $0x560] sm:$0xff] %vm434, %v889
  %1088 = vst.msk [vmem:[#allocation3 + $0x5c8] sm:$0xff] %vm434, %v890
  %1089 = vst.msk [vmem:[#allocation3 + $0x630] sm:$0xff] %vm434, %v891
  %1090 = vst.msk [vmem:[#allocation3 + $0x698] sm:$0xff] %vm434, %v892
  %1091 = vst.msk [vmem:[#allocation3 + $0x700] sm:$0xff] %vm434, %v893
  %1092 = vst.msk [vmem:[#allocation3 + $0x768] sm:$0xff] %vm434, %v894
  %1093 = vst.msk [vmem:[#allocation3 + $0x7d0] sm:$0xff] %vm434, %v895
  %1094 = vst.msk [vmem:[#allocation3 + $0x838] sm:$0xff] %vm434, %v896
  %1095 = vst.msk [vmem:[#allocation3 + $0x8a0] sm:$0xff] %vm434, %v897
  %1096 = vst.msk [vmem:[#allocation3 + $0x908] sm:$0xff] %vm434, %v898
  %1097 = vst.msk [vmem:[#allocation3 + $0x970] sm:$0xff] %vm434, %v899
  %1098 = vst.msk [vmem:[#allocation3 + $0x9d8] sm:$0xff] %vm434, %v900
  %1099 = vst.msk [vmem:[#allocation3 + $0xa40] sm:$0xff] %vm434, %v901
  %1100 = vst.msk [vmem:[#allocation3 + $0xaa8] sm:$0xff] %vm434, %v902
  %1101 = vst.msk [vmem:[#allocation3 + $0xb10] sm:$0xff] %vm434, %v903
  %1102 = vst.msk [vmem:[#allocation3 + $0xb78] sm:$0xff] %vm434, %v904
  %1103 = vst.msk [vmem:[#allocation3 + $0xbe0] sm:$0xff] %vm434, %v905
  %1104 = vst.msk [vmem:[#allocation3 + $0xc48] sm:$0xff] %vm434, %v906
  %1105 = vst.msk [vmem:[#allocation3 + $0xcb0] sm:$0xff] %vm434, %v907
  %1110 = vrot.lane.b32.xlu0 %v906, 64
  %v1111 = vpop.permute.xlu0 %1110
  %1112 = vrot.lane.b32.xlu0 %v907, 64
  %v1113 = vpop.permute.xlu0 %1112
  %1114 = vrot.lane.b32.xlu0 %v908, 64
  %v1115 = vpop.permute.xlu0 %1114
  %1116 = vrot.lane.b32.xlu0 %v909, 64
  %v1117 = vpop.permute.xlu0 %1116
  %1122 = vst.msk [vmem:[#allocation3 + $0x28] sm:$0xff] %vm729, %v955
  %1123 = vst.msk [vmem:[#allocation3 + $0x90] sm:$0xff] %vm729, %v957
  %1124 = vst.msk [vmem:[#allocation3 + $0xf8] sm:$0xff] %vm729, %v959
  %1125 = vst.msk [vmem:[#allocation3 + $0x160] sm:$0xff] %vm729, %v961
  %1126 = vst.msk [vmem:[#allocation3 + $0x1c8] sm:$0xff] %vm729, %v963
  %1127 = vst.msk [vmem:[#allocation3 + $0x230] sm:$0xff] %vm729, %v965
  %1128 = vst.msk [vmem:[#allocation3 + $0x298] sm:$0xff] %vm729, %v967
  %1129 = vst.msk [vmem:[#allocation3 + $0x300] sm:$0xff] %vm729, %v969
  %1130 = vst.msk [vmem:[#allocation3 + $0x368] sm:$0xff] %vm729, %v971
  %1131 = vst.msk [vmem:[#allocation3 + $0x3d0] sm:$0xff] %vm729, %v973
  %1132 = vst.msk [vmem:[#allocation3 + $0x438] sm:$0xff] %vm729, %v975
  %1133 = vst.msk [vmem:[#allocation3 + $0x4a0] sm:$0xff] %vm729, %v977
  %1134 = vst.msk [vmem:[#allocation3 + $0x508] sm:$0xff] %vm729, %v979
  %1135 = vst.msk [vmem:[#allocation3 + $0x570] sm:$0xff] %vm729, %v981
  %1136 = vst.msk [vmem:[#allocation3 + $0x5d8] sm:$0xff] %vm729, %v983
  %1137 = vst.msk [vmem:[#allocation3 + $0x640] sm:$0xff] %vm729, %v985
  %1138 = vst.msk [vmem:[#allocation3 + $0x6a8] sm:$0xff] %vm729, %v987
  %1139 = vst.msk [vmem:[#allocation3 + $0x710] sm:$0xff] %vm729, %v989
  %1140 = vst.msk [vmem:[#allocation3 + $0x778] sm:$0xff] %vm729, %v991
  %1141 = vst.msk [vmem:[#allocation3 + $0x7e0] sm:$0xff] %vm729, %v993
  %1142 = vst.msk [vmem:[#allocation3 + $0x848] sm:$0xff] %vm729, %v995
  %1143 = vst.msk [vmem:[#allocation3 + $0x8b0] sm:$0xff] %vm729, %v997
  %1144 = vst.msk [vmem:[#allocation3 + $0x918] sm:$0xff] %vm729, %v999
  %1145 = vst.msk [vmem:[#allocation3 + $0x980] sm:$0xff] %vm729, %v1001
  %1146 = vst.msk [vmem:[#allocation3 + $0x9e8] sm:$0xff] %vm729, %v1003
  %1147 = vst.msk [vmem:[#allocation3 + $0xa50] sm:$0xff] %vm729, %v1005
  %1148 = vst.msk [vmem:[#allocation3 + $0xab8] sm:$0xff] %vm729, %v1007
  %1149 = vst.msk [vmem:[#allocation3 + $0xb20] sm:$0xff] %vm729, %v1009
  %1150 = vst.msk [vmem:[#allocation3 + $0xb88] sm:$0xff] %vm729, %v1111
  %1151 = vst.msk [vmem:[#allocation3 + $0xbf0] sm:$0xff] %vm729, %v1113
  %1152 = vst.msk [vmem:[#allocation3 + $0xc58] sm:$0xff] %vm729, %v1115
  %1153 = vst.msk [vmem:[#allocation3 + $0xcc0] sm:$0xff] %vm729, %v1117
  %1154 = vst.msk [vmem:[#allocation3 + $0x40] sm:$0xff] %vm434, %v880
  %1155 = vst.msk [vmem:[#allocation3 + $0xa8] sm:$0xff] %vm434, %v881
  %1156 = vst.msk [vmem:[#allocation3 + $0x110] sm:$0xff] %vm434, %v882
  %1157 = vst.msk [vmem:[#allocation3 + $0x178] sm:$0xff] %vm434, %v883
  %1158 = vst.msk [vmem:[#allocation3 + $0x1e0] sm:$0xff] %vm434, %v884
  %1159 = vst.msk [vmem:[#allocation3 + $0x248] sm:$0xff] %vm434, %v885
  %1160 = vst.msk [vmem:[#allocation3 + $0x2b0] sm:$0xff] %vm434, %v886
  %1161 = vst.msk [vmem:[#allocation3 + $0x318] sm:$0xff] %vm434, %v887
  %1162 = vst.msk [vmem:[#allocation3 + $0x380] sm:$0xff] %vm434, %v888
  %1163 = vst.msk [vmem:[#allocation3 + $0x3e8] sm:$0xff] %vm434, %v889
  %1164 = vst.msk [vmem:[#allocation3 + $0x450] sm:$0xff] %vm434, %v890
  %1165 = vst.msk [vmem:[#allocation3 + $0x4b8] sm:$0xff] %vm434, %v891
  %1166 = vst.msk [vmem:[#allocation3 + $0x520] sm:$0xff] %vm434, %v892
  %1167 = vst.msk [vmem:[#allocation3 + $0x588] sm:$0xff] %vm434, %v893
  %1168 = vst.msk [vmem:[#allocation3 + $0x5f0] sm:$0xff] %vm434, %v894
  %1169 = vst.msk [vmem:[#allocation3 + $0x658] sm:$0xff] %vm434, %v895
  %1170 = vst.msk [vmem:[#allocation3 + $0x6c0] sm:$0xff] %vm434, %v896
  %1171 = vst.msk [vmem:[#allocation3 + $0x728] sm:$0xff] %vm434, %v897
  %1172 = vst.msk [vmem:[#allocation3 + $0x790] sm:$0xff] %vm434, %v898
  %1173 = vst.msk [vmem:[#allocation3 + $0x7f8] sm:$0xff] %vm434, %v899
  %1174 = vst.msk [vmem:[#allocation3 + $0x860] sm:$0xff] %vm434, %v900
  %1175 = vst.msk [vmem:[#allocation3 + $0x8c8] sm:$0xff] %vm434, %v901
  %1176 = vst.msk [vmem:[#allocation3 + $0x930] sm:$0xff] %vm434, %v902
  %1177 = vst.msk [vmem:[#allocation3 + $0x998] sm:$0xff] %vm434, %v903
  %1178 = vst.msk [vmem:[#allocation3 + $0xa00] sm:$0xff] %vm434, %v904
  %1179 = vst.msk [vmem:[#allocation3 + $0xa68] sm:$0xff] %vm434, %v905
  %1180 = vst.msk [vmem:[#allocation3 + $0xad0] sm:$0xff] %vm434, %v906
  %1181 = vst.msk [vmem:[#allocation3 + $0xb38] sm:$0xff] %vm434, %v907
  %1182 = vst.msk [vmem:[#allocation3 + $0xba0] sm:$0xff] %vm434, %v908
  %1183 = vst.msk [vmem:[#allocation3 + $0xc08] sm:$0xff] %vm434, %v909
  %1184 = vst.msk [vmem:[#allocation3 + $0xc70] sm:$0xff] %vm434, %v910
  %1185 = vst.msk [vmem:[#allocation3 + $0xcd8] sm:$0xff] %vm434, %v911
  %1190 = vrot.lane.b32.xlu0 %v910, 64
  %v1191 = vpop.permute.xlu0 %1190
  %1192 = vrot.lane.b32.xlu0 %v911, 64
  %v1193 = vpop.permute.xlu0 %1192
  %1194 = vrot.lane.b32.xlu0 %v912, 64
  %v1195 = vpop.permute.xlu0 %1194
  %1196 = vrot.lane.b32.xlu0 %v913, 64
  %v1197 = vpop.permute.xlu0 %1196
  %1202 = vst.msk [vmem:[#allocation3 + $0x50] sm:$0xff] %vm729, %v963
  %1203 = vst.msk [vmem:[#allocation3 + $0xb8] sm:$0xff] %vm729, %v965
  %1204 = vst.msk [vmem:[#allocation3 + $0x120] sm:$0xff] %vm729, %v967
  %1205 = vst.msk [vmem:[#allocation3 + $0x188] sm:$0xff] %vm729, %v969
  %1206 = vst.msk [vmem:[#allocation3 + $0x1f0] sm:$0xff] %vm729, %v971
  %1207 = vst.msk [vmem:[#allocation3 + $0x258] sm:$0xff] %vm729, %v973
  %1208 = vst.msk [vmem:[#allocation3 + $0x2c0] sm:$0xff] %vm729, %v975
  %1209 = vst.msk [vmem:[#allocation3 + $0x328] sm:$0xff] %vm729, %v977
  %1210 = vst.msk [vmem:[#allocation3 + $0x390] sm:$0xff] %vm729, %v979
  %1211 = vst.msk [vmem:[#allocation3 + $0x3f8] sm:$0xff] %vm729, %v981
  %1212 = vst.msk [vmem:[#allocation3 + $0x460] sm:$0xff] %vm729, %v983
  %1213 = vst.msk [vmem:[#allocation3 + $0x4c8] sm:$0xff] %vm729, %v985
  %1214 = vst.msk [vmem:[#allocation3 + $0x530] sm:$0xff] %vm729, %v987
  %1215 = vst.msk [vmem:[#allocation3 + $0x598] sm:$0xff] %vm729, %v989
  %1216 = vst.msk [vmem:[#allocation3 + $0x600] sm:$0xff] %vm729, %v991
  %1217 = vst.msk [vmem:[#allocation3 + $0x668] sm:$0xff] %vm729, %v993
  %1218 = vst.msk [vmem:[#allocation3 + $0x6d0] sm:$0xff] %vm729, %v995
  %1219 = vst.msk [vmem:[#allocation3 + $0x738] sm:$0xff] %vm729, %v997
  %1220 = vst.msk [vmem:[#allocation3 + $0x7a0] sm:$0xff] %vm729, %v999
  %1221 = vst.msk [vmem:[#allocation3 + $0x808] sm:$0xff] %vm729, %v1001
  %1222 = vst.msk [vmem:[#allocation3 + $0x870] sm:$0xff] %vm729, %v1003
  %1223 = vst.msk [vmem:[#allocation3 + $0x8d8] sm:$0xff] %vm729, %v1005
  %1224 = vst.msk [vmem:[#allocation3 + $0x940] sm:$0xff] %vm729, %v1007
  %1225 = vst.msk [vmem:[#allocation3 + $0x9a8] sm:$0xff] %vm729, %v1009
  %1226 = vst.msk [vmem:[#allocation3 + $0xa10] sm:$0xff] %vm729, %v1111
  %1227 = vst.msk [vmem:[#allocation3 + $0xa78] sm:$0xff] %vm729, %v1113
  %1228 = vst.msk [vmem:[#allocation3 + $0xae0] sm:$0xff] %vm729, %v1115
  %1229 = vst.msk [vmem:[#allocation3 + $0xb48] sm:$0xff] %vm729, %v1117
  %1230 = vst.msk [vmem:[#allocation3 + $0xbb0] sm:$0xff] %vm729, %v1191
  %1231 = vst.msk [vmem:[#allocation3 + $0xc18] sm:$0xff] %vm729, %v1193
  %1232 = vst.msk [vmem:[#allocation3 + $0xc80] sm:$0xff] %vm729, %v1195
  %1233 = vst.msk [vmem:[#allocation3 + $0xce8] sm:$0xff] %vm729, %v1197
  %v1234 = vld [vmem:[#allocation2 + $0x2] sm:$0xff]
  %v1235 = vld [vmem:[#allocation2 + $0xa] sm:$0xff]
  %v1236 = vld [vmem:[#allocation2 + $0x1a] sm:$0xff]
  %v1237 = vld [vmem:[#allocation2 + $0x22] sm:$0xff]
  %v1238 = vld [vmem:[#allocation2 + $0x32] sm:$0xff]
  %v1239 = vld [vmem:[#allocation2 + $0x3a] sm:$0xff]
  %v1240 = vld [vmem:[#allocation2 + $0x4a] sm:$0xff]
  %v1241 = vld [vmem:[#allocation2 + $0x52] sm:$0xff]
  %v1242 = vld [vmem:[#allocation2 + $0x62] sm:$0xff]
  %v1243 = vld [vmem:[#allocation2 + $0x6a] sm:$0xff]
  %v1244 = vld [vmem:[#allocation2 + $0x7a] sm:$0xff]
  %v1245 = vld [vmem:[#allocation2 + $0x82] sm:$0xff]
  %v1246 = vld [vmem:[#allocation2 + $0x92] sm:$0xff]
  %v1247 = vld [vmem:[#allocation2 + $0x9a] sm:$0xff]
  %v1248 = vld [vmem:[#allocation2 + $0xaa] sm:$0xff]
  %v1249 = vld [vmem:[#allocation2 + $0xb2] sm:$0xff]
  %v1250 = vld [vmem:[#allocation2 + $0xc2] sm:$0xff]
  %v1251 = vld [vmem:[#allocation2 + $0xca] sm:$0xff]
  %v1252 = vld [vmem:[#allocation2 + $0xda] sm:$0xff]
  %v1253 = vld [vmem:[#allocation2 + $0xe2] sm:$0xff]
  %v1254 = vld [vmem:[#allocation2 + $0xf2] sm:$0xff]
  %v1255 = vld [vmem:[#allocation2 + $0xfa] sm:$0xff]
  %v1256 = vld [vmem:[#allocation2 + $0x10a] sm:$0xff]
  %v1257 = vld [vmem:[#allocation2 + $0x112] sm:$0xff]
  %v1258 = vld [vmem:[#allocation2 + $0x122] sm:$0xff]
  %v1259 = vld [vmem:[#allocation2 + $0x12a] sm:$0xff]
  %v1260 = vld [vmem:[#allocation2 + $0x13a] sm:$0xff]
  %v1261 = vld [vmem:[#allocation2 + $0x142] sm:$0xff]
  %v1262 = vld [vmem:[#allocation2 + $0x152] sm:$0xff]
  %v1263 = vld [vmem:[#allocation2 + $0x15a] sm:$0xff]
  %v1264 = vld [vmem:[#allocation2 + $0x16a] sm:$0xff]
  %v1265 = vld [vmem:[#allocation2 + $0x172] sm:$0xff]
  %v1266 = vld [vmem:[#allocation2 + $0x182] sm:$0xff]
  %v1267 = vld [vmem:[#allocation2 + $0x18a] sm:$0xff]
  %v1268 = vld [vmem:[#allocation2 + $0x19a] sm:$0xff]
  %v1269 = vld [vmem:[#allocation2 + $0x1a2] sm:$0xff]
  %v1270 = vld [vmem:[#allocation2 + $0x1b2] sm:$0xff]
  %v1271 = vld [vmem:[#allocation2 + $0x1ba] sm:$0xff]
  %v1272 = vld [vmem:[#allocation2 + $0x1ca] sm:$0xff]
  %v1273 = vld [vmem:[#allocation2 + $0x1d2] sm:$0xff]
  %1274 = vst.msk [vmem:[#allocation3 + $0x8] sm:$0xff] %vm434, %v1234
  %1275 = vst.msk [vmem:[#allocation3 + $0x70] sm:$0xff] %vm434, %v1235
  %1276 = vst.msk [vmem:[#allocation3 + $0xd8] sm:$0xff] %vm434, %v1236
  %1277 = vst.msk [vmem:[#allocation3 + $0x140] sm:$0xff] %vm434, %v1237
  %1278 = vst.msk [vmem:[#allocation3 + $0x1a8] sm:$0xff] %vm434, %v1238
  %1279 = vst.msk [vmem:[#allocation3 + $0x210] sm:$0xff] %vm434, %v1239
  %1280 = vst.msk [vmem:[#allocation3 + $0x278] sm:$0xff] %vm434, %v1240
  %1281 = vst.msk [vmem:[#allocation3 + $0x2e0] sm:$0xff] %vm434, %v1241
  %1282 = vst.msk [vmem:[#allocation3 + $0x348] sm:$0xff] %vm434, %v1242
  %1283 = vst.msk [vmem:[#allocation3 + $0x3b0] sm:$0xff] %vm434, %v1243
  %1284 = vst.msk [vmem:[#allocation3 + $0x418] sm:$0xff] %vm434, %v1244
  %1285 = vst.msk [vmem:[#allocation3 + $0x480] sm:$0xff] %vm434, %v1245
  %1286 = vst.msk [vmem:[#allocation3 + $0x4e8] sm:$0xff] %vm434, %v1246
  %1287 = vst.msk [vmem:[#allocation3 + $0x550] sm:$0xff] %vm434, %v1247
  %1288 = vst.msk [vmem:[#allocation3 + $0x5b8] sm:$0xff] %vm434, %v1248
  %1289 = vst.msk [vmem:[#allocation3 + $0x620] sm:$0xff] %vm434, %v1249
  %1290 = vst.msk [vmem:[#allocation3 + $0x688] sm:$0xff] %vm434, %v1250
  %1291 = vst.msk [vmem:[#allocation3 + $0x6f0] sm:$0xff] %vm434, %v1251
  %1292 = vst.msk [vmem:[#allocation3 + $0x758] sm:$0xff] %vm434, %v1252
  %1293 = vst.msk [vmem:[#allocation3 + $0x7c0] sm:$0xff] %vm434, %v1253
  %1294 = vst.msk [vmem:[#allocation3 + $0x828] sm:$0xff] %vm434, %v1254
  %1295 = vst.msk [vmem:[#allocation3 + $0x890] sm:$0xff] %vm434, %v1255
  %1296 = vst.msk [vmem:[#allocation3 + $0x8f8] sm:$0xff] %vm434, %v1256
  %1297 = vst.msk [vmem:[#allocation3 + $0x960] sm:$0xff] %vm434, %v1257
  %1298 = vst.msk [vmem:[#allocation3 + $0x9c8] sm:$0xff] %vm434, %v1258
  %1299 = vst.msk [vmem:[#allocation3 + $0xa30] sm:$0xff] %vm434, %v1259
  %1300 = vst.msk [vmem:[#allocation3 + $0xa98] sm:$0xff] %vm434, %v1260
  %1301 = vst.msk [vmem:[#allocation3 + $0xb00] sm:$0xff] %vm434, %v1261
  %1302 = vst.msk [vmem:[#allocation3 + $0xb68] sm:$0xff] %vm434, %v1262
  %1303 = vst.msk [vmem:[#allocation3 + $0xbd0] sm:$0xff] %vm434, %v1263
  %1304 = vst.msk [vmem:[#allocation3 + $0xc38] sm:$0xff] %vm434, %v1264
  %1305 = vst.msk [vmem:[#allocation3 + $0xca0] sm:$0xff] %vm434, %v1265
  %1338 = vrot.lane.b32.xlu0 %v1236, 64
  %v1339 = vpop.permute.xlu0 %1338
  %1340 = vrot.lane.b32.xlu0 %v1237, 64
  %v1341 = vpop.permute.xlu0 %1340
  %1342 = vrot.lane.b32.xlu0 %v1238, 64
  %v1343 = vpop.permute.xlu0 %1342
  %1344 = vrot.lane.b32.xlu0 %v1239, 64
  %v1345 = vpop.permute.xlu0 %1344
  %1346 = vrot.lane.b32.xlu0 %v1240, 64
  %v1347 = vpop.permute.xlu0 %1346
  %1348 = vrot.lane.b32.xlu0 %v1241, 64
  %v1349 = vpop.permute.xlu0 %1348
  %1350 = vrot.lane.b32.xlu0 %v1242, 64
  %v1351 = vpop.permute.xlu0 %1350
  %1352 = vrot.lane.b32.xlu0 %v1243, 64
  %v1353 = vpop.permute.xlu0 %1352
  %1354 = vrot.lane.b32.xlu0 %v1244, 64
  %v1355 = vpop.permute.xlu0 %1354
  %1356 = vrot.lane.b32.xlu0 %v1245, 64
  %v1357 = vpop.permute.xlu0 %1356
  %1358 = vrot.lane.b32.xlu0 %v1246, 64
  %v1359 = vpop.permute.xlu0 %1358
  %1360 = vrot.lane.b32.xlu0 %v1247, 64
  %v1361 = vpop.permute.xlu0 %1360
  %1362 = vrot.lane.b32.xlu0 %v1248, 64
  %v1363 = vpop.permute.xlu0 %1362
  %1364 = vrot.lane.b32.xlu0 %v1249, 64
  %v1365 = vpop.permute.xlu0 %1364
  %1366 = vrot.lane.b32.xlu0 %v1250, 64
  %v1367 = vpop.permute.xlu0 %1366
  %1368 = vrot.lane.b32.xlu0 %v1251, 64
  %v1369 = vpop.permute.xlu0 %1368
  %1370 = vrot.lane.b32.xlu0 %v1252, 64
  %v1371 = vpop.permute.xlu0 %1370
  %1372 = vrot.lane.b32.xlu0 %v1253, 64
  %v1373 = vpop.permute.xlu0 %1372
  %1374 = vrot.lane.b32.xlu0 %v1254, 64
  %v1375 = vpop.permute.xlu0 %1374
  %1376 = vrot.lane.b32.xlu0 %v1255, 64
  %v1377 = vpop.permute.xlu0 %1376
  %1378 = vrot.lane.b32.xlu0 %v1256, 64
  %v1379 = vpop.permute.xlu0 %1378
  %1380 = vrot.lane.b32.xlu0 %v1257, 64
  %v1381 = vpop.permute.xlu0 %1380
  %1382 = vrot.lane.b32.xlu0 %v1258, 64
  %v1383 = vpop.permute.xlu0 %1382
  %1384 = vrot.lane.b32.xlu0 %v1259, 64
  %v1385 = vpop.permute.xlu0 %1384
  %1386 = vrot.lane.b32.xlu0 %v1260, 64
  %v1387 = vpop.permute.xlu0 %1386
  %1388 = vrot.lane.b32.xlu0 %v1261, 64
  %v1389 = vpop.permute.xlu0 %1388
  %1390 = vrot.lane.b32.xlu0 %v1262, 64
  %v1391 = vpop.permute.xlu0 %1390
  %1392 = vrot.lane.b32.xlu0 %v1263, 64
  %v1393 = vpop.permute.xlu0 %1392
  %1394 = vrot.lane.b32.xlu0 %v1264, 64
  %v1395 = vpop.permute.xlu0 %1394
  %1396 = vrot.lane.b32.xlu0 %v1265, 64
  %v1397 = vpop.permute.xlu0 %1396
  %1398 = vrot.lane.b32.xlu0 %v1266, 64
  %v1399 = vpop.permute.xlu0 %1398
  %1400 = vrot.lane.b32.xlu0 %v1267, 64
  %v1401 = vpop.permute.xlu0 %1400
  %1434 = vst.msk [vmem:[#allocation3 + $0x18] sm:$0xff] %vm729, %v1339
  %1435 = vst.msk [vmem:[#allocation3 + $0x80] sm:$0xff] %vm729, %v1341
  %1436 = vst.msk [vmem:[#allocation3 + $0xe8] sm:$0xff] %vm729, %v1343
  %1437 = vst.msk [vmem:[#allocation3 + $0x150] sm:$0xff] %vm729, %v1345
  %1438 = vst.msk [vmem:[#allocation3 + $0x1b8] sm:$0xff] %vm729, %v1347
  %1439 = vst.msk [vmem:[#allocation3 + $0x220] sm:$0xff] %vm729, %v1349
  %1440 = vst.msk [vmem:[#allocation3 + $0x288] sm:$0xff] %vm729, %v1351
  %1441 = vst.msk [vmem:[#allocation3 + $0x2f0] sm:$0xff] %vm729, %v1353
  %1442 = vst.msk [vmem:[#allocation3 + $0x358] sm:$0xff] %vm729, %v1355
  %1443 = vst.msk [vmem:[#allocation3 + $0x3c0] sm:$0xff] %vm729, %v1357
  %1444 = vst.msk [vmem:[#allocation3 + $0x428] sm:$0xff] %vm729, %v1359
  %1445 = vst.msk [vmem:[#allocation3 + $0x490] sm:$0xff] %vm729, %v1361
  %1446 = vst.msk [vmem:[#allocation3 + $0x4f8] sm:$0xff] %vm729, %v1363
  %1447 = vst.msk [vmem:[#allocation3 + $0x560] sm:$0xff] %vm729, %v1365
  %1448 = vst.msk [vmem:[#allocation3 + $0x5c8] sm:$0xff] %vm729, %v1367
  %1449 = vst.msk [vmem:[#allocation3 + $0x630] sm:$0xff] %vm729, %v1369
  %1450 = vst.msk [vmem:[#allocation3 + $0x698] sm:$0xff] %vm729, %v1371
  %1451 = vst.msk [vmem:[#allocation3 + $0x700] sm:$0xff] %vm729, %v1373
  %1452 = vst.msk [vmem:[#allocation3 + $0x768] sm:$0xff] %vm729, %v1375
  %1453 = vst.msk [vmem:[#allocation3 + $0x7d0] sm:$0xff] %vm729, %v1377
  %1454 = vst.msk [vmem:[#allocation3 + $0x838] sm:$0xff] %vm729, %v1379
  %1455 = vst.msk [vmem:[#allocation3 + $0x8a0] sm:$0xff] %vm729, %v1381
  %1456 = vst.msk [vmem:[#allocation3 + $0x908] sm:$0xff] %vm729, %v1383
  %1457 = vst.msk [vmem:[#allocation3 + $0x970] sm:$0xff] %vm729, %v1385
  %1458 = vst.msk [vmem:[#allocation3 + $0x9d8] sm:$0xff] %vm729, %v1387
  %1459 = vst.msk [vmem:[#allocation3 + $0xa40] sm:$0xff] %vm729, %v1389
  %1460 = vst.msk [vmem:[#allocation3 + $0xaa8] sm:$0xff] %vm729, %v1391
  %1461 = vst.msk [vmem:[#allocation3 + $0xb10] sm:$0xff] %vm729, %v1393
  %1462 = vst.msk [vmem:[#allocation3 + $0xb78] sm:$0xff] %vm729, %v1395
  %1463 = vst.msk [vmem:[#allocation3 + $0xbe0] sm:$0xff] %vm729, %v1397
  %1464 = vst.msk [vmem:[#allocation3 + $0xc48] sm:$0xff] %vm729, %v1399
  %1465 = vst.msk [vmem:[#allocation3 + $0xcb0] sm:$0xff] %vm729, %v1401
  %1466 = vst.msk [vmem:[#allocation3 + $0x30] sm:$0xff] %vm434, %v1238
  %1467 = vst.msk [vmem:[#allocation3 + $0x98] sm:$0xff] %vm434, %v1239
  %1468 = vst.msk [vmem:[#allocation3 + $0x100] sm:$0xff] %vm434, %v1240
  %1469 = vst.msk [vmem:[#allocation3 + $0x168] sm:$0xff] %vm434, %v1241
  %1470 = vst.msk [vmem:[#allocation3 + $0x1d0] sm:$0xff] %vm434, %v1242
  %1471 = vst.msk [vmem:[#allocation3 + $0x238] sm:$0xff] %vm434, %v1243
  %1472 = vst.msk [vmem:[#allocation3 + $0x2a0] sm:$0xff] %vm434, %v1244
  %1473 = vst.msk [vmem:[#allocation3 + $0x308] sm:$0xff] %vm434, %v1245
  %1474 = vst.msk [vmem:[#allocation3 + $0x370] sm:$0xff] %vm434, %v1246
  %1475 = vst.msk [vmem:[#allocation3 + $0x3d8] sm:$0xff] %vm434, %v1247
  %1476 = vst.msk [vmem:[#allocation3 + $0x440] sm:$0xff] %vm434, %v1248
  %1477 = vst.msk [vmem:[#allocation3 + $0x4a8] sm:$0xff] %vm434, %v1249
  %1478 = vst.msk [vmem:[#allocation3 + $0x510] sm:$0xff] %vm434, %v1250
  %1479 = vst.msk [vmem:[#allocation3 + $0x578] sm:$0xff] %vm434, %v1251
  %1480 = vst.msk [vmem:[#allocation3 + $0x5e0] sm:$0xff] %vm434, %v1252
  %1481 = vst.msk [vmem:[#allocation3 + $0x648] sm:$0xff] %vm434, %v1253
  %1482 = vst.msk [vmem:[#allocation3 + $0x6b0] sm:$0xff] %vm434, %v1254
  %1483 = vst.msk [vmem:[#allocation3 + $0x718] sm:$0xff] %vm434, %v1255
  %1484 = vst.msk [vmem:[#allocation3 + $0x780] sm:$0xff] %vm434, %v1256
  %1485 = vst.msk [vmem:[#allocation3 + $0x7e8] sm:$0xff] %vm434, %v1257
  %1486 = vst.msk [vmem:[#allocation3 + $0x850] sm:$0xff] %vm434, %v1258
  %1487 = vst.msk [vmem:[#allocation3 + $0x8b8] sm:$0xff] %vm434, %v1259
  %1488 = vst.msk [vmem:[#allocation3 + $0x920] sm:$0xff] %vm434, %v1260
  %1489 = vst.msk [vmem:[#allocation3 + $0x988] sm:$0xff] %vm434, %v1261
  %1490 = vst.msk [vmem:[#allocation3 + $0x9f0] sm:$0xff] %vm434, %v1262
  %1491 = vst.msk [vmem:[#allocation3 + $0xa58] sm:$0xff] %vm434, %v1263
  %1492 = vst.msk [vmem:[#allocation3 + $0xac0] sm:$0xff] %vm434, %v1264
  %1493 = vst.msk [vmem:[#allocation3 + $0xb28] sm:$0xff] %vm434, %v1265
  %1494 = vst.msk [vmem:[#allocation3 + $0xb90] sm:$0xff] %vm434, %v1266
  %1495 = vst.msk [vmem:[#allocation3 + $0xbf8] sm:$0xff] %vm434, %v1267
  %1496 = vst.msk [vmem:[#allocation3 + $0xc60] sm:$0xff] %vm434, %v1268
  %1497 = vst.msk [vmem:[#allocation3 + $0xcc8] sm:$0xff] %vm434, %v1269
  %1502 = vrot.lane.b32.xlu0 %v1268, 64
  %v1503 = vpop.permute.xlu0 %1502
  %1504 = vrot.lane.b32.xlu0 %v1269, 64
  %v1505 = vpop.permute.xlu0 %1504
  %1506 = vrot.lane.b32.xlu0 %v1270, 64
  %v1507 = vpop.permute.xlu0 %1506
  %1508 = vrot.lane.b32.xlu0 %v1271, 64
  %v1509 = vpop.permute.xlu0 %1508
  %1514 = vst.msk [vmem:[#allocation3 + $0x40] sm:$0xff] %vm729, %v1347
  %1515 = vst.msk [vmem:[#allocation3 + $0xa8] sm:$0xff] %vm729, %v1349
  %1516 = vst.msk [vmem:[#allocation3 + $0x110] sm:$0xff] %vm729, %v1351
  %1517 = vst.msk [vmem:[#allocation3 + $0x178] sm:$0xff] %vm729, %v1353
  %1518 = vst.msk [vmem:[#allocation3 + $0x1e0] sm:$0xff] %vm729, %v1355
  %1519 = vst.msk [vmem:[#allocation3 + $0x248] sm:$0xff] %vm729, %v1357
  %1520 = vst.msk [vmem:[#allocation3 + $0x2b0] sm:$0xff] %vm729, %v1359
  %1521 = vst.msk [vmem:[#allocation3 + $0x318] sm:$0xff] %vm729, %v1361
  %1522 = vst.msk [vmem:[#allocation3 + $0x380] sm:$0xff] %vm729, %v1363
  %1523 = vst.msk [vmem:[#allocation3 + $0x3e8] sm:$0xff] %vm729, %v1365
  %1524 = vst.msk [vmem:[#allocation3 + $0x450] sm:$0xff] %vm729, %v1367
  %1525 = vst.msk [vmem:[#allocation3 + $0x4b8] sm:$0xff] %vm729, %v1369
  %1526 = vst.msk [vmem:[#allocation3 + $0x520] sm:$0xff] %vm729, %v1371
  %1527 = vst.msk [vmem:[#allocation3 + $0x588] sm:$0xff] %vm729, %v1373
  %1528 = vst.msk [vmem:[#allocation3 + $0x5f0] sm:$0xff] %vm729, %v1375
  %1529 = vst.msk [vmem:[#allocation3 + $0x658] sm:$0xff] %vm729, %v1377
  %1530 = vst.msk [vmem:[#allocation3 + $0x6c0] sm:$0xff] %vm729, %v1379
  %1531 = vst.msk [vmem:[#allocation3 + $0x728] sm:$0xff] %vm729, %v1381
  %1532 = vst.msk [vmem:[#allocation3 + $0x790] sm:$0xff] %vm729, %v1383
  %1533 = vst.msk [vmem:[#allocation3 + $0x7f8] sm:$0xff] %vm729, %v1385
  %1534 = vst.msk [vmem:[#allocation3 + $0x860] sm:$0xff] %vm729, %v1387
  %1535 = vst.msk [vmem:[#allocation3 + $0x8c8] sm:$0xff] %vm729, %v1389
  %1536 = vst.msk [vmem:[#allocation3 + $0x930] sm:$0xff] %vm729, %v1391
  %1537 = vst.msk [vmem:[#allocation3 + $0x998] sm:$0xff] %vm729, %v1393
  %1538 = vst.msk [vmem:[#allocation3 + $0xa00] sm:$0xff] %vm729, %v1395
  %1539 = vst.msk [vmem:[#allocation3 + $0xa68] sm:$0xff] %vm729, %v1397
  %1540 = vst.msk [vmem:[#allocation3 + $0xad0] sm:$0xff] %vm729, %v1399
  %1541 = vst.msk [vmem:[#allocation3 + $0xb38] sm:$0xff] %vm729, %v1401
  %1542 = vst.msk [vmem:[#allocation3 + $0xba0] sm:$0xff] %vm729, %v1503
  %1543 = vst.msk [vmem:[#allocation3 + $0xc08] sm:$0xff] %vm729, %v1505
  %1544 = vst.msk [vmem:[#allocation3 + $0xc70] sm:$0xff] %vm729, %v1507
  %1545 = vst.msk [vmem:[#allocation3 + $0xcd8] sm:$0xff] %vm729, %v1509
  %1546 = vst.msk [vmem:[#allocation3 + $0x58] sm:$0xff] %vm434, %v1242
  %1547 = vst.msk [vmem:[#allocation3 + $0xc0] sm:$0xff] %vm434, %v1243
  %1548 = vst.msk [vmem:[#allocation3 + $0x128] sm:$0xff] %vm434, %v1244
  %1549 = vst.msk [vmem:[#allocation3 + $0x190] sm:$0xff] %vm434, %v1245
  %1550 = vst.msk [vmem:[#allocation3 + $0x1f8] sm:$0xff] %vm434, %v1246
  %1551 = vst.msk [vmem:[#allocation3 + $0x260] sm:$0xff] %vm434, %v1247
  %1552 = vst.msk [vmem:[#allocation3 + $0x2c8] sm:$0xff] %vm434, %v1248
  %1553 = vst.msk [vmem:[#allocation3 + $0x330] sm:$0xff] %vm434, %v1249
  %1554 = vst.msk [vmem:[#allocation3 + $0x398] sm:$0xff] %vm434, %v1250
  %1555 = vst.msk [vmem:[#allocation3 + $0x400] sm:$0xff] %vm434, %v1251
  %1556 = vst.msk [vmem:[#allocation3 + $0x468] sm:$0xff] %vm434, %v1252
  %1557 = vst.msk [vmem:[#allocation3 + $0x4d0] sm:$0xff] %vm434, %v1253
  %1558 = vst.msk [vmem:[#allocation3 + $0x538] sm:$0xff] %vm434, %v1254
  %1559 = vst.msk [vmem:[#allocation3 + $0x5a0] sm:$0xff] %vm434, %v1255
  %1560 = vst.msk [vmem:[#allocation3 + $0x608] sm:$0xff] %vm434, %v1256
  %1561 = vst.msk [vmem:[#allocation3 + $0x670] sm:$0xff] %vm434, %v1257
  %1562 = vst.msk [vmem:[#allocation3 + $0x6d8] sm:$0xff] %vm434, %v1258
  %1563 = vst.msk [vmem:[#allocation3 + $0x740] sm:$0xff] %vm434, %v1259
  %1564 = vst.msk [vmem:[#allocation3 + $0x7a8] sm:$0xff] %vm434, %v1260
  %1565 = vst.msk [vmem:[#allocation3 + $0x810] sm:$0xff] %vm434, %v1261
  %1566 = vst.msk [vmem:[#allocation3 + $0x878] sm:$0xff] %vm434, %v1262
  %1567 = vst.msk [vmem:[#allocation3 + $0x8e0] sm:$0xff] %vm434, %v1263
  %1568 = vst.msk [vmem:[#allocation3 + $0x948] sm:$0xff] %vm434, %v1264
  %1569 = vst.msk [vmem:[#allocation3 + $0x9b0] sm:$0xff] %vm434, %v1265
  %1570 = vst.msk [vmem:[#allocation3 + $0xa18] sm:$0xff] %vm434, %v1266
  %1571 = vst.msk [vmem:[#allocation3 + $0xa80] sm:$0xff] %vm434, %v1267
  %1572 = vst.msk [vmem:[#allocation3 + $0xae8] sm:$0xff] %vm434, %v1268
  %1573 = vst.msk [vmem:[#allocation3 + $0xb50] sm:$0xff] %vm434, %v1269
  %1574 = vst.msk [vmem:[#allocation3 + $0xbb8] sm:$0xff] %vm434, %v1270
  %1575 = vst.msk [vmem:[#allocation3 + $0xc20] sm:$0xff] %vm434, %v1271
  %1576 = vst.msk [vmem:[#allocation3 + $0xc88] sm:$0xff] %vm434, %v1272
  %1577 = vst.msk [vmem:[#allocation3 + $0xcf0] sm:$0xff] %vm434, %v1273
  %v1578 = vld [vmem:[#allocation2 + $0x3] sm:$0xff]
  %v1579 = vld [vmem:[#allocation2 + $0xb] sm:$0xff]
  %v1580 = vld [vmem:[#allocation2 + $0x1b] sm:$0xff]
  %v1581 = vld [vmem:[#allocation2 + $0x23] sm:$0xff]
  %v1582 = vld [vmem:[#allocation2 + $0x33] sm:$0xff]
  %v1583 = vld [vmem:[#allocation2 + $0x3b] sm:$0xff]
  %v1584 = vld [vmem:[#allocation2 + $0x4b] sm:$0xff]
  %v1585 = vld [vmem:[#allocation2 + $0x53] sm:$0xff]
  %v1586 = vld [vmem:[#allocation2 + $0x63] sm:$0xff]
  %v1587 = vld [vmem:[#allocation2 + $0x6b] sm:$0xff]
  %v1588 = vld [vmem:[#allocation2 + $0x7b] sm:$0xff]
  %v1589 = vld [vmem:[#allocation2 + $0x83] sm:$0xff]
  %v1590 = vld [vmem:[#allocation2 + $0x93] sm:$0xff]
  %v1591 = vld [vmem:[#allocation2 + $0x9b] sm:$0xff]
  %v1592 = vld [vmem:[#allocation2 + $0xab] sm:$0xff]
  %v1593 = vld [vmem:[#allocation2 + $0xb3] sm:$0xff]
  %v1594 = vld [vmem:[#allocation2 + $0xc3] sm:$0xff]
  %v1595 = vld [vmem:[#allocation2 + $0xcb] sm:$0xff]
  %v1596 = vld [vmem:[#allocation2 + $0xdb] sm:$0xff]
  %v1597 = vld [vmem:[#allocation2 + $0xe3] sm:$0xff]
  %v1598 = vld [vmem:[#allocation2 + $0xf3] sm:$0xff]
  %v1599 = vld [vmem:[#allocation2 + $0xfb] sm:$0xff]
  %v1600 = vld [vmem:[#allocation2 + $0x10b] sm:$0xff]
  %v1601 = vld [vmem:[#allocation2 + $0x113] sm:$0xff]
  %v1602 = vld [vmem:[#allocation2 + $0x123] sm:$0xff]
  %v1603 = vld [vmem:[#allocation2 + $0x12b] sm:$0xff]
  %v1604 = vld [vmem:[#allocation2 + $0x13b] sm:$0xff]
  %v1605 = vld [vmem:[#allocation2 + $0x143] sm:$0xff]
  %v1606 = vld [vmem:[#allocation2 + $0x153] sm:$0xff]
  %v1607 = vld [vmem:[#allocation2 + $0x15b] sm:$0xff]
  %v1608 = vld [vmem:[#allocation2 + $0x16b] sm:$0xff]
  %v1609 = vld [vmem:[#allocation2 + $0x173] sm:$0xff]
  %v1610 = vld [vmem:[#allocation2 + $0x183] sm:$0xff]
  %v1611 = vld [vmem:[#allocation2 + $0x18b] sm:$0xff]
  %v1612 = vld [vmem:[#allocation2 + $0x19b] sm:$0xff]
  %v1613 = vld [vmem:[#allocation2 + $0x1a3] sm:$0xff]
  %v1614 = vld [vmem:[#allocation2 + $0x1b3] sm:$0xff]
  %v1615 = vld [vmem:[#allocation2 + $0x1bb] sm:$0xff]
  %v1616 = vld [vmem:[#allocation2 + $0x1cb] sm:$0xff]
  %v1617 = vld [vmem:[#allocation2 + $0x1d3] sm:$0xff]
  %1650 = vrot.lane.b32.xlu0 %v1578, 64
  %v1651 = vpop.permute.xlu0 %1650
  %1652 = vrot.lane.b32.xlu0 %v1579, 64
  %v1653 = vpop.permute.xlu0 %1652
  %1654 = vrot.lane.b32.xlu0 %v1580, 64
  %v1655 = vpop.permute.xlu0 %1654
  %1656 = vrot.lane.b32.xlu0 %v1581, 64
  %v1657 = vpop.permute.xlu0 %1656
  %1658 = vrot.lane.b32.xlu0 %v1582, 64
  %v1659 = vpop.permute.xlu0 %1658
  %1660 = vrot.lane.b32.xlu0 %v1583, 64
  %v1661 = vpop.permute.xlu0 %1660
  %1662 = vrot.lane.b32.xlu0 %v1584, 64
  %v1663 = vpop.permute.xlu0 %1662
  %1664 = vrot.lane.b32.xlu0 %v1585, 64
  %v1665 = vpop.permute.xlu0 %1664
  %1666 = vrot.lane.b32.xlu0 %v1586, 64
  %v1667 = vpop.permute.xlu0 %1666
  %1668 = vrot.lane.b32.xlu0 %v1587, 64
  %v1669 = vpop.permute.xlu0 %1668
  %1670 = vrot.lane.b32.xlu0 %v1588, 64
  %v1671 = vpop.permute.xlu0 %1670
  %1672 = vrot.lane.b32.xlu0 %v1589, 64
  %v1673 = vpop.permute.xlu0 %1672
  %1674 = vrot.lane.b32.xlu0 %v1590, 64
  %v1675 = vpop.permute.xlu0 %1674
  %1676 = vrot.lane.b32.xlu0 %v1591, 64
  %v1677 = vpop.permute.xlu0 %1676
  %1678 = vrot.lane.b32.xlu0 %v1592, 64
  %v1679 = vpop.permute.xlu0 %1678
  %1680 = vrot.lane.b32.xlu0 %v1593, 64
  %v1681 = vpop.permute.xlu0 %1680
  %1682 = vrot.lane.b32.xlu0 %v1594, 64
  %v1683 = vpop.permute.xlu0 %1682
  %1684 = vrot.lane.b32.xlu0 %v1595, 64
  %v1685 = vpop.permute.xlu0 %1684
  %1686 = vrot.lane.b32.xlu0 %v1596, 64
  %v1687 = vpop.permute.xlu0 %1686
  %1688 = vrot.lane.b32.xlu0 %v1597, 64
  %v1689 = vpop.permute.xlu0 %1688
  %1690 = vrot.lane.b32.xlu0 %v1598, 64
  %v1691 = vpop.permute.xlu0 %1690
  %1692 = vrot.lane.b32.xlu0 %v1599, 64
  %v1693 = vpop.permute.xlu0 %1692
  %1694 = vrot.lane.b32.xlu0 %v1600, 64
  %v1695 = vpop.permute.xlu0 %1694
  %1696 = vrot.lane.b32.xlu0 %v1601, 64
  %v1697 = vpop.permute.xlu0 %1696
  %1698 = vrot.lane.b32.xlu0 %v1602, 64
  %v1699 = vpop.permute.xlu0 %1698
  %1700 = vrot.lane.b32.xlu0 %v1603, 64
  %v1701 = vpop.permute.xlu0 %1700
  %1702 = vrot.lane.b32.xlu0 %v1604, 64
  %v1703 = vpop.permute.xlu0 %1702
  %1704 = vrot.lane.b32.xlu0 %v1605, 64
  %v1705 = vpop.permute.xlu0 %1704
  %1706 = vrot.lane.b32.xlu0 %v1606, 64
  %v1707 = vpop.permute.xlu0 %1706
  %1708 = vrot.lane.b32.xlu0 %v1607, 64
  %v1709 = vpop.permute.xlu0 %1708
  %1710 = vrot.lane.b32.xlu0 %v1608, 64
  %v1711 = vpop.permute.xlu0 %1710
  %1712 = vrot.lane.b32.xlu0 %v1609, 64
  %v1713 = vpop.permute.xlu0 %1712
  %1746 = vst.msk [vmem:[#allocation3 + $0x8] sm:$0xff] %vm729, %v1651
  %1747 = vst.msk [vmem:[#allocation3 + $0x70] sm:$0xff] %vm729, %v1653
  %1748 = vst.msk [vmem:[#allocation3 + $0xd8] sm:$0xff] %vm729, %v1655
  %1749 = vst.msk [vmem:[#allocation3 + $0x140] sm:$0xff] %vm729, %v1657
  %1750 = vst.msk [vmem:[#allocation3 + $0x1a8] sm:$0xff] %vm729, %v1659
  %1751 = vst.msk [vmem:[#allocation3 + $0x210] sm:$0xff] %vm729, %v1661
  %1752 = vst.msk [vmem:[#allocation3 + $0x278] sm:$0xff] %vm729, %v1663
  %1753 = vst.msk [vmem:[#allocation3 + $0x2e0] sm:$0xff] %vm729, %v1665
  %1754 = vst.msk [vmem:[#allocation3 + $0x348] sm:$0xff] %vm729, %v1667
  %1755 = vst.msk [vmem:[#allocation3 + $0x3b0] sm:$0xff] %vm729, %v1669
  %1756 = vst.msk [vmem:[#allocation3 + $0x418] sm:$0xff] %vm729, %v1671
  %1757 = vst.msk [vmem:[#allocation3 + $0x480] sm:$0xff] %vm729, %v1673
  %1758 = vst.msk [vmem:[#allocation3 + $0x4e8] sm:$0xff] %vm729, %v1675
  %1759 = vst.msk [vmem:[#allocation3 + $0x550] sm:$0xff] %vm729, %v1677
  %1760 = vst.msk [vmem:[#allocation3 + $0x5b8] sm:$0xff] %vm729, %v1679
  %1761 = vst.msk [vmem:[#allocation3 + $0x620] sm:$0xff] %vm729, %v1681
  %1762 = vst.msk [vmem:[#allocation3 + $0x688] sm:$0xff] %vm729, %v1683
  %1763 = vst.msk [vmem:[#allocation3 + $0x6f0] sm:$0xff] %vm729, %v1685
  %1764 = vst.msk [vmem:[#allocation3 + $0x758] sm:$0xff] %vm729, %v1687
  %1765 = vst.msk [vmem:[#allocation3 + $0x7c0] sm:$0xff] %vm729, %v1689
  %1766 = vst.msk [vmem:[#allocation3 + $0x828] sm:$0xff] %vm729, %v1691
  %1767 = vst.msk [vmem:[#allocation3 + $0x890] sm:$0xff] %vm729, %v1693
  %1768 = vst.msk [vmem:[#allocation3 + $0x8f8] sm:$0xff] %vm729, %v1695
  %1769 = vst.msk [vmem:[#allocation3 + $0x960] sm:$0xff] %vm729, %v1697
  %1770 = vst.msk [vmem:[#allocation3 + $0x9c8] sm:$0xff] %vm729, %v1699
  %1771 = vst.msk [vmem:[#allocation3 + $0xa30] sm:$0xff] %vm729, %v1701
  %1772 = vst.msk [vmem:[#allocation3 + $0xa98] sm:$0xff] %vm729, %v1703
  %1773 = vst.msk [vmem:[#allocation3 + $0xb00] sm:$0xff] %vm729, %v1705
  %1774 = vst.msk [vmem:[#allocation3 + $0xb68] sm:$0xff] %vm729, %v1707
  %1775 = vst.msk [vmem:[#allocation3 + $0xbd0] sm:$0xff] %vm729, %v1709
  %1776 = vst.msk [vmem:[#allocation3 + $0xc38] sm:$0xff] %vm729, %v1711
  %1777 = vst.msk [vmem:[#allocation3 + $0xca0] sm:$0xff] %vm729, %v1713
  %1778 = vst.msk [vmem:[#allocation3 + $0x20] sm:$0xff] %vm434, %v1580
  %1779 = vst.msk [vmem:[#allocation3 + $0x88] sm:$0xff] %vm434, %v1581
  %1780 = vst.msk [vmem:[#allocation3 + $0xf0] sm:$0xff] %vm434, %v1582
  %1781 = vst.msk [vmem:[#allocation3 + $0x158] sm:$0xff] %vm434, %v1583
  %1782 = vst.msk [vmem:[#allocation3 + $0x1c0] sm:$0xff] %vm434, %v1584
  %1783 = vst.msk [vmem:[#allocation3 + $0x228] sm:$0xff] %vm434, %v1585
  %1784 = vst.msk [vmem:[#allocation3 + $0x290] sm:$0xff] %vm434, %v1586
  %1785 = vst.msk [vmem:[#allocation3 + $0x2f8] sm:$0xff] %vm434, %v1587
  %1786 = vst.msk [vmem:[#allocation3 + $0x360] sm:$0xff] %vm434, %v1588
  %1787 = vst.msk [vmem:[#allocation3 + $0x3c8] sm:$0xff] %vm434, %v1589
  %1788 = vst.msk [vmem:[#allocation3 + $0x430] sm:$0xff] %vm434, %v1590
  %1789 = vst.msk [vmem:[#allocation3 + $0x498] sm:$0xff] %vm434, %v1591
  %1790 = vst.msk [vmem:[#allocation3 + $0x500] sm:$0xff] %vm434, %v1592
  %1791 = vst.msk [vmem:[#allocation3 + $0x568] sm:$0xff] %vm434, %v1593
  %1792 = vst.msk [vmem:[#allocation3 + $0x5d0] sm:$0xff] %vm434, %v1594
  %1793 = vst.msk [vmem:[#allocation3 + $0x638] sm:$0xff] %vm434, %v1595
  %1794 = vst.msk [vmem:[#allocation3 + $0x6a0] sm:$0xff] %vm434, %v1596
  %1795 = vst.msk [vmem:[#allocation3 + $0x708] sm:$0xff] %vm434, %v1597
  %1796 = vst.msk [vmem:[#allocation3 + $0x770] sm:$0xff] %vm434, %v1598
  %1797 = vst.msk [vmem:[#allocation3 + $0x7d8] sm:$0xff] %vm434, %v1599
  %1798 = vst.msk [vmem:[#allocation3 + $0x840] sm:$0xff] %vm434, %v1600
  %1799 = vst.msk [vmem:[#allocation3 + $0x8a8] sm:$0xff] %vm434, %v1601
  %1800 = vst.msk [vmem:[#allocation3 + $0x910] sm:$0xff] %vm434, %v1602
  %1801 = vst.msk [vmem:[#allocation3 + $0x978] sm:$0xff] %vm434, %v1603
  %1802 = vst.msk [vmem:[#allocation3 + $0x9e0] sm:$0xff] %vm434, %v1604
  %1803 = vst.msk [vmem:[#allocation3 + $0xa48] sm:$0xff] %vm434, %v1605
  %1804 = vst.msk [vmem:[#allocation3 + $0xab0] sm:$0xff] %vm434, %v1606
  %1805 = vst.msk [vmem:[#allocation3 + $0xb18] sm:$0xff] %vm434, %v1607
  %1806 = vst.msk [vmem:[#allocation3 + $0xb80] sm:$0xff] %vm434, %v1608
  %1807 = vst.msk [vmem:[#allocation3 + $0xbe8] sm:$0xff] %vm434, %v1609
  %1808 = vst.msk [vmem:[#allocation3 + $0xc50] sm:$0xff] %vm434, %v1610
  %1809 = vst.msk [vmem:[#allocation3 + $0xcb8] sm:$0xff] %vm434, %v1611
  %1814 = vrot.lane.b32.xlu0 %v1610, 64
  %v1815 = vpop.permute.xlu0 %1814
  %1816 = vrot.lane.b32.xlu0 %v1611, 64
  %v1817 = vpop.permute.xlu0 %1816
  %1818 = vrot.lane.b32.xlu0 %v1612, 64
  %v1819 = vpop.permute.xlu0 %1818
  %1820 = vrot.lane.b32.xlu0 %v1613, 64
  %v1821 = vpop.permute.xlu0 %1820
  %1826 = vst.msk [vmem:[#allocation3 + $0x30] sm:$0xff] %vm729, %v1659
  %1827 = vst.msk [vmem:[#allocation3 + $0x98] sm:$0xff] %vm729, %v1661
  %1828 = vst.msk [vmem:[#allocation3 + $0x100] sm:$0xff] %vm729, %v1663
  %1829 = vst.msk [vmem:[#allocation3 + $0x168] sm:$0xff] %vm729, %v1665
  %1830 = vst.msk [vmem:[#allocation3 + $0x1d0] sm:$0xff] %vm729, %v1667
  %1831 = vst.msk [vmem:[#allocation3 + $0x238] sm:$0xff] %vm729, %v1669
  %1832 = vst.msk [vmem:[#allocation3 + $0x2a0] sm:$0xff] %vm729, %v1671
  %1833 = vst.msk [vmem:[#allocation3 + $0x308] sm:$0xff] %vm729, %v1673
  %1834 = vst.msk [vmem:[#allocation3 + $0x370] sm:$0xff] %vm729, %v1675
  %1835 = vst.msk [vmem:[#allocation3 + $0x3d8] sm:$0xff] %vm729, %v1677
  %1836 = vst.msk [vmem:[#allocation3 + $0x440] sm:$0xff] %vm729, %v1679
  %1837 = vst.msk [vmem:[#allocation3 + $0x4a8] sm:$0xff] %vm729, %v1681
  %1838 = vst.msk [vmem:[#allocation3 + $0x510] sm:$0xff] %vm729, %v1683
  %1839 = vst.msk [vmem:[#allocation3 + $0x578] sm:$0xff] %vm729, %v1685
  %1840 = vst.msk [vmem:[#allocation3 + $0x5e0] sm:$0xff] %vm729, %v1687
  %1841 = vst.msk [vmem:[#allocation3 + $0x648] sm:$0xff] %vm729, %v1689
  %1842 = vst.msk [vmem:[#allocation3 + $0x6b0] sm:$0xff] %vm729, %v1691
  %1843 = vst.msk [vmem:[#allocation3 + $0x718] sm:$0xff] %vm729, %v1693
  %1844 = vst.msk [vmem:[#allocation3 + $0x780] sm:$0xff] %vm729, %v1695
  %1845 = vst.msk [vmem:[#allocation3 + $0x7e8] sm:$0xff] %vm729, %v1697
  %1846 = vst.msk [vmem:[#allocation3 + $0x850] sm:$0xff] %vm729, %v1699
  %1847 = vst.msk [vmem:[#allocation3 + $0x8b8] sm:$0xff] %vm729, %v1701
  %1848 = vst.msk [vmem:[#allocation3 + $0x920] sm:$0xff] %vm729, %v1703
  %1849 = vst.msk [vmem:[#allocation3 + $0x988] sm:$0xff] %vm729, %v1705
  %1850 = vst.msk [vmem:[#allocation3 + $0x9f0] sm:$0xff] %vm729, %v1707
  %1851 = vst.msk [vmem:[#allocation3 + $0xa58] sm:$0xff] %vm729, %v1709
  %1852 = vst.msk [vmem:[#allocation3 + $0xac0] sm:$0xff] %vm729, %v1711
  %1853 = vst.msk [vmem:[#allocation3 + $0xb28] sm:$0xff] %vm729, %v1713
  %1854 = vst.msk [vmem:[#allocation3 + $0xb90] sm:$0xff] %vm729, %v1815
  %1855 = vst.msk [vmem:[#allocation3 + $0xbf8] sm:$0xff] %vm729, %v1817
  %1856 = vst.msk [vmem:[#allocation3 + $0xc60] sm:$0xff] %vm729, %v1819
  %1857 = vst.msk [vmem:[#allocation3 + $0xcc8] sm:$0xff] %vm729, %v1821
  %1858 = vst.msk [vmem:[#allocation3 + $0x48] sm:$0xff] %vm434, %v1584
  %1859 = vst.msk [vmem:[#allocation3 + $0xb0] sm:$0xff] %vm434, %v1585
  %1860 = vst.msk [vmem:[#allocation3 + $0x118] sm:$0xff] %vm434, %v1586
  %1861 = vst.msk [vmem:[#allocation3 + $0x180] sm:$0xff] %vm434, %v1587
  %1862 = vst.msk [vmem:[#allocation3 + $0x1e8] sm:$0xff] %vm434, %v1588
  %1863 = vst.msk [vmem:[#allocation3 + $0x250] sm:$0xff] %vm434, %v1589
  %1864 = vst.msk [vmem:[#allocation3 + $0x2b8] sm:$0xff] %vm434, %v1590
  %1865 = vst.msk [vmem:[#allocation3 + $0x320] sm:$0xff] %vm434, %v1591
  %1866 = vst.msk [vmem:[#allocation3 + $0x388] sm:$0xff] %vm434, %v1592
  %1867 = vst.msk [vmem:[#allocation3 + $0x3f0] sm:$0xff] %vm434, %v1593
  %1868 = vst.msk [vmem:[#allocation3 + $0x458] sm:$0xff] %vm434, %v1594
  %1869 = vst.msk [vmem:[#allocation3 + $0x4c0] sm:$0xff] %vm434, %v1595
  %1870 = vst.msk [vmem:[#allocation3 + $0x528] sm:$0xff] %vm434, %v1596
  %1871 = vst.msk [vmem:[#allocation3 + $0x590] sm:$0xff] %vm434, %v1597
  %1872 = vst.msk [vmem:[#allocation3 + $0x5f8] sm:$0xff] %vm434, %v1598
  %1873 = vst.msk [vmem:[#allocation3 + $0x660] sm:$0xff] %vm434, %v1599
  %1874 = vst.msk [vmem:[#allocation3 + $0x6c8] sm:$0xff] %vm434, %v1600
  %1875 = vst.msk [vmem:[#allocation3 + $0x730] sm:$0xff] %vm434, %v1601
  %1876 = vst.msk [vmem:[#allocation3 + $0x798] sm:$0xff] %vm434, %v1602
  %1877 = vst.msk [vmem:[#allocation3 + $0x800] sm:$0xff] %vm434, %v1603
  %1878 = vst.msk [vmem:[#allocation3 + $0x868] sm:$0xff] %vm434, %v1604
  %1879 = vst.msk [vmem:[#allocation3 + $0x8d0] sm:$0xff] %vm434, %v1605
  %1880 = vst.msk [vmem:[#allocation3 + $0x938] sm:$0xff] %vm434, %v1606
  %1881 = vst.msk [vmem:[#allocation3 + $0x9a0] sm:$0xff] %vm434, %v1607
  %1882 = vst.msk [vmem:[#allocation3 + $0xa08] sm:$0xff] %vm434, %v1608
  %1883 = vst.msk [vmem:[#allocation3 + $0xa70] sm:$0xff] %vm434, %v1609
  %1884 = vst.msk [vmem:[#allocation3 + $0xad8] sm:$0xff] %vm434, %v1610
  %1885 = vst.msk [vmem:[#allocation3 + $0xb40] sm:$0xff] %vm434, %v1611
  %1886 = vst.msk [vmem:[#allocation3 + $0xba8] sm:$0xff] %vm434, %v1612
  %1887 = vst.msk [vmem:[#allocation3 + $0xc10] sm:$0xff] %vm434, %v1613
  %1888 = vst.msk [vmem:[#allocation3 + $0xc78] sm:$0xff] %vm434, %v1614
  %1889 = vst.msk [vmem:[#allocation3 + $0xce0] sm:$0xff] %vm434, %v1615
  %1894 = vrot.lane.b32.xlu0 %v1614, 64
  %v1895 = vpop.permute.xlu0 %1894
  %1896 = vrot.lane.b32.xlu0 %v1615, 64
  %v1897 = vpop.permute.xlu0 %1896
  %1898 = vrot.lane.b32.xlu0 %v1616, 64
  %v1899 = vpop.permute.xlu0 %1898
  %1900 = vrot.lane.b32.xlu0 %v1617, 64
  %v1901 = vpop.permute.xlu0 %1900
  %1906 = vst.msk [vmem:[#allocation3 + $0x58] sm:$0xff] %vm729, %v1667
  %1907 = vst.msk [vmem:[#allocation3 + $0xc0] sm:$0xff] %vm729, %v1669
  %1908 = vst.msk [vmem:[#allocation3 + $0x128] sm:$0xff] %vm729, %v1671
  %1909 = vst.msk [vmem:[#allocation3 + $0x190] sm:$0xff] %vm729, %v1673
  %1910 = vst.msk [vmem:[#allocation3 + $0x1f8] sm:$0xff] %vm729, %v1675
  %1911 = vst.msk [vmem:[#allocation3 + $0x260] sm:$0xff] %vm729, %v1677
  %1912 = vst.msk [vmem:[#allocation3 + $0x2c8] sm:$0xff] %vm729, %v1679
  %1913 = vst.msk [vmem:[#allocation3 + $0x330] sm:$0xff] %vm729, %v1681
  %1914 = vst.msk [vmem:[#allocation3 + $0x398] sm:$0xff] %vm729, %v1683
  %1915 = vst.msk [vmem:[#allocation3 + $0x400] sm:$0xff] %vm729, %v1685
  %1916 = vst.msk [vmem:[#allocation3 + $0x468] sm:$0xff] %vm729, %v1687
  %1917 = vst.msk [vmem:[#allocation3 + $0x4d0] sm:$0xff] %vm729, %v1689
  %1918 = vst.msk [vmem:[#allocation3 + $0x538] sm:$0xff] %vm729, %v1691
  %1919 = vst.msk [vmem:[#allocation3 + $0x5a0] sm:$0xff] %vm729, %v1693
  %1920 = vst.msk [vmem:[#allocation3 + $0x608] sm:$0xff] %vm729, %v1695
  %1921 = vst.msk [vmem:[#allocation3 + $0x670] sm:$0xff] %vm729, %v1697
  %1922 = vst.msk [vmem:[#allocation3 + $0x6d8] sm:$0xff] %vm729, %v1699
  %1923 = vst.msk [vmem:[#allocation3 + $0x740] sm:$0xff] %vm729, %v1701
  %1924 = vst.msk [vmem:[#allocation3 + $0x7a8] sm:$0xff] %vm729, %v1703
  %1925 = vst.msk [vmem:[#allocation3 + $0x810] sm:$0xff] %vm729, %v1705
  %1926 = vst.msk [vmem:[#allocation3 + $0x878] sm:$0xff] %vm729, %v1707
  %1927 = vst.msk [vmem:[#allocation3 + $0x8e0] sm:$0xff] %vm729, %v1709
  %1928 = vst.msk [vmem:[#allocation3 + $0x948] sm:$0xff] %vm729, %v1711
  %1929 = vst.msk [vmem:[#allocation3 + $0x9b0] sm:$0xff] %vm729, %v1713
  %1930 = vst.msk [vmem:[#allocation3 + $0xa18] sm:$0xff] %vm729, %v1815
  %1931 = vst.msk [vmem:[#allocation3 + $0xa80] sm:$0xff] %vm729, %v1817
  %1932 = vst.msk [vmem:[#allocation3 + $0xae8] sm:$0xff] %vm729, %v1819
  %1933 = vst.msk [vmem:[#allocation3 + $0xb50] sm:$0xff] %vm729, %v1821
  %1934 = vst.msk [vmem:[#allocation3 + $0xbb8] sm:$0xff] %vm729, %v1895
  %1935 = vst.msk [vmem:[#allocation3 + $0xc20] sm:$0xff] %vm729, %v1897
  %1936 = vst.msk [vmem:[#allocation3 + $0xc88] sm:$0xff] %vm729, %v1899
  %1937 = vst.msk [vmem:[#allocation3 + $0xcf0] sm:$0xff] %vm729, %v1901
  %v1938 = vld [vmem:[#allocation2 + $0x4] sm:$0xff]
  %v1939 = vld [vmem:[#allocation2 + $0xc] sm:$0xff]
  %v1940 = vld [vmem:[#allocation2 + $0x1c] sm:$0xff]
  %v1941 = vld [vmem:[#allocation2 + $0x24] sm:$0xff]
  %v1942 = vld [vmem:[#allocation2 + $0x34] sm:$0xff]
  %v1943 = vld [vmem:[#allocation2 + $0x3c] sm:$0xff]
  %v1944 = vld [vmem:[#allocation2 + $0x4c] sm:$0xff]
  %v1945 = vld [vmem:[#allocation2 + $0x54] sm:$0xff]
  %v1946 = vld [vmem:[#allocation2 + $0x64] sm:$0xff]
  %v1947 = vld [vmem:[#allocation2 + $0x6c] sm:$0xff]
  %v1948 = vld [vmem:[#allocation2 + $0x7c] sm:$0xff]
  %v1949 = vld [vmem:[#allocation2 + $0x84] sm:$0xff]
  %v1950 = vld [vmem:[#allocation2 + $0x94] sm:$0xff]
  %v1951 = vld [vmem:[#allocation2 + $0x9c] sm:$0xff]
  %v1952 = vld [vmem:[#allocation2 + $0xac] sm:$0xff]
  %v1953 = vld [vmem:[#allocation2 + $0xb4] sm:$0xff]
  %v1954 = vld [vmem:[#allocation2 + $0xc4] sm:$0xff]
  %v1955 = vld [vmem:[#allocation2 + $0xcc] sm:$0xff]
  %v1956 = vld [vmem:[#allocation2 + $0xdc] sm:$0xff]
  %v1957 = vld [vmem:[#allocation2 + $0xe4] sm:$0xff]
  %v1958 = vld [vmem:[#allocation2 + $0xf4] sm:$0xff]
  %v1959 = vld [vmem:[#allocation2 + $0xfc] sm:$0xff]
  %v1960 = vld [vmem:[#allocation2 + $0x10c] sm:$0xff]
  %v1961 = vld [vmem:[#allocation2 + $0x114] sm:$0xff]
  %v1962 = vld [vmem:[#allocation2 + $0x124] sm:$0xff]
  %v1963 = vld [vmem:[#allocation2 + $0x12c] sm:$0xff]
  %v1964 = vld [vmem:[#allocation2 + $0x13c] sm:$0xff]
  %v1965 = vld [vmem:[#allocation2 + $0x144] sm:$0xff]
  %v1966 = vld [vmem:[#allocation2 + $0x154] sm:$0xff]
  %v1967 = vld [vmem:[#allocation2 + $0x15c] sm:$0xff]
  %v1968 = vld [vmem:[#allocation2 + $0x16c] sm:$0xff]
  %v1969 = vld [vmem:[#allocation2 + $0x174] sm:$0xff]
  %v1970 = vld [vmem:[#allocation2 + $0x184] sm:$0xff]
  %v1971 = vld [vmem:[#allocation2 + $0x18c] sm:$0xff]
  %v1972 = vld [vmem:[#allocation2 + $0x19c] sm:$0xff]
  %v1973 = vld [vmem:[#allocation2 + $0x1a4] sm:$0xff]
  %v1974 = vld [vmem:[#allocation2 + $0x1b4] sm:$0xff]
  %v1975 = vld [vmem:[#allocation2 + $0x1bc] sm:$0xff]
  %v1976 = vld [vmem:[#allocation2 + $0x1cc] sm:$0xff]
  %v1977 = vld [vmem:[#allocation2 + $0x1d4] sm:$0xff]
  %1978 = vst.msk [vmem:[#allocation3 + $0x10] sm:$0xff] %vm434, %v1938
  %1979 = vst.msk [vmem:[#allocation3 + $0x78] sm:$0xff] %vm434, %v1939
  %1980 = vst.msk [vmem:[#allocation3 + $0xe0] sm:$0xff] %vm434, %v1940
  %1981 = vst.msk [vmem:[#allocation3 + $0x148] sm:$0xff] %vm434, %v1941
  %1982 = vst.msk [vmem:[#allocation3 + $0x1b0] sm:$0xff] %vm434, %v1942
  %1983 = vst.msk [vmem:[#allocation3 + $0x218] sm:$0xff] %vm434, %v1943
  %1984 = vst.msk [vmem:[#allocation3 + $0x280] sm:$0xff] %vm434, %v1944
  %1985 = vst.msk [vmem:[#allocation3 + $0x2e8] sm:$0xff] %vm434, %v1945
  %1986 = vst.msk [vmem:[#allocation3 + $0x350] sm:$0xff] %vm434, %v1946
  %1987 = vst.msk [vmem:[#allocation3 + $0x3b8] sm:$0xff] %vm434, %v1947
  %1988 = vst.msk [vmem:[#allocation3 + $0x420] sm:$0xff] %vm434, %v1948
  %1989 = vst.msk [vmem:[#allocation3 + $0x488] sm:$0xff] %vm434, %v1949
  %1990 = vst.msk [vmem:[#allocation3 + $0x4f0] sm:$0xff] %vm434, %v1950
  %1991 = vst.msk [vmem:[#allocation3 + $0x558] sm:$0xff] %vm434, %v1951
  %1992 = vst.msk [vmem:[#allocation3 + $0x5c0] sm:$0xff] %vm434, %v1952
  %1993 = vst.msk [vmem:[#allocation3 + $0x628] sm:$0xff] %vm434, %v1953
  %1994 = vst.msk [vmem:[#allocation3 + $0x690] sm:$0xff] %vm434, %v1954
  %1995 = vst.msk [vmem:[#allocation3 + $0x6f8] sm:$0xff] %vm434, %v1955
  %1996 = vst.msk [vmem:[#allocation3 + $0x760] sm:$0xff] %vm434, %v1956
  %1997 = vst.msk [vmem:[#allocation3 + $0x7c8] sm:$0xff] %vm434, %v1957
  %1998 = vst.msk [vmem:[#allocation3 + $0x830] sm:$0xff] %vm434, %v1958
  %1999 = vst.msk [vmem:[#allocation3 + $0x898] sm:$0xff] %vm434, %v1959
  %2000 = vst.msk [vmem:[#allocation3 + $0x900] sm:$0xff] %vm434, %v1960
  %2001 = vst.msk [vmem:[#allocation3 + $0x968] sm:$0xff] %vm434, %v1961
  %2002 = vst.msk [vmem:[#allocation3 + $0x9d0] sm:$0xff] %vm434, %v1962
  %2003 = vst.msk [vmem:[#allocation3 + $0xa38] sm:$0xff] %vm434, %v1963
  %2004 = vst.msk [vmem:[#allocation3 + $0xaa0] sm:$0xff] %vm434, %v1964
  %2005 = vst.msk [vmem:[#allocation3 + $0xb08] sm:$0xff] %vm434, %v1965
  %2006 = vst.msk [vmem:[#allocation3 + $0xb70] sm:$0xff] %vm434, %v1966
  %2007 = vst.msk [vmem:[#allocation3 + $0xbd8] sm:$0xff] %vm434, %v1967
  %2008 = vst.msk [vmem:[#allocation3 + $0xc40] sm:$0xff] %vm434, %v1968
  %2009 = vst.msk [vmem:[#allocation3 + $0xca8] sm:$0xff] %vm434, %v1969
  %2042 = vrot.lane.b32.xlu0 %v1940, 64
  %v2043 = vpop.permute.xlu0 %2042
  %2044 = vrot.lane.b32.xlu0 %v1941, 64
  %v2045 = vpop.permute.xlu0 %2044
  %2046 = vrot.lane.b32.xlu0 %v1942, 64
  %v2047 = vpop.permute.xlu0 %2046
  %2048 = vrot.lane.b32.xlu0 %v1943, 64
  %v2049 = vpop.permute.xlu0 %2048
  %2050 = vrot.lane.b32.xlu0 %v1944, 64
  %v2051 = vpop.permute.xlu0 %2050
  %2052 = vrot.lane.b32.xlu0 %v1945, 64
  %v2053 = vpop.permute.xlu0 %2052
  %2054 = vrot.lane.b32.xlu0 %v1946, 64
  %v2055 = vpop.permute.xlu0 %2054
  %2056 = vrot.lane.b32.xlu0 %v1947, 64
  %v2057 = vpop.permute.xlu0 %2056
  %2058 = vrot.lane.b32.xlu0 %v1948, 64
  %v2059 = vpop.permute.xlu0 %2058
  %2060 = vrot.lane.b32.xlu0 %v1949, 64
  %v2061 = vpop.permute.xlu0 %2060
  %2062 = vrot.lane.b32.xlu0 %v1950, 64
  %v2063 = vpop.permute.xlu0 %2062
  %2064 = vrot.lane.b32.xlu0 %v1951, 64
  %v2065 = vpop.permute.xlu0 %2064
  %2066 = vrot.lane.b32.xlu0 %v1952, 64
  %v2067 = vpop.permute.xlu0 %2066
  %2068 = vrot.lane.b32.xlu0 %v1953, 64
  %v2069 = vpop.permute.xlu0 %2068
  %2070 = vrot.lane.b32.xlu0 %v1954, 64
  %v2071 = vpop.permute.xlu0 %2070
  %2072 = vrot.lane.b32.xlu0 %v1955, 64
  %v2073 = vpop.permute.xlu0 %2072
  %2074 = vrot.lane.b32.xlu0 %v1956, 64
  %v2075 = vpop.permute.xlu0 %2074
  %2076 = vrot.lane.b32.xlu0 %v1957, 64
  %v2077 = vpop.permute.xlu0 %2076
  %2078 = vrot.lane.b32.xlu0 %v1958, 64
  %v2079 = vpop.permute.xlu0 %2078
  %2080 = vrot.lane.b32.xlu0 %v1959, 64
  %v2081 = vpop.permute.xlu0 %2080
  %2082 = vrot.lane.b32.xlu0 %v1960, 64
  %v2083 = vpop.permute.xlu0 %2082
  %2084 = vrot.lane.b32.xlu0 %v1961, 64
  %v2085 = vpop.permute.xlu0 %2084
  %2086 = vrot.lane.b32.xlu0 %v1962, 64
  %v2087 = vpop.permute.xlu0 %2086
  %2088 = vrot.lane.b32.xlu0 %v1963, 64
  %v2089 = vpop.permute.xlu0 %2088
  %2090 = vrot.lane.b32.xlu0 %v1964, 64
  %v2091 = vpop.permute.xlu0 %2090
  %2092 = vrot.lane.b32.xlu0 %v1965, 64
  %v2093 = vpop.permute.xlu0 %2092
  %2094 = vrot.lane.b32.xlu0 %v1966, 64
  %v2095 = vpop.permute.xlu0 %2094
  %2096 = vrot.lane.b32.xlu0 %v1967, 64
  %v2097 = vpop.permute.xlu0 %2096
  %2098 = vrot.lane.b32.xlu0 %v1968, 64
  %v2099 = vpop.permute.xlu0 %2098
  %2100 = vrot.lane.b32.xlu0 %v1969, 64
  %v2101 = vpop.permute.xlu0 %2100
  %2102 = vrot.lane.b32.xlu0 %v1970, 64
  %v2103 = vpop.permute.xlu0 %2102
  %2104 = vrot.lane.b32.xlu0 %v1971, 64
  %v2105 = vpop.permute.xlu0 %2104
  %2138 = vst.msk [vmem:[#allocation3 + $0x20] sm:$0xff] %vm729, %v2043
  %2139 = vst.msk [vmem:[#allocation3 + $0x88] sm:$0xff] %vm729, %v2045
  %2140 = vst.msk [vmem:[#allocation3 + $0xf0] sm:$0xff] %vm729, %v2047
  %2141 = vst.msk [vmem:[#allocation3 + $0x158] sm:$0xff] %vm729, %v2049
  %2142 = vst.msk [vmem:[#allocation3 + $0x1c0] sm:$0xff] %vm729, %v2051
  %2143 = vst.msk [vmem:[#allocation3 + $0x228] sm:$0xff] %vm729, %v2053
  %2144 = vst.msk [vmem:[#allocation3 + $0x290] sm:$0xff] %vm729, %v2055
  %2145 = vst.msk [vmem:[#allocation3 + $0x2f8] sm:$0xff] %vm729, %v2057
  %2146 = vst.msk [vmem:[#allocation3 + $0x360] sm:$0xff] %vm729, %v2059
  %2147 = vst.msk [vmem:[#allocation3 + $0x3c8] sm:$0xff] %vm729, %v2061
  %2148 = vst.msk [vmem:[#allocation3 + $0x430] sm:$0xff] %vm729, %v2063
  %2149 = vst.msk [vmem:[#allocation3 + $0x498] sm:$0xff] %vm729, %v2065
  %2150 = vst.msk [vmem:[#allocation3 + $0x500] sm:$0xff] %vm729, %v2067
  %2151 = vst.msk [vmem:[#allocation3 + $0x568] sm:$0xff] %vm729, %v2069
  %2152 = vst.msk [vmem:[#allocation3 + $0x5d0] sm:$0xff] %vm729, %v2071
  %2153 = vst.msk [vmem:[#allocation3 + $0x638] sm:$0xff] %vm729, %v2073
  %2154 = vst.msk [vmem:[#allocation3 + $0x6a0] sm:$0xff] %vm729, %v2075
  %2155 = vst.msk [vmem:[#allocation3 + $0x708] sm:$0xff] %vm729, %v2077
  %2156 = vst.msk [vmem:[#allocation3 + $0x770] sm:$0xff] %vm729, %v2079
  %2157 = vst.msk [vmem:[#allocation3 + $0x7d8] sm:$0xff] %vm729, %v2081
  %2158 = vst.msk [vmem:[#allocation3 + $0x840] sm:$0xff] %vm729, %v2083
  %2159 = vst.msk [vmem:[#allocation3 + $0x8a8] sm:$0xff] %vm729, %v2085
  %2160 = vst.msk [vmem:[#allocation3 + $0x910] sm:$0xff] %vm729, %v2087
  %2161 = vst.msk [vmem:[#allocation3 + $0x978] sm:$0xff] %vm729, %v2089
  %2162 = vst.msk [vmem:[#allocation3 + $0x9e0] sm:$0xff] %vm729, %v2091
  %2163 = vst.msk [vmem:[#allocation3 + $0xa48] sm:$0xff] %vm729, %v2093
  %2164 = vst.msk [vmem:[#allocation3 + $0xab0] sm:$0xff] %vm729, %v2095
  %2165 = vst.msk [vmem:[#allocation3 + $0xb18] sm:$0xff] %vm729, %v2097
  %2166 = vst.msk [vmem:[#allocation3 + $0xb80] sm:$0xff] %vm729, %v2099
  %2167 = vst.msk [vmem:[#allocation3 + $0xbe8] sm:$0xff] %vm729, %v2101
  %2168 = vst.msk [vmem:[#allocation3 + $0xc50] sm:$0xff] %vm729, %v2103
  %2169 = vst.msk [vmem:[#allocation3 + $0xcb8] sm:$0xff] %vm729, %v2105
  %2170 = vst.msk [vmem:[#allocation3 + $0x38] sm:$0xff] %vm434, %v1942
  %2171 = vst.msk [vmem:[#allocation3 + $0xa0] sm:$0xff] %vm434, %v1943
  %2172 = vst.msk [vmem:[#allocation3 + $0x108] sm:$0xff] %vm434, %v1944
  %2173 = vst.msk [vmem:[#allocation3 + $0x170] sm:$0xff] %vm434, %v1945
  %2174 = vst.msk [vmem:[#allocation3 + $0x1d8] sm:$0xff] %vm434, %v1946
  %2175 = vst.msk [vmem:[#allocation3 + $0x240] sm:$0xff] %vm434, %v1947
  %2176 = vst.msk [vmem:[#allocation3 + $0x2a8] sm:$0xff] %vm434, %v1948
  %2177 = vst.msk [vmem:[#allocation3 + $0x310] sm:$0xff] %vm434, %v1949
  %2178 = vst.msk [vmem:[#allocation3 + $0x378] sm:$0xff] %vm434, %v1950
  %2179 = vst.msk [vmem:[#allocation3 + $0x3e0] sm:$0xff] %vm434, %v1951
  %2180 = vst.msk [vmem:[#allocation3 + $0x448] sm:$0xff] %vm434, %v1952
  %2181 = vst.msk [vmem:[#allocation3 + $0x4b0] sm:$0xff] %vm434, %v1953
  %2182 = vst.msk [vmem:[#allocation3 + $0x518] sm:$0xff] %vm434, %v1954
  %2183 = vst.msk [vmem:[#allocation3 + $0x580] sm:$0xff] %vm434, %v1955
  %2184 = vst.msk [vmem:[#allocation3 + $0x5e8] sm:$0xff] %vm434, %v1956
  %2185 = vst.msk [vmem:[#allocation3 + $0x650] sm:$0xff] %vm434, %v1957
  %2186 = vst.msk [vmem:[#allocation3 + $0x6b8] sm:$0xff] %vm434, %v1958
  %2187 = vst.msk [vmem:[#allocation3 + $0x720] sm:$0xff] %vm434, %v1959
  %2188 = vst.msk [vmem:[#allocation3 + $0x788] sm:$0xff] %vm434, %v1960
  %2189 = vst.msk [vmem:[#allocation3 + $0x7f0] sm:$0xff] %vm434, %v1961
  %2190 = vst.msk [vmem:[#allocation3 + $0x858] sm:$0xff] %vm434, %v1962
  %2191 = vst.msk [vmem:[#allocation3 + $0x8c0] sm:$0xff] %vm434, %v1963
  %2192 = vst.msk [vmem:[#allocation3 + $0x928] sm:$0xff] %vm434, %v1964
  %2193 = vst.msk [vmem:[#allocation3 + $0x990] sm:$0xff] %vm434, %v1965
  %2194 = vst.msk [vmem:[#allocation3 + $0x9f8] sm:$0xff] %vm434, %v1966
  %2195 = vst.msk [vmem:[#allocation3 + $0xa60] sm:$0xff] %vm434, %v1967
  %2196 = vst.msk [vmem:[#allocation3 + $0xac8] sm:$0xff] %vm434, %v1968
  %2197 = vst.msk [vmem:[#allocation3 + $0xb30] sm:$0xff] %vm434, %v1969
  %2198 = vst.msk [vmem:[#allocation3 + $0xb98] sm:$0xff] %vm434, %v1970
  %2199 = vst.msk [vmem:[#allocation3 + $0xc00] sm:$0xff] %vm434, %v1971
  %2200 = vst.msk [vmem:[#allocation3 + $0xc68] sm:$0xff] %vm434, %v1972
  %2201 = vst.msk [vmem:[#allocation3 + $0xcd0] sm:$0xff] %vm434, %v1973
  %2206 = vrot.lane.b32.xlu0 %v1972, 64
  %v2207 = vpop.permute.xlu0 %2206
  %2208 = vrot.lane.b32.xlu0 %v1973, 64
  %v2209 = vpop.permute.xlu0 %2208
  %2210 = vrot.lane.b32.xlu0 %v1974, 64
  %v2211 = vpop.permute.xlu0 %2210
  %2212 = vrot.lane.b32.xlu0 %v1975, 64
  %v2213 = vpop.permute.xlu0 %2212
  %2218 = vst.msk [vmem:[#allocation3 + $0x48] sm:$0xff] %vm729, %v2051
  %2219 = vst.msk [vmem:[#allocation3 + $0xb0] sm:$0xff] %vm729, %v2053
  %2220 = vst.msk [vmem:[#allocation3 + $0x118] sm:$0xff] %vm729, %v2055
  %2221 = vst.msk [vmem:[#allocation3 + $0x180] sm:$0xff] %vm729, %v2057
  %2222 = vst.msk [vmem:[#allocation3 + $0x1e8] sm:$0xff] %vm729, %v2059
  %2223 = vst.msk [vmem:[#allocation3 + $0x250] sm:$0xff] %vm729, %v2061
  %2224 = vst.msk [vmem:[#allocation3 + $0x2b8] sm:$0xff] %vm729, %v2063
  %2225 = vst.msk [vmem:[#allocation3 + $0x320] sm:$0xff] %vm729, %v2065
  %2226 = vst.msk [vmem:[#allocation3 + $0x388] sm:$0xff] %vm729, %v2067
  %2227 = vst.msk [vmem:[#allocation3 + $0x3f0] sm:$0xff] %vm729, %v2069
  %2228 = vst.msk [vmem:[#allocation3 + $0x458] sm:$0xff] %vm729, %v2071
  %2229 = vst.msk [vmem:[#allocation3 + $0x4c0] sm:$0xff] %vm729, %v2073
  %2230 = vst.msk [vmem:[#allocation3 + $0x528] sm:$0xff] %vm729, %v2075
  %2231 = vst.msk [vmem:[#allocation3 + $0x590] sm:$0xff] %vm729, %v2077
  %2232 = vst.msk [vmem:[#allocation3 + $0x5f8] sm:$0xff] %vm729, %v2079
  %2233 = vst.msk [vmem:[#allocation3 + $0x660] sm:$0xff] %vm729, %v2081
  %2234 = vst.msk [vmem:[#allocation3 + $0x6c8] sm:$0xff] %vm729, %v2083
  %2235 = vst.msk [vmem:[#allocation3 + $0x730] sm:$0xff] %vm729, %v2085
  %2236 = vst.msk [vmem:[#allocation3 + $0x798] sm:$0xff] %vm729, %v2087
  %2237 = vst.msk [vmem:[#allocation3 + $0x800] sm:$0xff] %vm729, %v2089
  %2238 = vst.msk [vmem:[#allocation3 + $0x868] sm:$0xff] %vm729, %v2091
  %2239 = vst.msk [vmem:[#allocation3 + $0x8d0] sm:$0xff] %vm729, %v2093
  %2240 = vst.msk [vmem:[#allocation3 + $0x938] sm:$0xff] %vm729, %v2095
  %2241 = vst.msk [vmem:[#allocation3 + $0x9a0] sm:$0xff] %vm729, %v2097
  %2242 = vst.msk [vmem:[#allocation3 + $0xa08] sm:$0xff] %vm729, %v2099
  %2243 = vst.msk [vmem:[#allocation3 + $0xa70] sm:$0xff] %vm729, %v2101
  %2244 = vst.msk [vmem:[#allocation3 + $0xad8] sm:$0xff] %vm729, %v2103
  %2245 = vst.msk [vmem:[#allocation3 + $0xb40] sm:$0xff] %vm729, %v2105
  %2246 = vst.msk [vmem:[#allocation3 + $0xba8] sm:$0xff] %vm729, %v2207
  %2247 = vst.msk [vmem:[#allocation3 + $0xc10] sm:$0xff] %vm729, %v2209
  %2248 = vst.msk [vmem:[#allocation3 + $0xc78] sm:$0xff] %vm729, %v2211
  %2249 = vst.msk [vmem:[#allocation3 + $0xce0] sm:$0xff] %vm729, %v2213
  %2250 = vst.msk [vmem:[#allocation3 + $0x60] sm:$0xff] %vm434, %v1946
  %2251 = vst.msk [vmem:[#allocation3 + $0xc8] sm:$0xff] %vm434, %v1947
  %2252 = vst.msk [vmem:[#allocation3 + $0x130] sm:$0xff] %vm434, %v1948
  %2253 = vst.msk [vmem:[#allocation3 + $0x198] sm:$0xff] %vm434, %v1949
  %2254 = vst.msk [vmem:[#allocation3 + $0x200] sm:$0xff] %vm434, %v1950
  %2255 = vst.msk [vmem:[#allocation3 + $0x268] sm:$0xff] %vm434, %v1951
  %2256 = vst.msk [vmem:[#allocation3 + $0x2d0] sm:$0xff] %vm434, %v1952
  %2257 = vst.msk [vmem:[#allocation3 + $0x338] sm:$0xff] %vm434, %v1953
  %2258 = vst.msk [vmem:[#allocation3 + $0x3a0] sm:$0xff] %vm434, %v1954
  %2259 = vst.msk [vmem:[#allocation3 + $0x408] sm:$0xff] %vm434, %v1955
  %2260 = vst.msk [vmem:[#allocation3 + $0x470] sm:$0xff] %vm434, %v1956
  %2261 = vst.msk [vmem:[#allocation3 + $0x4d8] sm:$0xff] %vm434, %v1957
  %2262 = vst.msk [vmem:[#allocation3 + $0x540] sm:$0xff] %vm434, %v1958
  %2263 = vst.msk [vmem:[#allocation3 + $0x5a8] sm:$0xff] %vm434, %v1959
  %2264 = vst.msk [vmem:[#allocation3 + $0x610] sm:$0xff] %vm434, %v1960
  %2265 = vst.msk [vmem:[#allocation3 + $0x678] sm:$0xff] %vm434, %v1961
  %2266 = vst.msk [vmem:[#allocation3 + $0x6e0] sm:$0xff] %vm434, %v1962
  %2267 = vst.msk [vmem:[#allocation3 + $0x748] sm:$0xff] %vm434, %v1963
  %2268 = vst.msk [vmem:[#allocation3 + $0x7b0] sm:$0xff] %vm434, %v1964
  %2269 = vst.msk [vmem:[#allocation3 + $0x818] sm:$0xff] %vm434, %v1965
  %2270 = vst.msk [vmem:[#allocation3 + $0x880] sm:$0xff] %vm434, %v1966
  %2271 = vst.msk [vmem:[#allocation3 + $0x8e8] sm:$0xff] %vm434, %v1967
  %2272 = vst.msk [vmem:[#allocation3 + $0x950] sm:$0xff] %vm434, %v1968
  %2273 = vst.msk [vmem:[#allocation3 + $0x9b8] sm:$0xff] %vm434, %v1969
  %2274 = vst.msk [vmem:[#allocation3 + $0xa20] sm:$0xff] %vm434, %v1970
  %2275 = vst.msk [vmem:[#allocation3 + $0xa88] sm:$0xff] %vm434, %v1971
  %2276 = vst.msk [vmem:[#allocation3 + $0xaf0] sm:$0xff] %vm434, %v1972
  %2277 = vst.msk [vmem:[#allocation3 + $0xb58] sm:$0xff] %vm434, %v1973
  %2278 = vst.msk [vmem:[#allocation3 + $0xbc0] sm:$0xff] %vm434, %v1974
  %2279 = vst.msk [vmem:[#allocation3 + $0xc28] sm:$0xff] %vm434, %v1975
  %2280 = vst.msk [vmem:[#allocation3 + $0xc90] sm:$0xff] %vm434, %v1976
  %2281 = vst.msk [vmem:[#allocation3 + $0xcf8] sm:$0xff] %vm434, %v1977
  %v2282 = vld [vmem:[#allocation3] sm:$0xff]
  %v2283 = vld [vmem:[#allocation3 + $0x8] sm:$0xff]
  %v2284 = vld [vmem:[#allocation3 + $0x10] sm:$0xff]
  %v2285 = vld [vmem:[#allocation3 + $0x18] sm:$0xff]
  %v2286 = vld [vmem:[#allocation3 + $0x20] sm:$0xff]
  %v2287 = vld [vmem:[#allocation3 + $0x28] sm:$0xff]
  %v2288 = vld [vmem:[#allocation3 + $0x30] sm:$0xff]
  %v2289 = vld [vmem:[#allocation3 + $0x38] sm:$0xff]
  %v2290 = vld [vmem:[#allocation3 + $0x40] sm:$0xff]
  %v2291 = vld [vmem:[#allocation3 + $0x48] sm:$0xff]
  %v2292 = vld [vmem:[#allocation3 + $0x50] sm:$0xff]
  %v2293 = vld [vmem:[#allocation3 + $0x58] sm:$0xff]
  %v2294 = vld [vmem:[#allocation3 + $0x60] sm:$0xff]
  %v2295 = vld [vmem:[#allocation3 + $0x68] sm:$0xff]
  %v2296 = vld [vmem:[#allocation3 + $0x70] sm:$0xff]
  %v2297 = vld [vmem:[#allocation3 + $0x78] sm:$0xff]
  %v2298 = vld [vmem:[#allocation3 + $0x80] sm:$0xff]
  %v2299 = vld [vmem:[#allocation3 + $0x88] sm:$0xff]
  %v2300 = vld [vmem:[#allocation3 + $0x90] sm:$0xff]
  %v2301 = vld [vmem:[#allocation3 + $0x98] sm:$0xff]
  %v2302 = vld [vmem:[#allocation3 + $0xa0] sm:$0xff]
  %v2303 = vld [vmem:[#allocation3 + $0xa8] sm:$0xff]
  %v2304 = vld [vmem:[#allocation3 + $0xb0] sm:$0xff]
  %v2305 = vld [vmem:[#allocation3 + $0xb8] sm:$0xff]
  %v2306 = vld [vmem:[#allocation3 + $0xc0] sm:$0xff]
  %v2307 = vld [vmem:[#allocation3 + $0xc8] sm:$0xff]
  %v2308 = vld [vmem:[#allocation3 + $0xd0] sm:$0xff]
  %v2309 = vld [vmem:[#allocation3 + $0xd8] sm:$0xff]
  %v2310 = vld [vmem:[#allocation3 + $0xe0] sm:$0xff]
  %v2311 = vld [vmem:[#allocation3 + $0xe8] sm:$0xff]
  %v2312 = vld [vmem:[#allocation3 + $0xf0] sm:$0xff]
  %v2313 = vld [vmem:[#allocation3 + $0xf8] sm:$0xff]
  %v2314 = vld [vmem:[#allocation3 + $0x100] sm:$0xff]
  %v2315 = vld [vmem:[#allocation3 + $0x108] sm:$0xff]
  %v2316 = vld [vmem:[#allocation3 + $0x110] sm:$0xff]
  %v2317 = vld [vmem:[#allocation3 + $0x118] sm:$0xff]
  %v2318 = vld [vmem:[#allocation3 + $0x120] sm:$0xff]
  %v2319 = vld [vmem:[#allocation3 + $0x128] sm:$0xff]
  %v2320 = vld [vmem:[#allocation3 + $0x130] sm:$0xff]
  %v2321 = vld [vmem:[#allocation3 + $0x138] sm:$0xff]
  %v2322 = vld [vmem:[#allocation3 + $0x140] sm:$0xff]
  %v2323 = vld [vmem:[#allocation3 + $0x148] sm:$0xff]
  %v2324 = vld [vmem:[#allocation3 + $0x150] sm:$0xff]
  %v2325 = vld [vmem:[#allocation3 + $0x158] sm:$0xff]
  %v2326 = vld [vmem:[#allocation3 + $0x160] sm:$0xff]
  %v2327 = vld [vmem:[#allocation3 + $0x168] sm:$0xff]
  %v2328 = vld [vmem:[#allocation3 + $0x170] sm:$0xff]
  %v2329 = vld [vmem:[#allocation3 + $0x178] sm:$0xff]
  %v2330 = vld [vmem:[#allocation3 + $0x180] sm:$0xff]
  %v2331 = vld [vmem:[#allocation3 + $0x188] sm:$0xff]
  %v2332 = vld [vmem:[#allocation3 + $0x190] sm:$0xff]
  %v2333 = vld [vmem:[#allocation3 + $0x198] sm:$0xff]
  %v2334 = vld [vmem:[#allocation3 + $0x1a0] sm:$0xff]
  %v2335 = vld [vmem:[#allocation3 + $0x1a8] sm:$0xff]
  %v2336 = vld [vmem:[#allocation3 + $0x1b0] sm:$0xff]
  %v2337 = vld [vmem:[#allocation3 + $0x1b8] sm:$0xff]
  %v2338 = vld [vmem:[#allocation3 + $0x1c0] sm:$0xff]
  %v2339 = vld [vmem:[#allocation3 + $0x1c8] sm:$0xff]
  %v2340 = vld [vmem:[#allocation3 + $0x1d0] sm:$0xff]
  %v2341 = vld [vmem:[#allocation3 + $0x1d8] sm:$0xff]
  %v2342 = vld [vmem:[#allocation3 + $0x1e0] sm:$0xff]
  %v2343 = vld [vmem:[#allocation3 + $0x1e8] sm:$0xff]
  %v2344 = vld [vmem:[#allocation3 + $0x1f0] sm:$0xff]
  %v2345 = vld [vmem:[#allocation3 + $0x1f8] sm:$0xff]
  %v2346 = vld [vmem:[#allocation3 + $0x200] sm:$0xff]
  %v2347 = vld [vmem:[#allocation3 + $0x208] sm:$0xff]
  %v2348 = vld [vmem:[#allocation3 + $0x210] sm:$0xff]
  %v2349 = vld [vmem:[#allocation3 + $0x218] sm:$0xff]
  %v2350 = vld [vmem:[#allocation3 + $0x220] sm:$0xff]
  %v2351 = vld [vmem:[#allocation3 + $0x228] sm:$0xff]
  %v2352 = vld [vmem:[#allocation3 + $0x230] sm:$0xff]
  %v2353 = vld [vmem:[#allocation3 + $0x238] sm:$0xff]
  %v2354 = vld [vmem:[#allocation3 + $0x240] sm:$0xff]
  %v2355 = vld [vmem:[#allocation3 + $0x248] sm:$0xff]
  %v2356 = vld [vmem:[#allocation3 + $0x250] sm:$0xff]
  %v2357 = vld [vmem:[#allocation3 + $0x258] sm:$0xff]
  %v2358 = vld [vmem:[#allocation3 + $0x260] sm:$0xff]
  %v2359 = vld [vmem:[#allocation3 + $0x268] sm:$0xff]
  %v2360 = vld [vmem:[#allocation3 + $0x270] sm:$0xff]
  %v2361 = vld [vmem:[#allocation3 + $0x278] sm:$0xff]
  %v2362 = vld [vmem:[#allocation3 + $0x280] sm:$0xff]
  %v2363 = vld [vmem:[#allocation3 + $0x288] sm:$0xff]
  %v2364 = vld [vmem:[#allocation3 + $0x290] sm:$0xff]
  %v2365 = vld [vmem:[#allocation3 + $0x298] sm:$0xff]
  %v2366 = vld [vmem:[#allocation3 + $0x2a0] sm:$0xff]
  %v2367 = vld [vmem:[#allocation3 + $0x2a8] sm:$0xff]
  %v2368 = vld [vmem:[#allocation3 + $0x2b0] sm:$0xff]
  %v2369 = vld [vmem:[#allocation3 + $0x2b8] sm:$0xff]
  %v2370 = vld [vmem:[#allocation3 + $0x2c0] sm:$0xff]
  %v2371 = vld [vmem:[#allocation3 + $0x2c8] sm:$0xff]
  %v2372 = vld [vmem:[#allocation3 + $0x2d0] sm:$0xff]
  %v2373 = vld [vmem:[#allocation3 + $0x2d8] sm:$0xff]
  %v2374 = vld [vmem:[#allocation3 + $0x2e0] sm:$0xff]
  %v2375 = vld [vmem:[#allocation3 + $0x2e8] sm:$0xff]
  %v2376 = vld [vmem:[#allocation3 + $0x2f0] sm:$0xff]
  %v2377 = vld [vmem:[#allocation3 + $0x2f8] sm:$0xff]
  %v2378 = vld [vmem:[#allocation3 + $0x300] sm:$0xff]
  %v2379 = vld [vmem:[#allocation3 + $0x308] sm:$0xff]
  %v2380 = vld [vmem:[#allocation3 + $0x310] sm:$0xff]
  %v2381 = vld [vmem:[#allocation3 + $0x318] sm:$0xff]
  %v2382 = vld [vmem:[#allocation3 + $0x320] sm:$0xff]
  %v2383 = vld [vmem:[#allocation3 + $0x328] sm:$0xff]
  %v2384 = vld [vmem:[#allocation3 + $0x330] sm:$0xff]
  %v2385 = vld [vmem:[#allocation3 + $0x338] sm:$0xff]
  %v2386 = vld [vmem:[#allocation3 + $0x340] sm:$0xff]
  %v2387 = vld [vmem:[#allocation3 + $0x348] sm:$0xff]
  %v2388 = vld [vmem:[#allocation3 + $0x350] sm:$0xff]
  %v2389 = vld [vmem:[#allocation3 + $0x358] sm:$0xff]
  %v2390 = vld [vmem:[#allocation3 + $0x360] sm:$0xff]
  %v2391 = vld [vmem:[#allocation3 + $0x368] sm:$0xff]
  %v2392 = vld [vmem:[#allocation3 + $0x370] sm:$0xff]
  %v2393 = vld [vmem:[#allocation3 + $0x378] sm:$0xff]
  %v2394 = vld [vmem:[#allocation3 + $0x380] sm:$0xff]
  %v2395 = vld [vmem:[#allocation3 + $0x388] sm:$0xff]
  %v2396 = vld [vmem:[#allocation3 + $0x390] sm:$0xff]
  %v2397 = vld [vmem:[#allocation3 + $0x398] sm:$0xff]
  %v2398 = vld [vmem:[#allocation3 + $0x3a0] sm:$0xff]
  %v2399 = vld [vmem:[#allocation3 + $0x3a8] sm:$0xff]
  %v2400 = vld [vmem:[#allocation3 + $0x3b0] sm:$0xff]
  %v2401 = vld [vmem:[#allocation3 + $0x3b8] sm:$0xff]
  %v2402 = vld [vmem:[#allocation3 + $0x3c0] sm:$0xff]
  %v2403 = vld [vmem:[#allocation3 + $0x3c8] sm:$0xff]
  %v2404 = vld [vmem:[#allocation3 + $0x3d0] sm:$0xff]
  %v2405 = vld [vmem:[#allocation3 + $0x3d8] sm:$0xff]
  %v2406 = vld [vmem:[#allocation3 + $0x3e0] sm:$0xff]
  %v2407 = vld [vmem:[#allocation3 + $0x3e8] sm:$0xff]
  %v2408 = vld [vmem:[#allocation3 + $0x3f0] sm:$0xff]
  %v2409 = vld [vmem:[#allocation3 + $0x3f8] sm:$0xff]
  %v2410 = vld [vmem:[#allocation3 + $0x400] sm:$0xff]
  %v2411 = vld [vmem:[#allocation3 + $0x408] sm:$0xff]
  %v2412 = vld [vmem:[#allocation3 + $0x410] sm:$0xff]
  %v2413 = vld [vmem:[#allocation3 + $0x418] sm:$0xff]
  %v2414 = vld [vmem:[#allocation3 + $0x420] sm:$0xff]
  %v2415 = vld [vmem:[#allocation3 + $0x428] sm:$0xff]
  %v2416 = vld [vmem:[#allocation3 + $0x430] sm:$0xff]
  %v2417 = vld [vmem:[#allocation3 + $0x438] sm:$0xff]
  %v2418 = vld [vmem:[#allocation3 + $0x440] sm:$0xff]
  %v2419 = vld [vmem:[#allocation3 + $0x448] sm:$0xff]
  %v2420 = vld [vmem:[#allocation3 + $0x450] sm:$0xff]
  %v2421 = vld [vmem:[#allocation3 + $0x458] sm:$0xff]
  %v2422 = vld [vmem:[#allocation3 + $0x460] sm:$0xff]
  %v2423 = vld [vmem:[#allocation3 + $0x468] sm:$0xff]
  %v2424 = vld [vmem:[#allocation3 + $0x470] sm:$0xff]
  %v2425 = vld [vmem:[#allocation3 + $0x478] sm:$0xff]
  %v2426 = vld [vmem:[#allocation3 + $0x480] sm:$0xff]
  %v2427 = vld [vmem:[#allocation3 + $0x488] sm:$0xff]
  %v2428 = vld [vmem:[#allocation3 + $0x490] sm:$0xff]
  %v2429 = vld [vmem:[#allocation3 + $0x498] sm:$0xff]
  %v2430 = vld [vmem:[#allocation3 + $0x4a0] sm:$0xff]
  %v2431 = vld [vmem:[#allocation3 + $0x4a8] sm:$0xff]
  %v2432 = vld [vmem:[#allocation3 + $0x4b0] sm:$0xff]
  %v2433 = vld [vmem:[#allocation3 + $0x4b8] sm:$0xff]
  %v2434 = vld [vmem:[#allocation3 + $0x4c0] sm:$0xff]
  %v2435 = vld [vmem:[#allocation3 + $0x4c8] sm:$0xff]
  %v2436 = vld [vmem:[#allocation3 + $0x4d0] sm:$0xff]
  %v2437 = vld [vmem:[#allocation3 + $0x4d8] sm:$0xff]
  %v2438 = vld [vmem:[#allocation3 + $0x4e0] sm:$0xff]
  %v2439 = vld [vmem:[#allocation3 + $0x4e8] sm:$0xff]
  %v2440 = vld [vmem:[#allocation3 + $0x4f0] sm:$0xff]
  %v2441 = vld [vmem:[#allocation3 + $0x4f8] sm:$0xff]
  %v2442 = vld [vmem:[#allocation3 + $0x500] sm:$0xff]
  %v2443 = vld [vmem:[#allocation3 + $0x508] sm:$0xff]
  %v2444 = vld [vmem:[#allocation3 + $0x510] sm:$0xff]
  %v2445 = vld [vmem:[#allocation3 + $0x518] sm:$0xff]
  %v2446 = vld [vmem:[#allocation3 + $0x520] sm:$0xff]
  %v2447 = vld [vmem:[#allocation3 + $0x528] sm:$0xff]
  %v2448 = vld [vmem:[#allocation3 + $0x530] sm:$0xff]
  %v2449 = vld [vmem:[#allocation3 + $0x538] sm:$0xff]
  %v2450 = vld [vmem:[#allocation3 + $0x540] sm:$0xff]
  %v2451 = vld [vmem:[#allocation3 + $0x548] sm:$0xff]
  %v2452 = vld [vmem:[#allocation3 + $0x550] sm:$0xff]
  %v2453 = vld [vmem:[#allocation3 + $0x558] sm:$0xff]
  %v2454 = vld [vmem:[#allocation3 + $0x560] sm:$0xff]
  %v2455 = vld [vmem:[#allocation3 + $0x568] sm:$0xff]
  %v2456 = vld [vmem:[#allocation3 + $0x570] sm:$0xff]
  %v2457 = vld [vmem:[#allocation3 + $0x578] sm:$0xff]
  %v2458 = vld [vmem:[#allocation3 + $0x580] sm:$0xff]
  %v2459 = vld [vmem:[#allocation3 + $0x588] sm:$0xff]
  %v2460 = vld [vmem:[#allocation3 + $0x590] sm:$0xff]
  %v2461 = vld [vmem:[#allocation3 + $0x598] sm:$0xff]
  %v2462 = vld [vmem:[#allocation3 + $0x5a0] sm:$0xff]
  %v2463 = vld [vmem:[#allocation3 + $0x5a8] sm:$0xff]
  %v2464 = vld [vmem:[#allocation3 + $0x5b0] sm:$0xff]
  %v2465 = vld [vmem:[#allocation3 + $0x5b8] sm:$0xff]
  %v2466 = vld [vmem:[#allocation3 + $0x5c0] sm:$0xff]
  %v2467 = vld [vmem:[#allocation3 + $0x5c8] sm:$0xff]
  %v2468 = vld [vmem:[#allocation3 + $0x5d0] sm:$0xff]
  %v2469 = vld [vmem:[#allocation3 + $0x5d8] sm:$0xff]
  %v2470 = vld [vmem:[#allocation3 + $0x5e0] sm:$0xff]
  %v2471 = vld [vmem:[#allocation3 + $0x5e8] sm:$0xff]
  %v2472 = vld [vmem:[#allocation3 + $0x5f0] sm:$0xff]
  %v2473 = vld [vmem:[#allocation3 + $0x5f8] sm:$0xff]
  %v2474 = vld [vmem:[#allocation3 + $0x600] sm:$0xff]
  %v2475 = vld [vmem:[#allocation3 + $0x608] sm:$0xff]
  %v2476 = vld [vmem:[#allocation3 + $0x610] sm:$0xff]
  %v2477 = vld [vmem:[#allocation3 + $0x618] sm:$0xff]
  %v2478 = vld [vmem:[#allocation3 + $0x620] sm:$0xff]
  %v2479 = vld [vmem:[#allocation3 + $0x628] sm:$0xff]
  %v2480 = vld [vmem:[#allocation3 + $0x630] sm:$0xff]
  %v2481 = vld [vmem:[#allocation3 + $0x638] sm:$0xff]
  %v2482 = vld [vmem:[#allocation3 + $0x640] sm:$0xff]
  %v2483 = vld [vmem:[#allocation3 + $0x648] sm:$0xff]
  %v2484 = vld [vmem:[#allocation3 + $0x650] sm:$0xff]
  %v2485 = vld [vmem:[#allocation3 + $0x658] sm:$0xff]
  %v2486 = vld [vmem:[#allocation3 + $0x660] sm:$0xff]
  %v2487 = vld [vmem:[#allocation3 + $0x668] sm:$0xff]
  %v2488 = vld [vmem:[#allocation3 + $0x670] sm:$0xff]
  %v2489 = vld [vmem:[#allocation3 + $0x678] sm:$0xff]
  %v2490 = vld [vmem:[#allocation3 + $0x680] sm:$0xff]
  %v2491 = vld [vmem:[#allocation3 + $0x688] sm:$0xff]
  %v2492 = vld [vmem:[#allocation3 + $0x690] sm:$0xff]
  %v2493 = vld [vmem:[#allocation3 + $0x698] sm:$0xff]
  %v2494 = vld [vmem:[#allocation3 + $0x6a0] sm:$0xff]
  %v2495 = vld [vmem:[#allocation3 + $0x6a8] sm:$0xff]
  %v2496 = vld [vmem:[#allocation3 + $0x6b0] sm:$0xff]
  %v2497 = vld [vmem:[#allocation3 + $0x6b8] sm:$0xff]
  %v2498 = vld [vmem:[#allocation3 + $0x6c0] sm:$0xff]
  %v2499 = vld [vmem:[#allocation3 + $0x6c8] sm:$0xff]
  %v2500 = vld [vmem:[#allocation3 + $0x6d0] sm:$0xff]
  %v2501 = vld [vmem:[#allocation3 + $0x6d8] sm:$0xff]
  %v2502 = vld [vmem:[#allocation3 + $0x6e0] sm:$0xff]
  %v2503 = vld [vmem:[#allocation3 + $0x6e8] sm:$0xff]
  %v2504 = vld [vmem:[#allocation3 + $0x6f0] sm:$0xff]
  %v2505 = vld [vmem:[#allocation3 + $0x6f8] sm:$0xff]
  %v2506 = vld [vmem:[#allocation3 + $0x700] sm:$0xff]
  %v2507 = vld [vmem:[#allocation3 + $0x708] sm:$0xff]
  %v2508 = vld [vmem:[#allocation3 + $0x710] sm:$0xff]
  %v2509 = vld [vmem:[#allocation3 + $0x718] sm:$0xff]
  %v2510 = vld [vmem:[#allocation3 + $0x720] sm:$0xff]
  %v2511 = vld [vmem:[#allocation3 + $0x728] sm:$0xff]
  %v2512 = vld [vmem:[#allocation3 + $0x730] sm:$0xff]
  %v2513 = vld [vmem:[#allocation3 + $0x738] sm:$0xff]
  %v2514 = vld [vmem:[#allocation3 + $0x740] sm:$0xff]
  %v2515 = vld [vmem:[#allocation3 + $0x748] sm:$0xff]
  %v2516 = vld [vmem:[#allocation3 + $0x750] sm:$0xff]
  %v2517 = vld [vmem:[#allocation3 + $0x758] sm:$0xff]
  %v2518 = vld [vmem:[#allocation3 + $0x760] sm:$0xff]
  %v2519 = vld [vmem:[#allocation3 + $0x768] sm:$0xff]
  %v2520 = vld [vmem:[#allocation3 + $0x770] sm:$0xff]
  %v2521 = vld [vmem:[#allocation3 + $0x778] sm:$0xff]
  %v2522 = vld [vmem:[#allocation3 + $0x780] sm:$0xff]
  %v2523 = vld [vmem:[#allocation3 + $0x788] sm:$0xff]
  %v2524 = vld [vmem:[#allocation3 + $0x790] sm:$0xff]
  %v2525 = vld [vmem:[#allocation3 + $0x798] sm:$0xff]
  %v2526 = vld [vmem:[#allocation3 + $0x7a0] sm:$0xff]
  %v2527 = vld [vmem:[#allocation3 + $0x7a8] sm:$0xff]
  %v2528 = vld [vmem:[#allocation3 + $0x7b0] sm:$0xff]
  %v2529 = vld [vmem:[#allocation3 + $0x7b8] sm:$0xff]
  %v2530 = vld [vmem:[#allocation3 + $0x7c0] sm:$0xff]
  %v2531 = vld [vmem:[#allocation3 + $0x7c8] sm:$0xff]
  %v2532 = vld [vmem:[#allocation3 + $0x7d0] sm:$0xff]
  %v2533 = vld [vmem:[#allocation3 + $0x7d8] sm:$0xff]
  %v2534 = vld [vmem:[#allocation3 + $0x7e0] sm:$0xff]
  %v2535 = vld [vmem:[#allocation3 + $0x7e8] sm:$0xff]
  %v2536 = vld [vmem:[#allocation3 + $0x7f0] sm:$0xff]
  %v2537 = vld [vmem:[#allocation3 + $0x7f8] sm:$0xff]
  %v2538 = vld [vmem:[#allocation3 + $0x800] sm:$0xff]
  %v2539 = vld [vmem:[#allocation3 + $0x808] sm:$0xff]
  %v2540 = vld [vmem:[#allocation3 + $0x810] sm:$0xff]
  %v2541 = vld [vmem:[#allocation3 + $0x818] sm:$0xff]
  %v2542 = vld [vmem:[#allocation3 + $0x820] sm:$0xff]
  %v2543 = vld [vmem:[#allocation3 + $0x828] sm:$0xff]
  %v2544 = vld [vmem:[#allocation3 + $0x830] sm:$0xff]
  %v2545 = vld [vmem:[#allocation3 + $0x838] sm:$0xff]
  %v2546 = vld [vmem:[#allocation3 + $0x840] sm:$0xff]
  %v2547 = vld [vmem:[#allocation3 + $0x848] sm:$0xff]
  %v2548 = vld [vmem:[#allocation3 + $0x850] sm:$0xff]
  %v2549 = vld [vmem:[#allocation3 + $0x858] sm:$0xff]
  %v2550 = vld [vmem:[#allocation3 + $0x860] sm:$0xff]
  %v2551 = vld [vmem:[#allocation3 + $0x868] sm:$0xff]
  %v2552 = vld [vmem:[#allocation3 + $0x870] sm:$0xff]
  %v2553 = vld [vmem:[#allocation3 + $0x878] sm:$0xff]
  %v2554 = vld [vmem:[#allocation3 + $0x880] sm:$0xff]
  %v2555 = vld [vmem:[#allocation3 + $0x888] sm:$0xff]
  %v2556 = vld [vmem:[#allocation3 + $0x890] sm:$0xff]
  %v2557 = vld [vmem:[#allocation3 + $0x898] sm:$0xff]
  %v2558 = vld [vmem:[#allocation3 + $0x8a0] sm:$0xff]
  %v2559 = vld [vmem:[#allocation3 + $0x8a8] sm:$0xff]
  %v2560 = vld [vmem:[#allocation3 + $0x8b0] sm:$0xff]
  %v2561 = vld [vmem:[#allocation3 + $0x8b8] sm:$0xff]
  %v2562 = vld [vmem:[#allocation3 + $0x8c0] sm:$0xff]
  %v2563 = vld [vmem:[#allocation3 + $0x8c8] sm:$0xff]
  %v2564 = vld [vmem:[#allocation3 + $0x8d0] sm:$0xff]
  %v2565 = vld [vmem:[#allocation3 + $0x8d8] sm:$0xff]
  %v2566 = vld [vmem:[#allocation3 + $0x8e0] sm:$0xff]
  %v2567 = vld [vmem:[#allocation3 + $0x8e8] sm:$0xff]
  %v2568 = vld [vmem:[#allocation3 + $0x8f0] sm:$0xff]
  %v2569 = vld [vmem:[#allocation3 + $0x8f8] sm:$0xff]
  %v2570 = vld [vmem:[#allocation3 + $0x900] sm:$0xff]
  %v2571 = vld [vmem:[#allocation3 + $0x908] sm:$0xff]
  %v2572 = vld [vmem:[#allocation3 + $0x910] sm:$0xff]
  %v2573 = vld [vmem:[#allocation3 + $0x918] sm:$0xff]
  %v2574 = vld [vmem:[#allocation3 + $0x920] sm:$0xff]
  %v2575 = vld [vmem:[#allocation3 + $0x928] sm:$0xff]
  %v2576 = vld [vmem:[#allocation3 + $0x930] sm:$0xff]
  %v2577 = vld [vmem:[#allocation3 + $0x938] sm:$0xff]
  %v2578 = vld [vmem:[#allocation3 + $0x940] sm:$0xff]
  %v2579 = vld [vmem:[#allocation3 + $0x948] sm:$0xff]
  %v2580 = vld [vmem:[#allocation3 + $0x950] sm:$0xff]
  %v2581 = vld [vmem:[#allocation3 + $0x958] sm:$0xff]
  %v2582 = vld [vmem:[#allocation3 + $0x960] sm:$0xff]
  %v2583 = vld [vmem:[#allocation3 + $0x968] sm:$0xff]
  %v2584 = vld [vmem:[#allocation3 + $0x970] sm:$0xff]
  %v2585 = vld [vmem:[#allocation3 + $0x978] sm:$0xff]
  %v2586 = vld [vmem:[#allocation3 + $0x980] sm:$0xff]
  %v2587 = vld [vmem:[#allocation3 + $0x988] sm:$0xff]
  %v2588 = vld [vmem:[#allocation3 + $0x990] sm:$0xff]
  %v2589 = vld [vmem:[#allocation3 + $0x998] sm:$0xff]
  %v2590 = vld [vmem:[#allocation3 + $0x9a0] sm:$0xff]
  %v2591 = vld [vmem:[#allocation3 + $0x9a8] sm:$0xff]
  %v2592 = vld [vmem:[#allocation3 + $0x9b0] sm:$0xff]
  %v2593 = vld [vmem:[#allocation3 + $0x9b8] sm:$0xff]
  %v2594 = vld [vmem:[#allocation3 + $0x9c0] sm:$0xff]
  %v2595 = vld [vmem:[#allocation3 + $0x9c8] sm:$0xff]
  %v2596 = vld [vmem:[#allocation3 + $0x9d0] sm:$0xff]
  %v2597 = vld [vmem:[#allocation3 + $0x9d8] sm:$0xff]
  %v2598 = vld [vmem:[#allocation3 + $0x9e0] sm:$0xff]
  %v2599 = vld [vmem:[#allocation3 + $0x9e8] sm:$0xff]
  %v2600 = vld [vmem:[#allocation3 + $0x9f0] sm:$0xff]
  %v2601 = vld [vmem:[#allocation3 + $0x9f8] sm:$0xff]
  %v2602 = vld [vmem:[#allocation3 + $0xa00] sm:$0xff]
  %v2603 = vld [vmem:[#allocation3 + $0xa08] sm:$0xff]
  %v2604 = vld [vmem:[#allocation3 + $0xa10] sm:$0xff]
  %v2605 = vld [vmem:[#allocation3 + $0xa18] sm:$0xff]
  %v2606 = vld [vmem:[#allocation3 + $0xa20] sm:$0xff]
  %v2607 = vld [vmem:[#allocation3 + $0xa28] sm:$0xff]
  %v2608 = vld [vmem:[#allocation3 + $0xa30] sm:$0xff]
  %v2609 = vld [vmem:[#allocation3 + $0xa38] sm:$0xff]
  %v2610 = vld [vmem:[#allocation3 + $0xa40] sm:$0xff]
  %v2611 = vld [vmem:[#allocation3 + $0xa48] sm:$0xff]
  %v2612 = vld [vmem:[#allocation3 + $0xa50] sm:$0xff]
  %v2613 = vld [vmem:[#allocation3 + $0xa58] sm:$0xff]
  %v2614 = vld [vmem:[#allocation3 + $0xa60] sm:$0xff]
  %v2615 = vld [vmem:[#allocation3 + $0xa68] sm:$0xff]
  %v2616 = vld [vmem:[#allocation3 + $0xa70] sm:$0xff]
  %v2617 = vld [vmem:[#allocation3 + $0xa78] sm:$0xff]
  %v2618 = vld [vmem:[#allocation3 + $0xa80] sm:$0xff]
  %v2619 = vld [vmem:[#allocation3 + $0xa88] sm:$0xff]
  %v2620 = vld [vmem:[#allocation3 + $0xa90] sm:$0xff]
  %v2621 = vld [vmem:[#allocation3 + $0xa98] sm:$0xff]
  %v2622 = vld [vmem:[#allocation3 + $0xaa0] sm:$0xff]
  %v2623 = vld [vmem:[#allocation3 + $0xaa8] sm:$0xff]
  %v2624 = vld [vmem:[#allocation3 + $0xab0] sm:$0xff]
  %v2625 = vld [vmem:[#allocation3 + $0xab8] sm:$0xff]
  %v2626 = vld [vmem:[#allocation3 + $0xac0] sm:$0xff]
  %v2627 = vld [vmem:[#allocation3 + $0xac8] sm:$0xff]
  %v2628 = vld [vmem:[#allocation3 + $0xad0] sm:$0xff]
  %v2629 = vld [vmem:[#allocation3 + $0xad8] sm:$0xff]
  %v2630 = vld [vmem:[#allocation3 + $0xae0] sm:$0xff]
  %v2631 = vld [vmem:[#allocation3 + $0xae8] sm:$0xff]
  %v2632 = vld [vmem:[#allocation3 + $0xaf0] sm:$0xff]
  %v2633 = vld [vmem:[#allocation3 + $0xaf8] sm:$0xff]
  %v2634 = vld [vmem:[#allocation3 + $0xb00] sm:$0xff]
  %v2635 = vld [vmem:[#allocation3 + $0xb08] sm:$0xff]
  %v2636 = vld [vmem:[#allocation3 + $0xb10] sm:$0xff]
  %v2637 = vld [vmem:[#allocation3 + $0xb18] sm:$0xff]
  %v2638 = vld [vmem:[#allocation3 + $0xb20] sm:$0xff]
  %v2639 = vld [vmem:[#allocation3 + $0xb28] sm:$0xff]
  %v2640 = vld [vmem:[#allocation3 + $0xb30] sm:$0xff]
  %v2641 = vld [vmem:[#allocation3 + $0xb38] sm:$0xff]
  %v2642 = vld [vmem:[#allocation3 + $0xb40] sm:$0xff]
  %v2643 = vld [vmem:[#allocation3 + $0xb48] sm:$0xff]
  %v2644 = vld [vmem:[#allocation3 + $0xb50] sm:$0xff]
  %v2645 = vld [vmem:[#allocation3 + $0xb58] sm:$0xff]
  %v2646 = vld [vmem:[#allocation3 + $0xb60] sm:$0xff]
  %v2647 = vld [vmem:[#allocation3 + $0xb68] sm:$0xff]
  %v2648 = vld [vmem:[#allocation3 + $0xb70] sm:$0xff]
  %v2649 = vld [vmem:[#allocation3 + $0xb78] sm:$0xff]
  %v2650 = vld [vmem:[#allocation3 + $0xb80] sm:$0xff]
  %v2651 = vld [vmem:[#allocation3 + $0xb88] sm:$0xff]
  %v2652 = vld [vmem:[#allocation3 + $0xb90] sm:$0xff]
  %v2653 = vld [vmem:[#allocation3 + $0xb98] sm:$0xff]
  %v2654 = vld [vmem:[#allocation3 + $0xba0] sm:$0xff]
  %v2655 = vld [vmem:[#allocation3 + $0xba8] sm:$0xff]
  %v2656 = vld [vmem:[#allocation3 + $0xbb0] sm:$0xff]
  %v2657 = vld [vmem:[#allocation3 + $0xbb8] sm:$0xff]
  %v2658 = vld [vmem:[#allocation3 + $0xbc0] sm:$0xff]
  %v2659 = vld [vmem:[#allocation3 + $0xbc8] sm:$0xff]
  %v2660 = vld [vmem:[#allocation3 + $0xbd0] sm:$0xff]
  %v2661 = vld [vmem:[#allocation3 + $0xbd8] sm:$0xff]
  %v2662 = vld [vmem:[#allocation3 + $0xbe0] sm:$0xff]
  %v2663 = vld [vmem:[#allocation3 + $0xbe8] sm:$0xff]
  %v2664 = vld [vmem:[#allocation3 + $0xbf0] sm:$0xff]
  %v2665 = vld [vmem:[#allocation3 + $0xbf8] sm:$0xff]
  %v2666 = vld [vmem:[#allocation3 + $0xc00] sm:$0xff]
  %v2667 = vld [vmem:[#allocation3 + $0xc08] sm:$0xff]
  %v2668 = vld [vmem:[#allocation3 + $0xc10] sm:$0xff]
  %v2669 = vld [vmem:[#allocation3 + $0xc18] sm:$0xff]
  %v2670 = vld [vmem:[#allocation3 + $0xc20] sm:$0xff]
  %v2671 = vld [vmem:[#allocation3 + $0xc28] sm:$0xff]
  %v2672 = vld [vmem:[#allocation3 + $0xc30] sm:$0xff]
  %v2673 = vld [vmem:[#allocation3 + $0xc38] sm:$0xff]
  %v2674 = vld [vmem:[#allocation3 + $0xc40] sm:$0xff]
  %v2675 = vld [vmem:[#allocation3 + $0xc48] sm:$0xff]
  %v2676 = vld [vmem:[#allocation3 + $0xc50] sm:$0xff]
  %v2677 = vld [vmem:[#allocation3 + $0xc58] sm:$0xff]
  %v2678 = vld [vmem:[#allocation3 + $0xc60] sm:$0xff]
  %v2679 = vld [vmem:[#allocation3 + $0xc68] sm:$0xff]
  %v2680 = vld [vmem:[#allocation3 + $0xc70] sm:$0xff]
  %v2681 = vld [vmem:[#allocation3 + $0xc78] sm:$0xff]
  %v2682 = vld [vmem:[#allocation3 + $0xc80] sm:$0xff]
  %v2683 = vld [vmem:[#allocation3 + $0xc88] sm:$0xff]
  %v2684 = vld [vmem:[#allocation3 + $0xc90] sm:$0xff]
  %v2685 = vld [vmem:[#allocation3 + $0xc98] sm:$0xff]
  %v2686 = vld [vmem:[#allocation3 + $0xca0] sm:$0xff]
  %v2687 = vld [vmem:[#allocation3 + $0xca8] sm:$0xff]
  %v2688 = vld [vmem:[#allocation3 + $0xcb0] sm:$0xff]
  %v2689 = vld [vmem:[#allocation3 + $0xcb8] sm:$0xff]
  %v2690 = vld [vmem:[#allocation3 + $0xcc0] sm:$0xff]
  %v2691 = vld [vmem:[#allocation3 + $0xcc8] sm:$0xff]
  %v2692 = vld [vmem:[#allocation3 + $0xcd0] sm:$0xff]
  %v2693 = vld [vmem:[#allocation3 + $0xcd8] sm:$0xff]
  %v2694 = vld [vmem:[#allocation3 + $0xce0] sm:$0xff]
  %v2695 = vld [vmem:[#allocation3 + $0xce8] sm:$0xff]
  %v2696 = vld [vmem:[#allocation3 + $0xcf0] sm:$0xff]
  %v2697 = vld [vmem:[#allocation3 + $0xcf8] sm:$0xff]
  %v2698 = vld [vmem:[%s3] sm:$0xff]
  %v2699 = vld [vmem:[%s3 + $0x8] sm:$0xff]
  %v2700 = vld [vmem:[%s3 + $0x10] sm:$0xff]
  %v2701 = vld [vmem:[%s3 + $0x18] sm:$0xff]
  %v2702 = vld [vmem:[%s3 + $0x20] sm:$0xff]
  %v2703 = vld [vmem:[%s3 + $0x28] sm:$0xff]
  %v2704 = vld [vmem:[%s3 + $0x30] sm:$0xff]
  %v2705 = vld [vmem:[%s3 + $0x38] sm:$0xff]
  %v2706 = vld [vmem:[%s3 + $0x40] sm:$0xff]
  %v2707 = vld [vmem:[%s3 + $0x48] sm:$0xff]
  %v2708 = vld [vmem:[%s3 + $0x50] sm:$0xff]
  %v2709 = vld [vmem:[%s3 + $0x58] sm:$0xff]
  %v2710 = vld [vmem:[%s3 + $0x60] sm:$0xff]
  %v2711 = vld [vmem:[%s3 + $0x68] sm:$0xff]
  %v2712 = vld [vmem:[%s3 + $0x70] sm:$0xff]
  %v2713 = vld [vmem:[%s3 + $0x78] sm:$0xff]
  %v2714 = vld [vmem:[%s3 + $0x80] sm:$0xff]
  %v2715 = vld [vmem:[%s3 + $0x88] sm:$0xff]
  %v2716 = vld [vmem:[%s3 + $0x90] sm:$0xff]
  %v2717 = vld [vmem:[%s3 + $0x98] sm:$0xff]
  %v2718 = vld [vmem:[%s3 + $0xa0] sm:$0xff]
  %v2719 = vld [vmem:[%s3 + $0xa8] sm:$0xff]
  %v2720 = vld [vmem:[%s3 + $0xb0] sm:$0xff]
  %v2721 = vld [vmem:[%s3 + $0xb8] sm:$0xff]
  %v2722 = vld [vmem:[%s3 + $0xc0] sm:$0xff]
  %v2723 = vld [vmem:[%s3 + $0xc8] sm:$0xff]
  %v2724 = vld [vmem:[%s3 + $0xd0] sm:$0xff]
  %v2725 = vld [vmem:[%s3 + $0xd8] sm:$0xff]
  %v2726 = vld [vmem:[%s3 + $0xe0] sm:$0xff]
  %v2727 = vld [vmem:[%s3 + $0xe8] sm:$0xff]
  %v2728 = vld [vmem:[%s3 + $0xf0] sm:$0xff]
  %v2729 = vld [vmem:[%s3 + $0xf8] sm:$0xff]
  %v2730 = vld [vmem:[%s3 + $0x100] sm:$0xff]
  %v2731 = vld [vmem:[%s3 + $0x108] sm:$0xff]
  %v2732 = vld [vmem:[%s3 + $0x110] sm:$0xff]
  %v2733 = vld [vmem:[%s3 + $0x118] sm:$0xff]
  %v2734 = vld [vmem:[%s3 + $0x120] sm:$0xff]
  %v2735 = vld [vmem:[%s3 + $0x128] sm:$0xff]
  %v2736 = vld [vmem:[%s3 + $0x130] sm:$0xff]
  %v2737 = vld [vmem:[%s3 + $0x138] sm:$0xff]
  %v2738 = vld [vmem:[%s3 + $0x140] sm:$0xff]
  %v2739 = vld [vmem:[%s3 + $0x148] sm:$0xff]
  %v2740 = vld [vmem:[%s3 + $0x150] sm:$0xff]
  %v2741 = vld [vmem:[%s3 + $0x158] sm:$0xff]
  %v2742 = vld [vmem:[%s3 + $0x160] sm:$0xff]
  %v2743 = vld [vmem:[%s3 + $0x168] sm:$0xff]
  %v2744 = vld [vmem:[%s3 + $0x170] sm:$0xff]
  %v2745 = vld [vmem:[%s3 + $0x178] sm:$0xff]
  %v2746 = vld [vmem:[%s3 + $0x180] sm:$0xff]
  %v2747 = vld [vmem:[%s3 + $0x188] sm:$0xff]
  %v2748 = vld [vmem:[%s3 + $0x190] sm:$0xff]
  %v2749 = vld [vmem:[%s3 + $0x198] sm:$0xff]
  %v2750 = vld [vmem:[%s3 + $0x1a0] sm:$0xff]
  %v2751 = vld [vmem:[%s3 + $0x1a8] sm:$0xff]
  %v2752 = vld [vmem:[%s3 + $0x1b0] sm:$0xff]
  %v2753 = vld [vmem:[%s3 + $0x1b8] sm:$0xff]
  %v2754 = vld [vmem:[%s3 + $0x1c0] sm:$0xff]
  %v2755 = vld [vmem:[%s3 + $0x1c8] sm:$0xff]
  %v2756 = vld [vmem:[%s3 + $0x1d0] sm:$0xff]
  %v2757 = vld [vmem:[%s3 + $0x1d8] sm:$0xff]
  %v2758 = vld [vmem:[%s3 + $0x1e0] sm:$0xff]
  %v2759 = vld [vmem:[%s3 + $0x1e8] sm:$0xff]
  %v2760 = vld [vmem:[%s3 + $0x1f0] sm:$0xff]
  %v2761 = vld [vmem:[%s3 + $0x1f8] sm:$0xff]
  %v2762 = vld [vmem:[%s3 + $0x200] sm:$0xff]
  %v2763 = vld [vmem:[%s3 + $0x208] sm:$0xff]
  %v2764 = vld [vmem:[%s3 + $0x210] sm:$0xff]
  %v2765 = vld [vmem:[%s3 + $0x218] sm:$0xff]
  %v2766 = vld [vmem:[%s3 + $0x220] sm:$0xff]
  %v2767 = vld [vmem:[%s3 + $0x228] sm:$0xff]
  %v2768 = vld [vmem:[%s3 + $0x230] sm:$0xff]
  %v2769 = vld [vmem:[%s3 + $0x238] sm:$0xff]
  %v2770 = vld [vmem:[%s3 + $0x240] sm:$0xff]
  %v2771 = vld [vmem:[%s3 + $0x248] sm:$0xff]
  %v2772 = vld [vmem:[%s3 + $0x250] sm:$0xff]
  %v2773 = vld [vmem:[%s3 + $0x258] sm:$0xff]
  %v2774 = vld [vmem:[%s3 + $0x260] sm:$0xff]
  %v2775 = vld [vmem:[%s3 + $0x268] sm:$0xff]
  %v2776 = vld [vmem:[%s3 + $0x270] sm:$0xff]
  %v2777 = vld [vmem:[%s3 + $0x278] sm:$0xff]
  %v2778 = vld [vmem:[%s3 + $0x280] sm:$0xff]
  %v2779 = vld [vmem:[%s3 + $0x288] sm:$0xff]
  %v2780 = vld [vmem:[%s3 + $0x290] sm:$0xff]
  %v2781 = vld [vmem:[%s3 + $0x298] sm:$0xff]
  %v2782 = vld [vmem:[%s3 + $0x2a0] sm:$0xff]
  %v2783 = vld [vmem:[%s3 + $0x2a8] sm:$0xff]
  %v2784 = vld [vmem:[%s3 + $0x2b0] sm:$0xff]
  %v2785 = vld [vmem:[%s3 + $0x2b8] sm:$0xff]
  %v2786 = vld [vmem:[%s3 + $0x2c0] sm:$0xff]
  %v2787 = vld [vmem:[%s3 + $0x2c8] sm:$0xff]
  %v2788 = vld [vmem:[%s3 + $0x2d0] sm:$0xff]
  %v2789 = vld [vmem:[%s3 + $0x2d8] sm:$0xff]
  %v2790 = vld [vmem:[%s3 + $0x2e0] sm:$0xff]
  %v2791 = vld [vmem:[%s3 + $0x2e8] sm:$0xff]
  %v2792 = vld [vmem:[%s3 + $0x2f0] sm:$0xff]
  %v2793 = vld [vmem:[%s3 + $0x2f8] sm:$0xff]
  %v2794 = vld [vmem:[%s3 + $0x300] sm:$0xff]
  %v2795 = vld [vmem:[%s3 + $0x308] sm:$0xff]
  %v2796 = vld [vmem:[%s3 + $0x310] sm:$0xff]
  %v2797 = vld [vmem:[%s3 + $0x318] sm:$0xff]
  %v2798 = vld [vmem:[%s3 + $0x320] sm:$0xff]
  %v2799 = vld [vmem:[%s3 + $0x328] sm:$0xff]
  %v2800 = vld [vmem:[%s3 + $0x330] sm:$0xff]
  %v2801 = vld [vmem:[%s3 + $0x338] sm:$0xff]
  %v2802 = vld [vmem:[%s3 + $0x340] sm:$0xff]
  %v2803 = vld [vmem:[%s3 + $0x348] sm:$0xff]
  %v2804 = vld [vmem:[%s3 + $0x350] sm:$0xff]
  %v2805 = vld [vmem:[%s3 + $0x358] sm:$0xff]
  %v2806 = vld [vmem:[%s3 + $0x360] sm:$0xff]
  %v2807 = vld [vmem:[%s3 + $0x368] sm:$0xff]
  %v2808 = vld [vmem:[%s3 + $0x370] sm:$0xff]
  %v2809 = vld [vmem:[%s3 + $0x378] sm:$0xff]
  %v2810 = vld [vmem:[%s3 + $0x380] sm:$0xff]
  %v2811 = vld [vmem:[%s3 + $0x388] sm:$0xff]
  %v2812 = vld [vmem:[%s3 + $0x390] sm:$0xff]
  %v2813 = vld [vmem:[%s3 + $0x398] sm:$0xff]
  %v2814 = vld [vmem:[%s3 + $0x3a0] sm:$0xff]
  %v2815 = vld [vmem:[%s3 + $0x3a8] sm:$0xff]
  %v2816 = vld [vmem:[%s3 + $0x3b0] sm:$0xff]
  %v2817 = vld [vmem:[%s3 + $0x3b8] sm:$0xff]
  %v2818 = vld [vmem:[%s3 + $0x3c0] sm:$0xff]
  %v2819 = vld [vmem:[%s3 + $0x3c8] sm:$0xff]
  %v2820 = vld [vmem:[%s3 + $0x3d0] sm:$0xff]
  %v2821 = vld [vmem:[%s3 + $0x3d8] sm:$0xff]
  %v2822 = vld [vmem:[%s3 + $0x3e0] sm:$0xff]
  %v2823 = vld [vmem:[%s3 + $0x3e8] sm:$0xff]
  %v2824 = vld [vmem:[%s3 + $0x3f0] sm:$0xff]
  %v2825 = vld [vmem:[%s3 + $0x3f8] sm:$0xff]
  %v2826 = vld [vmem:[%s3 + $0x400] sm:$0xff]
  %v2827 = vld [vmem:[%s3 + $0x408] sm:$0xff]
  %v2828 = vld [vmem:[%s3 + $0x410] sm:$0xff]
  %v2829 = vld [vmem:[%s3 + $0x418] sm:$0xff]
  %v2830 = vld [vmem:[%s3 + $0x420] sm:$0xff]
  %v2831 = vld [vmem:[%s3 + $0x428] sm:$0xff]
  %v2832 = vld [vmem:[%s3 + $0x430] sm:$0xff]
  %v2833 = vld [vmem:[%s3 + $0x438] sm:$0xff]
  %v2834 = vld [vmem:[%s3 + $0x440] sm:$0xff]
  %v2835 = vld [vmem:[%s3 + $0x448] sm:$0xff]
  %v2836 = vld [vmem:[%s3 + $0x450] sm:$0xff]
  %v2837 = vld [vmem:[%s3 + $0x458] sm:$0xff]
  %v2838 = vld [vmem:[%s3 + $0x460] sm:$0xff]
  %v2839 = vld [vmem:[%s3 + $0x468] sm:$0xff]
  %v2840 = vld [vmem:[%s3 + $0x470] sm:$0xff]
  %v2841 = vld [vmem:[%s3 + $0x478] sm:$0xff]
  %v2842 = vld [vmem:[%s3 + $0x480] sm:$0xff]
  %v2843 = vld [vmem:[%s3 + $0x488] sm:$0xff]
  %v2844 = vld [vmem:[%s3 + $0x490] sm:$0xff]
  %v2845 = vld [vmem:[%s3 + $0x498] sm:$0xff]
  %v2846 = vld [vmem:[%s3 + $0x4a0] sm:$0xff]
  %v2847 = vld [vmem:[%s3 + $0x4a8] sm:$0xff]
  %v2848 = vld [vmem:[%s3 + $0x4b0] sm:$0xff]
  %v2849 = vld [vmem:[%s3 + $0x4b8] sm:$0xff]
  %v2850 = vld [vmem:[%s3 + $0x4c0] sm:$0xff]
  %v2851 = vld [vmem:[%s3 + $0x4c8] sm:$0xff]
  %v2852 = vld [vmem:[%s3 + $0x4d0] sm:$0xff]
  %v2853 = vld [vmem:[%s3 + $0x4d8] sm:$0xff]
  %v2854 = vld [vmem:[%s3 + $0x4e0] sm:$0xff]
  %v2855 = vld [vmem:[%s3 + $0x4e8] sm:$0xff]
  %v2856 = vld [vmem:[%s3 + $0x4f0] sm:$0xff]
  %v2857 = vld [vmem:[%s3 + $0x4f8] sm:$0xff]
  %v2858 = vld [vmem:[%s3 + $0x500] sm:$0xff]
  %v2859 = vld [vmem:[%s3 + $0x508] sm:$0xff]
  %v2860 = vld [vmem:[%s3 + $0x510] sm:$0xff]
  %v2861 = vld [vmem:[%s3 + $0x518] sm:$0xff]
  %v2862 = vld [vmem:[%s3 + $0x520] sm:$0xff]
  %v2863 = vld [vmem:[%s3 + $0x528] sm:$0xff]
  %v2864 = vld [vmem:[%s3 + $0x530] sm:$0xff]
  %v2865 = vld [vmem:[%s3 + $0x538] sm:$0xff]
  %v2866 = vld [vmem:[%s3 + $0x540] sm:$0xff]
  %v2867 = vld [vmem:[%s3 + $0x548] sm:$0xff]
  %v2868 = vld [vmem:[%s3 + $0x550] sm:$0xff]
  %v2869 = vld [vmem:[%s3 + $0x558] sm:$0xff]
  %v2870 = vld [vmem:[%s3 + $0x560] sm:$0xff]
  %v2871 = vld [vmem:[%s3 + $0x568] sm:$0xff]
  %v2872 = vld [vmem:[%s3 + $0x570] sm:$0xff]
  %v2873 = vld [vmem:[%s3 + $0x578] sm:$0xff]
  %v2874 = vld [vmem:[%s3 + $0x580] sm:$0xff]
  %v2875 = vld [vmem:[%s3 + $0x588] sm:$0xff]
  %v2876 = vld [vmem:[%s3 + $0x590] sm:$0xff]
  %v2877 = vld [vmem:[%s3 + $0x598] sm:$0xff]
  %v2878 = vld [vmem:[%s3 + $0x5a0] sm:$0xff]
  %v2879 = vld [vmem:[%s3 + $0x5a8] sm:$0xff]
  %v2880 = vld [vmem:[%s3 + $0x5b0] sm:$0xff]
  %v2881 = vld [vmem:[%s3 + $0x5b8] sm:$0xff]
  %v2882 = vld [vmem:[%s3 + $0x5c0] sm:$0xff]
  %v2883 = vld [vmem:[%s3 + $0x5c8] sm:$0xff]
  %v2884 = vld [vmem:[%s3 + $0x5d0] sm:$0xff]
  %v2885 = vld [vmem:[%s3 + $0x5d8] sm:$0xff]
  %v2886 = vld [vmem:[%s3 + $0x5e0] sm:$0xff]
  %v2887 = vld [vmem:[%s3 + $0x5e8] sm:$0xff]
  %v2888 = vld [vmem:[%s3 + $0x5f0] sm:$0xff]
  %v2889 = vld [vmem:[%s3 + $0x5f8] sm:$0xff]
  %v2890 = vld [vmem:[%s3 + $0x600] sm:$0xff]
  %v2891 = vld [vmem:[%s3 + $0x608] sm:$0xff]
  %v2892 = vld [vmem:[%s3 + $0x610] sm:$0xff]
  %v2893 = vld [vmem:[%s3 + $0x618] sm:$0xff]
  %v2894 = vld [vmem:[%s3 + $0x620] sm:$0xff]
  %v2895 = vld [vmem:[%s3 + $0x628] sm:$0xff]
  %v2896 = vld [vmem:[%s3 + $0x630] sm:$0xff]
  %v2897 = vld [vmem:[%s3 + $0x638] sm:$0xff]
  %v2898 = vld [vmem:[%s4] sm:$0x1]
  %v2900 = vlaneseq
  %v2901 = vshrl.u32 %v2900, 7
  %v2902 = vsub.s32 0, %v2901
  %v2903 = vrot.slane %v2898, %v2902
  %v2906 = vsel %vm434, %v2294, 0
  %v2909 = vsel %vm434, %v2307, 0
  %v2912 = vsel %vm434, %v2320, 0
  %v2915 = vsel %vm434, %v2333, 0
  %v2918 = vsel %vm434, %v2346, 0
  %v2921 = vsel %vm434, %v2359, 0
  %v2924 = vsel %vm434, %v2372, 0
  %v2927 = vsel %vm434, %v2385, 0
  %v2930 = vsel %vm434, %v2398, 0
  %v2933 = vsel %vm434, %v2411, 0
  %v2936 = vsel %vm434, %v2424, 0
  %v2939 = vsel %vm434, %v2437, 0
  %v2942 = vsel %vm434, %v2450, 0
  %v2945 = vsel %vm434, %v2463, 0
  %v2948 = vsel %vm434, %v2476, 0
  %v2951 = vsel %vm434, %v2489, 0
  %v2954 = vsel %vm434, %v2502, 0
  %v2957 = vsel %vm434, %v2515, 0
  %v2960 = vsel %vm434, %v2528, 0
  %v2963 = vsel %vm434, %v2541, 0
  %v2966 = vsel %vm434, %v2554, 0
  %v2969 = vsel %vm434, %v2567, 0
  %v2972 = vsel %vm434, %v2580, 0
  %v2975 = vsel %vm434, %v2593, 0
  %v2978 = vsel %vm434, %v2606, 0
  %v2981 = vsel %vm434, %v2619, 0
  %v2984 = vsel %vm434, %v2632, 0
  %v2987 = vsel %vm434, %v2645, 0
  %v2990 = vsel %vm434, %v2658, 0
  %v2993 = vsel %vm434, %v2671, 0
  %v2996 = vsel %vm434, %v2684, 0
  %v2999 = vsel %vm434, %v2697, 0
  %3001 = vmatprep.subr.mxu0 0.0
  %3002 = vmatpush1.msra.mxu0 %v2698
  %3003 = vmatprep.subr.mxu0 0.0
  %3004 = vmatpush1.msra.mxu0 %v2699
  %3005 = vmatprep.subr.mxu0 0.0
  %3006 = vmatpush1.msra.mxu0 %v2700
  %3007 = vmatprep.subr.mxu0 0.0
  %3008 = vmatpush1.msra.mxu0 %v2701
  %3009 = vmatprep.subr.mxu0 0.0
  %3010 = vmatpush1.msra.mxu0 %v2702
  %3011 = vmatprep.subr.mxu0 0.0
  %3012 = vmatpush1.msra.mxu0 %v2703
  %3013 = vmatprep.subr.mxu0 0.0
  %3014 = vmatpush1.msra.mxu0 %v2704
  %3015 = vmatprep.subr.mxu0 0.0
  %3016 = vmatpush1.msra.mxu0 %v2705
  %3017 = vmatprep.subr.mxu0 0.0
  %3018 = vmatpush1.msra.mxu0 %v2706
  %3019 = vmatprep.subr.mxu0 0.0
  %3020 = vmatpush1.msra.mxu0 %v2707
  %3021 = vmatprep.subr.mxu0 0.0
  %3022 = vmatpush1.msra.mxu0 %v2708
  %3023 = vmatprep.subr.mxu0 0.0
  %3024 = vmatpush1.msra.mxu0 %v2709
  %3025 = vmatprep.subr.mxu0 0.0
  %3026 = vmatpush1.msra.mxu0 %v2710
  %3027 = vmatprep.subr.mxu0 0.0
  %3028 = vmatpush1.msra.mxu0 %v2711
  %3029 = vmatprep.subr.mxu0 0.0
  %3030 = vmatpush1.msra.mxu0 %v2712
  %3031 = vmatprep.subr.mxu0 0.0
  %3032 = vmatpush1.msra.mxu0 %v2713
  %3033 = vmatprep.subr.mxu0 0.0
  %3034 = vmatpush1.msra.mxu0 %v2714
  %3035 = vmatprep.subr.mxu0 0.0
  %3036 = vmatpush1.msra.mxu0 %v2715
  %3037 = vmatprep.subr.mxu0 0.0
  %3038 = vmatpush1.msra.mxu0 %v2716
  %3039 = vmatprep.subr.mxu0 0.0
  %3040 = vmatpush1.msra.mxu0 %v2717
  %3041 = vmatprep.subr.mxu0 0.0
  %3042 = vmatpush1.msra.mxu0 %v2718
  %3043 = vmatprep.subr.mxu0 0.0
  %3044 = vmatpush1.msra.mxu0 %v2719
  %3045 = vmatprep.subr.mxu0 0.0
  %3046 = vmatpush1.msra.mxu0 %v2720
  %3047 = vmatprep.subr.mxu0 0.0
  %3048 = vmatpush1.msra.mxu0 %v2721
  %3049 = vmatprep.subr.mxu0 0.0
  %3050 = vmatpush1.msra.mxu0 %v2722
  %3051 = vmatprep.subr.mxu0 0.0
  %3052 = vmatpush1.msra.mxu0 %v2723
  %3053 = vmatprep.subr.mxu0 0.0
  %3054 = vmatpush1.msra.mxu0 %v2724
  %3055 = vmatprep.subr.mxu0 0.0
  %3056 = vmatpush1.msra.mxu0 %v2725
  %3057 = vmatprep.subr.mxu0 0.0
  %3058 = vmatpush1.msra.mxu0 %v2726
  %3059 = vmatprep.subr.mxu0 0.0
  %3060 = vmatpush1.msra.mxu0 %v2727
  %3061 = vmatprep.subr.mxu0 0.0
  %3062 = vmatpush1.msra.mxu0 %v2728
  %3063 = vmatprep.subr.mxu0 0.0
  %3064 = vmatpush1.msra.mxu0 %v2729
  %3065 = vmatprep.mubr.f32.mxu0 %v2283
  %3066 = vmatmul.mubr.f32.gmra.mrb[0].mxu0 %v2282
  %v3067 = vpop.f32.mrb[0].mxu0
  %v3068 = vadd.f32 %v2903, %v3067
  %v3069 = vpop.f32.mrb[0].mxu0
  %3070 = vmatprep.mubr.f32.mxu0 %v2296
  %3071 = vmatmul.mubr.f32.gmra.mrb[0].mxu0 %v2295
  %v3072 = vpop.f32.mrb[0].mxu0
  %v3073 = vadd.f32 %v2903, %v3072
  %v3074 = vpop.f32.mrb[0].mxu0
  %3075 = vmatprep.mubr.f32.mxu0 %v2309
  %3076 = vmatmul.mubr.f32.gmra.mrb[0].mxu0 %v2308
  %v3077 = vpop.f32.mrb[0].mxu0
  %v3078 = vadd.f32 %v2903, %v3077
  %v3079 = vpop.f32.mrb[0].mxu0
  %3080 = vmatprep.mubr.f32.mxu0 %v2322
  %3081 = vmatmul.mubr.f32.gmra.mrb[0].mxu0 %v2321
  %v3082 = vpop.f32.mrb[0].mxu0
  %v3083 = vadd.f32 %v2903, %v3082
  %v3084 = vpop.f32.mrb[0].mxu0
  %3085 = vmatprep.mubr.f32.mxu0 %v2335
  %3086 = vmatmul.mubr.f32.gmra.mrb[0].mxu0 %v2334
  %v3087 = vpop.f32.mrb[0].mxu0
  %v3088 = vadd.f32 %v2903, %v3087
  %v3089 = vpop.f32.mrb[0].mxu0
  %3090 = vmatprep.mubr.f32.mxu0 %v2348
  %3091 = vmatmul.mubr.f32.gmra.mrb[0].mxu0 %v2347
  %v3092 = vpop.f32.mrb[0].mxu0
  %v3093 = vadd.f32 %v2903, %v3092
  %v3094 = vpop.f32.mrb[0].mxu0
  %3095 = vmatprep.mubr.f32.mxu0 %v2361
  %3096 = vmatmul.mubr.f32.gmra.mrb[0].mxu0 %v2360
  %v3097 = vpop.f32.mrb[0].mxu0
  %v3098 = vadd.f32 %v2903, %v3097
  %v3099 = vpop.f32.mrb[0].mxu0
  %3100 = vmatprep.mubr.f32.mxu0 %v2374
  %3101 = vmatmul.mubr.f32.gmra.mrb[0].mxu0 %v2373
  %v3102 = vpop.f32.mrb[0].mxu0
  %v3103 = vadd.f32 %v2903, %v3102
  %v3104 = vpop.f32.mrb[0].mxu0
  %3105 = vmatprep.mubr.f32.mxu0 %v2387
  %3106 = vmatmul.mubr.f32.gmra.mrb[0].mxu0 %v2386
  %v3107 = vpop.f32.mrb[0].mxu0
  %v3108 = vadd.f32 %v2903, %v3107
  %v3109 = vpop.f32.mrb[0].mxu0
  %3110 = vmatprep.mubr.f32.mxu0 %v2400
  %3111 = vmatmul.mubr.f32.gmra.mrb[0].mxu0 %v2399
  %v3112 = vpop.f32.mrb[0].mxu0
  %v3113 = vadd.f32 %v2903, %v3112
  %v3114 = vpop.f32.mrb[0].mxu0
  %3115 = vmatprep.mubr.f32.mxu0 %v2413
  %3116 = vmatmul.mubr.f32.gmra.mrb[0].mxu0 %v2412
  %v3117 = vpop.f32.mrb[0].mxu0
  %v3118 = vadd.f32 %v2903, %v3117
  %v3119 = vpop.f32.mrb[0].mxu0
  %3120 = vmatprep.mubr.f32.mxu0 %v2426
  %3121 = vmatmul.mubr.f32.gmra.mrb[0].mxu0 %v2425
  %v3122 = vpop.f32.mrb[0].mxu0
  %v3123 = vadd.f32 %v2903, %v3122
  %v3124 = vpop.f32.mrb[0].mxu0
  %3125 = vmatprep.mubr.f32.mxu0 %v2439
  %3126 = vmatmul.mubr.f32.gmra.mrb[0].mxu0 %v2438
  %v3127 = vpop.f32.mrb[0].mxu0
  %v3128 = vadd.f32 %v2903, %v3127
  %v3129 = vpop.f32.mrb[0].mxu0
  %3130 = vmatprep.mubr.f32.mxu0 %v2452
  %3131 = vmatmul.mubr.f32.gmra.mrb[0].mxu0 %v2451
  %v3132 = vpop.f32.mrb[0].mxu0
  %v3133 = vadd.f32 %v2903, %v3132
  %v3134 = vpop.f32.mrb[0].mxu0
  %3135 = vmatprep.mubr.f32.mxu0 %v2465
  %3136 = vmatmul.mubr.f32.gmra.mrb[0].mxu0 %v2464
  %v3137 = vpop.f32.mrb[0].mxu0
  %v3138 = vadd.f32 %v2903, %v3137
  %v3139 = vpop.f32.mrb[0].mxu0
  %3140 = vmatprep.mubr.f32.mxu0 %v2478
  %3141 = vmatmul.mubr.f32.gmra.mrb[0].mxu0 %v2477
  %v3142 = vpop.f32.mrb[0].mxu0
  %v3143 = vadd.f32 %v2903, %v3142
  %v3144 = vpop.f32.mrb[0].mxu0
  %3145 = vmatprep.mubr.f32.mxu0 %v2491
  %3146 = vmatmul.mubr.f32.gmra.mrb[0].mxu0 %v2490
  %v3147 = vpop.f32.mrb[0].mxu0
  %v3148 = vadd.f32 %v2903, %v3147
  %v3149 = vpop.f32.mrb[0].mxu0
  %3150 = vmatprep.mubr.f32.mxu0 %v2504
  %3151 = vmatmul.mubr.f32.gmra.mrb[0].mxu0 %v2503
  %v3152 = vpop.f32.mrb[0].mxu0
  %v3153 = vadd.f32 %v2903, %v3152
  %v3154 = vpop.f32.mrb[0].mxu0
  %3155 = vmatprep.mubr.f32.mxu0 %v2517
  %3156 = vmatmul.mubr.f32.gmra.mrb[0].mxu0 %v2516
  %v3157 = vpop.f32.mrb[0].mxu0
  %v3158 = vadd.f32 %v2903, %v3157
  %v3159 = vpop.f32.mrb[0].mxu0
  %3160 = vmatprep.mubr.f32.mxu0 %v2530
  %3161 = vmatmul.mubr.f32.gmra.mrb[0].mxu0 %v2529
  %v3162 = vpop.f32.mrb[0].mxu0
  %v3163 = vadd.f32 %v2903, %v3162
  %v3164 = vpop.f32.mrb[0].mxu0
  %3165 = vmatprep.mubr.f32.mxu0 %v2543
  %3166 = vmatmul.mubr.f32.gmra.mrb[0].mxu0 %v2542
  %v3167 = vpop.f32.mrb[0].mxu0
  %v3168 = vadd.f32 %v2903, %v3167
  %v3169 = vpop.f32.mrb[0].mxu0
  %3170 = vmatprep.mubr.f32.mxu0 %v2556
  %3171 = vmatmul.mubr.f32.gmra.mrb[0].mxu0 %v2555
  %v3172 = vpop.f32.mrb[0].mxu0
  %v3173 = vadd.f32 %v2903, %v3172
  %v3174 = vpop.f32.mrb[0].mxu0
  %3175 = vmatprep.mubr.f32.mxu0 %v2569
  %3176 = vmatmul.mubr.f32.gmra.mrb[0].mxu0 %v2568
  %v3177 = vpop.f32.mrb[0].mxu0
  %v3178 = vadd.f32 %v2903, %v3177
  %v3179 = vpop.f32.mrb[0].mxu0
  %3180 = vmatprep.mubr.f32.mxu0 %v2582
  %3181 = vmatmul.mubr.f32.gmra.mrb[0].mxu0 %v2581
  %v3182 = vpop.f32.mrb[0].mxu0
  %v3183 = vadd.f32 %v2903, %v3182
  %v3184 = vpop.f32.mrb[0].mxu0
  %3185 = vmatprep.mubr.f32.mxu0 %v2595
  %3186 = vmatmul.mubr.f32.gmra.mrb[0].mxu0 %v2594
  %v3187 = vpop.f32.mrb[0].mxu0
  %v3188 = vadd.f32 %v2903, %v3187
  %v3189 = vpop.f32.mrb[0].mxu0
  %3190 = vmatprep.mubr.f32.mxu0 %v2608
  %3191 = vmatmul.mubr.f32.gmra.mrb[0].mxu0 %v2607
  %v3192 = vpop.f32.mrb[0].mxu0
  %v3193 = vadd.f32 %v2903, %v3192
  %v3194 = vpop.f32.mrb[0].mxu0
  %3195 = vmatprep.mubr.f32.mxu0 %v2621
  %3196 = vmatmul.mubr.f32.gmra.mrb[0].mxu0 %v2620
  %v3197 = vpop.f32.mrb[0].mxu0
  %v3198 = vadd.f32 %v2903, %v3197
  %v3199 = vpop.f32.mrb[0].mxu0
  %3200 = vmatprep.mubr.f32.mxu0 %v2634
  %3201 = vmatmul.mubr.f32.gmra.mrb[0].mxu0 %v2633
  %v3202 = vpop.f32.mrb[0].mxu0
  %v3203 = vadd.f32 %v2903, %v3202
  %v3204 = vpop.f32.mrb[0].mxu0
  %3205 = vmatprep.mubr.f32.mxu0 %v2647
  %3206 = vmatmul.mubr.f32.gmra.mrb[0].mxu0 %v2646
  %v3207 = vpop.f32.mrb[0].mxu0
  %v3208 = vadd.f32 %v2903, %v3207
  %v3209 = vpop.f32.mrb[0].mxu0
  %3210 = vmatprep.mubr.f32.mxu0 %v2660
  %3211 = vmatmul.mubr.f32.gmra.mrb[0].mxu0 %v2659
  %v3212 = vpop.f32.mrb[0].mxu0
  %v3213 = vadd.f32 %v2903, %v3212
  %v3214 = vpop.f32.mrb[0].mxu0
  %3215 = vmatprep.mubr.f32.mxu0 %v2673
  %3216 = vmatmul.mubr.f32.gmra.mrb[0].mxu0 %v2672
  %v3217 = vpop.f32.mrb[0].mxu0
  %v3218 = vadd.f32 %v2903, %v3217
  %v3219 = vpop.f32.mrb[0].mxu0
  %3220 = vmatprep.mubr.f32.mxu0 %v2686
  %3221 = vmatmul.mubr.f32.gmra.mrb[0].mxu0 %v2685
  %v3222 = vpop.f32.mrb[0].mxu0
  %v3223 = vadd.f32 %v2903, %v3222
  %v3224 = vpop.f32.mrb[0].mxu0
  %3225 = vdwg.mxu0
  %3226 = vmatprep.subr.mxu0 0.0
  %3227 = vmatpush1.msra.mxu0 %v2730
  %3228 = vmatprep.subr.mxu0 0.0
  %3229 = vmatpush1.msra.mxu0 %v2731
  %3230 = vmatprep.subr.mxu0 0.0
  %3231 = vmatpush1.msra.mxu0 %v2732
  %3232 = vmatprep.subr.mxu0 0.0
  %3233 = vmatpush1.msra.mxu0 %v2733
  %3234 = vmatprep.subr.mxu0 0.0
  %3235 = vmatpush1.msra.mxu0 %v2734
  %3236 = vmatprep.subr.mxu0 0.0
  %3237 = vmatpush1.msra.mxu0 %v2735
  %3238 = vmatprep.subr.mxu0 0.0
  %3239 = vmatpush1.msra.mxu0 %v2736
  %3240 = vmatprep.subr.mxu0 0.0
  %3241 = vmatpush1.msra.mxu0 %v2737
  %3242 = vmatprep.subr.mxu0 0.0
  %3243 = vmatpush1.msra.mxu0 %v2738
  %3244 = vmatprep.subr.mxu0 0.0
  %3245 = vmatpush1.msra.mxu0 %v2739
  %3246 = vmatprep.subr.mxu0 0.0
  %3247 = vmatpush1.msra.mxu0 %v2740
  %3248 = vmatprep.subr.mxu0 0.0
  %3249 = vmatpush1.msra.mxu0 %v2741
  %3250 = vmatprep.subr.mxu0 0.0
  %3251 = vmatpush1.msra.mxu0 %v2742
  %3252 = vmatprep.subr.mxu0 0.0
  %3253 = vmatpush1.msra.mxu0 %v2743
  %3254 = vmatprep.subr.mxu0 0.0
  %3255 = vmatpush1.msra.mxu0 %v2744
  %3256 = vmatprep.subr.mxu0 0.0
  %3257 = vmatpush1.msra.mxu0 %v2745
  %3258 = vmatprep.subr.mxu0 0.0
  %3259 = vmatpush1.msra.mxu0 %v2746
  %3260 = vmatprep.subr.mxu0 0.0
  %3261 = vmatpush1.msra.mxu0 %v2747
  %3262 = vmatprep.subr.mxu0 0.0
  %3263 = vmatpush1.msra.mxu0 %v2748
  %3264 = vmatprep.subr.mxu0 0.0
  %3265 = vmatpush1.msra.mxu0 %v2749
  %3266 = vmatprep.subr.mxu0 0.0
  %3267 = vmatpush1.msra.mxu0 %v2750
  %3268 = vmatprep.subr.mxu0 0.0
  %3269 = vmatpush1.msra.mxu0 %v2751
  %3270 = vmatprep.subr.mxu0 0.0
  %3271 = vmatpush1.msra.mxu0 %v2752
  %3272 = vmatprep.subr.mxu0 0.0
  %3273 = vmatpush1.msra.mxu0 %v2753
  %3274 = vmatprep.subr.mxu0 0.0
  %3275 = vmatpush1.msra.mxu0 %v2754
  %3276 = vmatprep.subr.mxu0 0.0
  %3277 = vmatpush1.msra.mxu0 %v2755
  %3278 = vmatprep.subr.mxu0 0.0
  %3279 = vmatpush1.msra.mxu0 %v2756
  %3280 = vmatprep.subr.mxu0 0.0
  %3281 = vmatpush1.msra.mxu0 %v2757
  %3282 = vmatprep.subr.mxu0 0.0
  %3283 = vmatpush1.msra.mxu0 %v2758
  %3284 = vmatprep.subr.mxu0 0.0
  %3285 = vmatpush1.msra.mxu0 %v2759
  %3286 = vmatprep.subr.mxu0 0.0
  %3287 = vmatpush1.msra.mxu0 %v2760
  %3288 = vmatprep.subr.mxu0 0.0
  %3289 = vmatpush1.msra.mxu0 %v2761
  %3290 = vmatprep.mubr.f32.mxu0 %v2285
  %3291 = vmatmul.mubr.f32.gmra.mrb[0].mxu0 %v2284
  %v3292 = vpop.f32.mrb[0].mxu0
  %v3293 = vadd.f32 %v3068, %v3292
  %v3294 = vpop.f32.mrb[0].mxu0
  %3295 = vmatprep.mubr.f32.mxu0 %v2298
  %3296 = vmatmul.mubr.f32.gmra.mrb[0].mxu0 %v2297
  %v3297 = vpop.f32.mrb[0].mxu0
  %v3298 = vadd.f32 %v3073, %v3297
  %v3299 = vpop.f32.mrb[0].mxu0
  %3300 = vmatprep.mubr.f32.mxu0 %v2311
  %3301 = vmatmul.mubr.f32.gmra.mrb[0].mxu0 %v2310
  %v3302 = vpop.f32.mrb[0].mxu0
  %v3303 = vadd.f32 %v3078, %v3302
  %v3304 = vpop.f32.mrb[0].mxu0
  %3305 = vmatprep.mubr.f32.mxu0 %v2324
  %3306 = vmatmul.mubr.f32.gmra.mrb[0].mxu0 %v2323
  %v3307 = vpop.f32.mrb[0].mxu0
  %v3308 = vadd.f32 %v3083, %v3307
  %v3309 = vpop.f32.mrb[0].mxu0
  %3310 = vmatprep.mubr.f32.mxu0 %v2337
  %3311 = vmatmul.mubr.f32.gmra.mrb[0].mxu0 %v2336
  %v3312 = vpop.f32.mrb[0].mxu0
  %v3313 = vadd.f32 %v3088, %v3312
  %v3314 = vpop.f32.mrb[0].mxu0
  %3315 = vmatprep.mubr.f32.mxu0 %v2350
  %3316 = vmatmul.mubr.f32.gmra.mrb[0].mxu0 %v2349
  %v3317 = vpop.f32.mrb[0].mxu0
  %v3318 = vadd.f32 %v3093, %v3317
  %v3319 = vpop.f32.mrb[0].mxu0
  %3320 = vmatprep.mubr.f32.mxu0 %v2363
  %3321 = vmatmul.mubr.f32.gmra.mrb[0].mxu0 %v2362
  %v3322 = vpop.f32.mrb[0].mxu0
  %v3323 = vadd.f32 %v3098, %v3322
  %v3324 = vpop.f32.mrb[0].mxu0
  %3325 = vmatprep.mubr.f32.mxu0 %v2376
  %3326 = vmatmul.mubr.f32.gmra.mrb[0].mxu0 %v2375
  %v3327 = vpop.f32.mrb[0].mxu0
  %v3328 = vadd.f32 %v3103, %v3327
  %v3329 = vpop.f32.mrb[0].mxu0
  %3330 = vmatprep.mubr.f32.mxu0 %v2389
  %3331 = vmatmul.mubr.f32.gmra.mrb[0].mxu0 %v2388
  %v3332 = vpop.f32.mrb[0].mxu0
  %v3333 = vadd.f32 %v3108, %v3332
  %v3334 = vpop.f32.mrb[0].mxu0
  %3335 = vmatprep.mubr.f32.mxu0 %v2402
  %3336 = vmatmul.mubr.f32.gmra.mrb[0].mxu0 %v2401
  %v3337 = vpop.f32.mrb[0].mxu0
  %v3338 = vadd.f32 %v3113, %v3337
  %v3339 = vpop.f32.mrb[0].mxu0
  %3340 = vmatprep.mubr.f32.mxu0 %v2415
  %3341 = vmatmul.mubr.f32.gmra.mrb[0].mxu0 %v2414
  %v3342 = vpop.f32.mrb[0].mxu0
  %v3343 = vadd.f32 %v3118, %v3342
  %v3344 = vpop.f32.mrb[0].mxu0
  %3345 = vmatprep.mubr.f32.mxu0 %v2428
  %3346 = vmatmul.mubr.f32.gmra.mrb[0].mxu0 %v2427
  %v3347 = vpop.f32.mrb[0].mxu0
  %v3348 = vadd.f32 %v3123, %v3347
  %v3349 = vpop.f32.mrb[0].mxu0
  %3350 = vmatprep.mubr.f32.mxu0 %v2441
  %3351 = vmatmul.mubr.f32.gmra.mrb[0].mxu0 %v2440
  %v3352 = vpop.f32.mrb[0].mxu0
  %v3353 = vadd.f32 %v3128, %v3352
  %v3354 = vpop.f32.mrb[0].mxu0
  %3355 = vmatprep.mubr.f32.mxu0 %v2454
  %3356 = vmatmul.mubr.f32.gmra.mrb[0].mxu0 %v2453
  %v3357 = vpop.f32.mrb[0].mxu0
  %v3358 = vadd.f32 %v3133, %v3357
  %v3359 = vpop.f32.mrb[0].mxu0
  %3360 = vmatprep.mubr.f32.mxu0 %v2467
  %3361 = vmatmul.mubr.f32.gmra.mrb[0].mxu0 %v2466
  %v3362 = vpop.f32.mrb[0].mxu0
  %v3363 = vadd.f32 %v3138, %v3362
  %v3364 = vpop.f32.mrb[0].mxu0
  %3365 = vmatprep.mubr.f32.mxu0 %v2480
  %3366 = vmatmul.mubr.f32.gmra.mrb[0].mxu0 %v2479
  %v3367 = vpop.f32.mrb[0].mxu0
  %v3368 = vadd.f32 %v3143, %v3367
  %v3369 = vpop.f32.mrb[0].mxu0
  %3370 = vmatprep.mubr.f32.mxu0 %v2493
  %3371 = vmatmul.mubr.f32.gmra.mrb[0].mxu0 %v2492
  %v3372 = vpop.f32.mrb[0].mxu0
  %v3373 = vadd.f32 %v3148, %v3372
  %v3374 = vpop.f32.mrb[0].mxu0
  %3375 = vmatprep.mubr.f32.mxu0 %v2506
  %3376 = vmatmul.mubr.f32.gmra.mrb[0].mxu0 %v2505
  %v3377 = vpop.f32.mrb[0].mxu0
  %v3378 = vadd.f32 %v3153, %v3377
  %v3379 = vpop.f32.mrb[0].mxu0
  %3380 = vmatprep.mubr.f32.mxu0 %v2519
  %3381 = vmatmul.mubr.f32.gmra.mrb[0].mxu0 %v2518
  %v3382 = vpop.f32.mrb[0].mxu0
  %v3383 = vadd.f32 %v3158, %v3382
  %v3384 = vpop.f32.mrb[0].mxu0
  %3385 = vmatprep.mubr.f32.mxu0 %v2532
  %3386 = vmatmul.mubr.f32.gmra.mrb[0].mxu0 %v2531
  %v3387 = vpop.f32.mrb[0].mxu0
  %v3388 = vadd.f32 %v3163, %v3387
  %v3389 = vpop.f32.mrb[0].mxu0
  %3390 = vmatprep.mubr.f32.mxu0 %v2545
  %3391 = vmatmul.mubr.f32.gmra.mrb[0].mxu0 %v2544
  %v3392 = vpop.f32.mrb[0].mxu0
  %v3393 = vadd.f32 %v3168, %v3392
  %v3394 = vpop.f32.mrb[0].mxu0
  %3395 = vmatprep.mubr.f32.mxu0 %v2558
  %3396 = vmatmul.mubr.f32.gmra.mrb[0].mxu0 %v2557
  %v3397 = vpop.f32.mrb[0].mxu0
  %v3398 = vadd.f32 %v3173, %v3397
  %v3399 = vpop.f32.mrb[0].mxu0
  %3400 = vmatprep.mubr.f32.mxu0 %v2571
  %3401 = vmatmul.mubr.f32.gmra.mrb[0].mxu0 %v2570
  %v3402 = vpop.f32.mrb[0].mxu0
  %v3403 = vadd.f32 %v3178, %v3402
  %v3404 = vpop.f32.mrb[0].mxu0
  %3405 = vmatprep.mubr.f32.mxu0 %v2584
  %3406 = vmatmul.mubr.f32.gmra.mrb[0].mxu0 %v2583
  %v3407 = vpop.f32.mrb[0].mxu0
  %v3408 = vadd.f32 %v3183, %v3407
  %v3409 = vpop.f32.mrb[0].mxu0
  %3410 = vmatprep.mubr.f32.mxu0 %v2597
  %3411 = vmatmul.mubr.f32.gmra.mrb[0].mxu0 %v2596
  %v3412 = vpop.f32.mrb[0].mxu0
  %v3413 = vadd.f32 %v3188, %v3412
  %v3414 = vpop.f32.mrb[0].mxu0
  %3415 = vmatprep.mubr.f32.mxu0 %v2610
  %3416 = vmatmul.mubr.f32.gmra.mrb[0].mxu0 %v2609
  %v3417 = vpop.f32.mrb[0].mxu0
  %v3418 = vadd.f32 %v3193, %v3417
  %v3419 = vpop.f32.mrb[0].mxu0
  %3420 = vmatprep.mubr.f32.mxu0 %v2623
  %3421 = vmatmul.mubr.f32.gmra.mrb[0].mxu0 %v2622
  %v3422 = vpop.f32.mrb[0].mxu0
  %v3423 = vadd.f32 %v3198, %v3422
  %v3424 = vpop.f32.mrb[0].mxu0
  %3425 = vmatprep.mubr.f32.mxu0 %v2636
  %3426 = vmatmul.mubr.f32.gmra.mrb[0].mxu0 %v2635
  %v3427 = vpop.f32.mrb[0].mxu0
  %v3428 = vadd.f32 %v3203, %v3427
  %v3429 = vpop.f32.mrb[0].mxu0
  %3430 = vmatprep.mubr.f32.mxu0 %v2649
  %3431 = vmatmul.mubr.f32.gmra.mrb[0].mxu0 %v2648
  %v3432 = vpop.f32.mrb[0].mxu0
  %v3433 = vadd.f32 %v3208, %v3432
  %v3434 = vpop.f32.mrb[0].mxu0
  %3435 = vmatprep.mubr.f32.mxu0 %v2662
  %3436 = vmatmul.mubr.f32.gmra.mrb[0].mxu0 %v2661
  %v3437 = vpop.f32.mrb[0].mxu0
  %v3438 = vadd.f32 %v3213, %v3437
  %v3439 = vpop.f32.mrb[0].mxu0
  %3440 = vmatprep.mubr.f32.mxu0 %v2675
  %3441 = vmatmul.mubr.f32.gmra.mrb[0].mxu0 %v2674
  %v3442 = vpop.f32.mrb[0].mxu0
  %v3443 = vadd.f32 %v3218, %v3442
  %v3444 = vpop.f32.mrb[0].mxu0
  %3445 = vmatprep.mubr.f32.mxu0 %v2688
  %3446 = vmatmul.mubr.f32.gmra.mrb[0].mxu0 %v2687
  %v3447 = vpop.f32.mrb[0].mxu0
  %v3448 = vadd.f32 %v3223, %v3447
  %v3449 = vpop.f32.mrb[0].mxu0
  %3450 = vdwg.mxu0
  %3451 = vmatprep.subr.mxu0 0.0
  %3452 = vmatpush1.msra.mxu0 %v2762
  %3453 = vmatprep.subr.mxu0 0.0
  %3454 = vmatpush1.msra.mxu0 %v2763
  %3455 = vmatprep.subr.mxu0 0.0
  %3456 = vmatpush1.msra.mxu0 %v2764
  %3457 = vmatprep.subr.mxu0 0.0
  %3458 = vmatpush1.msra.mxu0 %v2765
  %3459 = vmatprep.subr.mxu0 0.0
  %3460 = vmatpush1.msra.mxu0 %v2766
  %3461 = vmatprep.subr.mxu0 0.0
  %3462 = vmatpush1.msra.mxu0 %v2767
  %3463 = vmatprep.subr.mxu0 0.0
  %3464 = vmatpush1.msra.mxu0 %v2768
  %3465 = vmatprep.subr.mxu0 0.0
  %3466 = vmatpush1.msra.mxu0 %v2769
  %3467 = vmatprep.subr.mxu0 0.0
  %3468 = vmatpush1.msra.mxu0 %v2770
  %3469 = vmatprep.subr.mxu0 0.0
  %3470 = vmatpush1.msra.mxu0 %v2771
  %3471 = vmatprep.subr.mxu0 0.0
  %3472 = vmatpush1.msra.mxu0 %v2772
  %3473 = vmatprep.subr.mxu0 0.0
  %3474 = vmatpush1.msra.mxu0 %v2773
  %3475 = vmatprep.subr.mxu0 0.0
  %3476 = vmatpush1.msra.mxu0 %v2774
  %3477 = vmatprep.subr.mxu0 0.0
  %3478 = vmatpush1.msra.mxu0 %v2775
  %3479 = vmatprep.subr.mxu0 0.0
  %3480 = vmatpush1.msra.mxu0 %v2776
  %3481 = vmatprep.subr.mxu0 0.0
  %3482 = vmatpush1.msra.mxu0 %v2777
  %3483 = vmatprep.subr.mxu0 0.0
  %3484 = vmatpush1.msra.mxu0 %v2778
  %3485 = vmatprep.subr.mxu0 0.0
  %3486 = vmatpush1.msra.mxu0 %v2779
  %3487 = vmatprep.subr.mxu0 0.0
  %3488 = vmatpush1.msra.mxu0 %v2780
  %3489 = vmatprep.subr.mxu0 0.0
  %3490 = vmatpush1.msra.mxu0 %v2781
  %3491 = vmatprep.subr.mxu0 0.0
  %3492 = vmatpush1.msra.mxu0 %v2782
  %3493 = vmatprep.subr.mxu0 0.0
  %3494 = vmatpush1.msra.mxu0 %v2783
  %3495 = vmatprep.subr.mxu0 0.0
  %3496 = vmatpush1.msra.mxu0 %v2784
  %3497 = vmatprep.subr.mxu0 0.0
  %3498 = vmatpush1.msra.mxu0 %v2785
  %3499 = vmatprep.subr.mxu0 0.0
  %3500 = vmatpush1.msra.mxu0 %v2786
  %3501 = vmatprep.subr.mxu0 0.0
  %3502 = vmatpush1.msra.mxu0 %v2787
  %3503 = vmatprep.subr.mxu0 0.0
  %3504 = vmatpush1.msra.mxu0 %v2788
  %3505 = vmatprep.subr.mxu0 0.0
  %3506 = vmatpush1.msra.mxu0 %v2789
  %3507 = vmatprep.subr.mxu0 0.0
  %3508 = vmatpush1.msra.mxu0 %v2790
  %3509 = vmatprep.subr.mxu0 0.0
  %3510 = vmatpush1.msra.mxu0 %v2791
  %3511 = vmatprep.subr.mxu0 0.0
  %3512 = vmatpush1.msra.mxu0 %v2792
  %3513 = vmatprep.subr.mxu0 0.0
  %3514 = vmatpush1.msra.mxu0 %v2793
  %3515 = vmatprep.mubr.f32.mxu0 %v2287
  %3516 = vmatmul.mubr.f32.gmra.mrb[0].mxu0 %v2286
  %v3517 = vpop.f32.mrb[0].mxu0
  %v3518 = vadd.f32 %v3293, %v3517
  %v3519 = vpop.f32.mrb[0].mxu0
  %3520 = vmatprep.mubr.f32.mxu0 %v2300
  %3521 = vmatmul.mubr.f32.gmra.mrb[0].mxu0 %v2299
  %v3522 = vpop.f32.mrb[0].mxu0
  %v3523 = vadd.f32 %v3298, %v3522
  %v3524 = vpop.f32.mrb[0].mxu0
  %3525 = vmatprep.mubr.f32.mxu0 %v2313
  %3526 = vmatmul.mubr.f32.gmra.mrb[0].mxu0 %v2312
  %v3527 = vpop.f32.mrb[0].mxu0
  %v3528 = vadd.f32 %v3303, %v3527
  %v3529 = vpop.f32.mrb[0].mxu0
  %3530 = vmatprep.mubr.f32.mxu0 %v2326
  %3531 = vmatmul.mubr.f32.gmra.mrb[0].mxu0 %v2325
  %v3532 = vpop.f32.mrb[0].mxu0
  %v3533 = vadd.f32 %v3308, %v3532
  %v3534 = vpop.f32.mrb[0].mxu0
  %3535 = vmatprep.mubr.f32.mxu0 %v2339
  %3536 = vmatmul.mubr.f32.gmra.mrb[0].mxu0 %v2338
  %v3537 = vpop.f32.mrb[0].mxu0
  %v3538 = vadd.f32 %v3313, %v3537
  %v3539 = vpop.f32.mrb[0].mxu0
  %3540 = vmatprep.mubr.f32.mxu0 %v2352
  %3541 = vmatmul.mubr.f32.gmra.mrb[0].mxu0 %v2351
  %v3542 = vpop.f32.mrb[0].mxu0
  %v3543 = vadd.f32 %v3318, %v3542
  %v3544 = vpop.f32.mrb[0].mxu0
  %3545 = vmatprep.mubr.f32.mxu0 %v2365
  %3546 = vmatmul.mubr.f32.gmra.mrb[0].mxu0 %v2364
  %v3547 = vpop.f32.mrb[0].mxu0
  %v3548 = vadd.f32 %v3323, %v3547
  %v3549 = vpop.f32.mrb[0].mxu0
  %3550 = vmatprep.mubr.f32.mxu0 %v2378
  %3551 = vmatmul.mubr.f32.gmra.mrb[0].mxu0 %v2377
  %v3552 = vpop.f32.mrb[0].mxu0
  %v3553 = vadd.f32 %v3328, %v3552
  %v3554 = vpop.f32.mrb[0].mxu0
  %3555 = vmatprep.mubr.f32.mxu0 %v2391
  %3556 = vmatmul.mubr.f32.gmra.mrb[0].mxu0 %v2390
  %v3557 = vpop.f32.mrb[0].mxu0
  %v3558 = vadd.f32 %v3333, %v3557
  %v3559 = vpop.f32.mrb[0].mxu0
  %3560 = vmatprep.mubr.f32.mxu0 %v2404
  %3561 = vmatmul.mubr.f32.gmra.mrb[0].mxu0 %v2403
  %v3562 = vpop.f32.mrb[0].mxu0
  %v3563 = vadd.f32 %v3338, %v3562
  %v3564 = vpop.f32.mrb[0].mxu0
  %3565 = vmatprep.mubr.f32.mxu0 %v2417
  %3566 = vmatmul.mubr.f32.gmra.mrb[0].mxu0 %v2416
  %v3567 = vpop.f32.mrb[0].mxu0
  %v3568 = vadd.f32 %v3343, %v3567
  %v3569 = vpop.f32.mrb[0].mxu0
  %3570 = vmatprep.mubr.f32.mxu0 %v2430
  %3571 = vmatmul.mubr.f32.gmra.mrb[0].mxu0 %v2429
  %v3572 = vpop.f32.mrb[0].mxu0
  %v3573 = vadd.f32 %v3348, %v3572
  %v3574 = vpop.f32.mrb[0].mxu0
  %3575 = vmatprep.mubr.f32.mxu0 %v2443
  %3576 = vmatmul.mubr.f32.gmra.mrb[0].mxu0 %v2442
  %v3577 = vpop.f32.mrb[0].mxu0
  %v3578 = vadd.f32 %v3353, %v3577
  %v3579 = vpop.f32.mrb[0].mxu0
  %3580 = vmatprep.mubr.f32.mxu0 %v2456
  %3581 = vmatmul.mubr.f32.gmra.mrb[0].mxu0 %v2455
  %v3582 = vpop.f32.mrb[0].mxu0
  %v3583 = vadd.f32 %v3358, %v3582
  %v3584 = vpop.f32.mrb[0].mxu0
  %3585 = vmatprep.mubr.f32.mxu0 %v2469
  %3586 = vmatmul.mubr.f32.gmra.mrb[0].mxu0 %v2468
  %v3587 = vpop.f32.mrb[0].mxu0
  %v3588 = vadd.f32 %v3363, %v3587
  %v3589 = vpop.f32.mrb[0].mxu0
  %3590 = vmatprep.mubr.f32.mxu0 %v2482
  %3591 = vmatmul.mubr.f32.gmra.mrb[0].mxu0 %v2481
  %v3592 = vpop.f32.mrb[0].mxu0
  %v3593 = vadd.f32 %v3368, %v3592
  %v3594 = vpop.f32.mrb[0].mxu0
  %3595 = vmatprep.mubr.f32.mxu0 %v2495
  %3596 = vmatmul.mubr.f32.gmra.mrb[0].mxu0 %v2494
  %v3597 = vpop.f32.mrb[0].mxu0
  %v3598 = vadd.f32 %v3373, %v3597
  %v3599 = vpop.f32.mrb[0].mxu0
  %3600 = vmatprep.mubr.f32.mxu0 %v2508
  %3601 = vmatmul.mubr.f32.gmra.mrb[0].mxu0 %v2507
  %v3602 = vpop.f32.mrb[0].mxu0
  %v3603 = vadd.f32 %v3378, %v3602
  %v3604 = vpop.f32.mrb[0].mxu0
  %3605 = vmatprep.mubr.f32.mxu0 %v2521
  %3606 = vmatmul.mubr.f32.gmra.mrb[0].mxu0 %v2520
  %v3607 = vpop.f32.mrb[0].mxu0
  %v3608 = vadd.f32 %v3383, %v3607
  %v3609 = vpop.f32.mrb[0].mxu0
  %3610 = vmatprep.mubr.f32.mxu0 %v2534
  %3611 = vmatmul.mubr.f32.gmra.mrb[0].mxu0 %v2533
  %v3612 = vpop.f32.mrb[0].mxu0
  %v3613 = vadd.f32 %v3388, %v3612
  %v3614 = vpop.f32.mrb[0].mxu0
  %3615 = vmatprep.mubr.f32.mxu0 %v2547
  %3616 = vmatmul.mubr.f32.gmra.mrb[0].mxu0 %v2546
  %v3617 = vpop.f32.mrb[0].mxu0
  %v3618 = vadd.f32 %v3393, %v3617
  %v3619 = vpop.f32.mrb[0].mxu0
  %3620 = vmatprep.mubr.f32.mxu0 %v2560
  %3621 = vmatmul.mubr.f32.gmra.mrb[0].mxu0 %v2559
  %v3622 = vpop.f32.mrb[0].mxu0
  %v3623 = vadd.f32 %v3398, %v3622
  %v3624 = vpop.f32.mrb[0].mxu0
  %3625 = vmatprep.mubr.f32.mxu0 %v2573
  %3626 = vmatmul.mubr.f32.gmra.mrb[0].mxu0 %v2572
  %v3627 = vpop.f32.mrb[0].mxu0
  %v3628 = vadd.f32 %v3403, %v3627
  %v3629 = vpop.f32.mrb[0].mxu0
  %3630 = vmatprep.mubr.f32.mxu0 %v2586
  %3631 = vmatmul.mubr.f32.gmra.mrb[0].mxu0 %v2585
  %v3632 = vpop.f32.mrb[0].mxu0
  %v3633 = vadd.f32 %v3408, %v3632
  %v3634 = vpop.f32.mrb[0].mxu0
  %3635 = vmatprep.mubr.f32.mxu0 %v2599
  %3636 = vmatmul.mubr.f32.gmra.mrb[0].mxu0 %v2598
  %v3637 = vpop.f32.mrb[0].mxu0
  %v3638 = vadd.f32 %v3413, %v3637
  %v3639 = vpop.f32.mrb[0].mxu0
  %3640 = vmatprep.mubr.f32.mxu0 %v2612
  %3641 = vmatmul.mubr.f32.gmra.mrb[0].mxu0 %v2611
  %v3642 = vpop.f32.mrb[0].mxu0
  %v3643 = vadd.f32 %v3418, %v3642
  %v3644 = vpop.f32.mrb[0].mxu0
  %3645 = vmatprep.mubr.f32.mxu0 %v2625
  %3646 = vmatmul.mubr.f32.gmra.mrb[0].mxu0 %v2624
  %v3647 = vpop.f32.mrb[0].mxu0
  %v3648 = vadd.f32 %v3423, %v3647
  %v3649 = vpop.f32.mrb[0].mxu0
  %3650 = vmatprep.mubr.f32.mxu0 %v2638
  %3651 = vmatmul.mubr.f32.gmra.mrb[0].mxu0 %v2637
  %v3652 = vpop.f32.mrb[0].mxu0
  %v3653 = vadd.f32 %v3428, %v3652
  %v3654 = vpop.f32.mrb[0].mxu0
  %3655 = vmatprep.mubr.f32.mxu0 %v2651
  %3656 = vmatmul.mubr.f32.gmra.mrb[0].mxu0 %v2650
  %v3657 = vpop.f32.mrb[0].mxu0
  %v3658 = vadd.f32 %v3433, %v3657
  %v3659 = vpop.f32.mrb[0].mxu0
  %3660 = vmatprep.mubr.f32.mxu0 %v2664
  %3661 = vmatmul.mubr.f32.gmra.mrb[0].mxu0 %v2663
  %v3662 = vpop.f32.mrb[0].mxu0
  %v3663 = vadd.f32 %v3438, %v3662
  %v3664 = vpop.f32.mrb[0].mxu0
  %3665 = vmatprep.mubr.f32.mxu0 %v2677
  %3666 = vmatmul.mubr.f32.gmra.mrb[0].mxu0 %v2676
  %v3667 = vpop.f32.mrb[0].mxu0
  %v3668 = vadd.f32 %v3443, %v3667
  %v3669 = vpop.f32.mrb[0].mxu0
  %3670 = vmatprep.mubr.f32.mxu0 %v2690
  %3671 = vmatmul.mubr.f32.gmra.mrb[0].mxu0 %v2689
  %v3672 = vpop.f32.mrb[0].mxu0
  %v3673 = vadd.f32 %v3448, %v3672
  %v3674 = vpop.f32.mrb[0].mxu0
  %3675 = vdwg.mxu0
  %3676 = vmatprep.subr.mxu0 0.0
  %3677 = vmatpush1.msra.mxu0 %v2794
  %3678 = vmatprep.subr.mxu0 0.0
  %3679 = vmatpush1.msra.mxu0 %v2795
  %3680 = vmatprep.subr.mxu0 0.0
  %3681 = vmatpush1.msra.mxu0 %v2796
  %3682 = vmatprep.subr.mxu0 0.0
  %3683 = vmatpush1.msra.mxu0 %v2797
  %3684 = vmatprep.subr.mxu0 0.0
  %3685 = vmatpush1.msra.mxu0 %v2798
  %3686 = vmatprep.subr.mxu0 0.0
  %3687 = vmatpush1.msra.mxu0 %v2799
  %3688 = vmatprep.subr.mxu0 0.0
  %3689 = vmatpush1.msra.mxu0 %v2800
  %3690 = vmatprep.subr.mxu0 0.0
  %3691 = vmatpush1.msra.mxu0 %v2801
  %3692 = vmatprep.subr.mxu0 0.0
  %3693 = vmatpush1.msra.mxu0 %v2802
  %3694 = vmatprep.subr.mxu0 0.0
  %3695 = vmatpush1.msra.mxu0 %v2803
  %3696 = vmatprep.subr.mxu0 0.0
  %3697 = vmatpush1.msra.mxu0 %v2804
  %3698 = vmatprep.subr.mxu0 0.0
  %3699 = vmatpush1.msra.mxu0 %v2805
  %3700 = vmatprep.subr.mxu0 0.0
  %3701 = vmatpush1.msra.mxu0 %v2806
  %3702 = vmatprep.subr.mxu0 0.0
  %3703 = vmatpush1.msra.mxu0 %v2807
  %3704 = vmatprep.subr.mxu0 0.0
  %3705 = vmatpush1.msra.mxu0 %v2808
  %3706 = vmatprep.subr.mxu0 0.0
  %3707 = vmatpush1.msra.mxu0 %v2809
  %3708 = vmatprep.subr.mxu0 0.0
  %3709 = vmatpush1.msra.mxu0 %v2810
  %3710 = vmatprep.subr.mxu0 0.0
  %3711 = vmatpush1.msra.mxu0 %v2811
  %3712 = vmatprep.subr.mxu0 0.0
  %3713 = vmatpush1.msra.mxu0 %v2812
  %3714 = vmatprep.subr.mxu0 0.0
  %3715 = vmatpush1.msra.mxu0 %v2813
  %3716 = vmatprep.subr.mxu0 0.0
  %3717 = vmatpush1.msra.mxu0 %v2814
  %3718 = vmatprep.subr.mxu0 0.0
  %3719 = vmatpush1.msra.mxu0 %v2815
  %3720 = vmatprep.subr.mxu0 0.0
  %3721 = vmatpush1.msra.mxu0 %v2816
  %3722 = vmatprep.subr.mxu0 0.0
  %3723 = vmatpush1.msra.mxu0 %v2817
  %3724 = vmatprep.subr.mxu0 0.0
  %3725 = vmatpush1.msra.mxu0 %v2818
  %3726 = vmatprep.subr.mxu0 0.0
  %3727 = vmatpush1.msra.mxu0 %v2819
  %3728 = vmatprep.subr.mxu0 0.0
  %3729 = vmatpush1.msra.mxu0 %v2820
  %3730 = vmatprep.subr.mxu0 0.0
  %3731 = vmatpush1.msra.mxu0 %v2821
  %3732 = vmatprep.subr.mxu0 0.0
  %3733 = vmatpush1.msra.mxu0 %v2822
  %3734 = vmatprep.subr.mxu0 0.0
  %3735 = vmatpush1.msra.mxu0 %v2823
  %3736 = vmatprep.subr.mxu0 0.0
  %3737 = vmatpush1.msra.mxu0 %v2824
  %3738 = vmatprep.subr.mxu0 0.0
  %3739 = vmatpush1.msra.mxu0 %v2825
  %3740 = vmatprep.mubr.f32.mxu0 %v2289
  %3741 = vmatmul.mubr.f32.gmra.mrb[0].mxu0 %v2288
  %v3742 = vpop.f32.mrb[0].mxu0
  %v3743 = vadd.f32 %v3518, %v3742
  %v3744 = vpop.f32.mrb[0].mxu0
  %3745 = vmatprep.mubr.f32.mxu0 %v2302
  %3746 = vmatmul.mubr.f32.gmra.mrb[0].mxu0 %v2301
  %v3747 = vpop.f32.mrb[0].mxu0
  %v3748 = vadd.f32 %v3523, %v3747
  %v3749 = vpop.f32.mrb[0].mxu0
  %3750 = vmatprep.mubr.f32.mxu0 %v2315
  %3751 = vmatmul.mubr.f32.gmra.mrb[0].mxu0 %v2314
  %v3752 = vpop.f32.mrb[0].mxu0
  %v3753 = vadd.f32 %v3528, %v3752
  %v3754 = vpop.f32.mrb[0].mxu0
  %3755 = vmatprep.mubr.f32.mxu0 %v2328
  %3756 = vmatmul.mubr.f32.gmra.mrb[0].mxu0 %v2327
  %v3757 = vpop.f32.mrb[0].mxu0
  %v3758 = vadd.f32 %v3533, %v3757
  %v3759 = vpop.f32.mrb[0].mxu0
  %3760 = vmatprep.mubr.f32.mxu0 %v2341
  %3761 = vmatmul.mubr.f32.gmra.mrb[0].mxu0 %v2340
  %v3762 = vpop.f32.mrb[0].mxu0
  %v3763 = vadd.f32 %v3538, %v3762
  %v3764 = vpop.f32.mrb[0].mxu0
  %3765 = vmatprep.mubr.f32.mxu0 %v2354
  %3766 = vmatmul.mubr.f32.gmra.mrb[0].mxu0 %v2353
  %v3767 = vpop.f32.mrb[0].mxu0
  %v3768 = vadd.f32 %v3543, %v3767
  %v3769 = vpop.f32.mrb[0].mxu0
  %3770 = vmatprep.mubr.f32.mxu0 %v2367
  %3771 = vmatmul.mubr.f32.gmra.mrb[0].mxu0 %v2366
  %v3772 = vpop.f32.mrb[0].mxu0
  %v3773 = vadd.f32 %v3548, %v3772
  %v3774 = vpop.f32.mrb[0].mxu0
  %3775 = vmatprep.mubr.f32.mxu0 %v2380
  %3776 = vmatmul.mubr.f32.gmra.mrb[0].mxu0 %v2379
  %v3777 = vpop.f32.mrb[0].mxu0
  %v3778 = vadd.f32 %v3553, %v3777
  %v3779 = vpop.f32.mrb[0].mxu0
  %3780 = vmatprep.mubr.f32.mxu0 %v2393
  %3781 = vmatmul.mubr.f32.gmra.mrb[0].mxu0 %v2392
  %v3782 = vpop.f32.mrb[0].mxu0
  %v3783 = vadd.f32 %v3558, %v3782
  %v3784 = vpop.f32.mrb[0].mxu0
  %3785 = vmatprep.mubr.f32.mxu0 %v2406
  %3786 = vmatmul.mubr.f32.gmra.mrb[0].mxu0 %v2405
  %v3787 = vpop.f32.mrb[0].mxu0
  %v3788 = vadd.f32 %v3563, %v3787
  %v3789 = vpop.f32.mrb[0].mxu0
  %3790 = vmatprep.mubr.f32.mxu0 %v2419
  %3791 = vmatmul.mubr.f32.gmra.mrb[0].mxu0 %v2418
  %v3792 = vpop.f32.mrb[0].mxu0
  %v3793 = vadd.f32 %v3568, %v3792
  %v3794 = vpop.f32.mrb[0].mxu0
  %3795 = vmatprep.mubr.f32.mxu0 %v2432
  %3796 = vmatmul.mubr.f32.gmra.mrb[0].mxu0 %v2431
  %v3797 = vpop.f32.mrb[0].mxu0
  %v3798 = vadd.f32 %v3573, %v3797
  %v3799 = vpop.f32.mrb[0].mxu0
  %3800 = vmatprep.mubr.f32.mxu0 %v2445
  %3801 = vmatmul.mubr.f32.gmra.mrb[0].mxu0 %v2444
  %v3802 = vpop.f32.mrb[0].mxu0
  %v3803 = vadd.f32 %v3578, %v3802
  %v3804 = vpop.f32.mrb[0].mxu0
  %3805 = vmatprep.mubr.f32.mxu0 %v2458
  %3806 = vmatmul.mubr.f32.gmra.mrb[0].mxu0 %v2457
  %v3807 = vpop.f32.mrb[0].mxu0
  %v3808 = vadd.f32 %v3583, %v3807
  %v3809 = vpop.f32.mrb[0].mxu0
  %3810 = vmatprep.mubr.f32.mxu0 %v2471
  %3811 = vmatmul.mubr.f32.gmra.mrb[0].mxu0 %v2470
  %v3812 = vpop.f32.mrb[0].mxu0
  %v3813 = vadd.f32 %v3588, %v3812
  %v3814 = vpop.f32.mrb[0].mxu0
  %3815 = vmatprep.mubr.f32.mxu0 %v2484
  %3816 = vmatmul.mubr.f32.gmra.mrb[0].mxu0 %v2483
  %v3817 = vpop.f32.mrb[0].mxu0
  %v3818 = vadd.f32 %v3593, %v3817
  %v3819 = vpop.f32.mrb[0].mxu0
  %3820 = vmatprep.mubr.f32.mxu0 %v2497
  %3821 = vmatmul.mubr.f32.gmra.mrb[0].mxu0 %v2496
  %v3822 = vpop.f32.mrb[0].mxu0
  %v3823 = vadd.f32 %v3598, %v3822
  %v3824 = vpop.f32.mrb[0].mxu0
  %3825 = vmatprep.mubr.f32.mxu0 %v2510
  %3826 = vmatmul.mubr.f32.gmra.mrb[0].mxu0 %v2509
  %v3827 = vpop.f32.mrb[0].mxu0
  %v3828 = vadd.f32 %v3603, %v3827
  %v3829 = vpop.f32.mrb[0].mxu0
  %3830 = vmatprep.mubr.f32.mxu0 %v2523
  %3831 = vmatmul.mubr.f32.gmra.mrb[0].mxu0 %v2522
  %v3832 = vpop.f32.mrb[0].mxu0
  %v3833 = vadd.f32 %v3608, %v3832
  %v3834 = vpop.f32.mrb[0].mxu0
  %3835 = vmatprep.mubr.f32.mxu0 %v2536
  %3836 = vmatmul.mubr.f32.gmra.mrb[0].mxu0 %v2535
  %v3837 = vpop.f32.mrb[0].mxu0
  %v3838 = vadd.f32 %v3613, %v3837
  %v3839 = vpop.f32.mrb[0].mxu0
  %3840 = vmatprep.mubr.f32.mxu0 %v2549
  %3841 = vmatmul.mubr.f32.gmra.mrb[0].mxu0 %v2548
  %v3842 = vpop.f32.mrb[0].mxu0
  %v3843 = vadd.f32 %v3618, %v3842
  %v3844 = vpop.f32.mrb[0].mxu0
  %3845 = vmatprep.mubr.f32.mxu0 %v2562
  %3846 = vmatmul.mubr.f32.gmra.mrb[0].mxu0 %v2561
  %v3847 = vpop.f32.mrb[0].mxu0
  %v3848 = vadd.f32 %v3623, %v3847
  %v3849 = vpop.f32.mrb[0].mxu0
  %3850 = vmatprep.mubr.f32.mxu0 %v2575
  %3851 = vmatmul.mubr.f32.gmra.mrb[0].mxu0 %v2574
  %v3852 = vpop.f32.mrb[0].mxu0
  %v3853 = vadd.f32 %v3628, %v3852
  %v3854 = vpop.f32.mrb[0].mxu0
  %3855 = vmatprep.mubr.f32.mxu0 %v2588
  %3856 = vmatmul.mubr.f32.gmra.mrb[0].mxu0 %v2587
  %v3857 = vpop.f32.mrb[0].mxu0
  %v3858 = vadd.f32 %v3633, %v3857
  %v3859 = vpop.f32.mrb[0].mxu0
  %3860 = vmatprep.mubr.f32.mxu0 %v2601
  %3861 = vmatmul.mubr.f32.gmra.mrb[0].mxu0 %v2600
  %v3862 = vpop.f32.mrb[0].mxu0
  %v3863 = vadd.f32 %v3638, %v3862
  %v3864 = vpop.f32.mrb[0].mxu0
  %3865 = vmatprep.mubr.f32.mxu0 %v2614
  %3866 = vmatmul.mubr.f32.gmra.mrb[0].mxu0 %v2613
  %v3867 = vpop.f32.mrb[0].mxu0
  %v3868 = vadd.f32 %v3643, %v3867
  %v3869 = vpop.f32.mrb[0].mxu0
  %3870 = vmatprep.mubr.f32.mxu0 %v2627
  %3871 = vmatmul.mubr.f32.gmra.mrb[0].mxu0 %v2626
  %v3872 = vpop.f32.mrb[0].mxu0
  %v3873 = vadd.f32 %v3648, %v3872
  %v3874 = vpop.f32.mrb[0].mxu0
  %3875 = vmatprep.mubr.f32.mxu0 %v2640
  %3876 = vmatmul.mubr.f32.gmra.mrb[0].mxu0 %v2639
  %v3877 = vpop.f32.mrb[0].mxu0
  %v3878 = vadd.f32 %v3653, %v3877
  %v3879 = vpop.f32.mrb[0].mxu0
  %3880 = vmatprep.mubr.f32.mxu0 %v2653
  %3881 = vmatmul.mubr.f32.gmra.mrb[0].mxu0 %v2652
  %v3882 = vpop.f32.mrb[0].mxu0
  %v3883 = vadd.f32 %v3658, %v3882
  %v3884 = vpop.f32.mrb[0].mxu0
  %3885 = vmatprep.mubr.f32.mxu0 %v2666
  %3886 = vmatmul.mubr.f32.gmra.mrb[0].mxu0 %v2665
  %v3887 = vpop.f32.mrb[0].mxu0
  %v3888 = vadd.f32 %v3663, %v3887
  %v3889 = vpop.f32.mrb[0].mxu0
  %3890 = vmatprep.mubr.f32.mxu0 %v2679
  %3891 = vmatmul.mubr.f32.gmra.mrb[0].mxu0 %v2678
  %v3892 = vpop.f32.mrb[0].mxu0
  %v3893 = vadd.f32 %v3668, %v3892
  %v3894 = vpop.f32.mrb[0].mxu0
  %3895 = vmatprep.mubr.f32.mxu0 %v2692
  %3896 = vmatmul.mubr.f32.gmra.mrb[0].mxu0 %v2691
  %v3897 = vpop.f32.mrb[0].mxu0
  %v3898 = vadd.f32 %v3673, %v3897
  %v3899 = vpop.f32.mrb[0].mxu0
  %3900 = vdwg.mxu0
  %3901 = vmatprep.subr.mxu0 0.0
  %3902 = vmatpush1.msra.mxu0 %v2826
  %3903 = vmatprep.subr.mxu0 0.0
  %3904 = vmatpush1.msra.mxu0 %v2827
  %3905 = vmatprep.subr.mxu0 0.0
  %3906 = vmatpush1.msra.mxu0 %v2828
  %3907 = vmatprep.subr.mxu0 0.0
  %3908 = vmatpush1.msra.mxu0 %v2829
  %3909 = vmatprep.subr.mxu0 0.0
  %3910 = vmatpush1.msra.mxu0 %v2830
  %3911 = vmatprep.subr.mxu0 0.0
  %3912 = vmatpush1.msra.mxu0 %v2831
  %3913 = vmatprep.subr.mxu0 0.0
  %3914 = vmatpush1.msra.mxu0 %v2832
  %3915 = vmatprep.subr.mxu0 0.0
  %3916 = vmatpush1.msra.mxu0 %v2833
  %3917 = vmatprep.subr.mxu0 0.0
  %3918 = vmatpush1.msra.mxu0 %v2834
  %3919 = vmatprep.subr.mxu0 0.0
  %3920 = vmatpush1.msra.mxu0 %v2835
  %3921 = vmatprep.subr.mxu0 0.0
  %3922 = vmatpush1.msra.mxu0 %v2836
  %3923 = vmatprep.subr.mxu0 0.0
  %3924 = vmatpush1.msra.mxu0 %v2837
  %3925 = vmatprep.subr.mxu0 0.0
  %3926 = vmatpush1.msra.mxu0 %v2838
  %3927 = vmatprep.subr.mxu0 0.0
  %3928 = vmatpush1.msra.mxu0 %v2839
  %3929 = vmatprep.subr.mxu0 0.0
  %3930 = vmatpush1.msra.mxu0 %v2840
  %3931 = vmatprep.subr.mxu0 0.0
  %3932 = vmatpush1.msra.mxu0 %v2841
  %3933 = vmatprep.subr.mxu0 0.0
  %3934 = vmatpush1.msra.mxu0 %v2842
  %3935 = vmatprep.subr.mxu0 0.0
  %3936 = vmatpush1.msra.mxu0 %v2843
  %3937 = vmatprep.subr.mxu0 0.0
  %3938 = vmatpush1.msra.mxu0 %v2844
  %3939 = vmatprep.subr.mxu0 0.0
  %3940 = vmatpush1.msra.mxu0 %v2845
  %3941 = vmatprep.subr.mxu0 0.0
  %3942 = vmatpush1.msra.mxu0 %v2846
  %3943 = vmatprep.subr.mxu0 0.0
  %3944 = vmatpush1.msra.mxu0 %v2847
  %3945 = vmatprep.subr.mxu0 0.0
  %3946 = vmatpush1.msra.mxu0 %v2848
  %3947 = vmatprep.subr.mxu0 0.0
  %3948 = vmatpush1.msra.mxu0 %v2849
  %3949 = vmatprep.subr.mxu0 0.0
  %3950 = vmatpush1.msra.mxu0 %v2850
  %3951 = vmatprep.subr.mxu0 0.0
  %3952 = vmatpush1.msra.mxu0 %v2851
  %3953 = vmatprep.subr.mxu0 0.0
  %3954 = vmatpush1.msra.mxu0 %v2852
  %3955 = vmatprep.subr.mxu0 0.0
  %3956 = vmatpush1.msra.mxu0 %v2853
  %3957 = vmatprep.subr.mxu0 0.0
  %3958 = vmatpush1.msra.mxu0 %v2854
  %3959 = vmatprep.subr.mxu0 0.0
  %3960 = vmatpush1.msra.mxu0 %v2855
  %3961 = vmatprep.subr.mxu0 0.0
  %3962 = vmatpush1.msra.mxu0 %v2856
  %3963 = vmatprep.subr.mxu0 0.0
  %3964 = vmatpush1.msra.mxu0 %v2857
  %3965 = vmatprep.mubr.f32.mxu0 %v2291
  %3966 = vmatmul.mubr.f32.gmra.mrb[0].mxu0 %v2290
  %v3967 = vpop.f32.mrb[0].mxu0
  %v3968 = vadd.f32 %v3743, %v3967
  %v3969 = vpop.f32.mrb[0].mxu0
  %3970 = vmatprep.mubr.f32.mxu0 %v2304
  %3971 = vmatmul.mubr.f32.gmra.mrb[0].mxu0 %v2303
  %v3972 = vpop.f32.mrb[0].mxu0
  %v3973 = vadd.f32 %v3748, %v3972
  %v3974 = vpop.f32.mrb[0].mxu0
  %3975 = vmatprep.mubr.f32.mxu0 %v2317
  %3976 = vmatmul.mubr.f32.gmra.mrb[0].mxu0 %v2316
  %v3977 = vpop.f32.mrb[0].mxu0
  %v3978 = vadd.f32 %v3753, %v3977
  %v3979 = vpop.f32.mrb[0].mxu0
  %3980 = vmatprep.mubr.f32.mxu0 %v2330
  %3981 = vmatmul.mubr.f32.gmra.mrb[0].mxu0 %v2329
  %v3982 = vpop.f32.mrb[0].mxu0
  %v3983 = vadd.f32 %v3758, %v3982
  %v3984 = vpop.f32.mrb[0].mxu0
  %3985 = vmatprep.mubr.f32.mxu0 %v2343
  %3986 = vmatmul.mubr.f32.gmra.mrb[0].mxu0 %v2342
  %v3987 = vpop.f32.mrb[0].mxu0
  %v3988 = vadd.f32 %v3763, %v3987
  %v3989 = vpop.f32.mrb[0].mxu0
  %3990 = vmatprep.mubr.f32.mxu0 %v2356
  %3991 = vmatmul.mubr.f32.gmra.mrb[0].mxu0 %v2355
  %v3992 = vpop.f32.mrb[0].mxu0
  %v3993 = vadd.f32 %v3768, %v3992
  %v3994 = vpop.f32.mrb[0].mxu0
  %3995 = vmatprep.mubr.f32.mxu0 %v2369
  %3996 = vmatmul.mubr.f32.gmra.mrb[0].mxu0 %v2368
  %v3997 = vpop.f32.mrb[0].mxu0
  %v3998 = vadd.f32 %v3773, %v3997
  %v3999 = vpop.f32.mrb[0].mxu0
  %4000 = vmatprep.mubr.f32.mxu0 %v2382
  %4001 = vmatmul.mubr.f32.gmra.mrb[0].mxu0 %v2381
  %v4002 = vpop.f32.mrb[0].mxu0
  %v4003 = vadd.f32 %v3778, %v4002
  %v4004 = vpop.f32.mrb[0].mxu0
  %4005 = vmatprep.mubr.f32.mxu0 %v2395
  %4006 = vmatmul.mubr.f32.gmra.mrb[0].mxu0 %v2394
  %v4007 = vpop.f32.mrb[0].mxu0
  %v4008 = vadd.f32 %v3783, %v4007
  %v4009 = vpop.f32.mrb[0].mxu0
  %4010 = vmatprep.mubr.f32.mxu0 %v2408
  %4011 = vmatmul.mubr.f32.gmra.mrb[0].mxu0 %v2407
  %v4012 = vpop.f32.mrb[0].mxu0
  %v4013 = vadd.f32 %v3788, %v4012
  %v4014 = vpop.f32.mrb[0].mxu0
  %4015 = vmatprep.mubr.f32.mxu0 %v2421
  %4016 = vmatmul.mubr.f32.gmra.mrb[0].mxu0 %v2420
  %v4017 = vpop.f32.mrb[0].mxu0
  %v4018 = vadd.f32 %v3793, %v4017
  %v4019 = vpop.f32.mrb[0].mxu0
  %4020 = vmatprep.mubr.f32.mxu0 %v2434
  %4021 = vmatmul.mubr.f32.gmra.mrb[0].mxu0 %v2433
  %v4022 = vpop.f32.mrb[0].mxu0
  %v4023 = vadd.f32 %v3798, %v4022
  %v4024 = vpop.f32.mrb[0].mxu0
  %4025 = vmatprep.mubr.f32.mxu0 %v2447
  %4026 = vmatmul.mubr.f32.gmra.mrb[0].mxu0 %v2446
  %v4027 = vpop.f32.mrb[0].mxu0
  %v4028 = vadd.f32 %v3803, %v4027
  %v4029 = vpop.f32.mrb[0].mxu0
  %4030 = vmatprep.mubr.f32.mxu0 %v2460
  %4031 = vmatmul.mubr.f32.gmra.mrb[0].mxu0 %v2459
  %v4032 = vpop.f32.mrb[0].mxu0
  %v4033 = vadd.f32 %v3808, %v4032
  %v4034 = vpop.f32.mrb[0].mxu0
  %4035 = vmatprep.mubr.f32.mxu0 %v2473
  %4036 = vmatmul.mubr.f32.gmra.mrb[0].mxu0 %v2472
  %v4037 = vpop.f32.mrb[0].mxu0
  %v4038 = vadd.f32 %v3813, %v4037
  %v4039 = vpop.f32.mrb[0].mxu0
  %4040 = vmatprep.mubr.f32.mxu0 %v2486
  %4041 = vmatmul.mubr.f32.gmra.mrb[0].mxu0 %v2485
  %v4042 = vpop.f32.mrb[0].mxu0
  %v4043 = vadd.f32 %v3818, %v4042
  %v4044 = vpop.f32.mrb[0].mxu0
  %4045 = vmatprep.mubr.f32.mxu0 %v2499
  %4046 = vmatmul.mubr.f32.gmra.mrb[0].mxu0 %v2498
  %v4047 = vpop.f32.mrb[0].mxu0
  %v4048 = vadd.f32 %v3823, %v4047
  %v4049 = vpop.f32.mrb[0].mxu0
  %4050 = vmatprep.mubr.f32.mxu0 %v2512
  %4051 = vmatmul.mubr.f32.gmra.mrb[0].mxu0 %v2511
  %v4052 = vpop.f32.mrb[0].mxu0
  %v4053 = vadd.f32 %v3828, %v4052
  %v4054 = vpop.f32.mrb[0].mxu0
  %4055 = vmatprep.mubr.f32.mxu0 %v2525
  %4056 = vmatmul.mubr.f32.gmra.mrb[0].mxu0 %v2524
  %v4057 = vpop.f32.mrb[0].mxu0
  %v4058 = vadd.f32 %v3833, %v4057
  %v4059 = vpop.f32.mrb[0].mxu0
  %4060 = vmatprep.mubr.f32.mxu0 %v2538
  %4061 = vmatmul.mubr.f32.gmra.mrb[0].mxu0 %v2537
  %v4062 = vpop.f32.mrb[0].mxu0
  %v4063 = vadd.f32 %v3838, %v4062
  %v4064 = vpop.f32.mrb[0].mxu0
  %4065 = vmatprep.mubr.f32.mxu0 %v2551
  %4066 = vmatmul.mubr.f32.gmra.mrb[0].mxu0 %v2550
  %v4067 = vpop.f32.mrb[0].mxu0
  %v4068 = vadd.f32 %v3843, %v4067
  %v4069 = vpop.f32.mrb[0].mxu0
  %4070 = vmatprep.mubr.f32.mxu0 %v2564
  %4071 = vmatmul.mubr.f32.gmra.mrb[0].mxu0 %v2563
  %v4072 = vpop.f32.mrb[0].mxu0
  %v4073 = vadd.f32 %v3848, %v4072
  %v4074 = vpop.f32.mrb[0].mxu0
  %4075 = vmatprep.mubr.f32.mxu0 %v2577
  %4076 = vmatmul.mubr.f32.gmra.mrb[0].mxu0 %v2576
  %v4077 = vpop.f32.mrb[0].mxu0
  %v4078 = vadd.f32 %v3853, %v4077
  %v4079 = vpop.f32.mrb[0].mxu0
  %4080 = vmatprep.mubr.f32.mxu0 %v2590
  %4081 = vmatmul.mubr.f32.gmra.mrb[0].mxu0 %v2589
  %v4082 = vpop.f32.mrb[0].mxu0
  %v4083 = vadd.f32 %v3858, %v4082
  %v4084 = vpop.f32.mrb[0].mxu0
  %4085 = vmatprep.mubr.f32.mxu0 %v2603
  %4086 = vmatmul.mubr.f32.gmra.mrb[0].mxu0 %v2602
  %v4087 = vpop.f32.mrb[0].mxu0
  %v4088 = vadd.f32 %v3863, %v4087
  %v4089 = vpop.f32.mrb[0].mxu0
  %4090 = vmatprep.mubr.f32.mxu0 %v2616
  %4091 = vmatmul.mubr.f32.gmra.mrb[0].mxu0 %v2615
  %v4092 = vpop.f32.mrb[0].mxu0
  %v4093 = vadd.f32 %v3868, %v4092
  %v4094 = vpop.f32.mrb[0].mxu0
  %4095 = vmatprep.mubr.f32.mxu0 %v2629
  %4096 = vmatmul.mubr.f32.gmra.mrb[0].mxu0 %v2628
  %v4097 = vpop.f32.mrb[0].mxu0
  %v4098 = vadd.f32 %v3873, %v4097
  %v4099 = vpop.f32.mrb[0].mxu0
  %4100 = vmatprep.mubr.f32.mxu0 %v2642
  %4101 = vmatmul.mubr.f32.gmra.mrb[0].mxu0 %v2641
  %v4102 = vpop.f32.mrb[0].mxu0
  %v4103 = vadd.f32 %v3878, %v4102
  %v4104 = vpop.f32.mrb[0].mxu0
  %4105 = vmatprep.mubr.f32.mxu0 %v2655
  %4106 = vmatmul.mubr.f32.gmra.mrb[0].mxu0 %v2654
  %v4107 = vpop.f32.mrb[0].mxu0
  %v4108 = vadd.f32 %v3883, %v4107
  %v4109 = vpop.f32.mrb[0].mxu0
  %4110 = vmatprep.mubr.f32.mxu0 %v2668
  %4111 = vmatmul.mubr.f32.gmra.mrb[0].mxu0 %v2667
  %v4112 = vpop.f32.mrb[0].mxu0
  %v4113 = vadd.f32 %v3888, %v4112
  %v4114 = vpop.f32.mrb[0].mxu0
  %4115 = vmatprep.mubr.f32.mxu0 %v2681
  %4116 = vmatmul.mubr.f32.gmra.mrb[0].mxu0 %v2680
  %v4117 = vpop.f32.mrb[0].mxu0
  %v4118 = vadd.f32 %v3893, %v4117
  %v4119 = vpop.f32.mrb[0].mxu0
  %4120 = vmatprep.mubr.f32.mxu0 %v2694
  %4121 = vmatmul.mubr.f32.gmra.mrb[0].mxu0 %v2693
  %v4122 = vpop.f32.mrb[0].mxu0
  %v4123 = vadd.f32 %v3898, %v4122
  %v4124 = vpop.f32.mrb[0].mxu0
  %4125 = vdwg.mxu0
  %4126 = vmatprep.subr.mxu0 0.0
  %4127 = vmatpush1.msra.mxu0 %v2858
  %4128 = vmatprep.subr.mxu0 0.0
  %4129 = vmatpush1.msra.mxu0 %v2859
  %4130 = vmatprep.subr.mxu0 0.0
  %4131 = vmatpush1.msra.mxu0 %v2860
  %4132 = vmatprep.subr.mxu0 0.0
  %4133 = vmatpush1.msra.mxu0 %v2861
  %4134 = vmatprep.subr.mxu0 0.0
  %4135 = vmatpush1.msra.mxu0 %v2862
  %4136 = vmatprep.subr.mxu0 0.0
  %4137 = vmatpush1.msra.mxu0 %v2863
  %4138 = vmatprep.subr.mxu0 0.0
  %4139 = vmatpush1.msra.mxu0 %v2864
  %4140 = vmatprep.subr.mxu0 0.0
  %4141 = vmatpush1.msra.mxu0 %v2865
  %4142 = vmatprep.subr.mxu0 0.0
  %4143 = vmatpush1.msra.mxu0 %v2866
  %4144 = vmatprep.subr.mxu0 0.0
  %4145 = vmatpush1.msra.mxu0 %v2867
  %4146 = vmatprep.subr.mxu0 0.0
  %4147 = vmatpush1.msra.mxu0 %v2868
  %4148 = vmatprep.subr.mxu0 0.0
  %4149 = vmatpush1.msra.mxu0 %v2869
  %4150 = vmatprep.subr.mxu0 0.0
  %4151 = vmatpush1.msra.mxu0 %v2870
  %4152 = vmatprep.subr.mxu0 0.0
  %4153 = vmatpush1.msra.mxu0 %v2871
  %4154 = vmatprep.subr.mxu0 0.0
  %4155 = vmatpush1.msra.mxu0 %v2872
  %4156 = vmatprep.subr.mxu0 0.0
  %4157 = vmatpush1.msra.mxu0 %v2873
  %4158 = vmatprep.subr.mxu0 0.0
  %4159 = vmatpush1.msra.mxu0 %v2874
  %4160 = vmatprep.subr.mxu0 0.0
  %4161 = vmatpush1.msra.mxu0 %v2875
  %4162 = vmatprep.subr.mxu0 0.0
  %4163 = vmatpush1.msra.mxu0 %v2876
  %4164 = vmatprep.subr.mxu0 0.0
  %4165 = vmatpush1.msra.mxu0 %v2877
  %4166 = vmatprep.subr.mxu0 0.0
  %4167 = vmatpush1.msra.mxu0 %v2878
  %4168 = vmatprep.subr.mxu0 0.0
  %4169 = vmatpush1.msra.mxu0 %v2879
  %4170 = vmatprep.subr.mxu0 0.0
  %4171 = vmatpush1.msra.mxu0 %v2880
  %4172 = vmatprep.subr.mxu0 0.0
  %4173 = vmatpush1.msra.mxu0 %v2881
  %4174 = vmatprep.subr.mxu0 0.0
  %4175 = vmatpush1.msra.mxu0 %v2882
  %4176 = vmatprep.subr.mxu0 0.0
  %4177 = vmatpush1.msra.mxu0 %v2883
  %4178 = vmatprep.subr.mxu0 0.0
  %4179 = vmatpush1.msra.mxu0 %v2884
  %4180 = vmatprep.subr.mxu0 0.0
  %4181 = vmatpush1.msra.mxu0 %v2885
  %4182 = vmatprep.subr.mxu0 0.0
  %4183 = vmatpush1.msra.mxu0 %v2886
  %4184 = vmatprep.subr.mxu0 0.0
  %4185 = vmatpush1.msra.mxu0 %v2887
  %4186 = vmatprep.subr.mxu0 0.0
  %4187 = vmatpush1.msra.mxu0 %v2888
  %4188 = vmatprep.subr.mxu0 0.0
  %4189 = vmatpush1.msra.mxu0 %v2889
  %4190 = vmatprep.mubr.f32.mxu0 %v2293
  %4191 = vmatmul.mubr.f32.gmra.mrb[0].mxu0 %v2292
  %v4192 = vpop.f32.mrb[0].mxu0
  %v4193 = vadd.f32 %v3968, %v4192
  %v4194 = vpop.f32.mrb[0].mxu0
  %4195 = vmatprep.mubr.f32.mxu0 %v2306
  %4196 = vmatmul.mubr.f32.gmra.mrb[0].mxu0 %v2305
  %v4197 = vpop.f32.mrb[0].mxu0
  %v4198 = vadd.f32 %v3973, %v4197
  %v4199 = vpop.f32.mrb[0].mxu0
  %4200 = vmatprep.mubr.f32.mxu0 %v2319
  %4201 = vmatmul.mubr.f32.gmra.mrb[0].mxu0 %v2318
  %v4202 = vpop.f32.mrb[0].mxu0
  %v4203 = vadd.f32 %v3978, %v4202
  %v4204 = vpop.f32.mrb[0].mxu0
  %4205 = vmatprep.mubr.f32.mxu0 %v2332
  %4206 = vmatmul.mubr.f32.gmra.mrb[0].mxu0 %v2331
  %v4207 = vpop.f32.mrb[0].mxu0
  %v4208 = vadd.f32 %v3983, %v4207
  %v4209 = vpop.f32.mrb[0].mxu0
  %4210 = vmatprep.mubr.f32.mxu0 %v2345
  %4211 = vmatmul.mubr.f32.gmra.mrb[0].mxu0 %v2344
  %v4212 = vpop.f32.mrb[0].mxu0
  %v4213 = vadd.f32 %v3988, %v4212
  %v4214 = vpop.f32.mrb[0].mxu0
  %4215 = vmatprep.mubr.f32.mxu0 %v2358
  %4216 = vmatmul.mubr.f32.gmra.mrb[0].mxu0 %v2357
  %v4217 = vpop.f32.mrb[0].mxu0
  %v4218 = vadd.f32 %v3993, %v4217
  %v4219 = vpop.f32.mrb[0].mxu0
  %4220 = vmatprep.mubr.f32.mxu0 %v2371
  %4221 = vmatmul.mubr.f32.gmra.mrb[0].mxu0 %v2370
  %v4222 = vpop.f32.mrb[0].mxu0
  %v4223 = vadd.f32 %v3998, %v4222
  %v4224 = vpop.f32.mrb[0].mxu0
  %4225 = vmatprep.mubr.f32.mxu0 %v2384
  %4226 = vmatmul.mubr.f32.gmra.mrb[0].mxu0 %v2383
  %v4227 = vpop.f32.mrb[0].mxu0
  %v4228 = vadd.f32 %v4003, %v4227
  %v4229 = vpop.f32.mrb[0].mxu0
  %4230 = vmatprep.mubr.f32.mxu0 %v2397
  %4231 = vmatmul.mubr.f32.gmra.mrb[0].mxu0 %v2396
  %v4232 = vpop.f32.mrb[0].mxu0
  %v4233 = vadd.f32 %v4008, %v4232
  %v4234 = vpop.f32.mrb[0].mxu0
  %4235 = vmatprep.mubr.f32.mxu0 %v2410
  %4236 = vmatmul.mubr.f32.gmra.mrb[0].mxu0 %v2409
  %v4237 = vpop.f32.mrb[0].mxu0
  %v4238 = vadd.f32 %v4013, %v4237
  %v4239 = vpop.f32.mrb[0].mxu0
  %4240 = vmatprep.mubr.f32.mxu0 %v2423
  %4241 = vmatmul.mubr.f32.gmra.mrb[0].mxu0 %v2422
  %v4242 = vpop.f32.mrb[0].mxu0
  %v4243 = vadd.f32 %v4018, %v4242
  %v4244 = vpop.f32.mrb[0].mxu0
  %4245 = vmatprep.mubr.f32.mxu0 %v2436
  %4246 = vmatmul.mubr.f32.gmra.mrb[0].mxu0 %v2435
  %v4247 = vpop.f32.mrb[0].mxu0
  %v4248 = vadd.f32 %v4023, %v4247
  %v4249 = vpop.f32.mrb[0].mxu0
  %4250 = vmatprep.mubr.f32.mxu0 %v2449
  %4251 = vmatmul.mubr.f32.gmra.mrb[0].mxu0 %v2448
  %v4252 = vpop.f32.mrb[0].mxu0
  %v4253 = vadd.f32 %v4028, %v4252
  %v4254 = vpop.f32.mrb[0].mxu0
  %4255 = vmatprep.mubr.f32.mxu0 %v2462
  %4256 = vmatmul.mubr.f32.gmra.mrb[0].mxu0 %v2461
  %v4257 = vpop.f32.mrb[0].mxu0
  %v4258 = vadd.f32 %v4033, %v4257
  %v4259 = vpop.f32.mrb[0].mxu0
  %4260 = vmatprep.mubr.f32.mxu0 %v2475
  %4261 = vmatmul.mubr.f32.gmra.mrb[0].mxu0 %v2474
  %v4262 = vpop.f32.mrb[0].mxu0
  %v4263 = vadd.f32 %v4038, %v4262
  %v4264 = vpop.f32.mrb[0].mxu0
  %4265 = vmatprep.mubr.f32.mxu0 %v2488
  %4266 = vmatmul.mubr.f32.gmra.mrb[0].mxu0 %v2487
  %v4267 = vpop.f32.mrb[0].mxu0
  %v4268 = vadd.f32 %v4043, %v4267
  %v4269 = vpop.f32.mrb[0].mxu0
  %4270 = vmatprep.mubr.f32.mxu0 %v2501
  %4271 = vmatmul.mubr.f32.gmra.mrb[0].mxu0 %v2500
  %v4272 = vpop.f32.mrb[0].mxu0
  %v4273 = vadd.f32 %v4048, %v4272
  %v4274 = vpop.f32.mrb[0].mxu0
  %4275 = vmatprep.mubr.f32.mxu0 %v2514
  %4276 = vmatmul.mubr.f32.gmra.mrb[0].mxu0 %v2513
  %v4277 = vpop.f32.mrb[0].mxu0
  %v4278 = vadd.f32 %v4053, %v4277
  %v4279 = vpop.f32.mrb[0].mxu0
  %4280 = vmatprep.mubr.f32.mxu0 %v2527
  %4281 = vmatmul.mubr.f32.gmra.mrb[0].mxu0 %v2526
  %v4282 = vpop.f32.mrb[0].mxu0
  %v4283 = vadd.f32 %v4058, %v4282
  %v4284 = vpop.f32.mrb[0].mxu0
  %4285 = vmatprep.mubr.f32.mxu0 %v2540
  %4286 = vmatmul.mubr.f32.gmra.mrb[0].mxu0 %v2539
  %v4287 = vpop.f32.mrb[0].mxu0
  %v4288 = vadd.f32 %v4063, %v4287
  %v4289 = vpop.f32.mrb[0].mxu0
  %4290 = vmatprep.mubr.f32.mxu0 %v2553
  %4291 = vmatmul.mubr.f32.gmra.mrb[0].mxu0 %v2552
  %v4292 = vpop.f32.mrb[0].mxu0
  %v4293 = vadd.f32 %v4068, %v4292
  %v4294 = vpop.f32.mrb[0].mxu0
  %4295 = vmatprep.mubr.f32.mxu0 %v2566
  %4296 = vmatmul.mubr.f32.gmra.mrb[0].mxu0 %v2565
  %v4297 = vpop.f32.mrb[0].mxu0
  %v4298 = vadd.f32 %v4073, %v4297
  %v4299 = vpop.f32.mrb[0].mxu0
  %4300 = vmatprep.mubr.f32.mxu0 %v2579
  %4301 = vmatmul.mubr.f32.gmra.mrb[0].mxu0 %v2578
  %v4302 = vpop.f32.mrb[0].mxu0
  %v4303 = vadd.f32 %v4078, %v4302
  %v4304 = vpop.f32.mrb[0].mxu0
  %4305 = vmatprep.mubr.f32.mxu0 %v2592
  %4306 = vmatmul.mubr.f32.gmra.mrb[0].mxu0 %v2591
  %v4307 = vpop.f32.mrb[0].mxu0
  %v4308 = vadd.f32 %v4083, %v4307
  %v4309 = vpop.f32.mrb[0].mxu0
  %4310 = vmatprep.mubr.f32.mxu0 %v2605
  %4311 = vmatmul.mubr.f32.gmra.mrb[0].mxu0 %v2604
  %v4312 = vpop.f32.mrb[0].mxu0
  %v4313 = vadd.f32 %v4088, %v4312
  %v4314 = vpop.f32.mrb[0].mxu0
  %4315 = vmatprep.mubr.f32.mxu0 %v2618
  %4316 = vmatmul.mubr.f32.gmra.mrb[0].mxu0 %v2617
  %v4317 = vpop.f32.mrb[0].mxu0
  %v4318 = vadd.f32 %v4093, %v4317
  %v4319 = vpop.f32.mrb[0].mxu0
  %4320 = vmatprep.mubr.f32.mxu0 %v2631
  %4321 = vmatmul.mubr.f32.gmra.mrb[0].mxu0 %v2630
  %v4322 = vpop.f32.mrb[0].mxu0
  %v4323 = vadd.f32 %v4098, %v4322
  %v4324 = vpop.f32.mrb[0].mxu0
  %4325 = vmatprep.mubr.f32.mxu0 %v2644
  %4326 = vmatmul.mubr.f32.gmra.mrb[0].mxu0 %v2643
  %v4327 = vpop.f32.mrb[0].mxu0
  %v4328 = vadd.f32 %v4103, %v4327
  %v4329 = vpop.f32.mrb[0].mxu0
  %4330 = vmatprep.mubr.f32.mxu0 %v2657
  %4331 = vmatmul.mubr.f32.gmra.mrb[0].mxu0 %v2656
  %v4332 = vpop.f32.mrb[0].mxu0
  %v4333 = vadd.f32 %v4108, %v4332
  %v4334 = vpop.f32.mrb[0].mxu0
  %4335 = vmatprep.mubr.f32.mxu0 %v2670
  %4336 = vmatmul.mubr.f32.gmra.mrb[0].mxu0 %v2669
  %v4337 = vpop.f32.mrb[0].mxu0
  %v4338 = vadd.f32 %v4113, %v4337
  %v4339 = vpop.f32.mrb[0].mxu0
  %4340 = vmatprep.mubr.f32.mxu0 %v2683
  %4341 = vmatmul.mubr.f32.gmra.mrb[0].mxu0 %v2682
  %v4342 = vpop.f32.mrb[0].mxu0
  %v4343 = vadd.f32 %v4118, %v4342
  %v4344 = vpop.f32.mrb[0].mxu0
  %4345 = vmatprep.mubr.f32.mxu0 %v2696
  %4346 = vmatmul.mubr.f32.gmra.mrb[0].mxu0 %v2695
  %v4347 = vpop.f32.mrb[0].mxu0
  %v4348 = vadd.f32 %v4123, %v4347
  %v4349 = vpop.f32.mrb[0].mxu0
  %4350 = vdwg.mxu0
  %4351 = vmatprep.subr.mxu0 0.0
  %4352 = vmatpush1.msra.mxu0 %v2890
  %4353 = vmatprep.subr.mxu0 0.0
  %4354 = vmatpush1.msra.mxu0 %v2891
  %4355 = vmatprep.subr.mxu0 0.0
  %4356 = vmatpush1.msra.mxu0 %v2892
  %4357 = vmatprep.subr.mxu0 0.0
  %4358 = vmatpush1.msra.mxu0 %v2893
  %4359 = vmatprep.subr.mxu0 0.0
  %4360 = vmatpush1.msra.mxu0 %v2894
  %4361 = vmatprep.subr.mxu0 0.0
  %4362 = vmatpush1.msra.mxu0 %v2895
  %4363 = vmatprep.subr.mxu0 0.0
  %4364 = vmatpush1.msra.mxu0 %v2896
  %4365 = vmatprep.subr.mxu0 0.0
  %4366 = vmatpush1.msra.mxu0 %v2897
  %4367 = vmatprep.subr.mxu0 0.0
  %4368 = vmatpush1.msra.mxu0 0.0
  %4369 = vmatprep.subr.mxu0 0.0
  %4370 = vmatpush1.msra.mxu0 0.0
  %4371 = vmatprep.subr.mxu0 0.0
  %4372 = vmatpush1.msra.mxu0 0.0
  %4373 = vmatprep.subr.mxu0 0.0
  %4374 = vmatpush1.msra.mxu0 0.0
  %4375 = vmatprep.subr.mxu0 0.0
  %4376 = vmatpush1.msra.mxu0 0.0
  %4377 = vmatprep.subr.mxu0 0.0
  %4378 = vmatpush1.msra.mxu0 0.0
  %4379 = vmatprep.subr.mxu0 0.0
  %4380 = vmatpush1.msra.mxu0 0.0
  %4381 = vmatprep.subr.mxu0 0.0
  %4382 = vmatpush1.msra.mxu0 0.0
  %4383 = vmatprep.subr.mxu0 0.0
  %4384 = vmatpush1.msra.mxu0 0.0
  %4385 = vmatprep.subr.mxu0 0.0
  %4386 = vmatpush1.msra.mxu0 0.0
  %4387 = vmatprep.subr.mxu0 0.0
  %4388 = vmatpush1.msra.mxu0 0.0
  %4389 = vmatprep.subr.mxu0 0.0
  %4390 = vmatpush1.msra.mxu0 0.0
  %4391 = vmatprep.subr.mxu0 0.0
  %4392 = vmatpush1.msra.mxu0 0.0
  %4393 = vmatprep.subr.mxu0 0.0
  %4394 = vmatpush1.msra.mxu0 0.0
  %4395 = vmatprep.subr.mxu0 0.0
  %4396 = vmatpush1.msra.mxu0 0.0
  %4397 = vmatprep.subr.mxu0 0.0
  %4398 = vmatpush1.msra.mxu0 0.0
  %4399 = vmatprep.subr.mxu0 0.0
  %4400 = vmatpush1.msra.mxu0 0.0
  %4401 = vmatprep.subr.mxu0 0.0
  %4402 = vmatpush1.msra.mxu0 0.0
  %4403 = vmatprep.subr.mxu0 0.0
  %4404 = vmatpush1.msra.mxu0 0.0
  %4405 = vmatprep.subr.mxu0 0.0
  %4406 = vmatpush1.msra.mxu0 0.0
  %4407 = vmatprep.subr.mxu0 0.0
  %4408 = vmatpush1.msra.mxu0 0.0
  %4409 = vmatprep.subr.mxu0 0.0
  %4410 = vmatpush1.msra.mxu0 0.0
  %4411 = vmatprep.subr.mxu0 0.0
  %4412 = vmatpush1.msra.mxu0 0.0
  %4413 = vmatprep.subr.mxu0 0.0
  %4414 = vmatpush1.msra.mxu0 0.0
  %4415 = vmatprep.mubr.f32.mxu0 0.0
  %4416 = vmatmul.mubr.f32.gmra.mrb[0].mxu0 %v2906
  %v4417 = vpop.f32.mrb[0].mxu0
  %v4418 = vadd.f32 %v4193, %v4417
  %v4419 = vpop.f32.mrb[0].mxu0
  %4420 = vmatprep.mubr.f32.mxu0 0.0
  %4421 = vmatmul.mubr.f32.gmra.mrb[0].mxu0 %v2909
  %v4422 = vpop.f32.mrb[0].mxu0
  %v4423 = vadd.f32 %v4198, %v4422
  %v4424 = vpop.f32.mrb[0].mxu0
  %4425 = vmatprep.mubr.f32.mxu0 0.0
  %4426 = vmatmul.mubr.f32.gmra.mrb[0].mxu0 %v2912
  %v4427 = vpop.f32.mrb[0].mxu0
  %v4428 = vadd.f32 %v4203, %v4427
  %v4429 = vpop.f32.mrb[0].mxu0
  %4430 = vmatprep.mubr.f32.mxu0 0.0
  %4431 = vmatmul.mubr.f32.gmra.mrb[0].mxu0 %v2915
  %v4432 = vpop.f32.mrb[0].mxu0
  %v4433 = vadd.f32 %v4208, %v4432
  %v4434 = vpop.f32.mrb[0].mxu0
  %4435 = vmatprep.mubr.f32.mxu0 0.0
  %4436 = vmatmul.mubr.f32.gmra.mrb[0].mxu0 %v2918
  %v4437 = vpop.f32.mrb[0].mxu0
  %v4438 = vadd.f32 %v4213, %v4437
  %v4439 = vpop.f32.mrb[0].mxu0
  %4440 = vmatprep.mubr.f32.mxu0 0.0
  %4441 = vmatmul.mubr.f32.gmra.mrb[0].mxu0 %v2921
  %v4442 = vpop.f32.mrb[0].mxu0
  %v4443 = vadd.f32 %v4218, %v4442
  %v4444 = vpop.f32.mrb[0].mxu0
  %4445 = vmatprep.mubr.f32.mxu0 0.0
  %4446 = vmatmul.mubr.f32.gmra.mrb[0].mxu0 %v2924
  %v4447 = vpop.f32.mrb[0].mxu0
  %v4448 = vadd.f32 %v4223, %v4447
  %v4449 = vpop.f32.mrb[0].mxu0
  %4450 = vmatprep.mubr.f32.mxu0 0.0
  %4451 = vmatmul.mubr.f32.gmra.mrb[0].mxu0 %v2927
  %v4452 = vpop.f32.mrb[0].mxu0
  %v4453 = vadd.f32 %v4228, %v4452
  %v4454 = vpop.f32.mrb[0].mxu0
  %4455 = vmatprep.mubr.f32.mxu0 0.0
  %4456 = vmatmul.mubr.f32.gmra.mrb[0].mxu0 %v2930
  %v4457 = vpop.f32.mrb[0].mxu0
  %v4458 = vadd.f32 %v4233, %v4457
  %v4459 = vpop.f32.mrb[0].mxu0
  %4460 = vmatprep.mubr.f32.mxu0 0.0
  %4461 = vmatmul.mubr.f32.gmra.mrb[0].mxu0 %v2933
  %v4462 = vpop.f32.mrb[0].mxu0
  %v4463 = vadd.f32 %v4238, %v4462
  %v4464 = vpop.f32.mrb[0].mxu0
  %4465 = vmatprep.mubr.f32.mxu0 0.0
  %4466 = vmatmul.mubr.f32.gmra.mrb[0].mxu0 %v2936
  %v4467 = vpop.f32.mrb[0].mxu0
  %v4468 = vadd.f32 %v4243, %v4467
  %v4469 = vpop.f32.mrb[0].mxu0
  %4470 = vmatprep.mubr.f32.mxu0 0.0
  %4471 = vmatmul.mubr.f32.gmra.mrb[0].mxu0 %v2939
  %v4472 = vpop.f32.mrb[0].mxu0
  %v4473 = vadd.f32 %v4248, %v4472
  %v4474 = vpop.f32.mrb[0].mxu0
  %4475 = vmatprep.mubr.f32.mxu0 0.0
  %4476 = vmatmul.mubr.f32.gmra.mrb[0].mxu0 %v2942
  %v4477 = vpop.f32.mrb[0].mxu0
  %v4478 = vadd.f32 %v4253, %v4477
  %v4479 = vpop.f32.mrb[0].mxu0
  %4480 = vmatprep.mubr.f32.mxu0 0.0
  %4481 = vmatmul.mubr.f32.gmra.mrb[0].mxu0 %v2945
  %v4482 = vpop.f32.mrb[0].mxu0
  %v4483 = vadd.f32 %v4258, %v4482
  %v4484 = vpop.f32.mrb[0].mxu0
  %4485 = vmatprep.mubr.f32.mxu0 0.0
  %4486 = vmatmul.mubr.f32.gmra.mrb[0].mxu0 %v2948
  %v4487 = vpop.f32.mrb[0].mxu0
  %v4488 = vadd.f32 %v4263, %v4487
  %v4489 = vpop.f32.mrb[0].mxu0
  %4490 = vmatprep.mubr.f32.mxu0 0.0
  %4491 = vmatmul.mubr.f32.gmra.mrb[0].mxu0 %v2951
  %v4492 = vpop.f32.mrb[0].mxu0
  %v4493 = vadd.f32 %v4268, %v4492
  %v4494 = vpop.f32.mrb[0].mxu0
  %4495 = vmatprep.mubr.f32.mxu0 0.0
  %4496 = vmatmul.mubr.f32.gmra.mrb[0].mxu0 %v2954
  %v4497 = vpop.f32.mrb[0].mxu0
  %v4498 = vadd.f32 %v4273, %v4497
  %v4499 = vpop.f32.mrb[0].mxu0
  %4500 = vmatprep.mubr.f32.mxu0 0.0
  %4501 = vmatmul.mubr.f32.gmra.mrb[0].mxu0 %v2957
  %v4502 = vpop.f32.mrb[0].mxu0
  %v4503 = vadd.f32 %v4278, %v4502
  %v4504 = vpop.f32.mrb[0].mxu0
  %4505 = vmatprep.mubr.f32.mxu0 0.0
  %4506 = vmatmul.mubr.f32.gmra.mrb[0].mxu0 %v2960
  %v4507 = vpop.f32.mrb[0].mxu0
  %v4508 = vadd.f32 %v4283, %v4507
  %v4509 = vpop.f32.mrb[0].mxu0
  %4510 = vmatprep.mubr.f32.mxu0 0.0
  %4511 = vmatmul.mubr.f32.gmra.mrb[0].mxu0 %v2963
  %v4512 = vpop.f32.mrb[0].mxu0
  %v4513 = vadd.f32 %v4288, %v4512
  %v4514 = vpop.f32.mrb[0].mxu0
  %4515 = vmatprep.mubr.f32.mxu0 0.0
  %4516 = vmatmul.mubr.f32.gmra.mrb[0].mxu0 %v2966
  %v4517 = vpop.f32.mrb[0].mxu0
  %v4518 = vadd.f32 %v4293, %v4517
  %v4519 = vpop.f32.mrb[0].mxu0
  %4520 = vmatprep.mubr.f32.mxu0 0.0
  %4521 = vmatmul.mubr.f32.gmra.mrb[0].mxu0 %v2969
  %v4522 = vpop.f32.mrb[0].mxu0
  %v4523 = vadd.f32 %v4298, %v4522
  %v4524 = vpop.f32.mrb[0].mxu0
  %4525 = vmatprep.mubr.f32.mxu0 0.0
  %4526 = vmatmul.mubr.f32.gmra.mrb[0].mxu0 %v2972
  %v4527 = vpop.f32.mrb[0].mxu0
  %v4528 = vadd.f32 %v4303, %v4527
  %v4529 = vpop.f32.mrb[0].mxu0
  %4530 = vmatprep.mubr.f32.mxu0 0.0
  %4531 = vmatmul.mubr.f32.gmra.mrb[0].mxu0 %v2975
  %v4532 = vpop.f32.mrb[0].mxu0
  %v4533 = vadd.f32 %v4308, %v4532
  %v4534 = vpop.f32.mrb[0].mxu0
  %4535 = vmatprep.mubr.f32.mxu0 0.0
  %4536 = vmatmul.mubr.f32.gmra.mrb[0].mxu0 %v2978
  %v4537 = vpop.f32.mrb[0].mxu0
  %v4538 = vadd.f32 %v4313, %v4537
  %v4539 = vpop.f32.mrb[0].mxu0
  %4540 = vmatprep.mubr.f32.mxu0 0.0
  %4541 = vmatmul.mubr.f32.gmra.mrb[0].mxu0 %v2981
  %v4542 = vpop.f32.mrb[0].mxu0
  %v4543 = vadd.f32 %v4318, %v4542
  %v4544 = vpop.f32.mrb[0].mxu0
  %4545 = vmatprep.mubr.f32.mxu0 0.0
  %4546 = vmatmul.mubr.f32.gmra.mrb[0].mxu0 %v2984
  %v4547 = vpop.f32.mrb[0].mxu0
  %v4548 = vadd.f32 %v4323, %v4547
  %v4549 = vpop.f32.mrb[0].mxu0
  %4550 = vmatprep.mubr.f32.mxu0 0.0
  %4551 = vmatmul.mubr.f32.gmra.mrb[0].mxu0 %v2987
  %v4552 = vpop.f32.mrb[0].mxu0
  %v4553 = vadd.f32 %v4328, %v4552
  %v4554 = vpop.f32.mrb[0].mxu0
  %4555 = vmatprep.mubr.f32.mxu0 0.0
  %4556 = vmatmul.mubr.f32.gmra.mrb[0].mxu0 %v2990
  %v4557 = vpop.f32.mrb[0].mxu0
  %v4558 = vadd.f32 %v4333, %v4557
  %v4559 = vpop.f32.mrb[0].mxu0
  %4560 = vmatprep.mubr.f32.mxu0 0.0
  %4561 = vmatmul.mubr.f32.gmra.mrb[0].mxu0 %v2993
  %v4562 = vpop.f32.mrb[0].mxu0
  %v4563 = vadd.f32 %v4338, %v4562
  %v4564 = vpop.f32.mrb[0].mxu0
  %4565 = vmatprep.mubr.f32.mxu0 0.0
  %4566 = vmatmul.mubr.f32.gmra.mrb[0].mxu0 %v2996
  %v4567 = vpop.f32.mrb[0].mxu0
  %v4568 = vadd.f32 %v4343, %v4567
  %v4569 = vpop.f32.mrb[0].mxu0
  %4570 = vmatprep.mubr.f32.mxu0 0.0
  %4571 = vmatmul.mubr.f32.gmra.mrb[0].mxu0 %v2999
  %v4572 = vpop.f32.mrb[0].mxu0
  %v4573 = vadd.f32 %v4348, %v4572
  %v4574 = vpop.f32.mrb[0].mxu0
  %4575 = vdwg.mxu0
  %v4576 = vld [vmem:[%s5] sm:$0xff]
  %v4577 = vld [vmem:[%s5 + $0x8] sm:$0xff]
  %v4578 = vld [vmem:[%s5 + $0x10] sm:$0xff]
  %v4579 = vld [vmem:[%s5 + $0x18] sm:$0xff]
  %v4580 = vld [vmem:[%s5 + $0x20] sm:$0xff]
  %v4581 = vld [vmem:[%s5 + $0x28] sm:$0xff]
  %v4582 = vld [vmem:[%s5 + $0x30] sm:$0xff]
  %v4583 = vld [vmem:[%s5 + $0x38] sm:$0xff]
  %v4584 = vld [vmem:[%s6] sm:$0x1]
  %v4586 = vlaneseq
  %v4587 = vshrl.u32 %v4586, 7
  %v4588 = vsub.s32 0, %v4587
  %v4589 = vrot.slane %v4584, %v4588
  %v4592 = vsel %vm434, %v4418, 0
  %v4595 = vsel %vm434, %v4423, 0
  %v4598 = vsel %vm434, %v4428, 0
  %v4601 = vsel %vm434, %v4433, 0
  %v4604 = vsel %vm434, %v4438, 0
  %v4607 = vsel %vm434, %v4443, 0
  %v4610 = vsel %vm434, %v4448, 0
  %v4613 = vsel %vm434, %v4453, 0
  %v4616 = vsel %vm434, %v4458, 0
  %v4619 = vsel %vm434, %v4463, 0
  %v4622 = vsel %vm434, %v4468, 0
  %v4625 = vsel %vm434, %v4473, 0
  %v4628 = vsel %vm434, %v4478, 0
  %v4631 = vsel %vm434, %v4483, 0
  %v4634 = vsel %vm434, %v4488, 0
  %v4637 = vsel %vm434, %v4493, 0
  %v4640 = vsel %vm434, %v4498, 0
  %v4643 = vsel %vm434, %v4503, 0
  %v4646 = vsel %vm434, %v4508, 0
  %v4649 = vsel %vm434, %v4513, 0
  %v4652 = vsel %vm434, %v4518, 0
  %v4655 = vsel %vm434, %v4523, 0
  %v4658 = vsel %vm434, %v4528, 0
  %v4661 = vsel %vm434, %v4533, 0
  %v4664 = vsel %vm434, %v4538, 0
  %v4667 = vsel %vm434, %v4543, 0
  %v4670 = vsel %vm434, %v4548, 0
  %v4673 = vsel %vm434, %v4553, 0
  %v4676 = vsel %vm434, %v4558, 0
  %v4679 = vsel %vm434, %v4563, 0
  %v4682 = vsel %vm434, %v4568, 0
  %v4685 = vsel %vm434, %v4573, 0
  %4687 = vmatprep.subr.mxu0 0.0
  %4688 = vmatpush1.msra.mxu0 %v4576
  %4689 = vmatprep.subr.mxu0 0.0
  %4690 = vmatpush1.msra.mxu0 %v4577
  %4691 = vmatprep.subr.mxu0 0.0
  %4692 = vmatpush1.msra.mxu0 %v4578
  %4693 = vmatprep.subr.mxu0 0.0
  %4694 = vmatpush1.msra.mxu0 %v4579
  %4695 = vmatprep.subr.mxu0 0.0
  %4696 = vmatpush1.msra.mxu0 %v4580
  %4697 = vmatprep.subr.mxu0 0.0
  %4698 = vmatpush1.msra.mxu0 %v4581
  %4699 = vmatprep.subr.mxu0 0.0
  %4700 = vmatpush1.msra.mxu0 %v4582
  %4701 = vmatprep.subr.mxu0 0.0
  %4702 = vmatpush1.msra.mxu0 %v4583
  %4703 = vmatprep.subr.mxu0 0.0
  %4704 = vmatpush1.msra.mxu0 0.0
  %4705 = vmatprep.subr.mxu0 0.0
  %4706 = vmatpush1.msra.mxu0 0.0
  %4707 = vmatprep.subr.mxu0 0.0
  %4708 = vmatpush1.msra.mxu0 0.0
  %4709 = vmatprep.subr.mxu0 0.0
  %4710 = vmatpush1.msra.mxu0 0.0
  %4711 = vmatprep.subr.mxu0 0.0
  %4712 = vmatpush1.msra.mxu0 0.0
  %4713 = vmatprep.subr.mxu0 0.0
  %4714 = vmatpush1.msra.mxu0 0.0
  %4715 = vmatprep.subr.mxu0 0.0
  %4716 = vmatpush1.msra.mxu0 0.0
  %4717 = vmatprep.subr.mxu0 0.0
  %4718 = vmatpush1.msra.mxu0 0.0
  %4719 = vmatprep.subr.mxu0 0.0
  %4720 = vmatpush1.msra.mxu0 0.0
  %4721 = vmatprep.subr.mxu0 0.0
  %4722 = vmatpush1.msra.mxu0 0.0
  %4723 = vmatprep.subr.mxu0 0.0
  %4724 = vmatpush1.msra.mxu0 0.0
  %4725 = vmatprep.subr.mxu0 0.0
  %4726 = vmatpush1.msra.mxu0 0.0
  %4727 = vmatprep.subr.mxu0 0.0
  %4728 = vmatpush1.msra.mxu0 0.0
  %4729 = vmatprep.subr.mxu0 0.0
  %4730 = vmatpush1.msra.mxu0 0.0
  %4731 = vmatprep.subr.mxu0 0.0
  %4732 = vmatpush1.msra.mxu0 0.0
  %4733 = vmatprep.subr.mxu0 0.0
  %4734 = vmatpush1.msra.mxu0 0.0
  %4735 = vmatprep.subr.mxu0 0.0
  %4736 = vmatpush1.msra.mxu0 0.0
  %4737 = vmatprep.subr.mxu0 0.0
  %4738 = vmatpush1.msra.mxu0 0.0
  %4739 = vmatprep.subr.mxu0 0.0
  %4740 = vmatpush1.msra.mxu0 0.0
  %4741 = vmatprep.subr.mxu0 0.0
  %4742 = vmatpush1.msra.mxu0 0.0
  %4743 = vmatprep.subr.mxu0 0.0
  %4744 = vmatpush1.msra.mxu0 0.0
  %4745 = vmatprep.subr.mxu0 0.0
  %4746 = vmatpush1.msra.mxu0 0.0
  %4747 = vmatprep.subr.mxu0 0.0
  %4748 = vmatpush1.msra.mxu0 0.0
  %4749 = vmatprep.subr.mxu0 0.0
  %4750 = vmatpush1.msra.mxu0 0.0
  %4751 = vmatprep.mubr.f32.mxu0 0.0
  %4752 = vmatmul.mubr.f32.gmra.mrb[0].mxu0 %v4592
  %v4753 = vpop.f32.mrb[0].mxu0
  %v4754 = vadd.f32 %v4589, %v4753
  %v4755 = vpop.f32.mrb[0].mxu0
  %4756 = vmatprep.mubr.f32.mxu0 0.0
  %4757 = vmatmul.mubr.f32.gmra.mrb[0].mxu0 %v4595
  %v4758 = vpop.f32.mrb[0].mxu0
  %v4759 = vadd.f32 %v4589, %v4758
  %v4760 = vpop.f32.mrb[0].mxu0
  %4761 = vmatprep.mubr.f32.mxu0 0.0
  %4762 = vmatmul.mubr.f32.gmra.mrb[0].mxu0 %v4598
  %v4763 = vpop.f32.mrb[0].mxu0
  %v4764 = vadd.f32 %v4589, %v4763
  %v4765 = vpop.f32.mrb[0].mxu0
  %4766 = vmatprep.mubr.f32.mxu0 0.0
  %4767 = vmatmul.mubr.f32.gmra.mrb[0].mxu0 %v4601
  %v4768 = vpop.f32.mrb[0].mxu0
  %v4769 = vadd.f32 %v4589, %v4768
  %v4770 = vpop.f32.mrb[0].mxu0
  %4771 = vmatprep.mubr.f32.mxu0 0.0
  %4772 = vmatmul.mubr.f32.gmra.mrb[0].mxu0 %v4604
  %v4773 = vpop.f32.mrb[0].mxu0
  %v4774 = vadd.f32 %v4589, %v4773
  %v4775 = vpop.f32.mrb[0].mxu0
  %4776 = vmatprep.mubr.f32.mxu0 0.0
  %4777 = vmatmul.mubr.f32.gmra.mrb[0].mxu0 %v4607
  %v4778 = vpop.f32.mrb[0].mxu0
  %v4779 = vadd.f32 %v4589, %v4778
  %v4780 = vpop.f32.mrb[0].mxu0
  %4781 = vmatprep.mubr.f32.mxu0 0.0
  %4782 = vmatmul.mubr.f32.gmra.mrb[0].mxu0 %v4610
  %v4783 = vpop.f32.mrb[0].mxu0
  %v4784 = vadd.f32 %v4589, %v4783
  %v4785 = vpop.f32.mrb[0].mxu0
  %4786 = vmatprep.mubr.f32.mxu0 0.0
  %4787 = vmatmul.mubr.f32.gmra.mrb[0].mxu0 %v4613
  %v4788 = vpop.f32.mrb[0].mxu0
  %v4789 = vadd.f32 %v4589, %v4788
  %v4790 = vpop.f32.mrb[0].mxu0
  %4791 = vmatprep.mubr.f32.mxu0 0.0
  %4792 = vmatmul.mubr.f32.gmra.mrb[0].mxu0 %v4616
  %v4793 = vpop.f32.mrb[0].mxu0
  %v4794 = vadd.f32 %v4589, %v4793
  %v4795 = vpop.f32.mrb[0].mxu0
  %4796 = vmatprep.mubr.f32.mxu0 0.0
  %4797 = vmatmul.mubr.f32.gmra.mrb[0].mxu0 %v4619
  %v4798 = vpop.f32.mrb[0].mxu0
  %v4799 = vadd.f32 %v4589, %v4798
  %v4800 = vpop.f32.mrb[0].mxu0
  %4801 = vmatprep.mubr.f32.mxu0 0.0
  %4802 = vmatmul.mubr.f32.gmra.mrb[0].mxu0 %v4622
  %v4803 = vpop.f32.mrb[0].mxu0
  %v4804 = vadd.f32 %v4589, %v4803
  %v4805 = vpop.f32.mrb[0].mxu0
  %4806 = vmatprep.mubr.f32.mxu0 0.0
  %4807 = vmatmul.mubr.f32.gmra.mrb[0].mxu0 %v4625
  %v4808 = vpop.f32.mrb[0].mxu0
  %v4809 = vadd.f32 %v4589, %v4808
  %v4810 = vpop.f32.mrb[0].mxu0
  %4811 = vmatprep.mubr.f32.mxu0 0.0
  %4812 = vmatmul.mubr.f32.gmra.mrb[0].mxu0 %v4628
  %v4813 = vpop.f32.mrb[0].mxu0
  %v4814 = vadd.f32 %v4589, %v4813
  %v4815 = vpop.f32.mrb[0].mxu0
  %4816 = vmatprep.mubr.f32.mxu0 0.0
  %4817 = vmatmul.mubr.f32.gmra.mrb[0].mxu0 %v4631
  %v4818 = vpop.f32.mrb[0].mxu0
  %v4819 = vadd.f32 %v4589, %v4818
  %v4820 = vpop.f32.mrb[0].mxu0
  %4821 = vmatprep.mubr.f32.mxu0 0.0
  %4822 = vmatmul.mubr.f32.gmra.mrb[0].mxu0 %v4634
  %v4823 = vpop.f32.mrb[0].mxu0
  %v4824 = vadd.f32 %v4589, %v4823
  %v4825 = vpop.f32.mrb[0].mxu0
  %4826 = vmatprep.mubr.f32.mxu0 0.0
  %4827 = vmatmul.mubr.f32.gmra.mrb[0].mxu0 %v4637
  %v4828 = vpop.f32.mrb[0].mxu0
  %v4829 = vadd.f32 %v4589, %v4828
  %v4830 = vpop.f32.mrb[0].mxu0
  %4831 = vmatprep.mubr.f32.mxu0 0.0
  %4832 = vmatmul.mubr.f32.gmra.mrb[0].mxu0 %v4640
  %v4833 = vpop.f32.mrb[0].mxu0
  %v4834 = vadd.f32 %v4589, %v4833
  %v4835 = vpop.f32.mrb[0].mxu0
  %4836 = vmatprep.mubr.f32.mxu0 0.0
  %4837 = vmatmul.mubr.f32.gmra.mrb[0].mxu0 %v4643
  %v4838 = vpop.f32.mrb[0].mxu0
  %v4839 = vadd.f32 %v4589, %v4838
  %v4840 = vpop.f32.mrb[0].mxu0
  %4841 = vmatprep.mubr.f32.mxu0 0.0
  %4842 = vmatmul.mubr.f32.gmra.mrb[0].mxu0 %v4646
  %v4843 = vpop.f32.mrb[0].mxu0
  %v4844 = vadd.f32 %v4589, %v4843
  %v4845 = vpop.f32.mrb[0].mxu0
  %4846 = vmatprep.mubr.f32.mxu0 0.0
  %4847 = vmatmul.mubr.f32.gmra.mrb[0].mxu0 %v4649
  %v4848 = vpop.f32.mrb[0].mxu0
  %v4849 = vadd.f32 %v4589, %v4848
  %v4850 = vpop.f32.mrb[0].mxu0
  %4851 = vmatprep.mubr.f32.mxu0 0.0
  %4852 = vmatmul.mubr.f32.gmra.mrb[0].mxu0 %v4652
  %v4853 = vpop.f32.mrb[0].mxu0
  %v4854 = vadd.f32 %v4589, %v4853
  %v4855 = vpop.f32.mrb[0].mxu0
  %4856 = vmatprep.mubr.f32.mxu0 0.0
  %4857 = vmatmul.mubr.f32.gmra.mrb[0].mxu0 %v4655
  %v4858 = vpop.f32.mrb[0].mxu0
  %v4859 = vadd.f32 %v4589, %v4858
  %v4860 = vpop.f32.mrb[0].mxu0
  %4861 = vmatprep.mubr.f32.mxu0 0.0
  %4862 = vmatmul.mubr.f32.gmra.mrb[0].mxu0 %v4658
  %v4863 = vpop.f32.mrb[0].mxu0
  %v4864 = vadd.f32 %v4589, %v4863
  %v4865 = vpop.f32.mrb[0].mxu0
  %4866 = vmatprep.mubr.f32.mxu0 0.0
  %4867 = vmatmul.mubr.f32.gmra.mrb[0].mxu0 %v4661
  %v4868 = vpop.f32.mrb[0].mxu0
  %v4869 = vadd.f32 %v4589, %v4868
  %v4870 = vpop.f32.mrb[0].mxu0
  %4871 = vmatprep.mubr.f32.mxu0 0.0
  %4872 = vmatmul.mubr.f32.gmra.mrb[0].mxu0 %v4664
  %v4873 = vpop.f32.mrb[0].mxu0
  %v4874 = vadd.f32 %v4589, %v4873
  %v4875 = vpop.f32.mrb[0].mxu0
  %4876 = vmatprep.mubr.f32.mxu0 0.0
  %4877 = vmatmul.mubr.f32.gmra.mrb[0].mxu0 %v4667
  %v4878 = vpop.f32.mrb[0].mxu0
  %v4879 = vadd.f32 %v4589, %v4878
  %v4880 = vpop.f32.mrb[0].mxu0
  %4881 = vmatprep.mubr.f32.mxu0 0.0
  %4882 = vmatmul.mubr.f32.gmra.mrb[0].mxu0 %v4670
  %v4883 = vpop.f32.mrb[0].mxu0
  %v4884 = vadd.f32 %v4589, %v4883
  %v4885 = vpop.f32.mrb[0].mxu0
  %4886 = vmatprep.mubr.f32.mxu0 0.0
  %4887 = vmatmul.mubr.f32.gmra.mrb[0].mxu0 %v4673
  %v4888 = vpop.f32.mrb[0].mxu0
  %v4889 = vadd.f32 %v4589, %v4888
  %v4890 = vpop.f32.mrb[0].mxu0
  %4891 = vmatprep.mubr.f32.mxu0 0.0
  %4892 = vmatmul.mubr.f32.gmra.mrb[0].mxu0 %v4676
  %v4893 = vpop.f32.mrb[0].mxu0
  %v4894 = vadd.f32 %v4589, %v4893
  %v4895 = vpop.f32.mrb[0].mxu0
  %4896 = vmatprep.mubr.f32.mxu0 0.0
  %4897 = vmatmul.mubr.f32.gmra.mrb[0].mxu0 %v4679
  %v4898 = vpop.f32.mrb[0].mxu0
  %v4899 = vadd.f32 %v4589, %v4898
  %v4900 = vpop.f32.mrb[0].mxu0
  %4901 = vmatprep.mubr.f32.mxu0 0.0
  %4902 = vmatmul.mubr.f32.gmra.mrb[0].mxu0 %v4682
  %v4903 = vpop.f32.mrb[0].mxu0
  %v4904 = vadd.f32 %v4589, %v4903
  %v4905 = vpop.f32.mrb[0].mxu0
  %4906 = vmatprep.mubr.f32.mxu0 0.0
  %4907 = vmatmul.mubr.f32.gmra.mrb[0].mxu0 %v4685
  %v4908 = vpop.f32.mrb[0].mxu0
  %v4909 = vadd.f32 %v4589, %v4908
  %v4910 = vpop.f32.mrb[0].mxu0
  %4911 = vdwg.mxu0
  %v4912 = vmax.f32 %v4754, 0.0
  %v4913 = vmax.f32 %v4759, 0.0
  %v4914 = vmax.f32 %v4764, 0.0
  %v4915 = vmax.f32 %v4769, 0.0
  %v4916 = vmax.f32 %v4774, 0.0
  %v4917 = vmax.f32 %v4779, 0.0
  %v4918 = vmax.f32 %v4784, 0.0
  %v4919 = vmax.f32 %v4789, 0.0
  %v4920 = vmax.f32 %v4794, 0.0
  %v4921 = vmax.f32 %v4799, 0.0
  %v4922 = vmax.f32 %v4804, 0.0
  %v4923 = vmax.f32 %v4809, 0.0
  %v4924 = vmax.f32 %v4814, 0.0
  %v4925 = vmax.f32 %v4819, 0.0
  %v4926 = vmax.f32 %v4824, 0.0
  %v4927 = vmax.f32 %v4829, 0.0
  %v4928 = vmax.f32 %v4834, 0.0
  %v4929 = vmax.f32 %v4839, 0.0
  %v4930 = vmax.f32 %v4844, 0.0
  %v4931 = vmax.f32 %v4849, 0.0
  %v4932 = vmax.f32 %v4854, 0.0
  %v4933 = vmax.f32 %v4859, 0.0
  %v4934 = vmax.f32 %v4864, 0.0
  %v4935 = vmax.f32 %v4869, 0.0
  %v4936 = vmax.f32 %v4874, 0.0
  %v4937 = vmax.f32 %v4879, 0.0
  %v4938 = vmax.f32 %v4884, 0.0
  %v4939 = vmax.f32 %v4889, 0.0
  %v4940 = vmax.f32 %v4894, 0.0
  %v4941 = vmax.f32 %v4899, 0.0
  %v4942 = vmax.f32 %v4904, 0.0
  %v4943 = vmax.f32 %v4909, 0.0
  %v4944 = vmax.f32 %v4584, 0.0
  %v4946 = vlaneseq
  %v4947 = vshrl.u32 %v4946, 7
  %v4948 = vsub.s32 0, %v4947
  %v4949 = vrot.slane %v4944, %v4948
  %4951 = vst.msk [vmem:[#allocation4] sm:$0xff] %vm72, %v4949
  %4952 = vst.msk [vmem:[#allocation4 + $0x8] sm:$0xff] %vm72, %v4949
  %4953 = vst.msk [vmem:[#allocation4 + $0x10] sm:$0xff] %vm72, %v4949
  %4954 = vst.msk [vmem:[#allocation4 + $0x18] sm:$0xff] %vm72, %v4949
  %4955 = vst.msk [vmem:[#allocation4 + $0x20] sm:$0xff] %vm72, %v4949
  %4956 = vst.msk [vmem:[#allocation4 + $0x28] sm:$0xff] %vm72, %v4949
  %4957 = vst.msk [vmem:[#allocation4 + $0x30] sm:$0xff] %vm72, %v4949
  %4958 = vst.msk [vmem:[#allocation4 + $0x38] sm:$0xff] %vm72, %v4949
  %4959 = vst.msk [vmem:[#allocation4 + $0x40] sm:$0xff] %vm72, %v4949
  %4960 = vst.msk [vmem:[#allocation4 + $0x48] sm:$0xff] %vm72, %v4949
  %4961 = vst.msk [vmem:[#allocation4 + $0x50] sm:$0xff] %vm72, %v4949
  %4962 = vst.msk [vmem:[#allocation4 + $0x58] sm:$0xff] %vm72, %v4949
  %4963 = vst.msk [vmem:[#allocation4 + $0x60] sm:$0xff] %vm72, %v4949
  %4964 = vst.msk [vmem:[#allocation4 + $0x68] sm:$0xff] %vm72, %v4949
  %4965 = vst.msk [vmem:[#allocation4 + $0x70] sm:$0xff] %vm72, %v4949
  %4966 = vst.msk [vmem:[#allocation4 + $0x78] sm:$0xff] %vm72, %v4949
  %4967 = vst.msk [vmem:[#allocation4 + $0x80] sm:$0xff] %vm72, %v4949
  %4968 = vst.msk [vmem:[#allocation4 + $0x88] sm:$0xff] %vm72, %v4949
  %4969 = vst.msk [vmem:[#allocation4 + $0x90] sm:$0xff] %vm72, %v4949
  %4970 = vst.msk [vmem:[#allocation4 + $0x98] sm:$0xff] %vm72, %v4949
  %4971 = vst.msk [vmem:[#allocation4 + $0xa0] sm:$0xff] %vm72, %v4949
  %4972 = vst.msk [vmem:[#allocation4 + $0xa8] sm:$0xff] %vm72, %v4949
  %4973 = vst.msk [vmem:[#allocation4 + $0xb0] sm:$0xff] %vm72, %v4949
  %4974 = vst.msk [vmem:[#allocation4 + $0xb8] sm:$0xff] %vm72, %v4949
  %4975 = vst.msk [vmem:[#allocation4 + $0xc0] sm:$0xff] %vm72, %v4949
  %4976 = vst.msk [vmem:[#allocation4 + $0xc8] sm:$0xff] %vm72, %v4949
  %4977 = vst.msk [vmem:[#allocation4 + $0xd0] sm:$0xff] %vm72, %v4949
  %4978 = vst.msk [vmem:[#allocation4 + $0xd8] sm:$0xff] %vm72, %v4949
  %4979 = vst.msk [vmem:[#allocation4 + $0xe0] sm:$0xff] %vm72, %v4949
  %4980 = vst.msk [vmem:[#allocation4 + $0xe8] sm:$0xff] %vm72, %v4949
  %4981 = vst.msk [vmem:[#allocation4 + $0xf0] sm:$0xff] %vm72, %v4949
  %4982 = vst.msk [vmem:[#allocation4 + $0xf8] sm:$0xff] %vm72, %v4949
  %4983 = vst.msk [vmem:[#allocation4 + $0x100] sm:$0xff] %vm72, %v4949
  %4984 = vst.msk [vmem:[#allocation4 + $0x108] sm:$0xff] %vm72, %v4949
  %4985 = vst.msk [vmem:[#allocation4 + $0x110] sm:$0xff] %vm72, %v4949
  %4986 = vst.msk [vmem:[#allocation4 + $0x118] sm:$0xff] %vm72, %v4949
  %4987 = vst.msk [vmem:[#allocation4 + $0x120] sm:$0xff] %vm72, %v4949
  %4988 = vst.msk [vmem:[#allocation4 + $0x128] sm:$0xff] %vm72, %v4949
  %4989 = vst.msk [vmem:[#allocation4 + $0x130] sm:$0xff] %vm72, %v4949
  %4990 = vst.msk [vmem:[#allocation4 + $0x138] sm:$0xff] %vm72, %v4949
  %4991 = vst.msk [vmem:[#allocation4 + $0x140] sm:$0xff] %vm72, %v4949
  %4992 = vst.msk [vmem:[#allocation4 + $0x148] sm:$0xff] %vm72, %v4949
  %4993 = vst.msk [vmem:[#allocation4 + $0x150] sm:$0xff] %vm72, %v4949
  %4994 = vst.msk [vmem:[#allocation4 + $0x158] sm:$0xff] %vm72, %v4949
  %4995 = vst.msk [vmem:[#allocation4 + $0x160] sm:$0xff] %vm72, %v4949
  %4996 = vst.msk [vmem:[#allocation4 + $0x168] sm:$0xff] %vm72, %v4949
  %4997 = vst.msk [vmem:[#allocation4 + $0x170] sm:$0xff] %vm72, %v4949
  %4998 = vst.msk [vmem:[#allocation4 + $0x178] sm:$0xff] %vm72, %v4949
  %4999 = vst.msk [vmem:[#allocation4 + $0x180] sm:$0xff] %vm72, %v4949
  %5000 = vst.msk [vmem:[#allocation4 + $0x188] sm:$0xff] %vm72, %v4949
  %5001 = vst.msk [vmem:[#allocation4 + $0x190] sm:$0xff] %vm72, %v4949
  %5002 = vst.msk [vmem:[#allocation4 + $0x198] sm:$0xff] %vm72, %v4949
  %5003 = vst.msk [vmem:[#allocation4 + $0x1a0] sm:$0xff] %vm72, %v4949
  %5004 = vst.msk [vmem:[#allocation4 + $0x1a8] sm:$0xff] %vm72, %v4949
  %5005 = vst.msk [vmem:[#allocation4 + $0x1b0] sm:$0xff] %vm72, %v4949
  %5006 = vst.msk [vmem:[#allocation4 + $0x1b8] sm:$0xff] %vm72, %v4949
  %5007 = vst.msk [vmem:[#allocation4 + $0x1c0] sm:$0xff] %vm72, %v4949
  %5008 = vst.msk [vmem:[#allocation4 + $0x1c8] sm:$0xff] %vm72, %v4949
  %5009 = vst.msk [vmem:[#allocation4 + $0x1d0] sm:$0xff] %vm72, %v4949
  %5010 = vst.msk [vmem:[#allocation4 + $0x1d8] sm:$0xff] %vm72, %v4949
  %5011 = vst.msk [vmem:[#allocation4 + $0x1e0] sm:$0xff] %vm72, %v4949
  %5012 = vst.msk [vmem:[#allocation4 + $0x1e8] sm:$0xff] %vm72, %v4949
  %5013 = vst.msk [vmem:[#allocation4 + $0x1f0] sm:$0xff] %vm72, %v4949
  %5014 = vst.msk [vmem:[#allocation4 + $0x1f8] sm:$0xff] %vm72, %v4949
  %5015 = vst.msk [vmem:[#allocation4 + $0x200] sm:$0xff] %vm72, %v4949
  %5016 = vst.msk [vmem:[#allocation4 + $0x208] sm:$0xff] %vm72, %v4949
  %5017 = vst.msk [vmem:[#allocation4 + $0x210] sm:$0xff] %vm72, %v4949
  %5018 = vst.msk [vmem:[#allocation4 + $0x218] sm:$0xff] %vm72, %v4949
  %5019 = vst.msk [vmem:[#allocation4 + $0x220] sm:$0xff] %vm72, %v4949
  %5020 = vst.msk [vmem:[#allocation4 + $0x228] sm:$0xff] %vm72, %v4949
  %5021 = vst.msk [vmem:[#allocation4 + $0x230] sm:$0xff] %vm72, %v4949
  %5022 = vst.msk [vmem:[#allocation4 + $0x238] sm:$0xff] %vm72, %v4949
  %s5023 = scalar_lea.vmem [#allocation4], 32
  %5024 = vst.msk [vmem:[%s5023 + $0x1] sm:$0xff] %vm72, %v4912
  %5025 = vst.msk [vmem:[%s5023 + $0x9] sm:$0xff] %vm72, %v4913
  %5026 = vst.msk [vmem:[%s5023 + $0x21] sm:$0xff] %vm72, %v4914
  %5027 = vst.msk [vmem:[%s5023 + $0x29] sm:$0xff] %vm72, %v4915
  %5028 = vst.msk [vmem:[%s5023 + $0x41] sm:$0xff] %vm72, %v4916
  %5029 = vst.msk [vmem:[%s5023 + $0x49] sm:$0xff] %vm72, %v4917
  %5030 = vst.msk [vmem:[%s5023 + $0x61] sm:$0xff] %vm72, %v4918
  %5031 = vst.msk [vmem:[%s5023 + $0x69] sm:$0xff] %vm72, %v4919
  %5032 = vst.msk [vmem:[%s5023 + $0x81] sm:$0xff] %vm72, %v4920
  %5033 = vst.msk [vmem:[%s5023 + $0x89] sm:$0xff] %vm72, %v4921
  %5034 = vst.msk [vmem:[%s5023 + $0xa1] sm:$0xff] %vm72, %v4922
  %5035 = vst.msk [vmem:[%s5023 + $0xa9] sm:$0xff] %vm72, %v4923
  %5036 = vst.msk [vmem:[%s5023 + $0xc1] sm:$0xff] %vm72, %v4924
  %5037 = vst.msk [vmem:[%s5023 + $0xc9] sm:$0xff] %vm72, %v4925
  %5038 = vst.msk [vmem:[%s5023 + $0xe1] sm:$0xff] %vm72, %v4926
  %5039 = vst.msk [vmem:[%s5023 + $0xe9] sm:$0xff] %vm72, %v4927
  %5040 = vst.msk [vmem:[%s5023 + $0x101] sm:$0xff] %vm72, %v4928
  %5041 = vst.msk [vmem:[%s5023 + $0x109] sm:$0xff] %vm72, %v4929
  %5042 = vst.msk [vmem:[%s5023 + $0x121] sm:$0xff] %vm72, %v4930
  %5043 = vst.msk [vmem:[%s5023 + $0x129] sm:$0xff] %vm72, %v4931
  %5044 = vst.msk [vmem:[%s5023 + $0x141] sm:$0xff] %vm72, %v4932
  %5045 = vst.msk [vmem:[%s5023 + $0x149] sm:$0xff] %vm72, %v4933
  %5046 = vst.msk [vmem:[%s5023 + $0x161] sm:$0xff] %vm72, %v4934
  %5047 = vst.msk [vmem:[%s5023 + $0x169] sm:$0xff] %vm72, %v4935
  %5048 = vst.msk [vmem:[%s5023 + $0x181] sm:$0xff] %vm72, %v4936
  %5049 = vst.msk [vmem:[%s5023 + $0x189] sm:$0xff] %vm72, %v4937
  %5050 = vst.msk [vmem:[%s5023 + $0x1a1] sm:$0xff] %vm72, %v4938
  %5051 = vst.msk [vmem:[%s5023 + $0x1a9] sm:$0xff] %vm72, %v4939
  %5052 = vst.msk [vmem:[%s5023 + $0x1c1] sm:$0xff] %vm72, %v4940
  %5053 = vst.msk [vmem:[%s5023 + $0x1c9] sm:$0xff] %vm72, %v4941
  %5054 = vst.msk [vmem:[%s5023 + $0x1e1] sm:$0xff] %vm72, %v4942
  %5055 = vst.msk [vmem:[%s5023 + $0x1e9] sm:$0xff] %vm72, %v4943
  %v5056 = vld [vmem:[#allocation4] sm:$0xff]
  %v5057 = vld [vmem:[#allocation4 + $0x8] sm:$0xff]
  %v5058 = vld [vmem:[#allocation4 + $0x10] sm:$0xff]
  %v5059 = vld [vmem:[#allocation4 + $0x20] sm:$0xff]
  %v5060 = vld [vmem:[#allocation4 + $0x28] sm:$0xff]
  %v5061 = vld [vmem:[#allocation4 + $0x30] sm:$0xff]
  %v5062 = vld [vmem:[#allocation4 + $0x40] sm:$0xff]
  %v5063 = vld [vmem:[#allocation4 + $0x48] sm:$0xff]
  %v5064 = vld [vmem:[#allocation4 + $0x50] sm:$0xff]
  %v5065 = vld [vmem:[#allocation4 + $0x60] sm:$0xff]
  %v5066 = vld [vmem:[#allocation4 + $0x68] sm:$0xff]
  %v5067 = vld [vmem:[#allocation4 + $0x70] sm:$0xff]
  %v5068 = vld [vmem:[#allocation4 + $0x80] sm:$0xff]
  %v5069 = vld [vmem:[#allocation4 + $0x88] sm:$0xff]
  %v5070 = vld [vmem:[#allocation4 + $0x90] sm:$0xff]
  %v5071 = vld [vmem:[#allocation4 + $0xa0] sm:$0xff]
  %v5072 = vld [vmem:[#allocation4 + $0xa8] sm:$0xff]
  %v5073 = vld [vmem:[#allocation4 + $0xb0] sm:$0xff]
  %v5074 = vld [vmem:[#allocation4 + $0xc0] sm:$0xff]
  %v5075 = vld [vmem:[#allocation4 + $0xc8] sm:$0xff]
  %v5076 = vld [vmem:[#allocation4 + $0xd0] sm:$0xff]
  %v5077 = vld [vmem:[#allocation4 + $0xe0] sm:$0xff]
  %v5078 = vld [vmem:[#allocation4 + $0xe8] sm:$0xff]
  %v5079 = vld [vmem:[#allocation4 + $0xf0] sm:$0xff]
  %v5080 = vld [vmem:[#allocation4 + $0x100] sm:$0xff]
  %v5081 = vld [vmem:[#allocation4 + $0x108] sm:$0xff]
  %v5082 = vld [vmem:[#allocation4 + $0x110] sm:$0xff]
  %v5083 = vld [vmem:[#allocation4 + $0x120] sm:$0xff]
  %v5084 = vld [vmem:[#allocation4 + $0x128] sm:$0xff]
  %v5085 = vld [vmem:[#allocation4 + $0x130] sm:$0xff]
  %v5086 = vld [vmem:[#allocation4 + $0x140] sm:$0xff]
  %v5087 = vld [vmem:[#allocation4 + $0x148] sm:$0xff]
  %v5088 = vld [vmem:[#allocation4 + $0x150] sm:$0xff]
  %v5089 = vld [vmem:[#allocation4 + $0x160] sm:$0xff]
  %v5090 = vld [vmem:[#allocation4 + $0x168] sm:$0xff]
  %v5091 = vld [vmem:[#allocation4 + $0x170] sm:$0xff]
  %v5092 = vld [vmem:[#allocation4 + $0x180] sm:$0xff]
  %v5093 = vld [vmem:[#allocation4 + $0x188] sm:$0xff]
  %v5094 = vld [vmem:[#allocation4 + $0x190] sm:$0xff]
  %v5095 = vld [vmem:[#allocation4 + $0x1a0] sm:$0xff]
  %v5096 = vld [vmem:[#allocation4 + $0x1a8] sm:$0xff]
  %v5097 = vld [vmem:[#allocation4 + $0x1b0] sm:$0xff]
  %v5098 = vld [vmem:[#allocation4 + $0x1c0] sm:$0xff]
  %v5099 = vld [vmem:[#allocation4 + $0x1c8] sm:$0xff]
  %v5100 = vld [vmem:[#allocation4 + $0x1d0] sm:$0xff]
  %v5101 = vld [vmem:[#allocation4 + $0x1e0] sm:$0xff]
  %v5102 = vld [vmem:[#allocation4 + $0x1e8] sm:$0xff]
  %v5103 = vld [vmem:[#allocation4 + $0x1f0] sm:$0xff]
  %v5104 = vld [vmem:[#allocation4 + $0x200] sm:$0xff]
  %v5105 = vld [vmem:[#allocation4 + $0x208] sm:$0xff]
  %v5106 = vld [vmem:[#allocation4 + $0x210] sm:$0xff]
  %v5107 = vld [vmem:[#allocation4 + $0x220] sm:$0xff]
  %v5108 = vld [vmem:[#allocation4 + $0x228] sm:$0xff]
  %v5109 = vld [vmem:[#allocation4 + $0x230] sm:$0xff]
  %v5110 = vld [vmem:[#allocation4 + $0x1] sm:$0xff]
  %v5111 = vld [vmem:[#allocation4 + $0x9] sm:$0xff]
  %v5112 = vld [vmem:[#allocation4 + $0x11] sm:$0xff]
  %v5113 = vld [vmem:[#allocation4 + $0x21] sm:$0xff]
  %v5114 = vld [vmem:[#allocation4 + $0x29] sm:$0xff]
  %v5115 = vld [vmem:[#allocation4 + $0x31] sm:$0xff]
  %v5116 = vld [vmem:[#allocation4 + $0x41] sm:$0xff]
  %v5117 = vld [vmem:[#allocation4 + $0x49] sm:$0xff]
  %v5118 = vld [vmem:[#allocation4 + $0x51] sm:$0xff]
  %v5119 = vld [vmem:[#allocation4 + $0x61] sm:$0xff]
  %v5120 = vld [vmem:[#allocation4 + $0x69] sm:$0xff]
  %v5121 = vld [vmem:[#allocation4 + $0x71] sm:$0xff]
  %v5122 = vld [vmem:[#allocation4 + $0x81] sm:$0xff]
  %v5123 = vld [vmem:[#allocation4 + $0x89] sm:$0xff]
  %v5124 = vld [vmem:[#allocation4 + $0x91] sm:$0xff]
  %v5125 = vld [vmem:[#allocation4 + $0xa1] sm:$0xff]
  %v5126 = vld [vmem:[#allocation4 + $0xa9] sm:$0xff]
  %v5127 = vld [vmem:[#allocation4 + $0xb1] sm:$0xff]
  %v5128 = vld [vmem:[#allocation4 + $0xc1] sm:$0xff]
  %v5129 = vld [vmem:[#allocation4 + $0xc9] sm:$0xff]
  %v5130 = vld [vmem:[#allocation4 + $0xd1] sm:$0xff]
  %v5131 = vld [vmem:[#allocation4 + $0xe1] sm:$0xff]
  %v5132 = vld [vmem:[#allocation4 + $0xe9] sm:$0xff]
  %v5133 = vld [vmem:[#allocation4 + $0xf1] sm:$0xff]
  %v5134 = vld [vmem:[#allocation4 + $0x101] sm:$0xff]
  %v5135 = vld [vmem:[#allocation4 + $0x109] sm:$0xff]
  %v5136 = vld [vmem:[#allocation4 + $0x111] sm:$0xff]
  %v5137 = vld [vmem:[#allocation4 + $0x121] sm:$0xff]
  %v5138 = vld [vmem:[#allocation4 + $0x129] sm:$0xff]
  %v5139 = vld [vmem:[#allocation4 + $0x131] sm:$0xff]
  %v5140 = vld [vmem:[#allocation4 + $0x141] sm:$0xff]
  %v5141 = vld [vmem:[#allocation4 + $0x149] sm:$0xff]
  %v5142 = vld [vmem:[#allocation4 + $0x151] sm:$0xff]
  %v5143 = vld [vmem:[#allocation4 + $0x161] sm:$0xff]
  %v5144 = vld [vmem:[#allocation4 + $0x169] sm:$0xff]
  %v5145 = vld [vmem:[#allocation4 + $0x171] sm:$0xff]
  %v5146 = vld [vmem:[#allocation4 + $0x181] sm:$0xff]
  %v5147 = vld [vmem:[#allocation4 + $0x189] sm:$0xff]
  %v5148 = vld [vmem:[#allocation4 + $0x191] sm:$0xff]
  %v5149 = vld [vmem:[#allocation4 + $0x1a1] sm:$0xff]
  %v5150 = vld [vmem:[#allocation4 + $0x1a9] sm:$0xff]
  %v5151 = vld [vmem:[#allocation4 + $0x1b1] sm:$0xff]
  %v5152 = vld [vmem:[#allocation4 + $0x1c1] sm:$0xff]
  %v5153 = vld [vmem:[#allocation4 + $0x1c9] sm:$0xff]
  %v5154 = vld [vmem:[#allocation4 + $0x1d1] sm:$0xff]
  %v5155 = vld [vmem:[#allocation4 + $0x1e1] sm:$0xff]
  %v5156 = vld [vmem:[#allocation4 + $0x1e9] sm:$0xff]
  %v5157 = vld [vmem:[#allocation4 + $0x1f1] sm:$0xff]
  %v5158 = vld [vmem:[#allocation4 + $0x201] sm:$0xff]
  %v5159 = vld [vmem:[#allocation4 + $0x209] sm:$0xff]
  %v5160 = vld [vmem:[#allocation4 + $0x211] sm:$0xff]
  %v5161 = vld [vmem:[#allocation4 + $0x221] sm:$0xff]
  %v5162 = vld [vmem:[#allocation4 + $0x229] sm:$0xff]
  %v5163 = vld [vmem:[#allocation4 + $0x231] sm:$0xff]
  %v5164 = vmax.f32 %v5056, %v5110
  %v5165 = vmax.f32 %v5057, %v5111
  %v5166 = vmax.f32 %v5058, %v5112
  %v5167 = vmax.f32 %v5059, %v5113
  %v5168 = vmax.f32 %v5060, %v5114
  %v5169 = vmax.f32 %v5061, %v5115
  %v5170 = vmax.f32 %v5062, %v5116
  %v5171 = vmax.f32 %v5063, %v5117
  %v5172 = vmax.f32 %v5064, %v5118
  %v5173 = vmax.f32 %v5065, %v5119
  %v5174 = vmax.f32 %v5066, %v5120
  %v5175 = vmax.f32 %v5067, %v5121
  %v5176 = vmax.f32 %v5068, %v5122
  %v5177 = vmax.f32 %v5069, %v5123
  %v5178 = vmax.f32 %v5070, %v5124
  %v5179 = vmax.f32 %v5071, %v5125
  %v5180 = vmax.f32 %v5072, %v5126
  %v5181 = vmax.f32 %v5073, %v5127
  %v5182 = vmax.f32 %v5074, %v5128
  %v5183 = vmax.f32 %v5075, %v5129
  %v5184 = vmax.f32 %v5076, %v5130
  %v5185 = vmax.f32 %v5077, %v5131
  %v5186 = vmax.f32 %v5078, %v5132
  %v5187 = vmax.f32 %v5079, %v5133
  %v5188 = vmax.f32 %v5080, %v5134
  %v5189 = vmax.f32 %v5081, %v5135
  %v5190 = vmax.f32 %v5082, %v5136
  %v5191 = vmax.f32 %v5083, %v5137
  %v5192 = vmax.f32 %v5084, %v5138
  %v5193 = vmax.f32 %v5085, %v5139
  %v5194 = vmax.f32 %v5086, %v5140
  %v5195 = vmax.f32 %v5087, %v5141
  %v5196 = vmax.f32 %v5088, %v5142
  %v5197 = vmax.f32 %v5089, %v5143
  %v5198 = vmax.f32 %v5090, %v5144
  %v5199 = vmax.f32 %v5091, %v5145
  %v5200 = vmax.f32 %v5092, %v5146
  %v5201 = vmax.f32 %v5093, %v5147
  %v5202 = vmax.f32 %v5094, %v5148
  %v5203 = vmax.f32 %v5095, %v5149
  %v5204 = vmax.f32 %v5096, %v5150
  %v5205 = vmax.f32 %v5097, %v5151
  %v5206 = vmax.f32 %v5098, %v5152
  %v5207 = vmax.f32 %v5099, %v5153
  %v5208 = vmax.f32 %v5100, %v5154
  %v5209 = vmax.f32 %v5101, %v5155
  %v5210 = vmax.f32 %v5102, %v5156
  %v5211 = vmax.f32 %v5103, %v5157
  %v5212 = vmax.f32 %v5104, %v5158
  %v5213 = vmax.f32 %v5105, %v5159
  %v5214 = vmax.f32 %v5106, %v5160
  %v5215 = vmax.f32 %v5107, %v5161
  %v5216 = vmax.f32 %v5108, %v5162
  %v5217 = vmax.f32 %v5109, %v5163
  %v5218 = vmax.f32 %v5164, %v5167
  %v5219 = vmax.f32 %v5165, %v5168
  %v5220 = vmax.f32 %v5166, %v5169
  %v5221 = vmax.f32 %v5170, %v5173
  %v5222 = vmax.f32 %v5171, %v5174
  %v5223 = vmax.f32 %v5172, %v5175
  %v5224 = vmax.f32 %v5176, %v5179
  %v5225 = vmax.f32 %v5177, %v5180
  %v5226 = vmax.f32 %v5178, %v5181
  %v5227 = vmax.f32 %v5182, %v5185
  %v5228 = vmax.f32 %v5183, %v5186
  %v5229 = vmax.f32 %v5184, %v5187
  %v5230 = vmax.f32 %v5188, %v5191
  %v5231 = vmax.f32 %v5189, %v5192
  %v5232 = vmax.f32 %v5190, %v5193
  %v5233 = vmax.f32 %v5194, %v5197
  %v5234 = vmax.f32 %v5195, %v5198
  %v5235 = vmax.f32 %v5196, %v5199
  %v5236 = vmax.f32 %v5200, %v5203
  %v5237 = vmax.f32 %v5201, %v5204
  %v5238 = vmax.f32 %v5202, %v5205
  %v5239 = vmax.f32 %v5206, %v5209
  %v5240 = vmax.f32 %v5207, %v5210
  %v5241 = vmax.f32 %v5208, %v5211
  %v5242 = vmax.f32 %v5212, %v5215
  %v5243 = vmax.f32 %v5213, %v5216
  %v5244 = vmax.f32 %v5214, %v5217
  %v5245 = vld [vmem:[%s7] sm:$0xff]
  %v5246 = vld [vmem:[%s8] sm:$0x1]
  %v5248 = vlaneseq
  %v5249 = vshrl.u32 %v5248, 7
  %v5250 = vsub.s32 0, %v5249
  %v5251 = vrot.slane %v5246, %v5250
  %v5254 = vsel %vm72, %v5218, 0
  %v5257 = vsel %vm72, %v5219, 0
  %v5260 = vsel %vm72, %v5220, 0
  %v5263 = vsel %vm72, %v5221, 0
  %v5266 = vsel %vm72, %v5222, 0
  %v5269 = vsel %vm72, %v5223, 0
  %v5272 = vsel %vm72, %v5224, 0
  %v5275 = vsel %vm72, %v5225, 0
  %v5278 = vsel %vm72, %v5226, 0
  %v5281 = vsel %vm72, %v5227, 0
  %v5284 = vsel %vm72, %v5228, 0
  %v5287 = vsel %vm72, %v5229, 0
  %v5290 = vsel %vm72, %v5230, 0
  %v5293 = vsel %vm72, %v5231, 0
  %v5296 = vsel %vm72, %v5232, 0
  %v5299 = vsel %vm72, %v5233, 0
  %v5302 = vsel %vm72, %v5234, 0
  %v5305 = vsel %vm72, %v5235, 0
  %v5308 = vsel %vm72, %v5236, 0
  %v5311 = vsel %vm72, %v5237, 0
  %v5314 = vsel %vm72, %v5238, 0
  %v5317 = vsel %vm72, %v5239, 0
  %v5320 = vsel %vm72, %v5240, 0
  %v5323 = vsel %vm72, %v5241, 0
  %v5326 = vsel %vm72, %v5242, 0
  %v5329 = vsel %vm72, %v5243, 0
  %v5332 = vsel %vm72, %v5244, 0
  %5334 = vmatprep.subr.mxu0 0.0
  %5335 = vmatpush1.msra.mxu0 %v5245
  %5336 = vmatprep.subr.mxu0 0.0
  %5337 = vmatpush1.msra.mxu0 0.0
  %5338 = vmatprep.subr.mxu0 0.0
  %5339 = vmatpush1.msra.mxu0 0.0
  %5340 = vmatprep.subr.mxu0 0.0
  %5341 = vmatpush1.msra.mxu0 0.0
  %5342 = vmatprep.subr.mxu0 0.0
  %5343 = vmatpush1.msra.mxu0 0.0
  %5344 = vmatprep.subr.mxu0 0.0
  %5345 = vmatpush1.msra.mxu0 0.0
  %5346 = vmatprep.subr.mxu0 0.0
  %5347 = vmatpush1.msra.mxu0 0.0
  %5348 = vmatprep.subr.mxu0 0.0
  %5349 = vmatpush1.msra.mxu0 0.0
  %5350 = vmatprep.subr.mxu0 0.0
  %5351 = vmatpush1.msra.mxu0 0.0
  %5352 = vmatprep.subr.mxu0 0.0
  %5353 = vmatpush1.msra.mxu0 0.0
  %5354 = vmatprep.subr.mxu0 0.0
  %5355 = vmatpush1.msra.mxu0 0.0
  %5356 = vmatprep.subr.mxu0 0.0
  %5357 = vmatpush1.msra.mxu0 0.0
  %5358 = vmatprep.subr.mxu0 0.0
  %5359 = vmatpush1.msra.mxu0 0.0
  %5360 = vmatprep.subr.mxu0 0.0
  %5361 = vmatpush1.msra.mxu0 0.0
  %5362 = vmatprep.subr.mxu0 0.0
  %5363 = vmatpush1.msra.mxu0 0.0
  %5364 = vmatprep.subr.mxu0 0.0
  %5365 = vmatpush1.msra.mxu0 0.0
  %5366 = vmatprep.subr.mxu0 0.0
  %5367 = vmatpush1.msra.mxu0 0.0
  %5368 = vmatprep.subr.mxu0 0.0
  %5369 = vmatpush1.msra.mxu0 0.0
  %5370 = vmatprep.subr.mxu0 0.0
  %5371 = vmatpush1.msra.mxu0 0.0
  %5372 = vmatprep.subr.mxu0 0.0
  %5373 = vmatpush1.msra.mxu0 0.0
  %5374 = vmatprep.subr.mxu0 0.0
  %5375 = vmatpush1.msra.mxu0 0.0
  %5376 = vmatprep.subr.mxu0 0.0
  %5377 = vmatpush1.msra.mxu0 0.0
  %5378 = vmatprep.subr.mxu0 0.0
  %5379 = vmatpush1.msra.mxu0 0.0
  %5380 = vmatprep.subr.mxu0 0.0
  %5381 = vmatpush1.msra.mxu0 0.0
  %5382 = vmatprep.subr.mxu0 0.0
  %5383 = vmatpush1.msra.mxu0 0.0
  %5384 = vmatprep.subr.mxu0 0.0
  %5385 = vmatpush1.msra.mxu0 0.0
  %5386 = vmatprep.subr.mxu0 0.0
  %5387 = vmatpush1.msra.mxu0 0.0
  %5388 = vmatprep.subr.mxu0 0.0
  %5389 = vmatpush1.msra.mxu0 0.0
  %5390 = vmatprep.subr.mxu0 0.0
  %5391 = vmatpush1.msra.mxu0 0.0
  %5392 = vmatprep.subr.mxu0 0.0
  %5393 = vmatpush1.msra.mxu0 0.0
  %5394 = vmatprep.subr.mxu0 0.0
  %5395 = vmatpush1.msra.mxu0 0.0
  %5396 = vmatprep.subr.mxu0 0.0
  %5397 = vmatpush1.msra.mxu0 0.0
  %5398 = vmatprep.mubr.f32.mxu0 0.0
  %5399 = vmatmul.mubr.f32.gmra.mrb[0].mxu0 %v5254
  %v5400 = vpop.f32.mrb[0].mxu0
  %v5401 = vadd.f32 %v5251, %v5400
  %v5402 = vpop.f32.mrb[0].mxu0
  %5403 = vmatprep.mubr.f32.mxu0 0.0
  %5404 = vmatmul.mubr.f32.gmra.mrb[0].mxu0 %v5257
  %v5405 = vpop.f32.mrb[0].mxu0
  %v5406 = vadd.f32 %v5251, %v5405
  %v5407 = vpop.f32.mrb[0].mxu0
  %5408 = vmatprep.mubr.f32.mxu0 0.0
  %5409 = vmatmul.mubr.f32.gmra.mrb[0].mxu0 %v5260
  %v5410 = vpop.f32.mrb[0].mxu0
  %v5411 = vadd.f32 %v5251, %v5410
  %v5412 = vpop.f32.mrb[0].mxu0
  %5413 = vmatprep.mubr.f32.mxu0 0.0
  %5414 = vmatmul.mubr.f32.gmra.mrb[0].mxu0 %v5263
  %v5415 = vpop.f32.mrb[0].mxu0
  %v5416 = vadd.f32 %v5251, %v5415
  %v5417 = vpop.f32.mrb[0].mxu0
  %5418 = vmatprep.mubr.f32.mxu0 0.0
  %5419 = vmatmul.mubr.f32.gmra.mrb[0].mxu0 %v5266
  %v5420 = vpop.f32.mrb[0].mxu0
  %v5421 = vadd.f32 %v5251, %v5420
  %v5422 = vpop.f32.mrb[0].mxu0
  %5423 = vmatprep.mubr.f32.mxu0 0.0
  %5424 = vmatmul.mubr.f32.gmra.mrb[0].mxu0 %v5269
  %v5425 = vpop.f32.mrb[0].mxu0
  %v5426 = vadd.f32 %v5251, %v5425
  %v5427 = vpop.f32.mrb[0].mxu0
  %5428 = vmatprep.mubr.f32.mxu0 0.0
  %5429 = vmatmul.mubr.f32.gmra.mrb[0].mxu0 %v5272
  %v5430 = vpop.f32.mrb[0].mxu0
  %v5431 = vadd.f32 %v5251, %v5430
  %v5432 = vpop.f32.mrb[0].mxu0
  %5433 = vmatprep.mubr.f32.mxu0 0.0
  %5434 = vmatmul.mubr.f32.gmra.mrb[0].mxu0 %v5275
  %v5435 = vpop.f32.mrb[0].mxu0
  %v5436 = vadd.f32 %v5251, %v5435
  %v5437 = vpop.f32.mrb[0].mxu0
  %5438 = vmatprep.mubr.f32.mxu0 0.0
  %5439 = vmatmul.mubr.f32.gmra.mrb[0].mxu0 %v5278
  %v5440 = vpop.f32.mrb[0].mxu0
  %v5441 = vadd.f32 %v5251, %v5440
  %v5442 = vpop.f32.mrb[0].mxu0
  %5443 = vmatprep.mubr.f32.mxu0 0.0
  %5444 = vmatmul.mubr.f32.gmra.mrb[0].mxu0 %v5281
  %v5445 = vpop.f32.mrb[0].mxu0
  %v5446 = vadd.f32 %v5251, %v5445
  %v5447 = vpop.f32.mrb[0].mxu0
  %5448 = vmatprep.mubr.f32.mxu0 0.0
  %5449 = vmatmul.mubr.f32.gmra.mrb[0].mxu0 %v5284
  %v5450 = vpop.f32.mrb[0].mxu0
  %v5451 = vadd.f32 %v5251, %v5450
  %v5452 = vpop.f32.mrb[0].mxu0
  %5453 = vmatprep.mubr.f32.mxu0 0.0
  %5454 = vmatmul.mubr.f32.gmra.mrb[0].mxu0 %v5287
  %v5455 = vpop.f32.mrb[0].mxu0
  %v5456 = vadd.f32 %v5251, %v5455
  %v5457 = vpop.f32.mrb[0].mxu0
  %5458 = vmatprep.mubr.f32.mxu0 0.0
  %5459 = vmatmul.mubr.f32.gmra.mrb[0].mxu0 %v5290
  %v5460 = vpop.f32.mrb[0].mxu0
  %v5461 = vadd.f32 %v5251, %v5460
  %v5462 = vpop.f32.mrb[0].mxu0
  %5463 = vmatprep.mubr.f32.mxu0 0.0
  %5464 = vmatmul.mubr.f32.gmra.mrb[0].mxu0 %v5293
  %v5465 = vpop.f32.mrb[0].mxu0
  %v5466 = vadd.f32 %v5251, %v5465
  %v5467 = vpop.f32.mrb[0].mxu0
  %5468 = vmatprep.mubr.f32.mxu0 0.0
  %5469 = vmatmul.mubr.f32.gmra.mrb[0].mxu0 %v5296
  %v5470 = vpop.f32.mrb[0].mxu0
  %v5471 = vadd.f32 %v5251, %v5470
  %v5472 = vpop.f32.mrb[0].mxu0
  %5473 = vmatprep.mubr.f32.mxu0 0.0
  %5474 = vmatmul.mubr.f32.gmra.mrb[0].mxu0 %v5299
  %v5475 = vpop.f32.mrb[0].mxu0
  %v5476 = vadd.f32 %v5251, %v5475
  %v5477 = vpop.f32.mrb[0].mxu0
  %5478 = vmatprep.mubr.f32.mxu0 0.0
  %5479 = vmatmul.mubr.f32.gmra.mrb[0].mxu0 %v5302
  %v5480 = vpop.f32.mrb[0].mxu0
  %v5481 = vadd.f32 %v5251, %v5480
  %v5482 = vpop.f32.mrb[0].mxu0
  %5483 = vmatprep.mubr.f32.mxu0 0.0
  %5484 = vmatmul.mubr.f32.gmra.mrb[0].mxu0 %v5305
  %v5485 = vpop.f32.mrb[0].mxu0
  %v5486 = vadd.f32 %v5251, %v5485
  %v5487 = vpop.f32.mrb[0].mxu0
  %5488 = vmatprep.mubr.f32.mxu0 0.0
  %5489 = vmatmul.mubr.f32.gmra.mrb[0].mxu0 %v5308
  %v5490 = vpop.f32.mrb[0].mxu0
  %v5491 = vadd.f32 %v5251, %v5490
  %v5492 = vpop.f32.mrb[0].mxu0
  %5493 = vmatprep.mubr.f32.mxu0 0.0
  %5494 = vmatmul.mubr.f32.gmra.mrb[0].mxu0 %v5311
  %v5495 = vpop.f32.mrb[0].mxu0
  %v5496 = vadd.f32 %v5251, %v5495
  %v5497 = vpop.f32.mrb[0].mxu0
  %5498 = vmatprep.mubr.f32.mxu0 0.0
  %5499 = vmatmul.mubr.f32.gmra.mrb[0].mxu0 %v5314
  %v5500 = vpop.f32.mrb[0].mxu0
  %v5501 = vadd.f32 %v5251, %v5500
  %v5502 = vpop.f32.mrb[0].mxu0
  %5503 = vmatprep.mubr.f32.mxu0 0.0
  %5504 = vmatmul.mubr.f32.gmra.mrb[0].mxu0 %v5317
  %v5505 = vpop.f32.mrb[0].mxu0
  %v5506 = vadd.f32 %v5251, %v5505
  %v5507 = vpop.f32.mrb[0].mxu0
  %5508 = vmatprep.mubr.f32.mxu0 0.0
  %5509 = vmatmul.mubr.f32.gmra.mrb[0].mxu0 %v5320
  %v5510 = vpop.f32.mrb[0].mxu0
  %v5511 = vadd.f32 %v5251, %v5510
  %v5512 = vpop.f32.mrb[0].mxu0
  %5513 = vmatprep.mubr.f32.mxu0 0.0
  %5514 = vmatmul.mubr.f32.gmra.mrb[0].mxu0 %v5323
  %v5515 = vpop.f32.mrb[0].mxu0
  %v5516 = vadd.f32 %v5251, %v5515
  %v5517 = vpop.f32.mrb[0].mxu0
  %5518 = vmatprep.mubr.f32.mxu0 0.0
  %5519 = vmatmul.mubr.f32.gmra.mrb[0].mxu0 %v5326
  %v5520 = vpop.f32.mrb[0].mxu0
  %v5521 = vadd.f32 %v5251, %v5520
  %v5522 = vpop.f32.mrb[0].mxu0
  %5523 = vmatprep.mubr.f32.mxu0 0.0
  %5524 = vmatmul.mubr.f32.gmra.mrb[0].mxu0 %v5329
  %v5525 = vpop.f32.mrb[0].mxu0
  %v5526 = vadd.f32 %v5251, %v5525
  %v5527 = vpop.f32.mrb[0].mxu0
  %5528 = vmatprep.mubr.f32.mxu0 0.0
  %5529 = vmatmul.mubr.f32.gmra.mrb[0].mxu0 %v5332
  %v5530 = vpop.f32.mrb[0].mxu0
  %v5531 = vadd.f32 %v5251, %v5530
  %v5532 = vpop.f32.mrb[0].mxu0
  %5533 = vdwg.mxu0
  %vm5534 = vcmask 130048
  %5535 = vst.msk [vmem:[%s9] sm:$0xff] %vm5534, %v5401
  %5536 = vst.msk [vmem:[%s9 + $0x8] sm:$0xff] %vm5534, %v5406
  %5537 = vst.msk [vmem:[%s9 + $0x10] sm:$0xff] %vm5534, %v5411
  %5538 = vst.msk [vmem:[%s9 + $0x18] sm:$0xff] %vm5534, %v5416
  %5539 = vst.msk [vmem:[%s9 + $0x20] sm:$0xff] %vm5534, %v5421
  %5540 = vst.msk [vmem:[%s9 + $0x28] sm:$0xff] %vm5534, %v5426
  %5541 = vst.msk [vmem:[%s9 + $0x30] sm:$0xff] %vm5534, %v5431
  %5542 = vst.msk [vmem:[%s9 + $0x38] sm:$0xff] %vm5534, %v5436
  %5543 = vst.msk [vmem:[%s9 + $0x40] sm:$0xff] %vm5534, %v5441
  %5544 = vst.msk [vmem:[%s9 + $0x48] sm:$0xff] %vm5534, %v5446
  %5545 = vst.msk [vmem:[%s9 + $0x50] sm:$0xff] %vm5534, %v5451
  %5546 = vst.msk [vmem:[%s9 + $0x58] sm:$0xff] %vm5534, %v5456
  %5547 = vst.msk [vmem:[%s9 + $0x60] sm:$0xff] %vm5534, %v5461
  %5548 = vst.msk [vmem:[%s9 + $0x68] sm:$0xff] %vm5534, %v5466
  %5549 = vst.msk [vmem:[%s9 + $0x70] sm:$0xff] %vm5534, %v5471
  %5550 = vst.msk [vmem:[%s9 + $0x78] sm:$0xff] %vm5534, %v5476
  %5551 = vst.msk [vmem:[%s9 + $0x80] sm:$0xff] %vm5534, %v5481
  %5552 = vst.msk [vmem:[%s9 + $0x88] sm:$0xff] %vm5534, %v5486
  %5553 = vst.msk [vmem:[%s9 + $0x90] sm:$0xff] %vm5534, %v5491
  %5554 = vst.msk [vmem:[%s9 + $0x98] sm:$0xff] %vm5534, %v5496
  %5555 = vst.msk [vmem:[%s9 + $0xa0] sm:$0xff] %vm5534, %v5501
  %5556 = vst.msk [vmem:[%s9 + $0xa8] sm:$0xff] %vm5534, %v5506
  %5557 = vst.msk [vmem:[%s9 + $0xb0] sm:$0xff] %vm5534, %v5511
  %5558 = vst.msk [vmem:[%s9 + $0xb8] sm:$0xff] %vm5534, %v5516
  %5559 = vst.msk [vmem:[%s9 + $0xc0] sm:$0xff] %vm5534, %v5521
  %5560 = vst.msk [vmem:[%s9 + $0xc8] sm:$0xff] %vm5534, %v5526
  %5561 = vst.msk [vmem:[%s9 + $0xd0] sm:$0xff] %vm5534, %v5531
  // Predicated region
  $region38: #{resnext_forward.1} parent=0 // pred_check
    _
  $region39: #{resnext_forward.1} parent=0 // pred_check_branch
    %5563 = sbr.rel (0) target = $region41
  $region40: #{resnext_forward.1} parent=0 // pred_region
    _
  $region41: #{resnext_forward.1} parent=0 // pred_fallthru
    _
  // Predicated region
  $region42: #{resnext_forward.1} parent=0 // pred_check
    _
  $region43: #{resnext_forward.1} parent=0 // pred_check_branch
    %5565 = sbr.rel (0) target = $region45
  $region44: #{resnext_forward.1} parent=0 // pred_region
    _
  $region45: #{resnext_forward.1} parent=0 // pred_fallthru
    _

</llo_original>
